<compile_context>
chip_gen: v7x
topology: tpu7x:2x2x1
jax: 0.10.0
libtpu: 0.0.40
codegen_flags: <defaults>
</compile_context>

<pallas_src>
import functools

import jax
import jax.numpy as jnp
from jax import lax
from jax.experimental import pallas as pl
from jax.experimental.pallas import tpu as pltpu

EPS = 1e-5


# ---------------------------------------------------------------------------
# Pallas kernels
# ---------------------------------------------------------------------------
def _gn_scale_shift(xb, gamma, beta, mem, mem_t, *, S, C, G):
    """Per-sample GroupNorm scale/shift ([1, C]) computed from a [S, C] slab."""
    s1 = jnp.sum(xb, axis=0, keepdims=True)            # [1, C]
    s2 = jnp.sum(xb * xb, axis=0, keepdims=True)       # [1, C]
    if G == C:                                         # group size 1 -> per-channel stats
        mean_c = s1 / float(S)
        ex2_c = s2 / float(S)
    else:                                              # grouped channels: reduce via 0/1 matrix
        denom = float(S * (C // G))
        mean_g = jnp.dot(s1, mem, preferred_element_type=jnp.float32) / denom   # [1, G]
        ex2_g = jnp.dot(s2, mem, preferred_element_type=jnp.float32) / denom
        mean_c = jnp.dot(mean_g, mem_t, preferred_element_type=jnp.float32)     # [1, C]
        ex2_c = jnp.dot(ex2_g, mem_t, preferred_element_type=jnp.float32)
    var_c = ex2_c - mean_c * mean_c
    inv = lax.rsqrt(var_c + EPS)
    scale = inv * gamma
    shift = beta - mean_c * scale
    return scale, shift


def gn_relu_kernel(x_ref, gamma_ref, beta_ref, mem_ref, memt_ref, o_ref, *, B, S, C, G):
    """o = relu(GroupNorm(x)); x is [B*S, C], stats computed per sample."""
    gamma = gamma_ref[...]
    beta = beta_ref[...]
    mem = mem_ref[...]
    mem_t = memt_ref[...]
    for b in range(B):                                  # static loop, B is tiny
        xb = x_ref[b * S:(b + 1) * S, :]
        scale, shift = _gn_scale_shift(xb, gamma, beta, mem, mem_t, S=S, C=C, G=G)
        o_ref[b * S:(b + 1) * S, :] = jnp.maximum(xb * scale + shift, 0.0)


def conv_reduce_kernel(p_ref, ys_ref, w1_ref, wr_ref, gamma_ref, beta_ref, mem_ref, memt_ref,
                       y2_ref, sc_ref, *, B, S, C, G):
    """Fused: conv3x3/s2 (as matmul) + conv1x1/s2 shortcut + GroupNorm2 + ReLU."""
    c1 = jnp.dot(p_ref[...], w1_ref[...], preferred_element_type=jnp.float32)   # [B*S, C]
    if wr_ref.shape[0] == 1:
        # Cin == 1: rank-1 product via VPU broadcast instead of a K=1 matmul.
        sc_ref[...] = ys_ref[...] * wr_ref[...]
    else:
        sc_ref[...] = jnp.dot(ys_ref[...], wr_ref[...], preferred_element_type=jnp.float32)
    gamma = gamma_ref[...]
    beta = beta_ref[...]
    mem = mem_ref[...]
    mem_t = memt_ref[...]
    for b in range(B):
        cb = c1[b * S:(b + 1) * S, :]
        scale, shift = _gn_scale_shift(cb, gamma, beta, mem, mem_t, S=S, C=C, G=G)
        y2_ref[b * S:(b + 1) * S, :] = jnp.maximum(cb * scale + shift, 0.0)


def conv_add_kernel(p_ref, w_ref, sc_ref, o_ref):
    """Fused conv3x3/s1 (as matmul) + residual add; M-tiled by the grid."""
    o_ref[...] = (jnp.dot(p_ref[...], w_ref[...], preferred_element_type=jnp.float32)
                  + sc_ref[...])


def rnn_cell_kernel(f_ref, h_ref, wix_ref, wih_ref, bi_ref, wo_ref, bo_ref, out_ref, hn_ref):
    """Fused RNN cell: h' = tanh([feat, h] @ Wi + bi); out = h' @ Wo + bo."""
    pre = (jnp.dot(f_ref[...], wix_ref[...], preferred_element_type=jnp.float32)
           + jnp.dot(h_ref[...], wih_ref[...], preferred_element_type=jnp.float32)
           + bi_ref[...])
    hn = jnp.tanh(pre)
    hn_ref[...] = hn
    out_ref[...] = jnp.dot(hn, wo_ref[...], preferred_element_type=jnp.float32) + bo_ref[...]


# ---------------------------------------------------------------------------
# pallas_call wrappers
# ---------------------------------------------------------------------------
def _full_spec(shape):
    return pl.BlockSpec(shape, lambda *_: (0,) * len(shape))


def _call_full(kernel, inputs, out_shapes):
    """Single-invocation pallas_call with whole-array (VMEM-resident) blocks."""
    single = not isinstance(out_shapes, (tuple, list))
    outs = (out_shapes,) if single else tuple(out_shapes)
    res = pl.pallas_call(
        kernel,
        out_shape=outs,
        in_specs=[_full_spec(a.shape) for a in inputs],
        out_specs=tuple(_full_spec(o.shape) for o in outs),
    )(*inputs)
    return res[0] if single else tuple(res)


def _conv_add_call(p2, w2, sc):
    """conv2 + residual add, tiled over the (large) M = B*Ho*Wo dimension."""
    M, K = p2.shape
    N = w2.shape[1]
    tm = M
    if M > 512:
        tm = 512
        while M % tm:
            tm //= 2
    flops = 2 * M * K * N
    bytes_acc = 4 * (M * K + K * N + 2 * M * N)
    return pl.pallas_call(
        conv_add_kernel,
        out_shape=jax.ShapeDtypeStruct((M, N), jnp.float32),
        grid=(M // tm,),
        in_specs=[pl.BlockSpec((tm, K), lambda i: (i, 0)),
                  pl.BlockSpec((K, N), lambda i: (0, 0)),
                  pl.BlockSpec((tm, N), lambda i: (i, 0))],
        out_specs=pl.BlockSpec((tm, N), lambda i: (i, 0)),
        compiler_params=pltpu.CompilerParams(dimension_semantics=("parallel",)),
        cost_estimate=pl.CostEstimate(flops=flops, transcendentals=0,
                                      bytes_accessed=bytes_acc),
    )(p2, w2, sc)


# ---------------------------------------------------------------------------
# Wrapper-side layout plumbing (no arithmetic)
# ---------------------------------------------------------------------------
def _im2col3x3(y, stride):
    """[B, H, W, C] -> ([B, Ho, Wo, 9*C] patches with zero pad 1, Ho, Wo)."""
    # TODO(synk): pull the padded patch gather into the kernel via manual DMA to avoid
    # materializing the 9x-expanded patch tensor in HBM.
    B, H, W, C = y.shape
    yp = jnp.pad(y, ((0, 0), (1, 1), (1, 1), (0, 0)))
    Ho = (H - 1) // stride + 1
    Wo = (W - 1) // stride + 1
    cols = []
    for dy in range(3):
        for dx in range(3):
            cols.append(yp[:, dy:dy + (Ho - 1) * stride + 1:stride,
                           dx:dx + (Wo - 1) * stride + 1:stride, :])
    return jnp.concatenate(cols, axis=-1), Ho, Wo


def _group_membership(C, G):
    cg = C // G
    return (jnp.arange(C)[:, None] // cg == jnp.arange(G)[None, :]).astype(jnp.float32)


# ---------------------------------------------------------------------------
# EncoderRNN forward built from the kernels
# ---------------------------------------------------------------------------
def res_block_forward(x_nhwc, bp):
    B, H, W, cin = x_nhwc.shape
    cout = bp["w1"].shape[1]
    S = H * W

    # 1) fused GroupNorm1 + ReLU
    y1 = _call_full(
        functools.partial(gn_relu_kernel, B=B, S=S, C=cin, G=bp["G1"]),
        [x_nhwc.reshape(B * S, cin), bp["g1"], bp["b1"], bp["mem1"], bp["mem1t"]],
        jax.ShapeDtypeStruct((B * S, cin), jnp.float32),
    ).reshape(B, H, W, cin)

    # 2) layout plumbing: 3x3/stride-2 patches + 1x1/stride-2 shortcut gather
    p1, Ho, Wo = _im2col3x3(y1, stride=2)
    S2 = Ho * Wo
    p1 = p1.reshape(B * S2, 9 * cin)
    ys = y1[:, ::2, ::2, :].reshape(B * S2, cin)

    # 3) fused conv1 + shortcut conv1x1 + GroupNorm2 + ReLU
    y2, sc = _call_full(
        functools.partial(conv_reduce_kernel, B=B, S=S2, C=cout, G=bp["G2"]),
        [p1, ys, bp["w1"], bp["wr"], bp["g2"], bp["b2"], bp["mem2"], bp["mem2t"]],
        (jax.ShapeDtypeStruct((B * S2, cout), jnp.float32),
         jax.ShapeDtypeStruct((B * S2, cout), jnp.float32)),
    )

    # 4) 3x3/stride-1 patches of y2, then fused conv2 + residual add (M-tiled, parallel grid)
    p2, _, _ = _im2col3x3(y2.reshape(B, Ho, Wo, cout), stride=1)
    out = _conv_add_call(p2.reshape(B * S2, 9 * cout), bp["w2"], sc)
    return out.reshape(B, Ho, Wo, cout)


def encoder_rnn_forward(x_nchw, h, kp):
    B = x_nchw.shape[0]
    x = jnp.transpose(x_nchw, (0, 2, 3, 1)).astype(jnp.float32)   # NHWC for lane-major channels
    for bp in kp["blocks"]:
        x = res_block_forward(x, bp)
    # match torch's x.view(bs, -1) which flattens NCHW order
    feat = jnp.transpose(x, (0, 3, 1, 2)).reshape(B, -1)
    out, h_new = _call_full(
        rnn_cell_kernel,
        [feat, h, kp["wix"], kp["wih"], kp["bi"], kp["wo"], kp["bo"]],
        (jax.ShapeDtypeStruct((B, kp["wo"].shape[1]), jnp.float32),
         jax.ShapeDtypeStruct((B, kp["wih"].shape[1]), jnp.float32)),
    )
    return out, h_new


# ---------------------------------------------------------------------------
# Parameters (PyTorch layout) and conversion to kernel layout
# ---------------------------------------------------------------------------
def init_params_pt(key, latent_dim=4, obs_dim=16, nhidden=25):
    cfg = [(1, 16), (16, 32), (32, 64), (64, 2)]
    keys = iter(jax.random.split(key, len(cfg) * 7 + 4))
    blocks = []
    for cin, cout in cfg:
        blocks.append(dict(
            G1=min(32, cin), G2=min(32, cout),
            g1=1.0 + 0.1 * jax.random.normal(next(keys), (cin,), jnp.float32),
            b1=0.1 * jax.random.normal(next(keys), (cin,), jnp.float32),
            wr=0.1 * jax.random.normal(next(keys), (cout, cin, 1, 1), jnp.float32),
            w1=0.1 * jax.random.normal(next(keys), (cout, cin, 3, 3), jnp.float32),
            g2=1.0 + 0.1 * jax.random.normal(next(keys), (cout,), jnp.float32),
            b2=0.1 * jax.random.normal(next(keys), (cout,), jnp.float32),
            w2=0.1 * jax.random.normal(next(keys), (cout, cout, 3, 3), jnp.float32),
        ))
    in_dim = 2 * obs_dim + nhidden
    return dict(
        blocks=blocks,
        i2h_w=0.1 * jax.random.normal(next(keys), (nhidden, in_dim), jnp.float32),
        i2h_b=0.1 * jax.random.normal(next(keys), (nhidden,), jnp.float32),
        h2o_w=0.1 * jax.random.normal(next(keys), (2 * latent_dim, nhidden), jnp.float32),
        h2o_b=0.1 * jax.random.normal(next(keys), (2 * latent_dim,), jnp.float32),
    )


def to_kernel_params(pt, obs_dim=16):
    blocks = []
    for bp in pt["blocks"]:
        cout, cin = bp["w1"].shape[0], bp["w1"].shape[1]
        mem1 = _group_membership(cin, bp["G1"])
        mem2 = _group_membership(cout, bp["G2"])
        blocks.append(dict(
            G1=bp["G1"], G2=bp["G2"],
            g1=bp["g1"].reshape(1, cin), b1=bp["b1"].reshape(1, cin),
            mem1=mem1, mem1t=mem1.T,
            g2=bp["g2"].reshape(1, cout), b2=bp["b2"].reshape(1, cout),
            mem2=mem2, mem2t=mem2.T,
            wr=bp["wr"][:, :, 0, 0].T,                                     # [cin, cout]
            w1=jnp.transpose(bp["w1"], (2, 3, 1, 0)).reshape(9 * cin, cout),
            w2=jnp.transpose(bp["w2"], (2, 3, 1, 0)).reshape(9 * cout, cout),
        ))
    wi = pt["i2h_w"].T                         # [2*obs_dim + nhidden, nhidden]
    feat_dim = 2 * obs_dim
    return dict(
        blocks=blocks,
        wix=wi[:feat_dim, :], wih=wi[feat_dim:, :],
        bi=pt["i2h_b"].reshape(1, -1),
        wo=pt["h2o_w"].T, bo=pt["h2o_b"].reshape(1, -1),
    )


# ---------------------------------------------------------------------------
# Pure-JAX reference (mirrors the PyTorch forward) for a correctness check
# ---------------------------------------------------------------------------
def _ref_groupnorm(x, G, gamma, beta):
    B, C, H, W = x.shape
    xg = x.reshape(B, G, (C // G) * H * W)
    mean = xg.mean(axis=2, keepdims=True)
    var = xg.var(axis=2, keepdims=True)
    xn = ((xg - mean) / jnp.sqrt(var + EPS)).reshape(B, C, H, W)
    return xn * gamma.reshape(1, C, 1, 1) + beta.reshape(1, C, 1, 1)


def _ref_conv(x, w, stride, pad):
    return lax.conv_general_dilated(
        x, w, (stride, stride), ((pad, pad), (pad, pad)),
        dimension_numbers=("NCHW", "OIHW", "NCHW"),
        precision=lax.Precision.HIGHEST)


def reference_forward(x, h, pt):
    for bp in pt["blocks"]:
        y = jax.nn.relu(_ref_groupnorm(x, bp["G1"], bp["g1"], bp["b1"]))
        shortcut = _ref_conv(y, bp["wr"], 2, 0)
        out = _ref_conv(y, bp["w1"], 2, 1)
        out = jax.nn.relu(_ref_groupnorm(out, bp["G2"], bp["g2"], bp["b2"]))
        out = _ref_conv(out, bp["w2"], 1, 1)
        x = out + shortcut
    B = x.shape[0]
    feat = x.reshape(B, -1)
    combined = jnp.concatenate([feat, h], axis=1)
    hn = jnp.tanh(jnp.dot(combined, pt["i2h_w"].T, precision=lax.Precision.HIGHEST)
                  + pt["i2h_b"])
    out = jnp.dot(hn, pt["h2o_w"].T, precision=lax.Precision.HIGHEST) + pt["h2o_b"]
    return out, hn


if __name__ == "__main__":
    B, obs_dim, nhidden, latent_dim = 2, 16, 25, 4
    H = W = 64   # 4 stride-2 blocks: 64 -> 4, so 2*4*4 = 2*obs_dim flattened features

    key = jax.random.PRNGKey(0)
    kx, kh, kp = jax.random.split(key, 3)
    x = jax.random.normal(kx, (B, 1, H, W), jnp.float32)          # NCHW, like the PyTorch module
    h0 = 0.1 * jax.random.normal(kh, (B, nhidden), jnp.float32)

    pt_params = init_params_pt(kp, latent_dim=latent_dim, obs_dim=obs_dim, nhidden=nhidden)
    kparams = to_kernel_params(pt_params, obs_dim=obs_dim)

    out, h_new = encoder_rnn_forward(x, h0, kparams)
    out = jax.block_until_ready(out)
    h_new = jax.block_until_ready(h_new)

    ref_out, ref_h = reference_forward(x, h0, pt_params)
    assert out.shape == (B, 2 * latent_dim) and h_new.shape == (B, nhidden)
    assert jnp.allclose(out, ref_out, atol=5e-3, rtol=5e-3), "out mismatch vs JAX reference"
    assert jnp.allclose(h_new, ref_h, atol=5e-3, rtol=5e-3), "hidden mismatch vs JAX reference"

    print("KERNEL_OK")
</pallas_src>

<mosaic_0001>
module attributes {stable_mosaic.version = 11 : i64} {
  func.func @gn_relu_kernel(%arg0: memref<8192x1xf32, #tpu.memory_space<vmem>>, %arg1: memref<1x1xf32, #tpu.memory_space<vmem>>, %arg2: memref<1x1xf32, #tpu.memory_space<vmem>>, %arg3: memref<1x1xf32, #tpu.memory_space<vmem>>, %arg4: memref<1x1xf32, #tpu.memory_space<vmem>>, %arg5: memref<8192x1xf32, #tpu.memory_space<vmem>>) attributes {dimension_semantics = [], scalar_prefetch = 0 : i64, scratch_operands = 0 : i64, tpu.core_type = #tpu.core_type<tc>} {
    %c0 = arith.constant 0 : index
    %c0_0 = arith.constant 0 : index
    %0 = vector.load %arg1[%c0, %c0_0] : memref<1x1xf32, #tpu.memory_space<vmem>>, vector<1x1xf32>
    %c0_1 = arith.constant 0 : index
    %c0_2 = arith.constant 0 : index
    %1 = vector.load %arg2[%c0_1, %c0_2] : memref<1x1xf32, #tpu.memory_space<vmem>>, vector<1x1xf32>
    %c0_3 = arith.constant 0 : index
    %c0_4 = arith.constant 0 : index
    %2 = vector.load %arg0[%c0_3, %c0_4] : memref<8192x1xf32, #tpu.memory_space<vmem>>, vector<4096x1xf32>
    %cst = arith.constant dense<0.000000e+00> : vector<1xf32>
    %3 = vector.multi_reduction <add>, %2, %cst [0] : vector<4096x1xf32> to vector<1xf32>
    %4 = vector.shape_cast %3 : vector<1xf32> to vector<1x1xf32>
    %5 = arith.mulf %2, %2 : vector<4096x1xf32>
    %cst_5 = arith.constant dense<0.000000e+00> : vector<1xf32>
    %6 = vector.multi_reduction <add>, %5, %cst_5 [0] : vector<4096x1xf32> to vector<1xf32>
    %7 = vector.shape_cast %6 : vector<1xf32> to vector<1x1xf32>
    %cst_6 = arith.constant 4.096000e+03 : f32
    %8 = vector.broadcast %cst_6 : f32 to vector<1x1xf32>
    %9 = arith.divf %4, %8 : vector<1x1xf32>
    %cst_7 = arith.constant 4.096000e+03 : f32
    %10 = vector.broadcast %cst_7 : f32 to vector<1x1xf32>
    %11 = arith.divf %7, %10 : vector<1x1xf32>
    %12 = arith.mulf %9, %9 : vector<1x1xf32>
    %13 = arith.subf %11, %12 : vector<1x1xf32>
    %cst_8 = arith.constant 9.99999974E-6 : f32
    %14 = vector.broadcast %cst_8 : f32 to vector<1x1xf32>
    %15 = arith.addf %13, %14 : vector<1x1xf32>
    %16 = math.rsqrt %15 : vector<1x1xf32>
    %17 = arith.mulf %16, %0 : vector<1x1xf32>
    %18 = arith.mulf %9, %17 : vector<1x1xf32>
    %19 = arith.subf %1, %18 : vector<1x1xf32>
    %20 = vector.broadcast %17 : vector<1x1xf32> to vector<4096x1xf32>
    %21 = arith.mulf %2, %20 : vector<4096x1xf32>
    %22 = vector.broadcast %19 : vector<1x1xf32> to vector<4096x1xf32>
    %23 = arith.addf %21, %22 : vector<4096x1xf32>
    %cst_9 = arith.constant 0.000000e+00 : f32
    %24 = vector.broadcast %cst_9 : f32 to vector<4096x1xf32>
    %25 = arith.maximumf %23, %24 : vector<4096x1xf32>
    %c0_10 = arith.constant 0 : index
    %c0_11 = arith.constant 0 : index
    %26 = vector.load %arg5[%c0_10, %c0_11] : memref<8192x1xf32, #tpu.memory_space<vmem>>, vector<4096x1xf32>
    tpu.vector_store %arg5[%c0_10, %c0_11], %25 {strides = array<i32>} : memref<8192x1xf32, #tpu.memory_space<vmem>>, vector<4096x1xf32>,
    %c4096 = arith.constant 4096 : index
    %c0_12 = arith.constant 0 : index
    %27 = vector.load %arg0[%c4096, %c0_12] : memref<8192x1xf32, #tpu.memory_space<vmem>>, vector<4096x1xf32>
    %cst_13 = arith.constant dense<0.000000e+00> : vector<1xf32>
    %28 = vector.multi_reduction <add>, %27, %cst_13 [0] : vector<4096x1xf32> to vector<1xf32>
    %29 = vector.shape_cast %28 : vector<1xf32> to vector<1x1xf32>
    %30 = arith.mulf %27, %27 : vector<4096x1xf32>
    %cst_14 = arith.constant dense<0.000000e+00> : vector<1xf32>
    %31 = vector.multi_reduction <add>, %30, %cst_14 [0] : vector<4096x1xf32> to vector<1xf32>
    %32 = vector.shape_cast %31 : vector<1xf32> to vector<1x1xf32>
    %cst_15 = arith.constant 4.096000e+03 : f32
    %33 = vector.broadcast %cst_15 : f32 to vector<1x1xf32>
    %34 = arith.divf %29, %33 : vector<1x1xf32>
    %cst_16 = arith.constant 4.096000e+03 : f32
    %35 = vector.broadcast %cst_16 : f32 to vector<1x1xf32>
    %36 = arith.divf %32, %35 : vector<1x1xf32>
    %37 = arith.mulf %34, %34 : vector<1x1xf32>
    %38 = arith.subf %36, %37 : vector<1x1xf32>
    %cst_17 = arith.constant 9.99999974E-6 : f32
    %39 = vector.broadcast %cst_17 : f32 to vector<1x1xf32>
    %40 = arith.addf %38, %39 : vector<1x1xf32>
    %41 = math.rsqrt %40 : vector<1x1xf32>
    %42 = arith.mulf %41, %0 : vector<1x1xf32>
    %43 = arith.mulf %34, %42 : vector<1x1xf32>
    %44 = arith.subf %1, %43 : vector<1x1xf32>
    %45 = vector.broadcast %42 : vector<1x1xf32> to vector<4096x1xf32>
    %46 = arith.mulf %27, %45 : vector<4096x1xf32>
    %47 = vector.broadcast %44 : vector<1x1xf32> to vector<4096x1xf32>
    %48 = arith.addf %46, %47 : vector<4096x1xf32>
    %cst_18 = arith.constant 0.000000e+00 : f32
    %49 = vector.broadcast %cst_18 : f32 to vector<4096x1xf32>
    %50 = arith.maximumf %48, %49 : vector<4096x1xf32>
    %c4096_19 = arith.constant 4096 : index
    %c0_20 = arith.constant 0 : index
    %51 = vector.load %arg5[%c4096_19, %c0_20] : memref<8192x1xf32, #tpu.memory_space<vmem>>, vector<4096x1xf32>
    tpu.vector_store %arg5[%c4096_19, %c0_20], %50 {strides = array<i32>} : memref<8192x1xf32, #tpu.memory_space<vmem>>, vector<4096x1xf32>,
    return
  }
}

</mosaic_0001>

<llo_original>
// kernel: tpu_custom_call.1
$region0: #{tpu_custom_call.1}
  #allocation0 [shape = 'u32[]', space=smem, size = 0x4, offset = 0x4, fixed_abs, tag = 'smem constant byte address 0x4 - core index']
  #allocation1 [shape = 'u32[144,128]{1,0:T(1,128)}', space=vmem, size = 0x12000, scoped, tag = 'internal scratch']
  #allocation2 [shape = 'f32[1,1]{1,0:T(1,128)S(1)}', space=vmem, size = 0x200, scoped, tag = 'scoped memory for tpu_custom_call.1']
  #allocation3 [shape = 'f32[1,1]{1,0:T(1,128)S(1)}', space=vmem, size = 0x200, scoped, tag = 'scoped memory for tpu_custom_call.1']
  #allocation4 [shape = 'f32[1,1]{1,0:T(1,128)S(1)}', space=vmem, size = 0x200, scoped, tag = 'scoped memory for tpu_custom_call.1']
  #allocation5 [shape = 'f32[1,1]{1,0:T(1,128)S(1)}', space=vmem, size = 0x200, scoped, tag = 'scoped memory for tpu_custom_call.1']
  %s0 = inlined_call_operand.vmem [shape: f32[8192,1], index: 0, kind: input, shape index: {}]
  %s1 = inlined_call_operand.<no memory space> [shape: f32[1,1], index: 1, kind: input, shape index: {}]
  %s2 = inlined_call_operand.<no memory space> [shape: f32[1,1], index: 2, kind: input, shape index: {}]
  %s3 = inlined_call_operand.<no memory space> [shape: f32[1,1], index: 3, kind: input, shape index: {}]
  %s4 = inlined_call_operand.<no memory space> [shape: f32[1,1], index: 4, kind: input, shape index: {}]
  %s5 = inlined_call_operand.vmem [shape: f32[8192,1], index: 5, kind: output, shape index: {}]
  %s6 = sld [smem:[#allocation0]]
  $region30: #{tpu_custom_call.1} parent=0
    _
  %s8 = ssub.s32 1, %s6
  %s9 = scalar_select 0, %s8, %s6
  %v10 = vstv %s1
  %11 = vst [vmem:[#allocation2] sm:$0x1] %v10
  %v12 = vstv %s2
  %13 = vst [vmem:[#allocation3] sm:$0x1] %v12
  %v14 = vstv %s3
  %15 = vst [vmem:[#allocation4] sm:$0x1] %v14
  %v16 = vstv %s4
  %17 = vst [vmem:[#allocation5] sm:$0x1] %v16
  // Predicated region
  $region2: #{tpu_custom_call.1} parent=0 // pred_check
    _
  $region3: #{tpu_custom_call.1} parent=0 // pred_check_branch
    %19 = sbr.rel (0) target = $region5
  $region4: #{tpu_custom_call.1} parent=0 // pred_region
    _
  $region5: #{tpu_custom_call.1} parent=0 // pred_fallthru
    _
  // Predicated region
  $region6: #{tpu_custom_call.1} parent=0 // pred_check
    _
  $region7: #{tpu_custom_call.1} parent=0 // pred_check_branch
    %21 = sbr.rel (0) target = $region9
  $region8: #{tpu_custom_call.1} parent=0 // pred_region
    _
  $region9: #{tpu_custom_call.1} parent=0 // pred_fallthru
    _
  // Predicated region
  $region10: #{tpu_custom_call.1} parent=0 // pred_check
    _
  $region11: #{tpu_custom_call.1} parent=0 // pred_check_branch
    %23 = sbr.rel (0) target = $region13
  $region12: #{tpu_custom_call.1} parent=0 // pred_region
    _
  $region13: #{tpu_custom_call.1} parent=0 // pred_fallthru
    _
  // Predicated region
  $region14: #{tpu_custom_call.1} parent=0 // pred_check
    _
  $region15: #{tpu_custom_call.1} parent=0 // pred_check_branch
    %25 = sbr.rel (0) target = $region17
  $region16: #{tpu_custom_call.1} parent=0 // pred_region
    _
  $region17: #{tpu_custom_call.1} parent=0 // pred_fallthru
    _
  // Predicated region
  $region18: #{tpu_custom_call.1} parent=0 // pred_check
    _
  $region19: #{tpu_custom_call.1} parent=0 // pred_check_branch
    %27 = sbr.rel (0) target = $region21
  $region20: #{tpu_custom_call.1} parent=0 // pred_region
    _
  $region21: #{tpu_custom_call.1} parent=0 // pred_fallthru
    _
  %v28 = vld [vmem:[#allocation2] sm:$0x1]
  %v29 = vld [vmem:[#allocation3] sm:$0x1]
  %v30 = vld [vmem:[%s0] sm:$0xff]
  %v31 = vld [vmem:[%s0 + $0x8] sm:$0xff]
  %v32 = vld [vmem:[%s0 + $0x10] sm:$0xff]
  %v33 = vld [vmem:[%s0 + $0x18] sm:$0xff]
  %v34 = vld [vmem:[%s0 + $0x20] sm:$0xff]
  %v35 = vld [vmem:[%s0 + $0x28] sm:$0xff]
  %v36 = vld [vmem:[%s0 + $0x30] sm:$0xff]
  %v37 = vld [vmem:[%s0 + $0x38] sm:$0xff]
  %v38 = vld [vmem:[%s0 + $0x40] sm:$0xff]
  %v39 = vld [vmem:[%s0 + $0x48] sm:$0xff]
  %v40 = vld [vmem:[%s0 + $0x50] sm:$0xff]
  %v41 = vld [vmem:[%s0 + $0x58] sm:$0xff]
  %v42 = vld [vmem:[%s0 + $0x60] sm:$0xff]
  %v43 = vld [vmem:[%s0 + $0x68] sm:$0xff]
  %v44 = vld [vmem:[%s0 + $0x70] sm:$0xff]
  %v45 = vld [vmem:[%s0 + $0x78] sm:$0xff]
  %v46 = vld [vmem:[%s0 + $0x80] sm:$0xff]
  %v47 = vld [vmem:[%s0 + $0x88] sm:$0xff]
  %v48 = vld [vmem:[%s0 + $0x90] sm:$0xff]
  %v49 = vld [vmem:[%s0 + $0x98] sm:$0xff]
  %v50 = vld [vmem:[%s0 + $0xa0] sm:$0xff]
  %v51 = vld [vmem:[%s0 + $0xa8] sm:$0xff]
  %v52 = vld [vmem:[%s0 + $0xb0] sm:$0xff]
  %v53 = vld [vmem:[%s0 + $0xb8] sm:$0xff]
  %v54 = vld [vmem:[%s0 + $0xc0] sm:$0xff]
  %v55 = vld [vmem:[%s0 + $0xc8] sm:$0xff]
  %v56 = vld [vmem:[%s0 + $0xd0] sm:$0xff]
  %v57 = vld [vmem:[%s0 + $0xd8] sm:$0xff]
  %v58 = vld [vmem:[%s0 + $0xe0] sm:$0xff]
  %v59 = vld [vmem:[%s0 + $0xe8] sm:$0xff]
  %v60 = vld [vmem:[%s0 + $0xf0] sm:$0xff]
  %v61 = vld [vmem:[%s0 + $0xf8] sm:$0xff]
  %v62 = vld [vmem:[%s0 + $0x100] sm:$0xff]
  %v63 = vld [vmem:[%s0 + $0x108] sm:$0xff]
  %v64 = vld [vmem:[%s0 + $0x110] sm:$0xff]
  %v65 = vld [vmem:[%s0 + $0x118] sm:$0xff]
  %v66 = vld [vmem:[%s0 + $0x120] sm:$0xff]
  %v67 = vld [vmem:[%s0 + $0x128] sm:$0xff]
  %v68 = vld [vmem:[%s0 + $0x130] sm:$0xff]
  %v69 = vld [vmem:[%s0 + $0x138] sm:$0xff]
  %v70 = vld [vmem:[%s0 + $0x140] sm:$0xff]
  %v71 = vld [vmem:[%s0 + $0x148] sm:$0xff]
  %v72 = vld [vmem:[%s0 + $0x150] sm:$0xff]
  %v73 = vld [vmem:[%s0 + $0x158] sm:$0xff]
  %v74 = vld [vmem:[%s0 + $0x160] sm:$0xff]
  %v75 = vld [vmem:[%s0 + $0x168] sm:$0xff]
  %v76 = vld [vmem:[%s0 + $0x170] sm:$0xff]
  %v77 = vld [vmem:[%s0 + $0x178] sm:$0xff]
  %v78 = vld [vmem:[%s0 + $0x180] sm:$0xff]
  %v79 = vld [vmem:[%s0 + $0x188] sm:$0xff]
  %v80 = vld [vmem:[%s0 + $0x190] sm:$0xff]
  %v81 = vld [vmem:[%s0 + $0x198] sm:$0xff]
  %v82 = vld [vmem:[%s0 + $0x1a0] sm:$0xff]
  %v83 = vld [vmem:[%s0 + $0x1a8] sm:$0xff]
  %v84 = vld [vmem:[%s0 + $0x1b0] sm:$0xff]
  %v85 = vld [vmem:[%s0 + $0x1b8] sm:$0xff]
  %v86 = vld [vmem:[%s0 + $0x1c0] sm:$0xff]
  %v87 = vld [vmem:[%s0 + $0x1c8] sm:$0xff]
  %v88 = vld [vmem:[%s0 + $0x1d0] sm:$0xff]
  %v89 = vld [vmem:[%s0 + $0x1d8] sm:$0xff]
  %v90 = vld [vmem:[%s0 + $0x1e0] sm:$0xff]
  %v91 = vld [vmem:[%s0 + $0x1e8] sm:$0xff]
  %v92 = vld [vmem:[%s0 + $0x1f0] sm:$0xff]
  %v93 = vld [vmem:[%s0 + $0x1f8] sm:$0xff]
  %v94 = vld [vmem:[%s0 + $0x200] sm:$0xff]
  %v95 = vld [vmem:[%s0 + $0x208] sm:$0xff]
  %v96 = vld [vmem:[%s0 + $0x210] sm:$0xff]
  %v97 = vld [vmem:[%s0 + $0x218] sm:$0xff]
  %v98 = vld [vmem:[%s0 + $0x220] sm:$0xff]
  %v99 = vld [vmem:[%s0 + $0x228] sm:$0xff]
  %v100 = vld [vmem:[%s0 + $0x230] sm:$0xff]
  %v101 = vld [vmem:[%s0 + $0x238] sm:$0xff]
  %v102 = vld [vmem:[%s0 + $0x240] sm:$0xff]
  %v103 = vld [vmem:[%s0 + $0x248] sm:$0xff]
  %v104 = vld [vmem:[%s0 + $0x250] sm:$0xff]
  %v105 = vld [vmem:[%s0 + $0x258] sm:$0xff]
  %v106 = vld [vmem:[%s0 + $0x260] sm:$0xff]
  %v107 = vld [vmem:[%s0 + $0x268] sm:$0xff]
  %v108 = vld [vmem:[%s0 + $0x270] sm:$0xff]
  %v109 = vld [vmem:[%s0 + $0x278] sm:$0xff]
  %v110 = vld [vmem:[%s0 + $0x280] sm:$0xff]
  %v111 = vld [vmem:[%s0 + $0x288] sm:$0xff]
  %v112 = vld [vmem:[%s0 + $0x290] sm:$0xff]
  %v113 = vld [vmem:[%s0 + $0x298] sm:$0xff]
  %v114 = vld [vmem:[%s0 + $0x2a0] sm:$0xff]
  %v115 = vld [vmem:[%s0 + $0x2a8] sm:$0xff]
  %v116 = vld [vmem:[%s0 + $0x2b0] sm:$0xff]
  %v117 = vld [vmem:[%s0 + $0x2b8] sm:$0xff]
  %v118 = vld [vmem:[%s0 + $0x2c0] sm:$0xff]
  %v119 = vld [vmem:[%s0 + $0x2c8] sm:$0xff]
  %v120 = vld [vmem:[%s0 + $0x2d0] sm:$0xff]
  %v121 = vld [vmem:[%s0 + $0x2d8] sm:$0xff]
  %v122 = vld [vmem:[%s0 + $0x2e0] sm:$0xff]
  %v123 = vld [vmem:[%s0 + $0x2e8] sm:$0xff]
  %v124 = vld [vmem:[%s0 + $0x2f0] sm:$0xff]
  %v125 = vld [vmem:[%s0 + $0x2f8] sm:$0xff]
  %v126 = vld [vmem:[%s0 + $0x300] sm:$0xff]
  %v127 = vld [vmem:[%s0 + $0x308] sm:$0xff]
  %v128 = vld [vmem:[%s0 + $0x310] sm:$0xff]
  %v129 = vld [vmem:[%s0 + $0x318] sm:$0xff]
  %v130 = vld [vmem:[%s0 + $0x320] sm:$0xff]
  %v131 = vld [vmem:[%s0 + $0x328] sm:$0xff]
  %v132 = vld [vmem:[%s0 + $0x330] sm:$0xff]
  %v133 = vld [vmem:[%s0 + $0x338] sm:$0xff]
  %v134 = vld [vmem:[%s0 + $0x340] sm:$0xff]
  %v135 = vld [vmem:[%s0 + $0x348] sm:$0xff]
  %v136 = vld [vmem:[%s0 + $0x350] sm:$0xff]
  %v137 = vld [vmem:[%s0 + $0x358] sm:$0xff]
  %v138 = vld [vmem:[%s0 + $0x360] sm:$0xff]
  %v139 = vld [vmem:[%s0 + $0x368] sm:$0xff]
  %v140 = vld [vmem:[%s0 + $0x370] sm:$0xff]
  %v141 = vld [vmem:[%s0 + $0x378] sm:$0xff]
  %v142 = vld [vmem:[%s0 + $0x380] sm:$0xff]
  %v143 = vld [vmem:[%s0 + $0x388] sm:$0xff]
  %v144 = vld [vmem:[%s0 + $0x390] sm:$0xff]
  %v145 = vld [vmem:[%s0 + $0x398] sm:$0xff]
  %v146 = vld [vmem:[%s0 + $0x3a0] sm:$0xff]
  %v147 = vld [vmem:[%s0 + $0x3a8] sm:$0xff]
  %v148 = vld [vmem:[%s0 + $0x3b0] sm:$0xff]
  %v149 = vld [vmem:[%s0 + $0x3b8] sm:$0xff]
  %v150 = vld [vmem:[%s0 + $0x3c0] sm:$0xff]
  %v151 = vld [vmem:[%s0 + $0x3c8] sm:$0xff]
  %v152 = vld [vmem:[%s0 + $0x3d0] sm:$0xff]
  %v153 = vld [vmem:[%s0 + $0x3d8] sm:$0xff]
  %v154 = vld [vmem:[%s0 + $0x3e0] sm:$0xff]
  %v155 = vld [vmem:[%s0 + $0x3e8] sm:$0xff]
  %v156 = vld [vmem:[%s0 + $0x3f0] sm:$0xff]
  %v157 = vld [vmem:[%s0 + $0x3f8] sm:$0xff]
  %v158 = vld [vmem:[%s0 + $0x400] sm:$0xff]
  %v159 = vld [vmem:[%s0 + $0x408] sm:$0xff]
  %v160 = vld [vmem:[%s0 + $0x410] sm:$0xff]
  %v161 = vld [vmem:[%s0 + $0x418] sm:$0xff]
  %v162 = vld [vmem:[%s0 + $0x420] sm:$0xff]
  %v163 = vld [vmem:[%s0 + $0x428] sm:$0xff]
  %v164 = vld [vmem:[%s0 + $0x430] sm:$0xff]
  %v165 = vld [vmem:[%s0 + $0x438] sm:$0xff]
  %v166 = vld [vmem:[%s0 + $0x440] sm:$0xff]
  %v167 = vld [vmem:[%s0 + $0x448] sm:$0xff]
  %v168 = vld [vmem:[%s0 + $0x450] sm:$0xff]
  %v169 = vld [vmem:[%s0 + $0x458] sm:$0xff]
  %v170 = vld [vmem:[%s0 + $0x460] sm:$0xff]
  %v171 = vld [vmem:[%s0 + $0x468] sm:$0xff]
  %v172 = vld [vmem:[%s0 + $0x470] sm:$0xff]
  %v173 = vld [vmem:[%s0 + $0x478] sm:$0xff]
  %v174 = vld [vmem:[%s0 + $0x480] sm:$0xff]
  %v175 = vld [vmem:[%s0 + $0x488] sm:$0xff]
  %v176 = vld [vmem:[%s0 + $0x490] sm:$0xff]
  %v177 = vld [vmem:[%s0 + $0x498] sm:$0xff]
  %v178 = vld [vmem:[%s0 + $0x4a0] sm:$0xff]
  %v179 = vld [vmem:[%s0 + $0x4a8] sm:$0xff]
  %v180 = vld [vmem:[%s0 + $0x4b0] sm:$0xff]
  %v181 = vld [vmem:[%s0 + $0x4b8] sm:$0xff]
  %v182 = vld [vmem:[%s0 + $0x4c0] sm:$0xff]
  %v183 = vld [vmem:[%s0 + $0x4c8] sm:$0xff]
  %v184 = vld [vmem:[%s0 + $0x4d0] sm:$0xff]
  %v185 = vld [vmem:[%s0 + $0x4d8] sm:$0xff]
  %v186 = vld [vmem:[%s0 + $0x4e0] sm:$0xff]
  %v187 = vld [vmem:[%s0 + $0x4e8] sm:$0xff]
  %v188 = vld [vmem:[%s0 + $0x4f0] sm:$0xff]
  %v189 = vld [vmem:[%s0 + $0x4f8] sm:$0xff]
  %v190 = vld [vmem:[%s0 + $0x500] sm:$0xff]
  %v191 = vld [vmem:[%s0 + $0x508] sm:$0xff]
  %v192 = vld [vmem:[%s0 + $0x510] sm:$0xff]
  %v193 = vld [vmem:[%s0 + $0x518] sm:$0xff]
  %v194 = vld [vmem:[%s0 + $0x520] sm:$0xff]
  %v195 = vld [vmem:[%s0 + $0x528] sm:$0xff]
  %v196 = vld [vmem:[%s0 + $0x530] sm:$0xff]
  %v197 = vld [vmem:[%s0 + $0x538] sm:$0xff]
  %v198 = vld [vmem:[%s0 + $0x540] sm:$0xff]
  %v199 = vld [vmem:[%s0 + $0x548] sm:$0xff]
  %v200 = vld [vmem:[%s0 + $0x550] sm:$0xff]
  %v201 = vld [vmem:[%s0 + $0x558] sm:$0xff]
  %v202 = vld [vmem:[%s0 + $0x560] sm:$0xff]
  %v203 = vld [vmem:[%s0 + $0x568] sm:$0xff]
  %v204 = vld [vmem:[%s0 + $0x570] sm:$0xff]
  %v205 = vld [vmem:[%s0 + $0x578] sm:$0xff]
  %v206 = vld [vmem:[%s0 + $0x580] sm:$0xff]
  %v207 = vld [vmem:[%s0 + $0x588] sm:$0xff]
  %v208 = vld [vmem:[%s0 + $0x590] sm:$0xff]
  %v209 = vld [vmem:[%s0 + $0x598] sm:$0xff]
  %v210 = vld [vmem:[%s0 + $0x5a0] sm:$0xff]
  %v211 = vld [vmem:[%s0 + $0x5a8] sm:$0xff]
  %v212 = vld [vmem:[%s0 + $0x5b0] sm:$0xff]
  %v213 = vld [vmem:[%s0 + $0x5b8] sm:$0xff]
  %v214 = vld [vmem:[%s0 + $0x5c0] sm:$0xff]
  %v215 = vld [vmem:[%s0 + $0x5c8] sm:$0xff]
  %v216 = vld [vmem:[%s0 + $0x5d0] sm:$0xff]
  %v217 = vld [vmem:[%s0 + $0x5d8] sm:$0xff]
  %v218 = vld [vmem:[%s0 + $0x5e0] sm:$0xff]
  %v219 = vld [vmem:[%s0 + $0x5e8] sm:$0xff]
  %v220 = vld [vmem:[%s0 + $0x5f0] sm:$0xff]
  %v221 = vld [vmem:[%s0 + $0x5f8] sm:$0xff]
  %v222 = vld [vmem:[%s0 + $0x600] sm:$0xff]
  %v223 = vld [vmem:[%s0 + $0x608] sm:$0xff]
  %v224 = vld [vmem:[%s0 + $0x610] sm:$0xff]
  %v225 = vld [vmem:[%s0 + $0x618] sm:$0xff]
  %v226 = vld [vmem:[%s0 + $0x620] sm:$0xff]
  %v227 = vld [vmem:[%s0 + $0x628] sm:$0xff]
  %v228 = vld [vmem:[%s0 + $0x630] sm:$0xff]
  %v229 = vld [vmem:[%s0 + $0x638] sm:$0xff]
  %v230 = vld [vmem:[%s0 + $0x640] sm:$0xff]
  %v231 = vld [vmem:[%s0 + $0x648] sm:$0xff]
  %v232 = vld [vmem:[%s0 + $0x650] sm:$0xff]
  %v233 = vld [vmem:[%s0 + $0x658] sm:$0xff]
  %v234 = vld [vmem:[%s0 + $0x660] sm:$0xff]
  %v235 = vld [vmem:[%s0 + $0x668] sm:$0xff]
  %v236 = vld [vmem:[%s0 + $0x670] sm:$0xff]
  %v237 = vld [vmem:[%s0 + $0x678] sm:$0xff]
  %v238 = vld [vmem:[%s0 + $0x680] sm:$0xff]
  %v239 = vld [vmem:[%s0 + $0x688] sm:$0xff]
  %v240 = vld [vmem:[%s0 + $0x690] sm:$0xff]
  %v241 = vld [vmem:[%s0 + $0x698] sm:$0xff]
  %v242 = vld [vmem:[%s0 + $0x6a0] sm:$0xff]
  %v243 = vld [vmem:[%s0 + $0x6a8] sm:$0xff]
  %v244 = vld [vmem:[%s0 + $0x6b0] sm:$0xff]
  %v245 = vld [vmem:[%s0 + $0x6b8] sm:$0xff]
  %v246 = vld [vmem:[%s0 + $0x6c0] sm:$0xff]
  %v247 = vld [vmem:[%s0 + $0x6c8] sm:$0xff]
  %v248 = vld [vmem:[%s0 + $0x6d0] sm:$0xff]
  %v249 = vld [vmem:[%s0 + $0x6d8] sm:$0xff]
  %v250 = vld [vmem:[%s0 + $0x6e0] sm:$0xff]
  %v251 = vld [vmem:[%s0 + $0x6e8] sm:$0xff]
  %v252 = vld [vmem:[%s0 + $0x6f0] sm:$0xff]
  %v253 = vld [vmem:[%s0 + $0x6f8] sm:$0xff]
  %v254 = vld [vmem:[%s0 + $0x700] sm:$0xff]
  %v255 = vld [vmem:[%s0 + $0x708] sm:$0xff]
  %v256 = vld [vmem:[%s0 + $0x710] sm:$0xff]
  %v257 = vld [vmem:[%s0 + $0x718] sm:$0xff]
  %v258 = vld [vmem:[%s0 + $0x720] sm:$0xff]
  %v259 = vld [vmem:[%s0 + $0x728] sm:$0xff]
  %v260 = vld [vmem:[%s0 + $0x730] sm:$0xff]
  %v261 = vld [vmem:[%s0 + $0x738] sm:$0xff]
  %v262 = vld [vmem:[%s0 + $0x740] sm:$0xff]
  %v263 = vld [vmem:[%s0 + $0x748] sm:$0xff]
  %v264 = vld [vmem:[%s0 + $0x750] sm:$0xff]
  %v265 = vld [vmem:[%s0 + $0x758] sm:$0xff]
  %v266 = vld [vmem:[%s0 + $0x760] sm:$0xff]
  %v267 = vld [vmem:[%s0 + $0x768] sm:$0xff]
  %v268 = vld [vmem:[%s0 + $0x770] sm:$0xff]
  %v269 = vld [vmem:[%s0 + $0x778] sm:$0xff]
  %v270 = vld [vmem:[%s0 + $0x780] sm:$0xff]
  %v271 = vld [vmem:[%s0 + $0x788] sm:$0xff]
  %v272 = vld [vmem:[%s0 + $0x790] sm:$0xff]
  %v273 = vld [vmem:[%s0 + $0x798] sm:$0xff]
  %v274 = vld [vmem:[%s0 + $0x7a0] sm:$0xff]
  %v275 = vld [vmem:[%s0 + $0x7a8] sm:$0xff]
  %v276 = vld [vmem:[%s0 + $0x7b0] sm:$0xff]
  %v277 = vld [vmem:[%s0 + $0x7b8] sm:$0xff]
  %v278 = vld [vmem:[%s0 + $0x7c0] sm:$0xff]
  %v279 = vld [vmem:[%s0 + $0x7c8] sm:$0xff]
  %v280 = vld [vmem:[%s0 + $0x7d0] sm:$0xff]
  %v281 = vld [vmem:[%s0 + $0x7d8] sm:$0xff]
  %v282 = vld [vmem:[%s0 + $0x7e0] sm:$0xff]
  %v283 = vld [vmem:[%s0 + $0x7e8] sm:$0xff]
  %v284 = vld [vmem:[%s0 + $0x7f0] sm:$0xff]
  %v285 = vld [vmem:[%s0 + $0x7f8] sm:$0xff]
  %v286 = vld [vmem:[%s0 + $0x800] sm:$0xff]
  %v287 = vld [vmem:[%s0 + $0x808] sm:$0xff]
  %v288 = vld [vmem:[%s0 + $0x810] sm:$0xff]
  %v289 = vld [vmem:[%s0 + $0x818] sm:$0xff]
  %v290 = vld [vmem:[%s0 + $0x820] sm:$0xff]
  %v291 = vld [vmem:[%s0 + $0x828] sm:$0xff]
  %v292 = vld [vmem:[%s0 + $0x830] sm:$0xff]
  %v293 = vld [vmem:[%s0 + $0x838] sm:$0xff]
  %v294 = vld [vmem:[%s0 + $0x840] sm:$0xff]
  %v295 = vld [vmem:[%s0 + $0x848] sm:$0xff]
  %v296 = vld [vmem:[%s0 + $0x850] sm:$0xff]
  %v297 = vld [vmem:[%s0 + $0x858] sm:$0xff]
  %v298 = vld [vmem:[%s0 + $0x860] sm:$0xff]
  %v299 = vld [vmem:[%s0 + $0x868] sm:$0xff]
  %v300 = vld [vmem:[%s0 + $0x870] sm:$0xff]
  %v301 = vld [vmem:[%s0 + $0x878] sm:$0xff]
  %v302 = vld [vmem:[%s0 + $0x880] sm:$0xff]
  %v303 = vld [vmem:[%s0 + $0x888] sm:$0xff]
  %v304 = vld [vmem:[%s0 + $0x890] sm:$0xff]
  %v305 = vld [vmem:[%s0 + $0x898] sm:$0xff]
  %v306 = vld [vmem:[%s0 + $0x8a0] sm:$0xff]
  %v307 = vld [vmem:[%s0 + $0x8a8] sm:$0xff]
  %v308 = vld [vmem:[%s0 + $0x8b0] sm:$0xff]
  %v309 = vld [vmem:[%s0 + $0x8b8] sm:$0xff]
  %v310 = vld [vmem:[%s0 + $0x8c0] sm:$0xff]
  %v311 = vld [vmem:[%s0 + $0x8c8] sm:$0xff]
  %v312 = vld [vmem:[%s0 + $0x8d0] sm:$0xff]
  %v313 = vld [vmem:[%s0 + $0x8d8] sm:$0xff]
  %v314 = vld [vmem:[%s0 + $0x8e0] sm:$0xff]
  %v315 = vld [vmem:[%s0 + $0x8e8] sm:$0xff]
  %v316 = vld [vmem:[%s0 + $0x8f0] sm:$0xff]
  %v317 = vld [vmem:[%s0 + $0x8f8] sm:$0xff]
  %v318 = vld [vmem:[%s0 + $0x900] sm:$0xff]
  %v319 = vld [vmem:[%s0 + $0x908] sm:$0xff]
  %v320 = vld [vmem:[%s0 + $0x910] sm:$0xff]
  %v321 = vld [vmem:[%s0 + $0x918] sm:$0xff]
  %v322 = vld [vmem:[%s0 + $0x920] sm:$0xff]
  %v323 = vld [vmem:[%s0 + $0x928] sm:$0xff]
  %v324 = vld [vmem:[%s0 + $0x930] sm:$0xff]
  %v325 = vld [vmem:[%s0 + $0x938] sm:$0xff]
  %v326 = vld [vmem:[%s0 + $0x940] sm:$0xff]
  %v327 = vld [vmem:[%s0 + $0x948] sm:$0xff]
  %v328 = vld [vmem:[%s0 + $0x950] sm:$0xff]
  %v329 = vld [vmem:[%s0 + $0x958] sm:$0xff]
  %v330 = vld [vmem:[%s0 + $0x960] sm:$0xff]
  %v331 = vld [vmem:[%s0 + $0x968] sm:$0xff]
  %v332 = vld [vmem:[%s0 + $0x970] sm:$0xff]
  %v333 = vld [vmem:[%s0 + $0x978] sm:$0xff]
  %v334 = vld [vmem:[%s0 + $0x980] sm:$0xff]
  %v335 = vld [vmem:[%s0 + $0x988] sm:$0xff]
  %v336 = vld [vmem:[%s0 + $0x990] sm:$0xff]
  %v337 = vld [vmem:[%s0 + $0x998] sm:$0xff]
  %v338 = vld [vmem:[%s0 + $0x9a0] sm:$0xff]
  %v339 = vld [vmem:[%s0 + $0x9a8] sm:$0xff]
  %v340 = vld [vmem:[%s0 + $0x9b0] sm:$0xff]
  %v341 = vld [vmem:[%s0 + $0x9b8] sm:$0xff]
  %v342 = vld [vmem:[%s0 + $0x9c0] sm:$0xff]
  %v343 = vld [vmem:[%s0 + $0x9c8] sm:$0xff]
  %v344 = vld [vmem:[%s0 + $0x9d0] sm:$0xff]
  %v345 = vld [vmem:[%s0 + $0x9d8] sm:$0xff]
  %v346 = vld [vmem:[%s0 + $0x9e0] sm:$0xff]
  %v347 = vld [vmem:[%s0 + $0x9e8] sm:$0xff]
  %v348 = vld [vmem:[%s0 + $0x9f0] sm:$0xff]
  %v349 = vld [vmem:[%s0 + $0x9f8] sm:$0xff]
  %v350 = vld [vmem:[%s0 + $0xa00] sm:$0xff]
  %v351 = vld [vmem:[%s0 + $0xa08] sm:$0xff]
  %v352 = vld [vmem:[%s0 + $0xa10] sm:$0xff]
  %v353 = vld [vmem:[%s0 + $0xa18] sm:$0xff]
  %v354 = vld [vmem:[%s0 + $0xa20] sm:$0xff]
  %v355 = vld [vmem:[%s0 + $0xa28] sm:$0xff]
  %v356 = vld [vmem:[%s0 + $0xa30] sm:$0xff]
  %v357 = vld [vmem:[%s0 + $0xa38] sm:$0xff]
  %v358 = vld [vmem:[%s0 + $0xa40] sm:$0xff]
  %v359 = vld [vmem:[%s0 + $0xa48] sm:$0xff]
  %v360 = vld [vmem:[%s0 + $0xa50] sm:$0xff]
  %v361 = vld [vmem:[%s0 + $0xa58] sm:$0xff]
  %v362 = vld [vmem:[%s0 + $0xa60] sm:$0xff]
  %v363 = vld [vmem:[%s0 + $0xa68] sm:$0xff]
  %v364 = vld [vmem:[%s0 + $0xa70] sm:$0xff]
  %v365 = vld [vmem:[%s0 + $0xa78] sm:$0xff]
  %v366 = vld [vmem:[%s0 + $0xa80] sm:$0xff]
  %v367 = vld [vmem:[%s0 + $0xa88] sm:$0xff]
  %v368 = vld [vmem:[%s0 + $0xa90] sm:$0xff]
  %v369 = vld [vmem:[%s0 + $0xa98] sm:$0xff]
  %v370 = vld [vmem:[%s0 + $0xaa0] sm:$0xff]
  %v371 = vld [vmem:[%s0 + $0xaa8] sm:$0xff]
  %v372 = vld [vmem:[%s0 + $0xab0] sm:$0xff]
  %v373 = vld [vmem:[%s0 + $0xab8] sm:$0xff]
  %v374 = vld [vmem:[%s0 + $0xac0] sm:$0xff]
  %v375 = vld [vmem:[%s0 + $0xac8] sm:$0xff]
  %v376 = vld [vmem:[%s0 + $0xad0] sm:$0xff]
  %v377 = vld [vmem:[%s0 + $0xad8] sm:$0xff]
  %v378 = vld [vmem:[%s0 + $0xae0] sm:$0xff]
  %v379 = vld [vmem:[%s0 + $0xae8] sm:$0xff]
  %v380 = vld [vmem:[%s0 + $0xaf0] sm:$0xff]
  %v381 = vld [vmem:[%s0 + $0xaf8] sm:$0xff]
  %v382 = vld [vmem:[%s0 + $0xb00] sm:$0xff]
  %v383 = vld [vmem:[%s0 + $0xb08] sm:$0xff]
  %v384 = vld [vmem:[%s0 + $0xb10] sm:$0xff]
  %v385 = vld [vmem:[%s0 + $0xb18] sm:$0xff]
  %v386 = vld [vmem:[%s0 + $0xb20] sm:$0xff]
  %v387 = vld [vmem:[%s0 + $0xb28] sm:$0xff]
  %v388 = vld [vmem:[%s0 + $0xb30] sm:$0xff]
  %v389 = vld [vmem:[%s0 + $0xb38] sm:$0xff]
  %v390 = vld [vmem:[%s0 + $0xb40] sm:$0xff]
  %v391 = vld [vmem:[%s0 + $0xb48] sm:$0xff]
  %v392 = vld [vmem:[%s0 + $0xb50] sm:$0xff]
  %v393 = vld [vmem:[%s0 + $0xb58] sm:$0xff]
  %v394 = vld [vmem:[%s0 + $0xb60] sm:$0xff]
  %v395 = vld [vmem:[%s0 + $0xb68] sm:$0xff]
  %v396 = vld [vmem:[%s0 + $0xb70] sm:$0xff]
  %v397 = vld [vmem:[%s0 + $0xb78] sm:$0xff]
  %v398 = vld [vmem:[%s0 + $0xb80] sm:$0xff]
  %v399 = vld [vmem:[%s0 + $0xb88] sm:$0xff]
  %v400 = vld [vmem:[%s0 + $0xb90] sm:$0xff]
  %v401 = vld [vmem:[%s0 + $0xb98] sm:$0xff]
  %v402 = vld [vmem:[%s0 + $0xba0] sm:$0xff]
  %v403 = vld [vmem:[%s0 + $0xba8] sm:$0xff]
  %v404 = vld [vmem:[%s0 + $0xbb0] sm:$0xff]
  %v405 = vld [vmem:[%s0 + $0xbb8] sm:$0xff]
  %v406 = vld [vmem:[%s0 + $0xbc0] sm:$0xff]
  %v407 = vld [vmem:[%s0 + $0xbc8] sm:$0xff]
  %v408 = vld [vmem:[%s0 + $0xbd0] sm:$0xff]
  %v409 = vld [vmem:[%s0 + $0xbd8] sm:$0xff]
  %v410 = vld [vmem:[%s0 + $0xbe0] sm:$0xff]
  %v411 = vld [vmem:[%s0 + $0xbe8] sm:$0xff]
  %v412 = vld [vmem:[%s0 + $0xbf0] sm:$0xff]
  %v413 = vld [vmem:[%s0 + $0xbf8] sm:$0xff]
  %v414 = vld [vmem:[%s0 + $0xc00] sm:$0xff]
  %v415 = vld [vmem:[%s0 + $0xc08] sm:$0xff]
  %v416 = vld [vmem:[%s0 + $0xc10] sm:$0xff]
  %v417 = vld [vmem:[%s0 + $0xc18] sm:$0xff]
  %v418 = vld [vmem:[%s0 + $0xc20] sm:$0xff]
  %v419 = vld [vmem:[%s0 + $0xc28] sm:$0xff]
  %v420 = vld [vmem:[%s0 + $0xc30] sm:$0xff]
  %v421 = vld [vmem:[%s0 + $0xc38] sm:$0xff]
  %v422 = vld [vmem:[%s0 + $0xc40] sm:$0xff]
  %v423 = vld [vmem:[%s0 + $0xc48] sm:$0xff]
  %v424 = vld [vmem:[%s0 + $0xc50] sm:$0xff]
  %v425 = vld [vmem:[%s0 + $0xc58] sm:$0xff]
  %v426 = vld [vmem:[%s0 + $0xc60] sm:$0xff]
  %v427 = vld [vmem:[%s0 + $0xc68] sm:$0xff]
  %v428 = vld [vmem:[%s0 + $0xc70] sm:$0xff]
  %v429 = vld [vmem:[%s0 + $0xc78] sm:$0xff]
  %v430 = vld [vmem:[%s0 + $0xc80] sm:$0xff]
  %v431 = vld [vmem:[%s0 + $0xc88] sm:$0xff]
  %v432 = vld [vmem:[%s0 + $0xc90] sm:$0xff]
  %v433 = vld [vmem:[%s0 + $0xc98] sm:$0xff]
  %v434 = vld [vmem:[%s0 + $0xca0] sm:$0xff]
  %v435 = vld [vmem:[%s0 + $0xca8] sm:$0xff]
  %v436 = vld [vmem:[%s0 + $0xcb0] sm:$0xff]
  %v437 = vld [vmem:[%s0 + $0xcb8] sm:$0xff]
  %v438 = vld [vmem:[%s0 + $0xcc0] sm:$0xff]
  %v439 = vld [vmem:[%s0 + $0xcc8] sm:$0xff]
  %v440 = vld [vmem:[%s0 + $0xcd0] sm:$0xff]
  %v441 = vld [vmem:[%s0 + $0xcd8] sm:$0xff]
  %v442 = vld [vmem:[%s0 + $0xce0] sm:$0xff]
  %v443 = vld [vmem:[%s0 + $0xce8] sm:$0xff]
  %v444 = vld [vmem:[%s0 + $0xcf0] sm:$0xff]
  %v445 = vld [vmem:[%s0 + $0xcf8] sm:$0xff]
  %v446 = vld [vmem:[%s0 + $0xd00] sm:$0xff]
  %v447 = vld [vmem:[%s0 + $0xd08] sm:$0xff]
  %v448 = vld [vmem:[%s0 + $0xd10] sm:$0xff]
  %v449 = vld [vmem:[%s0 + $0xd18] sm:$0xff]
  %v450 = vld [vmem:[%s0 + $0xd20] sm:$0xff]
  %v451 = vld [vmem:[%s0 + $0xd28] sm:$0xff]
  %v452 = vld [vmem:[%s0 + $0xd30] sm:$0xff]
  %v453 = vld [vmem:[%s0 + $0xd38] sm:$0xff]
  %v454 = vld [vmem:[%s0 + $0xd40] sm:$0xff]
  %v455 = vld [vmem:[%s0 + $0xd48] sm:$0xff]
  %v456 = vld [vmem:[%s0 + $0xd50] sm:$0xff]
  %v457 = vld [vmem:[%s0 + $0xd58] sm:$0xff]
  %v458 = vld [vmem:[%s0 + $0xd60] sm:$0xff]
  %v459 = vld [vmem:[%s0 + $0xd68] sm:$0xff]
  %v460 = vld [vmem:[%s0 + $0xd70] sm:$0xff]
  %v461 = vld [vmem:[%s0 + $0xd78] sm:$0xff]
  %v462 = vld [vmem:[%s0 + $0xd80] sm:$0xff]
  %v463 = vld [vmem:[%s0 + $0xd88] sm:$0xff]
  %v464 = vld [vmem:[%s0 + $0xd90] sm:$0xff]
  %v465 = vld [vmem:[%s0 + $0xd98] sm:$0xff]
  %v466 = vld [vmem:[%s0 + $0xda0] sm:$0xff]
  %v467 = vld [vmem:[%s0 + $0xda8] sm:$0xff]
  %v468 = vld [vmem:[%s0 + $0xdb0] sm:$0xff]
  %v469 = vld [vmem:[%s0 + $0xdb8] sm:$0xff]
  %v470 = vld [vmem:[%s0 + $0xdc0] sm:$0xff]
  %v471 = vld [vmem:[%s0 + $0xdc8] sm:$0xff]
  %v472 = vld [vmem:[%s0 + $0xdd0] sm:$0xff]
  %v473 = vld [vmem:[%s0 + $0xdd8] sm:$0xff]
  %v474 = vld [vmem:[%s0 + $0xde0] sm:$0xff]
  %v475 = vld [vmem:[%s0 + $0xde8] sm:$0xff]
  %v476 = vld [vmem:[%s0 + $0xdf0] sm:$0xff]
  %v477 = vld [vmem:[%s0 + $0xdf8] sm:$0xff]
  %v478 = vld [vmem:[%s0 + $0xe00] sm:$0xff]
  %v479 = vld [vmem:[%s0 + $0xe08] sm:$0xff]
  %v480 = vld [vmem:[%s0 + $0xe10] sm:$0xff]
  %v481 = vld [vmem:[%s0 + $0xe18] sm:$0xff]
  %v482 = vld [vmem:[%s0 + $0xe20] sm:$0xff]
  %v483 = vld [vmem:[%s0 + $0xe28] sm:$0xff]
  %v484 = vld [vmem:[%s0 + $0xe30] sm:$0xff]
  %v485 = vld [vmem:[%s0 + $0xe38] sm:$0xff]
  %v486 = vld [vmem:[%s0 + $0xe40] sm:$0xff]
  %v487 = vld [vmem:[%s0 + $0xe48] sm:$0xff]
  %v488 = vld [vmem:[%s0 + $0xe50] sm:$0xff]
  %v489 = vld [vmem:[%s0 + $0xe58] sm:$0xff]
  %v490 = vld [vmem:[%s0 + $0xe60] sm:$0xff]
  %v491 = vld [vmem:[%s0 + $0xe68] sm:$0xff]
  %v492 = vld [vmem:[%s0 + $0xe70] sm:$0xff]
  %v493 = vld [vmem:[%s0 + $0xe78] sm:$0xff]
  %v494 = vld [vmem:[%s0 + $0xe80] sm:$0xff]
  %v495 = vld [vmem:[%s0 + $0xe88] sm:$0xff]
  %v496 = vld [vmem:[%s0 + $0xe90] sm:$0xff]
  %v497 = vld [vmem:[%s0 + $0xe98] sm:$0xff]
  %v498 = vld [vmem:[%s0 + $0xea0] sm:$0xff]
  %v499 = vld [vmem:[%s0 + $0xea8] sm:$0xff]
  %v500 = vld [vmem:[%s0 + $0xeb0] sm:$0xff]
  %v501 = vld [vmem:[%s0 + $0xeb8] sm:$0xff]
  %v502 = vld [vmem:[%s0 + $0xec0] sm:$0xff]
  %v503 = vld [vmem:[%s0 + $0xec8] sm:$0xff]
  %v504 = vld [vmem:[%s0 + $0xed0] sm:$0xff]
  %v505 = vld [vmem:[%s0 + $0xed8] sm:$0xff]
  %v506 = vld [vmem:[%s0 + $0xee0] sm:$0xff]
  %v507 = vld [vmem:[%s0 + $0xee8] sm:$0xff]
  %v508 = vld [vmem:[%s0 + $0xef0] sm:$0xff]
  %v509 = vld [vmem:[%s0 + $0xef8] sm:$0xff]
  %v510 = vld [vmem:[%s0 + $0xf00] sm:$0xff]
  %v511 = vld [vmem:[%s0 + $0xf08] sm:$0xff]
  %v512 = vld [vmem:[%s0 + $0xf10] sm:$0xff]
  %v513 = vld [vmem:[%s0 + $0xf18] sm:$0xff]
  %v514 = vld [vmem:[%s0 + $0xf20] sm:$0xff]
  %v515 = vld [vmem:[%s0 + $0xf28] sm:$0xff]
  %v516 = vld [vmem:[%s0 + $0xf30] sm:$0xff]
  %v517 = vld [vmem:[%s0 + $0xf38] sm:$0xff]
  %v518 = vld [vmem:[%s0 + $0xf40] sm:$0xff]
  %v519 = vld [vmem:[%s0 + $0xf48] sm:$0xff]
  %v520 = vld [vmem:[%s0 + $0xf50] sm:$0xff]
  %v521 = vld [vmem:[%s0 + $0xf58] sm:$0xff]
  %v522 = vld [vmem:[%s0 + $0xf60] sm:$0xff]
  %v523 = vld [vmem:[%s0 + $0xf68] sm:$0xff]
  %v524 = vld [vmem:[%s0 + $0xf70] sm:$0xff]
  %v525 = vld [vmem:[%s0 + $0xf78] sm:$0xff]
  %v526 = vld [vmem:[%s0 + $0xf80] sm:$0xff]
  %v527 = vld [vmem:[%s0 + $0xf88] sm:$0xff]
  %v528 = vld [vmem:[%s0 + $0xf90] sm:$0xff]
  %v529 = vld [vmem:[%s0 + $0xf98] sm:$0xff]
  %v530 = vld [vmem:[%s0 + $0xfa0] sm:$0xff]
  %v531 = vld [vmem:[%s0 + $0xfa8] sm:$0xff]
  %v532 = vld [vmem:[%s0 + $0xfb0] sm:$0xff]
  %v533 = vld [vmem:[%s0 + $0xfb8] sm:$0xff]
  %v534 = vld [vmem:[%s0 + $0xfc0] sm:$0xff]
  %v535 = vld [vmem:[%s0 + $0xfc8] sm:$0xff]
  %v536 = vld [vmem:[%s0 + $0xfd0] sm:$0xff]
  %v537 = vld [vmem:[%s0 + $0xfd8] sm:$0xff]
  %v538 = vld [vmem:[%s0 + $0xfe0] sm:$0xff]
  %v539 = vld [vmem:[%s0 + $0xfe8] sm:$0xff]
  %v540 = vld [vmem:[%s0 + $0xff0] sm:$0xff]
  %v541 = vld [vmem:[%s0 + $0xff8] sm:$0xff]
  %vm542 = vcmask 7168
  %v543 = vsel %vm542, %v30, 0.0
  %v544 = vsel %vm542, %v31, 0.0
  %v545 = vadd.f32 %v543, %v544
  %v546 = vsel %vm542, %v32, 0.0
  %v547 = vadd.f32 %v545, %v546
  %v548 = vsel %vm542, %v33, 0.0
  %v549 = vadd.f32 %v547, %v548
  %v550 = vsel %vm542, %v34, 0.0
  %v551 = vadd.f32 %v549, %v550
  %v552 = vsel %vm542, %v35, 0.0
  %v553 = vadd.f32 %v551, %v552
  %v554 = vsel %vm542, %v36, 0.0
  %v555 = vadd.f32 %v553, %v554
  %v556 = vsel %vm542, %v37, 0.0
  %v557 = vadd.f32 %v555, %v556
  %v558 = vsel %vm542, %v38, 0.0
  %v559 = vadd.f32 %v557, %v558
  %v560 = vsel %vm542, %v39, 0.0
  %v561 = vadd.f32 %v559, %v560
  %v562 = vsel %vm542, %v40, 0.0
  %v563 = vadd.f32 %v561, %v562
  %v564 = vsel %vm542, %v41, 0.0
  %v565 = vadd.f32 %v563, %v564
  %v566 = vsel %vm542, %v42, 0.0
  %v567 = vadd.f32 %v565, %v566
  %v568 = vsel %vm542, %v43, 0.0
  %v569 = vadd.f32 %v567, %v568
  %v570 = vsel %vm542, %v44, 0.0
  %v571 = vadd.f32 %v569, %v570
  %v572 = vsel %vm542, %v45, 0.0
  %v573 = vadd.f32 %v571, %v572
  %v574 = vsel %vm542, %v46, 0.0
  %v575 = vadd.f32 %v573, %v574
  %v576 = vsel %vm542, %v47, 0.0
  %v577 = vadd.f32 %v575, %v576
  %v578 = vsel %vm542, %v48, 0.0
  %v579 = vadd.f32 %v577, %v578
  %v580 = vsel %vm542, %v49, 0.0
  %v581 = vadd.f32 %v579, %v580
  %v582 = vsel %vm542, %v50, 0.0
  %v583 = vadd.f32 %v581, %v582
  %v584 = vsel %vm542, %v51, 0.0
  %v585 = vadd.f32 %v583, %v584
  %v586 = vsel %vm542, %v52, 0.0
  %v587 = vadd.f32 %v585, %v586
  %v588 = vsel %vm542, %v53, 0.0
  %v589 = vadd.f32 %v587, %v588
  %v590 = vsel %vm542, %v54, 0.0
  %v591 = vadd.f32 %v589, %v590
  %v592 = vsel %vm542, %v55, 0.0
  %v593 = vadd.f32 %v591, %v592
  %v594 = vsel %vm542, %v56, 0.0
  %v595 = vadd.f32 %v593, %v594
  %v596 = vsel %vm542, %v57, 0.0
  %v597 = vadd.f32 %v595, %v596
  %v598 = vsel %vm542, %v58, 0.0
  %v599 = vadd.f32 %v597, %v598
  %v600 = vsel %vm542, %v59, 0.0
  %v601 = vadd.f32 %v599, %v600
  %v602 = vsel %vm542, %v60, 0.0
  %v603 = vadd.f32 %v601, %v602
  %v604 = vsel %vm542, %v61, 0.0
  %v605 = vadd.f32 %v603, %v604
  %v606 = vsel %vm542, %v62, 0.0
  %v607 = vadd.f32 %v605, %v606
  %v608 = vsel %vm542, %v63, 0.0
  %v609 = vadd.f32 %v607, %v608
  %v610 = vsel %vm542, %v64, 0.0
  %v611 = vadd.f32 %v609, %v610
  %v612 = vsel %vm542, %v65, 0.0
  %v613 = vadd.f32 %v611, %v612
  %v614 = vsel %vm542, %v66, 0.0
  %v615 = vadd.f32 %v613, %v614
  %v616 = vsel %vm542, %v67, 0.0
  %v617 = vadd.f32 %v615, %v616
  %v618 = vsel %vm542, %v68, 0.0
  %v619 = vadd.f32 %v617, %v618
  %v620 = vsel %vm542, %v69, 0.0
  %v621 = vadd.f32 %v619, %v620
  %v622 = vsel %vm542, %v70, 0.0
  %v623 = vadd.f32 %v621, %v622
  %v624 = vsel %vm542, %v71, 0.0
  %v625 = vadd.f32 %v623, %v624
  %v626 = vsel %vm542, %v72, 0.0
  %v627 = vadd.f32 %v625, %v626
  %v628 = vsel %vm542, %v73, 0.0
  %v629 = vadd.f32 %v627, %v628
  %v630 = vsel %vm542, %v74, 0.0
  %v631 = vadd.f32 %v629, %v630
  %v632 = vsel %vm542, %v75, 0.0
  %v633 = vadd.f32 %v631, %v632
  %v634 = vsel %vm542, %v76, 0.0
  %v635 = vadd.f32 %v633, %v634
  %v636 = vsel %vm542, %v77, 0.0
  %v637 = vadd.f32 %v635, %v636
  %v638 = vsel %vm542, %v78, 0.0
  %v639 = vadd.f32 %v637, %v638
  %v640 = vsel %vm542, %v79, 0.0
  %v641 = vadd.f32 %v639, %v640
  %v642 = vsel %vm542, %v80, 0.0
  %v643 = vadd.f32 %v641, %v642
  %v644 = vsel %vm542, %v81, 0.0
  %v645 = vadd.f32 %v643, %v644
  %v646 = vsel %vm542, %v82, 0.0
  %v647 = vadd.f32 %v645, %v646
  %v648 = vsel %vm542, %v83, 0.0
  %v649 = vadd.f32 %v647, %v648
  %v650 = vsel %vm542, %v84, 0.0
  %v651 = vadd.f32 %v649, %v650
  %v652 = vsel %vm542, %v85, 0.0
  %v653 = vadd.f32 %v651, %v652
  %v654 = vsel %vm542, %v86, 0.0
  %v655 = vadd.f32 %v653, %v654
  %v656 = vsel %vm542, %v87, 0.0
  %v657 = vadd.f32 %v655, %v656
  %v658 = vsel %vm542, %v88, 0.0
  %v659 = vadd.f32 %v657, %v658
  %v660 = vsel %vm542, %v89, 0.0
  %v661 = vadd.f32 %v659, %v660
  %v662 = vsel %vm542, %v90, 0.0
  %v663 = vadd.f32 %v661, %v662
  %v664 = vsel %vm542, %v91, 0.0
  %v665 = vadd.f32 %v663, %v664
  %v666 = vsel %vm542, %v92, 0.0
  %v667 = vadd.f32 %v665, %v666
  %v668 = vsel %vm542, %v93, 0.0
  %v669 = vadd.f32 %v667, %v668
  %v670 = vsel %vm542, %v94, 0.0
  %v671 = vadd.f32 %v669, %v670
  %v672 = vsel %vm542, %v95, 0.0
  %v673 = vadd.f32 %v671, %v672
  %v674 = vsel %vm542, %v96, 0.0
  %v675 = vadd.f32 %v673, %v674
  %v676 = vsel %vm542, %v97, 0.0
  %v677 = vadd.f32 %v675, %v676
  %v678 = vsel %vm542, %v98, 0.0
  %v679 = vadd.f32 %v677, %v678
  %v680 = vsel %vm542, %v99, 0.0
  %v681 = vadd.f32 %v679, %v680
  %v682 = vsel %vm542, %v100, 0.0
  %v683 = vadd.f32 %v681, %v682
  %v684 = vsel %vm542, %v101, 0.0
  %v685 = vadd.f32 %v683, %v684
  %v686 = vsel %vm542, %v102, 0.0
  %v687 = vadd.f32 %v685, %v686
  %v688 = vsel %vm542, %v103, 0.0
  %v689 = vadd.f32 %v687, %v688
  %v690 = vsel %vm542, %v104, 0.0
  %v691 = vadd.f32 %v689, %v690
  %v692 = vsel %vm542, %v105, 0.0
  %v693 = vadd.f32 %v691, %v692
  %v694 = vsel %vm542, %v106, 0.0
  %v695 = vadd.f32 %v693, %v694
  %v696 = vsel %vm542, %v107, 0.0
  %v697 = vadd.f32 %v695, %v696
  %v698 = vsel %vm542, %v108, 0.0
  %v699 = vadd.f32 %v697, %v698
  %v700 = vsel %vm542, %v109, 0.0
  %v701 = vadd.f32 %v699, %v700
  %v702 = vsel %vm542, %v110, 0.0
  %v703 = vadd.f32 %v701, %v702
  %v704 = vsel %vm542, %v111, 0.0
  %v705 = vadd.f32 %v703, %v704
  %v706 = vsel %vm542, %v112, 0.0
  %v707 = vadd.f32 %v705, %v706
  %v708 = vsel %vm542, %v113, 0.0
  %v709 = vadd.f32 %v707, %v708
  %v710 = vsel %vm542, %v114, 0.0
  %v711 = vadd.f32 %v709, %v710
  %v712 = vsel %vm542, %v115, 0.0
  %v713 = vadd.f32 %v711, %v712
  %v714 = vsel %vm542, %v116, 0.0
  %v715 = vadd.f32 %v713, %v714
  %v716 = vsel %vm542, %v117, 0.0
  %v717 = vadd.f32 %v715, %v716
  %v718 = vsel %vm542, %v118, 0.0
  %v719 = vadd.f32 %v717, %v718
  %v720 = vsel %vm542, %v119, 0.0
  %v721 = vadd.f32 %v719, %v720
  %v722 = vsel %vm542, %v120, 0.0
  %v723 = vadd.f32 %v721, %v722
  %v724 = vsel %vm542, %v121, 0.0
  %v725 = vadd.f32 %v723, %v724
  %v726 = vsel %vm542, %v122, 0.0
  %v727 = vadd.f32 %v725, %v726
  %v728 = vsel %vm542, %v123, 0.0
  %v729 = vadd.f32 %v727, %v728
  %v730 = vsel %vm542, %v124, 0.0
  %v731 = vadd.f32 %v729, %v730
  %v732 = vsel %vm542, %v125, 0.0
  %v733 = vadd.f32 %v731, %v732
  %v734 = vsel %vm542, %v126, 0.0
  %v735 = vadd.f32 %v733, %v734
  %v736 = vsel %vm542, %v127, 0.0
  %v737 = vadd.f32 %v735, %v736
  %v738 = vsel %vm542, %v128, 0.0
  %v739 = vadd.f32 %v737, %v738
  %v740 = vsel %vm542, %v129, 0.0
  %v741 = vadd.f32 %v739, %v740
  %v742 = vsel %vm542, %v130, 0.0
  %v743 = vadd.f32 %v741, %v742
  %v744 = vsel %vm542, %v131, 0.0
  %v745 = vadd.f32 %v743, %v744
  %v746 = vsel %vm542, %v132, 0.0
  %v747 = vadd.f32 %v745, %v746
  %v748 = vsel %vm542, %v133, 0.0
  %v749 = vadd.f32 %v747, %v748
  %v750 = vsel %vm542, %v134, 0.0
  %v751 = vadd.f32 %v749, %v750
  %v752 = vsel %vm542, %v135, 0.0
  %v753 = vadd.f32 %v751, %v752
  %v754 = vsel %vm542, %v136, 0.0
  %v755 = vadd.f32 %v753, %v754
  %v756 = vsel %vm542, %v137, 0.0
  %v757 = vadd.f32 %v755, %v756
  %v758 = vsel %vm542, %v138, 0.0
  %v759 = vadd.f32 %v757, %v758
  %v760 = vsel %vm542, %v139, 0.0
  %v761 = vadd.f32 %v759, %v760
  %v762 = vsel %vm542, %v140, 0.0
  %v763 = vadd.f32 %v761, %v762
  %v764 = vsel %vm542, %v141, 0.0
  %v765 = vadd.f32 %v763, %v764
  %v766 = vsel %vm542, %v142, 0.0
  %v767 = vadd.f32 %v765, %v766
  %v768 = vsel %vm542, %v143, 0.0
  %v769 = vadd.f32 %v767, %v768
  %v770 = vsel %vm542, %v144, 0.0
  %v771 = vadd.f32 %v769, %v770
  %v772 = vsel %vm542, %v145, 0.0
  %v773 = vadd.f32 %v771, %v772
  %v774 = vsel %vm542, %v146, 0.0
  %v775 = vadd.f32 %v773, %v774
  %v776 = vsel %vm542, %v147, 0.0
  %v777 = vadd.f32 %v775, %v776
  %v778 = vsel %vm542, %v148, 0.0
  %v779 = vadd.f32 %v777, %v778
  %v780 = vsel %vm542, %v149, 0.0
  %v781 = vadd.f32 %v779, %v780
  %v782 = vsel %vm542, %v150, 0.0
  %v783 = vadd.f32 %v781, %v782
  %v784 = vsel %vm542, %v151, 0.0
  %v785 = vadd.f32 %v783, %v784
  %v786 = vsel %vm542, %v152, 0.0
  %v787 = vadd.f32 %v785, %v786
  %v788 = vsel %vm542, %v153, 0.0
  %v789 = vadd.f32 %v787, %v788
  %v790 = vsel %vm542, %v154, 0.0
  %v791 = vadd.f32 %v789, %v790
  %v792 = vsel %vm542, %v155, 0.0
  %v793 = vadd.f32 %v791, %v792
  %v794 = vsel %vm542, %v156, 0.0
  %v795 = vadd.f32 %v793, %v794
  %v796 = vsel %vm542, %v157, 0.0
  %v797 = vadd.f32 %v795, %v796
  %v798 = vsel %vm542, %v158, 0.0
  %v799 = vadd.f32 %v797, %v798
  %v800 = vsel %vm542, %v159, 0.0
  %v801 = vadd.f32 %v799, %v800
  %v802 = vsel %vm542, %v160, 0.0
  %v803 = vadd.f32 %v801, %v802
  %v804 = vsel %vm542, %v161, 0.0
  %v805 = vadd.f32 %v803, %v804
  %v806 = vsel %vm542, %v162, 0.0
  %v807 = vadd.f32 %v805, %v806
  %v808 = vsel %vm542, %v163, 0.0
  %v809 = vadd.f32 %v807, %v808
  %v810 = vsel %vm542, %v164, 0.0
  %v811 = vadd.f32 %v809, %v810
  %v812 = vsel %vm542, %v165, 0.0
  %v813 = vadd.f32 %v811, %v812
  %v814 = vsel %vm542, %v166, 0.0
  %v815 = vadd.f32 %v813, %v814
  %v816 = vsel %vm542, %v167, 0.0
  %v817 = vadd.f32 %v815, %v816
  %v818 = vsel %vm542, %v168, 0.0
  %v819 = vadd.f32 %v817, %v818
  %v820 = vsel %vm542, %v169, 0.0
  %v821 = vadd.f32 %v819, %v820
  %v822 = vsel %vm542, %v170, 0.0
  %v823 = vadd.f32 %v821, %v822
  %v824 = vsel %vm542, %v171, 0.0
  %v825 = vadd.f32 %v823, %v824
  %v826 = vsel %vm542, %v172, 0.0
  %v827 = vadd.f32 %v825, %v826
  %v828 = vsel %vm542, %v173, 0.0
  %v829 = vadd.f32 %v827, %v828
  %v830 = vsel %vm542, %v174, 0.0
  %v831 = vadd.f32 %v829, %v830
  %v832 = vsel %vm542, %v175, 0.0
  %v833 = vadd.f32 %v831, %v832
  %v834 = vsel %vm542, %v176, 0.0
  %v835 = vadd.f32 %v833, %v834
  %v836 = vsel %vm542, %v177, 0.0
  %v837 = vadd.f32 %v835, %v836
  %v838 = vsel %vm542, %v178, 0.0
  %v839 = vadd.f32 %v837, %v838
  %v840 = vsel %vm542, %v179, 0.0
  %v841 = vadd.f32 %v839, %v840
  %v842 = vsel %vm542, %v180, 0.0
  %v843 = vadd.f32 %v841, %v842
  %v844 = vsel %vm542, %v181, 0.0
  %v845 = vadd.f32 %v843, %v844
  %v846 = vsel %vm542, %v182, 0.0
  %v847 = vadd.f32 %v845, %v846
  %v848 = vsel %vm542, %v183, 0.0
  %v849 = vadd.f32 %v847, %v848
  %v850 = vsel %vm542, %v184, 0.0
  %v851 = vadd.f32 %v849, %v850
  %v852 = vsel %vm542, %v185, 0.0
  %v853 = vadd.f32 %v851, %v852
  %v854 = vsel %vm542, %v186, 0.0
  %v855 = vadd.f32 %v853, %v854
  %v856 = vsel %vm542, %v187, 0.0
  %v857 = vadd.f32 %v855, %v856
  %v858 = vsel %vm542, %v188, 0.0
  %v859 = vadd.f32 %v857, %v858
  %v860 = vsel %vm542, %v189, 0.0
  %v861 = vadd.f32 %v859, %v860
  %v862 = vsel %vm542, %v190, 0.0
  %v863 = vadd.f32 %v861, %v862
  %v864 = vsel %vm542, %v191, 0.0
  %v865 = vadd.f32 %v863, %v864
  %v866 = vsel %vm542, %v192, 0.0
  %v867 = vadd.f32 %v865, %v866
  %v868 = vsel %vm542, %v193, 0.0
  %v869 = vadd.f32 %v867, %v868
  %v870 = vsel %vm542, %v194, 0.0
  %v871 = vadd.f32 %v869, %v870
  %v872 = vsel %vm542, %v195, 0.0
  %v873 = vadd.f32 %v871, %v872
  %v874 = vsel %vm542, %v196, 0.0
  %v875 = vadd.f32 %v873, %v874
  %v876 = vsel %vm542, %v197, 0.0
  %v877 = vadd.f32 %v875, %v876
  %v878 = vsel %vm542, %v198, 0.0
  %v879 = vadd.f32 %v877, %v878
  %v880 = vsel %vm542, %v199, 0.0
  %v881 = vadd.f32 %v879, %v880
  %v882 = vsel %vm542, %v200, 0.0
  %v883 = vadd.f32 %v881, %v882
  %v884 = vsel %vm542, %v201, 0.0
  %v885 = vadd.f32 %v883, %v884
  %v886 = vsel %vm542, %v202, 0.0
  %v887 = vadd.f32 %v885, %v886
  %v888 = vsel %vm542, %v203, 0.0
  %v889 = vadd.f32 %v887, %v888
  %v890 = vsel %vm542, %v204, 0.0
  %v891 = vadd.f32 %v889, %v890
  %v892 = vsel %vm542, %v205, 0.0
  %v893 = vadd.f32 %v891, %v892
  %v894 = vsel %vm542, %v206, 0.0
  %v895 = vadd.f32 %v893, %v894
  %v896 = vsel %vm542, %v207, 0.0
  %v897 = vadd.f32 %v895, %v896
  %v898 = vsel %vm542, %v208, 0.0
  %v899 = vadd.f32 %v897, %v898
  %v900 = vsel %vm542, %v209, 0.0
  %v901 = vadd.f32 %v899, %v900
  %v902 = vsel %vm542, %v210, 0.0
  %v903 = vadd.f32 %v901, %v902
  %v904 = vsel %vm542, %v211, 0.0
  %v905 = vadd.f32 %v903, %v904
  %v906 = vsel %vm542, %v212, 0.0
  %v907 = vadd.f32 %v905, %v906
  %v908 = vsel %vm542, %v213, 0.0
  %v909 = vadd.f32 %v907, %v908
  %v910 = vsel %vm542, %v214, 0.0
  %v911 = vadd.f32 %v909, %v910
  %v912 = vsel %vm542, %v215, 0.0
  %v913 = vadd.f32 %v911, %v912
  %v914 = vsel %vm542, %v216, 0.0
  %v915 = vadd.f32 %v913, %v914
  %v916 = vsel %vm542, %v217, 0.0
  %v917 = vadd.f32 %v915, %v916
  %v918 = vsel %vm542, %v218, 0.0
  %v919 = vadd.f32 %v917, %v918
  %v920 = vsel %vm542, %v219, 0.0
  %v921 = vadd.f32 %v919, %v920
  %v922 = vsel %vm542, %v220, 0.0
  %v923 = vadd.f32 %v921, %v922
  %v924 = vsel %vm542, %v221, 0.0
  %v925 = vadd.f32 %v923, %v924
  %v926 = vsel %vm542, %v222, 0.0
  %v927 = vadd.f32 %v925, %v926
  %v928 = vsel %vm542, %v223, 0.0
  %v929 = vadd.f32 %v927, %v928
  %v930 = vsel %vm542, %v224, 0.0
  %v931 = vadd.f32 %v929, %v930
  %v932 = vsel %vm542, %v225, 0.0
  %v933 = vadd.f32 %v931, %v932
  %v934 = vsel %vm542, %v226, 0.0
  %v935 = vadd.f32 %v933, %v934
  %v936 = vsel %vm542, %v227, 0.0
  %v937 = vadd.f32 %v935, %v936
  %v938 = vsel %vm542, %v228, 0.0
  %v939 = vadd.f32 %v937, %v938
  %v940 = vsel %vm542, %v229, 0.0
  %v941 = vadd.f32 %v939, %v940
  %v942 = vsel %vm542, %v230, 0.0
  %v943 = vadd.f32 %v941, %v942
  %v944 = vsel %vm542, %v231, 0.0
  %v945 = vadd.f32 %v943, %v944
  %v946 = vsel %vm542, %v232, 0.0
  %v947 = vadd.f32 %v945, %v946
  %v948 = vsel %vm542, %v233, 0.0
  %v949 = vadd.f32 %v947, %v948
  %v950 = vsel %vm542, %v234, 0.0
  %v951 = vadd.f32 %v949, %v950
  %v952 = vsel %vm542, %v235, 0.0
  %v953 = vadd.f32 %v951, %v952
  %v954 = vsel %vm542, %v236, 0.0
  %v955 = vadd.f32 %v953, %v954
  %v956 = vsel %vm542, %v237, 0.0
  %v957 = vadd.f32 %v955, %v956
  %v958 = vsel %vm542, %v238, 0.0
  %v959 = vadd.f32 %v957, %v958
  %v960 = vsel %vm542, %v239, 0.0
  %v961 = vadd.f32 %v959, %v960
  %v962 = vsel %vm542, %v240, 0.0
  %v963 = vadd.f32 %v961, %v962
  %v964 = vsel %vm542, %v241, 0.0
  %v965 = vadd.f32 %v963, %v964
  %v966 = vsel %vm542, %v242, 0.0
  %v967 = vadd.f32 %v965, %v966
  %v968 = vsel %vm542, %v243, 0.0
  %v969 = vadd.f32 %v967, %v968
  %v970 = vsel %vm542, %v244, 0.0
  %v971 = vadd.f32 %v969, %v970
  %v972 = vsel %vm542, %v245, 0.0
  %v973 = vadd.f32 %v971, %v972
  %v974 = vsel %vm542, %v246, 0.0
  %v975 = vadd.f32 %v973, %v974
  %v976 = vsel %vm542, %v247, 0.0
  %v977 = vadd.f32 %v975, %v976
  %v978 = vsel %vm542, %v248, 0.0
  %v979 = vadd.f32 %v977, %v978
  %v980 = vsel %vm542, %v249, 0.0
  %v981 = vadd.f32 %v979, %v980
  %v982 = vsel %vm542, %v250, 0.0
  %v983 = vadd.f32 %v981, %v982
  %v984 = vsel %vm542, %v251, 0.0
  %v985 = vadd.f32 %v983, %v984
  %v986 = vsel %vm542, %v252, 0.0
  %v987 = vadd.f32 %v985, %v986
  %v988 = vsel %vm542, %v253, 0.0
  %v989 = vadd.f32 %v987, %v988
  %v990 = vsel %vm542, %v254, 0.0
  %v991 = vadd.f32 %v989, %v990
  %v992 = vsel %vm542, %v255, 0.0
  %v993 = vadd.f32 %v991, %v992
  %v994 = vsel %vm542, %v256, 0.0
  %v995 = vadd.f32 %v993, %v994
  %v996 = vsel %vm542, %v257, 0.0
  %v997 = vadd.f32 %v995, %v996
  %v998 = vsel %vm542, %v258, 0.0
  %v999 = vadd.f32 %v997, %v998
  %v1000 = vsel %vm542, %v259, 0.0
  %v1001 = vadd.f32 %v999, %v1000
  %v1002 = vsel %vm542, %v260, 0.0
  %v1003 = vadd.f32 %v1001, %v1002
  %v1004 = vsel %vm542, %v261, 0.0
  %v1005 = vadd.f32 %v1003, %v1004
  %v1006 = vsel %vm542, %v262, 0.0
  %v1007 = vadd.f32 %v1005, %v1006
  %v1008 = vsel %vm542, %v263, 0.0
  %v1009 = vadd.f32 %v1007, %v1008
  %v1010 = vsel %vm542, %v264, 0.0
  %v1011 = vadd.f32 %v1009, %v1010
  %v1012 = vsel %vm542, %v265, 0.0
  %v1013 = vadd.f32 %v1011, %v1012
  %v1014 = vsel %vm542, %v266, 0.0
  %v1015 = vadd.f32 %v1013, %v1014
  %v1016 = vsel %vm542, %v267, 0.0
  %v1017 = vadd.f32 %v1015, %v1016
  %v1018 = vsel %vm542, %v268, 0.0
  %v1019 = vadd.f32 %v1017, %v1018
  %v1020 = vsel %vm542, %v269, 0.0
  %v1021 = vadd.f32 %v1019, %v1020
  %v1022 = vsel %vm542, %v270, 0.0
  %v1023 = vadd.f32 %v1021, %v1022
  %v1024 = vsel %vm542, %v271, 0.0
  %v1025 = vadd.f32 %v1023, %v1024
  %v1026 = vsel %vm542, %v272, 0.0
  %v1027 = vadd.f32 %v1025, %v1026
  %v1028 = vsel %vm542, %v273, 0.0
  %v1029 = vadd.f32 %v1027, %v1028
  %v1030 = vsel %vm542, %v274, 0.0
  %v1031 = vadd.f32 %v1029, %v1030
  %v1032 = vsel %vm542, %v275, 0.0
  %v1033 = vadd.f32 %v1031, %v1032
  %v1034 = vsel %vm542, %v276, 0.0
  %v1035 = vadd.f32 %v1033, %v1034
  %v1036 = vsel %vm542, %v277, 0.0
  %v1037 = vadd.f32 %v1035, %v1036
  %v1038 = vsel %vm542, %v278, 0.0
  %v1039 = vadd.f32 %v1037, %v1038
  %v1040 = vsel %vm542, %v279, 0.0
  %v1041 = vadd.f32 %v1039, %v1040
  %v1042 = vsel %vm542, %v280, 0.0
  %v1043 = vadd.f32 %v1041, %v1042
  %v1044 = vsel %vm542, %v281, 0.0
  %v1045 = vadd.f32 %v1043, %v1044
  %v1046 = vsel %vm542, %v282, 0.0
  %v1047 = vadd.f32 %v1045, %v1046
  %v1048 = vsel %vm542, %v283, 0.0
  %v1049 = vadd.f32 %v1047, %v1048
  %v1050 = vsel %vm542, %v284, 0.0
  %v1051 = vadd.f32 %v1049, %v1050
  %v1052 = vsel %vm542, %v285, 0.0
  %v1053 = vadd.f32 %v1051, %v1052
  %v1054 = vsel %vm542, %v286, 0.0
  %v1055 = vadd.f32 %v1053, %v1054
  %v1056 = vsel %vm542, %v287, 0.0
  %v1057 = vadd.f32 %v1055, %v1056
  %v1058 = vsel %vm542, %v288, 0.0
  %v1059 = vadd.f32 %v1057, %v1058
  %v1060 = vsel %vm542, %v289, 0.0
  %v1061 = vadd.f32 %v1059, %v1060
  %v1062 = vsel %vm542, %v290, 0.0
  %v1063 = vadd.f32 %v1061, %v1062
  %v1064 = vsel %vm542, %v291, 0.0
  %v1065 = vadd.f32 %v1063, %v1064
  %v1066 = vsel %vm542, %v292, 0.0
  %v1067 = vadd.f32 %v1065, %v1066
  %v1068 = vsel %vm542, %v293, 0.0
  %v1069 = vadd.f32 %v1067, %v1068
  %v1070 = vsel %vm542, %v294, 0.0
  %v1071 = vadd.f32 %v1069, %v1070
  %v1072 = vsel %vm542, %v295, 0.0
  %v1073 = vadd.f32 %v1071, %v1072
  %v1074 = vsel %vm542, %v296, 0.0
  %v1075 = vadd.f32 %v1073, %v1074
  %v1076 = vsel %vm542, %v297, 0.0
  %v1077 = vadd.f32 %v1075, %v1076
  %v1078 = vsel %vm542, %v298, 0.0
  %v1079 = vadd.f32 %v1077, %v1078
  %v1080 = vsel %vm542, %v299, 0.0
  %v1081 = vadd.f32 %v1079, %v1080
  %v1082 = vsel %vm542, %v300, 0.0
  %v1083 = vadd.f32 %v1081, %v1082
  %v1084 = vsel %vm542, %v301, 0.0
  %v1085 = vadd.f32 %v1083, %v1084
  %v1086 = vsel %vm542, %v302, 0.0
  %v1087 = vadd.f32 %v1085, %v1086
  %v1088 = vsel %vm542, %v303, 0.0
  %v1089 = vadd.f32 %v1087, %v1088
  %v1090 = vsel %vm542, %v304, 0.0
  %v1091 = vadd.f32 %v1089, %v1090
  %v1092 = vsel %vm542, %v305, 0.0
  %v1093 = vadd.f32 %v1091, %v1092
  %v1094 = vsel %vm542, %v306, 0.0
  %v1095 = vadd.f32 %v1093, %v1094
  %v1096 = vsel %vm542, %v307, 0.0
  %v1097 = vadd.f32 %v1095, %v1096
  %v1098 = vsel %vm542, %v308, 0.0
  %v1099 = vadd.f32 %v1097, %v1098
  %v1100 = vsel %vm542, %v309, 0.0
  %v1101 = vadd.f32 %v1099, %v1100
  %v1102 = vsel %vm542, %v310, 0.0
  %v1103 = vadd.f32 %v1101, %v1102
  %v1104 = vsel %vm542, %v311, 0.0
  %v1105 = vadd.f32 %v1103, %v1104
  %v1106 = vsel %vm542, %v312, 0.0
  %v1107 = vadd.f32 %v1105, %v1106
  %v1108 = vsel %vm542, %v313, 0.0
  %v1109 = vadd.f32 %v1107, %v1108
  %v1110 = vsel %vm542, %v314, 0.0
  %v1111 = vadd.f32 %v1109, %v1110
  %v1112 = vsel %vm542, %v315, 0.0
  %v1113 = vadd.f32 %v1111, %v1112
  %v1114 = vsel %vm542, %v316, 0.0
  %v1115 = vadd.f32 %v1113, %v1114
  %v1116 = vsel %vm542, %v317, 0.0
  %v1117 = vadd.f32 %v1115, %v1116
  %v1118 = vsel %vm542, %v318, 0.0
  %v1119 = vadd.f32 %v1117, %v1118
  %v1120 = vsel %vm542, %v319, 0.0
  %v1121 = vadd.f32 %v1119, %v1120
  %v1122 = vsel %vm542, %v320, 0.0
  %v1123 = vadd.f32 %v1121, %v1122
  %v1124 = vsel %vm542, %v321, 0.0
  %v1125 = vadd.f32 %v1123, %v1124
  %v1126 = vsel %vm542, %v322, 0.0
  %v1127 = vadd.f32 %v1125, %v1126
  %v1128 = vsel %vm542, %v323, 0.0
  %v1129 = vadd.f32 %v1127, %v1128
  %v1130 = vsel %vm542, %v324, 0.0
  %v1131 = vadd.f32 %v1129, %v1130
  %v1132 = vsel %vm542, %v325, 0.0
  %v1133 = vadd.f32 %v1131, %v1132
  %v1134 = vsel %vm542, %v326, 0.0
  %v1135 = vadd.f32 %v1133, %v1134
  %v1136 = vsel %vm542, %v327, 0.0
  %v1137 = vadd.f32 %v1135, %v1136
  %v1138 = vsel %vm542, %v328, 0.0
  %v1139 = vadd.f32 %v1137, %v1138
  %v1140 = vsel %vm542, %v329, 0.0
  %v1141 = vadd.f32 %v1139, %v1140
  %v1142 = vsel %vm542, %v330, 0.0
  %v1143 = vadd.f32 %v1141, %v1142
  %v1144 = vsel %vm542, %v331, 0.0
  %v1145 = vadd.f32 %v1143, %v1144
  %v1146 = vsel %vm542, %v332, 0.0
  %v1147 = vadd.f32 %v1145, %v1146
  %v1148 = vsel %vm542, %v333, 0.0
  %v1149 = vadd.f32 %v1147, %v1148
  %v1150 = vsel %vm542, %v334, 0.0
  %v1151 = vadd.f32 %v1149, %v1150
  %v1152 = vsel %vm542, %v335, 0.0
  %v1153 = vadd.f32 %v1151, %v1152
  %v1154 = vsel %vm542, %v336, 0.0
  %v1155 = vadd.f32 %v1153, %v1154
  %v1156 = vsel %vm542, %v337, 0.0
  %v1157 = vadd.f32 %v1155, %v1156
  %v1158 = vsel %vm542, %v338, 0.0
  %v1159 = vadd.f32 %v1157, %v1158
  %v1160 = vsel %vm542, %v339, 0.0
  %v1161 = vadd.f32 %v1159, %v1160
  %v1162 = vsel %vm542, %v340, 0.0
  %v1163 = vadd.f32 %v1161, %v1162
  %v1164 = vsel %vm542, %v341, 0.0
  %v1165 = vadd.f32 %v1163, %v1164
  %v1166 = vsel %vm542, %v342, 0.0
  %v1167 = vadd.f32 %v1165, %v1166
  %v1168 = vsel %vm542, %v343, 0.0
  %v1169 = vadd.f32 %v1167, %v1168
  %v1170 = vsel %vm542, %v344, 0.0
  %v1171 = vadd.f32 %v1169, %v1170
  %v1172 = vsel %vm542, %v345, 0.0
  %v1173 = vadd.f32 %v1171, %v1172
  %v1174 = vsel %vm542, %v346, 0.0
  %v1175 = vadd.f32 %v1173, %v1174
  %v1176 = vsel %vm542, %v347, 0.0
  %v1177 = vadd.f32 %v1175, %v1176
  %v1178 = vsel %vm542, %v348, 0.0
  %v1179 = vadd.f32 %v1177, %v1178
  %v1180 = vsel %vm542, %v349, 0.0
  %v1181 = vadd.f32 %v1179, %v1180
  %v1182 = vsel %vm542, %v350, 0.0
  %v1183 = vadd.f32 %v1181, %v1182
  %v1184 = vsel %vm542, %v351, 0.0
  %v1185 = vadd.f32 %v1183, %v1184
  %v1186 = vsel %vm542, %v352, 0.0
  %v1187 = vadd.f32 %v1185, %v1186
  %v1188 = vsel %vm542, %v353, 0.0
  %v1189 = vadd.f32 %v1187, %v1188
  %v1190 = vsel %vm542, %v354, 0.0
  %v1191 = vadd.f32 %v1189, %v1190
  %v1192 = vsel %vm542, %v355, 0.0
  %v1193 = vadd.f32 %v1191, %v1192
  %v1194 = vsel %vm542, %v356, 0.0
  %v1195 = vadd.f32 %v1193, %v1194
  %v1196 = vsel %vm542, %v357, 0.0
  %v1197 = vadd.f32 %v1195, %v1196
  %v1198 = vsel %vm542, %v358, 0.0
  %v1199 = vadd.f32 %v1197, %v1198
  %v1200 = vsel %vm542, %v359, 0.0
  %v1201 = vadd.f32 %v1199, %v1200
  %v1202 = vsel %vm542, %v360, 0.0
  %v1203 = vadd.f32 %v1201, %v1202
  %v1204 = vsel %vm542, %v361, 0.0
  %v1205 = vadd.f32 %v1203, %v1204
  %v1206 = vsel %vm542, %v362, 0.0
  %v1207 = vadd.f32 %v1205, %v1206
  %v1208 = vsel %vm542, %v363, 0.0
  %v1209 = vadd.f32 %v1207, %v1208
  %v1210 = vsel %vm542, %v364, 0.0
  %v1211 = vadd.f32 %v1209, %v1210
  %v1212 = vsel %vm542, %v365, 0.0
  %v1213 = vadd.f32 %v1211, %v1212
  %v1214 = vsel %vm542, %v366, 0.0
  %v1215 = vadd.f32 %v1213, %v1214
  %v1216 = vsel %vm542, %v367, 0.0
  %v1217 = vadd.f32 %v1215, %v1216
  %v1218 = vsel %vm542, %v368, 0.0
  %v1219 = vadd.f32 %v1217, %v1218
  %v1220 = vsel %vm542, %v369, 0.0
  %v1221 = vadd.f32 %v1219, %v1220
  %v1222 = vsel %vm542, %v370, 0.0
  %v1223 = vadd.f32 %v1221, %v1222
  %v1224 = vsel %vm542, %v371, 0.0
  %v1225 = vadd.f32 %v1223, %v1224
  %v1226 = vsel %vm542, %v372, 0.0
  %v1227 = vadd.f32 %v1225, %v1226
  %v1228 = vsel %vm542, %v373, 0.0
  %v1229 = vadd.f32 %v1227, %v1228
  %v1230 = vsel %vm542, %v374, 0.0
  %v1231 = vadd.f32 %v1229, %v1230
  %v1232 = vsel %vm542, %v375, 0.0
  %v1233 = vadd.f32 %v1231, %v1232
  %v1234 = vsel %vm542, %v376, 0.0
  %v1235 = vadd.f32 %v1233, %v1234
  %v1236 = vsel %vm542, %v377, 0.0
  %v1237 = vadd.f32 %v1235, %v1236
  %v1238 = vsel %vm542, %v378, 0.0
  %v1239 = vadd.f32 %v1237, %v1238
  %v1240 = vsel %vm542, %v379, 0.0
  %v1241 = vadd.f32 %v1239, %v1240
  %v1242 = vsel %vm542, %v380, 0.0
  %v1243 = vadd.f32 %v1241, %v1242
  %v1244 = vsel %vm542, %v381, 0.0
  %v1245 = vadd.f32 %v1243, %v1244
  %v1246 = vsel %vm542, %v382, 0.0
  %v1247 = vadd.f32 %v1245, %v1246
  %v1248 = vsel %vm542, %v383, 0.0
  %v1249 = vadd.f32 %v1247, %v1248
  %v1250 = vsel %vm542, %v384, 0.0
  %v1251 = vadd.f32 %v1249, %v1250
  %v1252 = vsel %vm542, %v385, 0.0
  %v1253 = vadd.f32 %v1251, %v1252
  %v1254 = vsel %vm542, %v386, 0.0
  %v1255 = vadd.f32 %v1253, %v1254
  %v1256 = vsel %vm542, %v387, 0.0
  %v1257 = vadd.f32 %v1255, %v1256
  %v1258 = vsel %vm542, %v388, 0.0
  %v1259 = vadd.f32 %v1257, %v1258
  %v1260 = vsel %vm542, %v389, 0.0
  %v1261 = vadd.f32 %v1259, %v1260
  %v1262 = vsel %vm542, %v390, 0.0
  %v1263 = vadd.f32 %v1261, %v1262
  %v1264 = vsel %vm542, %v391, 0.0
  %v1265 = vadd.f32 %v1263, %v1264
  %v1266 = vsel %vm542, %v392, 0.0
  %v1267 = vadd.f32 %v1265, %v1266
  %v1268 = vsel %vm542, %v393, 0.0
  %v1269 = vadd.f32 %v1267, %v1268
  %v1270 = vsel %vm542, %v394, 0.0
  %v1271 = vadd.f32 %v1269, %v1270
  %v1272 = vsel %vm542, %v395, 0.0
  %v1273 = vadd.f32 %v1271, %v1272
  %v1274 = vsel %vm542, %v396, 0.0
  %v1275 = vadd.f32 %v1273, %v1274
  %v1276 = vsel %vm542, %v397, 0.0
  %v1277 = vadd.f32 %v1275, %v1276
  %v1278 = vsel %vm542, %v398, 0.0
  %v1279 = vadd.f32 %v1277, %v1278
  %v1280 = vsel %vm542, %v399, 0.0
  %v1281 = vadd.f32 %v1279, %v1280
  %v1282 = vsel %vm542, %v400, 0.0
  %v1283 = vadd.f32 %v1281, %v1282
  %v1284 = vsel %vm542, %v401, 0.0
  %v1285 = vadd.f32 %v1283, %v1284
  %v1286 = vsel %vm542, %v402, 0.0
  %v1287 = vadd.f32 %v1285, %v1286
  %v1288 = vsel %vm542, %v403, 0.0
  %v1289 = vadd.f32 %v1287, %v1288
  %v1290 = vsel %vm542, %v404, 0.0
  %v1291 = vadd.f32 %v1289, %v1290
  %v1292 = vsel %vm542, %v405, 0.0
  %v1293 = vadd.f32 %v1291, %v1292
  %v1294 = vsel %vm542, %v406, 0.0
  %v1295 = vadd.f32 %v1293, %v1294
  %v1296 = vsel %vm542, %v407, 0.0
  %v1297 = vadd.f32 %v1295, %v1296
  %v1298 = vsel %vm542, %v408, 0.0
  %v1299 = vadd.f32 %v1297, %v1298
  %v1300 = vsel %vm542, %v409, 0.0
  %v1301 = vadd.f32 %v1299, %v1300
  %v1302 = vsel %vm542, %v410, 0.0
  %v1303 = vadd.f32 %v1301, %v1302
  %v1304 = vsel %vm542, %v411, 0.0
  %v1305 = vadd.f32 %v1303, %v1304
  %v1306 = vsel %vm542, %v412, 0.0
  %v1307 = vadd.f32 %v1305, %v1306
  %v1308 = vsel %vm542, %v413, 0.0
  %v1309 = vadd.f32 %v1307, %v1308
  %v1310 = vsel %vm542, %v414, 0.0
  %v1311 = vadd.f32 %v1309, %v1310
  %v1312 = vsel %vm542, %v415, 0.0
  %v1313 = vadd.f32 %v1311, %v1312
  %v1314 = vsel %vm542, %v416, 0.0
  %v1315 = vadd.f32 %v1313, %v1314
  %v1316 = vsel %vm542, %v417, 0.0
  %v1317 = vadd.f32 %v1315, %v1316
  %v1318 = vsel %vm542, %v418, 0.0
  %v1319 = vadd.f32 %v1317, %v1318
  %v1320 = vsel %vm542, %v419, 0.0
  %v1321 = vadd.f32 %v1319, %v1320
  %v1322 = vsel %vm542, %v420, 0.0
  %v1323 = vadd.f32 %v1321, %v1322
  %v1324 = vsel %vm542, %v421, 0.0
  %v1325 = vadd.f32 %v1323, %v1324
  %v1326 = vsel %vm542, %v422, 0.0
  %v1327 = vadd.f32 %v1325, %v1326
  %v1328 = vsel %vm542, %v423, 0.0
  %v1329 = vadd.f32 %v1327, %v1328
  %v1330 = vsel %vm542, %v424, 0.0
  %v1331 = vadd.f32 %v1329, %v1330
  %v1332 = vsel %vm542, %v425, 0.0
  %v1333 = vadd.f32 %v1331, %v1332
  %v1334 = vsel %vm542, %v426, 0.0
  %v1335 = vadd.f32 %v1333, %v1334
  %v1336 = vsel %vm542, %v427, 0.0
  %v1337 = vadd.f32 %v1335, %v1336
  %v1338 = vsel %vm542, %v428, 0.0
  %v1339 = vadd.f32 %v1337, %v1338
  %v1340 = vsel %vm542, %v429, 0.0
  %v1341 = vadd.f32 %v1339, %v1340
  %v1342 = vsel %vm542, %v430, 0.0
  %v1343 = vadd.f32 %v1341, %v1342
  %v1344 = vsel %vm542, %v431, 0.0
  %v1345 = vadd.f32 %v1343, %v1344
  %v1346 = vsel %vm542, %v432, 0.0
  %v1347 = vadd.f32 %v1345, %v1346
  %v1348 = vsel %vm542, %v433, 0.0
  %v1349 = vadd.f32 %v1347, %v1348
  %v1350 = vsel %vm542, %v434, 0.0
  %v1351 = vadd.f32 %v1349, %v1350
  %v1352 = vsel %vm542, %v435, 0.0
  %v1353 = vadd.f32 %v1351, %v1352
  %v1354 = vsel %vm542, %v436, 0.0
  %v1355 = vadd.f32 %v1353, %v1354
  %v1356 = vsel %vm542, %v437, 0.0
  %v1357 = vadd.f32 %v1355, %v1356
  %v1358 = vsel %vm542, %v438, 0.0
  %v1359 = vadd.f32 %v1357, %v1358
  %v1360 = vsel %vm542, %v439, 0.0
  %v1361 = vadd.f32 %v1359, %v1360
  %v1362 = vsel %vm542, %v440, 0.0
  %v1363 = vadd.f32 %v1361, %v1362
  %v1364 = vsel %vm542, %v441, 0.0
  %v1365 = vadd.f32 %v1363, %v1364
  %v1366 = vsel %vm542, %v442, 0.0
  %v1367 = vadd.f32 %v1365, %v1366
  %v1368 = vsel %vm542, %v443, 0.0
  %v1369 = vadd.f32 %v1367, %v1368
  %v1370 = vsel %vm542, %v444, 0.0
  %v1371 = vadd.f32 %v1369, %v1370
  %v1372 = vsel %vm542, %v445, 0.0
  %v1373 = vadd.f32 %v1371, %v1372
  %v1374 = vsel %vm542, %v446, 0.0
  %v1375 = vadd.f32 %v1373, %v1374
  %v1376 = vsel %vm542, %v447, 0.0
  %v1377 = vadd.f32 %v1375, %v1376
  %v1378 = vsel %vm542, %v448, 0.0
  %v1379 = vadd.f32 %v1377, %v1378
  %v1380 = vsel %vm542, %v449, 0.0
  %v1381 = vadd.f32 %v1379, %v1380
  %v1382 = vsel %vm542, %v450, 0.0
  %v1383 = vadd.f32 %v1381, %v1382
  %v1384 = vsel %vm542, %v451, 0.0
  %v1385 = vadd.f32 %v1383, %v1384
  %v1386 = vsel %vm542, %v452, 0.0
  %v1387 = vadd.f32 %v1385, %v1386
  %v1388 = vsel %vm542, %v453, 0.0
  %v1389 = vadd.f32 %v1387, %v1388
  %v1390 = vsel %vm542, %v454, 0.0
  %v1391 = vadd.f32 %v1389, %v1390
  %v1392 = vsel %vm542, %v455, 0.0
  %v1393 = vadd.f32 %v1391, %v1392
  %v1394 = vsel %vm542, %v456, 0.0
  %v1395 = vadd.f32 %v1393, %v1394
  %v1396 = vsel %vm542, %v457, 0.0
  %v1397 = vadd.f32 %v1395, %v1396
  %v1398 = vsel %vm542, %v458, 0.0
  %v1399 = vadd.f32 %v1397, %v1398
  %v1400 = vsel %vm542, %v459, 0.0
  %v1401 = vadd.f32 %v1399, %v1400
  %v1402 = vsel %vm542, %v460, 0.0
  %v1403 = vadd.f32 %v1401, %v1402
  %v1404 = vsel %vm542, %v461, 0.0
  %v1405 = vadd.f32 %v1403, %v1404
  %v1406 = vsel %vm542, %v462, 0.0
  %v1407 = vadd.f32 %v1405, %v1406
  %v1408 = vsel %vm542, %v463, 0.0
  %v1409 = vadd.f32 %v1407, %v1408
  %v1410 = vsel %vm542, %v464, 0.0
  %v1411 = vadd.f32 %v1409, %v1410
  %v1412 = vsel %vm542, %v465, 0.0
  %v1413 = vadd.f32 %v1411, %v1412
  %v1414 = vsel %vm542, %v466, 0.0
  %v1415 = vadd.f32 %v1413, %v1414
  %v1416 = vsel %vm542, %v467, 0.0
  %v1417 = vadd.f32 %v1415, %v1416
  %v1418 = vsel %vm542, %v468, 0.0
  %v1419 = vadd.f32 %v1417, %v1418
  %v1420 = vsel %vm542, %v469, 0.0
  %v1421 = vadd.f32 %v1419, %v1420
  %v1422 = vsel %vm542, %v470, 0.0
  %v1423 = vadd.f32 %v1421, %v1422
  %v1424 = vsel %vm542, %v471, 0.0
  %v1425 = vadd.f32 %v1423, %v1424
  %v1426 = vsel %vm542, %v472, 0.0
  %v1427 = vadd.f32 %v1425, %v1426
  %v1428 = vsel %vm542, %v473, 0.0
  %v1429 = vadd.f32 %v1427, %v1428
  %v1430 = vsel %vm542, %v474, 0.0
  %v1431 = vadd.f32 %v1429, %v1430
  %v1432 = vsel %vm542, %v475, 0.0
  %v1433 = vadd.f32 %v1431, %v1432
  %v1434 = vsel %vm542, %v476, 0.0
  %v1435 = vadd.f32 %v1433, %v1434
  %v1436 = vsel %vm542, %v477, 0.0
  %v1437 = vadd.f32 %v1435, %v1436
  %v1438 = vsel %vm542, %v478, 0.0
  %v1439 = vadd.f32 %v1437, %v1438
  %v1440 = vsel %vm542, %v479, 0.0
  %v1441 = vadd.f32 %v1439, %v1440
  %v1442 = vsel %vm542, %v480, 0.0
  %v1443 = vadd.f32 %v1441, %v1442
  %v1444 = vsel %vm542, %v481, 0.0
  %v1445 = vadd.f32 %v1443, %v1444
  %v1446 = vsel %vm542, %v482, 0.0
  %v1447 = vadd.f32 %v1445, %v1446
  %v1448 = vsel %vm542, %v483, 0.0
  %v1449 = vadd.f32 %v1447, %v1448
  %v1450 = vsel %vm542, %v484, 0.0
  %v1451 = vadd.f32 %v1449, %v1450
  %v1452 = vsel %vm542, %v485, 0.0
  %v1453 = vadd.f32 %v1451, %v1452
  %v1454 = vsel %vm542, %v486, 0.0
  %v1455 = vadd.f32 %v1453, %v1454
  %v1456 = vsel %vm542, %v487, 0.0
  %v1457 = vadd.f32 %v1455, %v1456
  %v1458 = vsel %vm542, %v488, 0.0
  %v1459 = vadd.f32 %v1457, %v1458
  %v1460 = vsel %vm542, %v489, 0.0
  %v1461 = vadd.f32 %v1459, %v1460
  %v1462 = vsel %vm542, %v490, 0.0
  %v1463 = vadd.f32 %v1461, %v1462
  %v1464 = vsel %vm542, %v491, 0.0
  %v1465 = vadd.f32 %v1463, %v1464
  %v1466 = vsel %vm542, %v492, 0.0
  %v1467 = vadd.f32 %v1465, %v1466
  %v1468 = vsel %vm542, %v493, 0.0
  %v1469 = vadd.f32 %v1467, %v1468
  %v1470 = vsel %vm542, %v494, 0.0
  %v1471 = vadd.f32 %v1469, %v1470
  %v1472 = vsel %vm542, %v495, 0.0
  %v1473 = vadd.f32 %v1471, %v1472
  %v1474 = vsel %vm542, %v496, 0.0
  %v1475 = vadd.f32 %v1473, %v1474
  %v1476 = vsel %vm542, %v497, 0.0
  %v1477 = vadd.f32 %v1475, %v1476
  %v1478 = vsel %vm542, %v498, 0.0
  %v1479 = vadd.f32 %v1477, %v1478
  %v1480 = vsel %vm542, %v499, 0.0
  %v1481 = vadd.f32 %v1479, %v1480
  %v1482 = vsel %vm542, %v500, 0.0
  %v1483 = vadd.f32 %v1481, %v1482
  %v1484 = vsel %vm542, %v501, 0.0
  %v1485 = vadd.f32 %v1483, %v1484
  %v1486 = vsel %vm542, %v502, 0.0
  %v1487 = vadd.f32 %v1485, %v1486
  %v1488 = vsel %vm542, %v503, 0.0
  %v1489 = vadd.f32 %v1487, %v1488
  %v1490 = vsel %vm542, %v504, 0.0
  %v1491 = vadd.f32 %v1489, %v1490
  %v1492 = vsel %vm542, %v505, 0.0
  %v1493 = vadd.f32 %v1491, %v1492
  %v1494 = vsel %vm542, %v506, 0.0
  %v1495 = vadd.f32 %v1493, %v1494
  %v1496 = vsel %vm542, %v507, 0.0
  %v1497 = vadd.f32 %v1495, %v1496
  %v1498 = vsel %vm542, %v508, 0.0
  %v1499 = vadd.f32 %v1497, %v1498
  %v1500 = vsel %vm542, %v509, 0.0
  %v1501 = vadd.f32 %v1499, %v1500
  %v1502 = vsel %vm542, %v510, 0.0
  %v1503 = vadd.f32 %v1501, %v1502
  %v1504 = vsel %vm542, %v511, 0.0
  %v1505 = vadd.f32 %v1503, %v1504
  %v1506 = vsel %vm542, %v512, 0.0
  %v1507 = vadd.f32 %v1505, %v1506
  %v1508 = vsel %vm542, %v513, 0.0
  %v1509 = vadd.f32 %v1507, %v1508
  %v1510 = vsel %vm542, %v514, 0.0
  %v1511 = vadd.f32 %v1509, %v1510
  %v1512 = vsel %vm542, %v515, 0.0
  %v1513 = vadd.f32 %v1511, %v1512
  %v1514 = vsel %vm542, %v516, 0.0
  %v1515 = vadd.f32 %v1513, %v1514
  %v1516 = vsel %vm542, %v517, 0.0
  %v1517 = vadd.f32 %v1515, %v1516
  %v1518 = vsel %vm542, %v518, 0.0
  %v1519 = vadd.f32 %v1517, %v1518
  %v1520 = vsel %vm542, %v519, 0.0
  %v1521 = vadd.f32 %v1519, %v1520
  %v1522 = vsel %vm542, %v520, 0.0
  %v1523 = vadd.f32 %v1521, %v1522
  %v1524 = vsel %vm542, %v521, 0.0
  %v1525 = vadd.f32 %v1523, %v1524
  %v1526 = vsel %vm542, %v522, 0.0
  %v1527 = vadd.f32 %v1525, %v1526
  %v1528 = vsel %vm542, %v523, 0.0
  %v1529 = vadd.f32 %v1527, %v1528
  %v1530 = vsel %vm542, %v524, 0.0
  %v1531 = vadd.f32 %v1529, %v1530
  %v1532 = vsel %vm542, %v525, 0.0
  %v1533 = vadd.f32 %v1531, %v1532
  %v1534 = vsel %vm542, %v526, 0.0
  %v1535 = vadd.f32 %v1533, %v1534
  %v1536 = vsel %vm542, %v527, 0.0
  %v1537 = vadd.f32 %v1535, %v1536
  %v1538 = vsel %vm542, %v528, 0.0
  %v1539 = vadd.f32 %v1537, %v1538
  %v1540 = vsel %vm542, %v529, 0.0
  %v1541 = vadd.f32 %v1539, %v1540
  %v1542 = vsel %vm542, %v530, 0.0
  %v1543 = vadd.f32 %v1541, %v1542
  %v1544 = vsel %vm542, %v531, 0.0
  %v1545 = vadd.f32 %v1543, %v1544
  %v1546 = vsel %vm542, %v532, 0.0
  %v1547 = vadd.f32 %v1545, %v1546
  %v1548 = vsel %vm542, %v533, 0.0
  %v1549 = vadd.f32 %v1547, %v1548
  %v1550 = vsel %vm542, %v534, 0.0
  %v1551 = vadd.f32 %v1549, %v1550
  %v1552 = vsel %vm542, %v535, 0.0
  %v1553 = vadd.f32 %v1551, %v1552
  %v1554 = vsel %vm542, %v536, 0.0
  %v1555 = vadd.f32 %v1553, %v1554
  %v1556 = vsel %vm542, %v537, 0.0
  %v1557 = vadd.f32 %v1555, %v1556
  %v1558 = vsel %vm542, %v538, 0.0
  %v1559 = vadd.f32 %v1557, %v1558
  %v1560 = vsel %vm542, %v539, 0.0
  %v1561 = vadd.f32 %v1559, %v1560
  %v1562 = vsel %vm542, %v540, 0.0
  %v1563 = vadd.f32 %v1561, %v1562
  %v1564 = vsel %vm542, %v541, 0.0
  %v1565 = vadd.f32 %v1563, %v1564
  %v1566 = vrot.slane %v1565, 4
  %v1567 = vadd.f32 %v1565, %v1566
  %v1568 = vrot.slane %v1567, 2
  %v1569 = vadd.f32 %v1567, %v1568
  %v1570 = vrot.slane %v1569, 1
  %v1571 = vadd.f32 %v1569, %v1570
  %v1572 = vmul.f32 %v30, %v30
  %v1573 = vmul.f32 %v31, %v31
  %v1574 = vmul.f32 %v32, %v32
  %v1575 = vmul.f32 %v33, %v33
  %v1576 = vmul.f32 %v34, %v34
  %v1577 = vmul.f32 %v35, %v35
  %v1578 = vmul.f32 %v36, %v36
  %v1579 = vmul.f32 %v37, %v37
  %v1580 = vmul.f32 %v38, %v38
  %v1581 = vmul.f32 %v39, %v39
  %v1582 = vmul.f32 %v40, %v40
  %v1583 = vmul.f32 %v41, %v41
  %v1584 = vmul.f32 %v42, %v42
  %v1585 = vmul.f32 %v43, %v43
  %v1586 = vmul.f32 %v44, %v44
  %v1587 = vmul.f32 %v45, %v45
  %v1588 = vmul.f32 %v46, %v46
  %v1589 = vmul.f32 %v47, %v47
  %v1590 = vmul.f32 %v48, %v48
  %v1591 = vmul.f32 %v49, %v49
  %v1592 = vmul.f32 %v50, %v50
  %v1593 = vmul.f32 %v51, %v51
  %v1594 = vmul.f32 %v52, %v52
  %v1595 = vmul.f32 %v53, %v53
  %v1596 = vmul.f32 %v54, %v54
  %v1597 = vmul.f32 %v55, %v55
  %v1598 = vmul.f32 %v56, %v56
  %v1599 = vmul.f32 %v57, %v57
  %v1600 = vmul.f32 %v58, %v58
  %v1601 = vmul.f32 %v59, %v59
  %v1602 = vmul.f32 %v60, %v60
  %v1603 = vmul.f32 %v61, %v61
  %v1604 = vmul.f32 %v62, %v62
  %v1605 = vmul.f32 %v63, %v63
  %v1606 = vmul.f32 %v64, %v64
  %v1607 = vmul.f32 %v65, %v65
  %v1608 = vmul.f32 %v66, %v66
  %v1609 = vmul.f32 %v67, %v67
  %v1610 = vmul.f32 %v68, %v68
  %v1611 = vmul.f32 %v69, %v69
  %v1612 = vmul.f32 %v70, %v70
  %v1613 = vmul.f32 %v71, %v71
  %v1614 = vmul.f32 %v72, %v72
  %v1615 = vmul.f32 %v73, %v73
  %v1616 = vmul.f32 %v74, %v74
  %v1617 = vmul.f32 %v75, %v75
  %v1618 = vmul.f32 %v76, %v76
  %v1619 = vmul.f32 %v77, %v77
  %v1620 = vmul.f32 %v78, %v78
  %v1621 = vmul.f32 %v79, %v79
  %v1622 = vmul.f32 %v80, %v80
  %v1623 = vmul.f32 %v81, %v81
  %v1624 = vmul.f32 %v82, %v82
  %v1625 = vmul.f32 %v83, %v83
  %v1626 = vmul.f32 %v84, %v84
  %v1627 = vmul.f32 %v85, %v85
  %v1628 = vmul.f32 %v86, %v86
  %v1629 = vmul.f32 %v87, %v87
  %v1630 = vmul.f32 %v88, %v88
  %v1631 = vmul.f32 %v89, %v89
  %v1632 = vmul.f32 %v90, %v90
  %v1633 = vmul.f32 %v91, %v91
  %v1634 = vmul.f32 %v92, %v92
  %v1635 = vmul.f32 %v93, %v93
  %v1636 = vmul.f32 %v94, %v94
  %v1637 = vmul.f32 %v95, %v95
  %v1638 = vmul.f32 %v96, %v96
  %v1639 = vmul.f32 %v97, %v97
  %v1640 = vmul.f32 %v98, %v98
  %v1641 = vmul.f32 %v99, %v99
  %v1642 = vmul.f32 %v100, %v100
  %v1643 = vmul.f32 %v101, %v101
  %v1644 = vmul.f32 %v102, %v102
  %v1645 = vmul.f32 %v103, %v103
  %v1646 = vmul.f32 %v104, %v104
  %v1647 = vmul.f32 %v105, %v105
  %v1648 = vmul.f32 %v106, %v106
  %v1649 = vmul.f32 %v107, %v107
  %v1650 = vmul.f32 %v108, %v108
  %v1651 = vmul.f32 %v109, %v109
  %v1652 = vmul.f32 %v110, %v110
  %v1653 = vmul.f32 %v111, %v111
  %v1654 = vmul.f32 %v112, %v112
  %v1655 = vmul.f32 %v113, %v113
  %v1656 = vmul.f32 %v114, %v114
  %v1657 = vmul.f32 %v115, %v115
  %v1658 = vmul.f32 %v116, %v116
  %v1659 = vmul.f32 %v117, %v117
  %v1660 = vmul.f32 %v118, %v118
  %v1661 = vmul.f32 %v119, %v119
  %v1662 = vmul.f32 %v120, %v120
  %v1663 = vmul.f32 %v121, %v121
  %v1664 = vmul.f32 %v122, %v122
  %v1665 = vmul.f32 %v123, %v123
  %v1666 = vmul.f32 %v124, %v124
  %v1667 = vmul.f32 %v125, %v125
  %v1668 = vmul.f32 %v126, %v126
  %v1669 = vmul.f32 %v127, %v127
  %v1670 = vmul.f32 %v128, %v128
  %v1671 = vmul.f32 %v129, %v129
  %v1672 = vmul.f32 %v130, %v130
  %v1673 = vmul.f32 %v131, %v131
  %v1674 = vmul.f32 %v132, %v132
  %v1675 = vmul.f32 %v133, %v133
  %v1676 = vmul.f32 %v134, %v134
  %v1677 = vmul.f32 %v135, %v135
  %v1678 = vmul.f32 %v136, %v136
  %v1679 = vmul.f32 %v137, %v137
  %v1680 = vmul.f32 %v138, %v138
  %v1681 = vmul.f32 %v139, %v139
  %v1682 = vmul.f32 %v140, %v140
  %v1683 = vmul.f32 %v141, %v141
  %v1684 = vmul.f32 %v142, %v142
  %v1685 = vmul.f32 %v143, %v143
  %v1686 = vmul.f32 %v144, %v144
  %v1687 = vmul.f32 %v145, %v145
  %v1688 = vmul.f32 %v146, %v146
  %v1689 = vmul.f32 %v147, %v147
  %v1690 = vmul.f32 %v148, %v148
  %v1691 = vmul.f32 %v149, %v149
  %v1692 = vmul.f32 %v150, %v150
  %v1693 = vmul.f32 %v151, %v151
  %v1694 = vmul.f32 %v152, %v152
  %v1695 = vmul.f32 %v153, %v153
  %v1696 = vmul.f32 %v154, %v154
  %v1697 = vmul.f32 %v155, %v155
  %v1698 = vmul.f32 %v156, %v156
  %v1699 = vmul.f32 %v157, %v157
  %v1700 = vmul.f32 %v158, %v158
  %v1701 = vmul.f32 %v159, %v159
  %v1702 = vmul.f32 %v160, %v160
  %v1703 = vmul.f32 %v161, %v161
  %v1704 = vmul.f32 %v162, %v162
  %v1705 = vmul.f32 %v163, %v163
  %v1706 = vmul.f32 %v164, %v164
  %v1707 = vmul.f32 %v165, %v165
  %v1708 = vmul.f32 %v166, %v166
  %v1709 = vmul.f32 %v167, %v167
  %v1710 = vmul.f32 %v168, %v168
  %v1711 = vmul.f32 %v169, %v169
  %v1712 = vmul.f32 %v170, %v170
  %v1713 = vmul.f32 %v171, %v171
  %v1714 = vmul.f32 %v172, %v172
  %v1715 = vmul.f32 %v173, %v173
  %v1716 = vmul.f32 %v174, %v174
  %v1717 = vmul.f32 %v175, %v175
  %v1718 = vmul.f32 %v176, %v176
  %v1719 = vmul.f32 %v177, %v177
  %v1720 = vmul.f32 %v178, %v178
  %v1721 = vmul.f32 %v179, %v179
  %v1722 = vmul.f32 %v180, %v180
  %v1723 = vmul.f32 %v181, %v181
  %v1724 = vmul.f32 %v182, %v182
  %v1725 = vmul.f32 %v183, %v183
  %v1726 = vmul.f32 %v184, %v184
  %v1727 = vmul.f32 %v185, %v185
  %v1728 = vmul.f32 %v186, %v186
  %v1729 = vmul.f32 %v187, %v187
  %v1730 = vmul.f32 %v188, %v188
  %v1731 = vmul.f32 %v189, %v189
  %v1732 = vmul.f32 %v190, %v190
  %v1733 = vmul.f32 %v191, %v191
  %v1734 = vmul.f32 %v192, %v192
  %v1735 = vmul.f32 %v193, %v193
  %v1736 = vmul.f32 %v194, %v194
  %v1737 = vmul.f32 %v195, %v195
  %v1738 = vmul.f32 %v196, %v196
  %v1739 = vmul.f32 %v197, %v197
  %v1740 = vmul.f32 %v198, %v198
  %v1741 = vmul.f32 %v199, %v199
  %v1742 = vmul.f32 %v200, %v200
  %v1743 = vmul.f32 %v201, %v201
  %v1744 = vmul.f32 %v202, %v202
  %v1745 = vmul.f32 %v203, %v203
  %v1746 = vmul.f32 %v204, %v204
  %v1747 = vmul.f32 %v205, %v205
  %v1748 = vmul.f32 %v206, %v206
  %v1749 = vmul.f32 %v207, %v207
  %v1750 = vmul.f32 %v208, %v208
  %v1751 = vmul.f32 %v209, %v209
  %v1752 = vmul.f32 %v210, %v210
  %v1753 = vmul.f32 %v211, %v211
  %v1754 = vmul.f32 %v212, %v212
  %v1755 = vmul.f32 %v213, %v213
  %v1756 = vmul.f32 %v214, %v214
  %v1757 = vmul.f32 %v215, %v215
  %v1758 = vmul.f32 %v216, %v216
  %v1759 = vmul.f32 %v217, %v217
  %v1760 = vmul.f32 %v218, %v218
  %v1761 = vmul.f32 %v219, %v219
  %v1762 = vmul.f32 %v220, %v220
  %v1763 = vmul.f32 %v221, %v221
  %v1764 = vmul.f32 %v222, %v222
  %v1765 = vmul.f32 %v223, %v223
  %v1766 = vmul.f32 %v224, %v224
  %v1767 = vmul.f32 %v225, %v225
  %v1768 = vmul.f32 %v226, %v226
  %v1769 = vmul.f32 %v227, %v227
  %v1770 = vmul.f32 %v228, %v228
  %v1771 = vmul.f32 %v229, %v229
  %v1772 = vmul.f32 %v230, %v230
  %v1773 = vmul.f32 %v231, %v231
  %v1774 = vmul.f32 %v232, %v232
  %v1775 = vmul.f32 %v233, %v233
  %v1776 = vmul.f32 %v234, %v234
  %v1777 = vmul.f32 %v235, %v235
  %v1778 = vmul.f32 %v236, %v236
  %v1779 = vmul.f32 %v237, %v237
  %v1780 = vmul.f32 %v238, %v238
  %v1781 = vmul.f32 %v239, %v239
  %v1782 = vmul.f32 %v240, %v240
  %v1783 = vmul.f32 %v241, %v241
  %v1784 = vmul.f32 %v242, %v242
  %v1785 = vmul.f32 %v243, %v243
  %v1786 = vmul.f32 %v244, %v244
  %v1787 = vmul.f32 %v245, %v245
  %v1788 = vmul.f32 %v246, %v246
  %v1789 = vmul.f32 %v247, %v247
  %v1790 = vmul.f32 %v248, %v248
  %v1791 = vmul.f32 %v249, %v249
  %v1792 = vmul.f32 %v250, %v250
  %v1793 = vmul.f32 %v251, %v251
  %v1794 = vmul.f32 %v252, %v252
  %v1795 = vmul.f32 %v253, %v253
  %v1796 = vmul.f32 %v254, %v254
  %v1797 = vmul.f32 %v255, %v255
  %v1798 = vmul.f32 %v256, %v256
  %v1799 = vmul.f32 %v257, %v257
  %v1800 = vmul.f32 %v258, %v258
  %v1801 = vmul.f32 %v259, %v259
  %v1802 = vmul.f32 %v260, %v260
  %v1803 = vmul.f32 %v261, %v261
  %v1804 = vmul.f32 %v262, %v262
  %v1805 = vmul.f32 %v263, %v263
  %v1806 = vmul.f32 %v264, %v264
  %v1807 = vmul.f32 %v265, %v265
  %v1808 = vmul.f32 %v266, %v266
  %v1809 = vmul.f32 %v267, %v267
  %v1810 = vmul.f32 %v268, %v268
  %v1811 = vmul.f32 %v269, %v269
  %v1812 = vmul.f32 %v270, %v270
  %v1813 = vmul.f32 %v271, %v271
  %v1814 = vmul.f32 %v272, %v272
  %v1815 = vmul.f32 %v273, %v273
  %v1816 = vmul.f32 %v274, %v274
  %v1817 = vmul.f32 %v275, %v275
  %v1818 = vmul.f32 %v276, %v276
  %v1819 = vmul.f32 %v277, %v277
  %v1820 = vmul.f32 %v278, %v278
  %v1821 = vmul.f32 %v279, %v279
  %v1822 = vmul.f32 %v280, %v280
  %v1823 = vmul.f32 %v281, %v281
  %v1824 = vmul.f32 %v282, %v282
  %v1825 = vmul.f32 %v283, %v283
  %v1826 = vmul.f32 %v284, %v284
  %v1827 = vmul.f32 %v285, %v285
  %v1828 = vmul.f32 %v286, %v286
  %v1829 = vmul.f32 %v287, %v287
  %v1830 = vmul.f32 %v288, %v288
  %v1831 = vmul.f32 %v289, %v289
  %v1832 = vmul.f32 %v290, %v290
  %v1833 = vmul.f32 %v291, %v291
  %v1834 = vmul.f32 %v292, %v292
  %v1835 = vmul.f32 %v293, %v293
  %v1836 = vmul.f32 %v294, %v294
  %v1837 = vmul.f32 %v295, %v295
  %v1838 = vmul.f32 %v296, %v296
  %v1839 = vmul.f32 %v297, %v297
  %v1840 = vmul.f32 %v298, %v298
  %v1841 = vmul.f32 %v299, %v299
  %v1842 = vmul.f32 %v300, %v300
  %v1843 = vmul.f32 %v301, %v301
  %v1844 = vmul.f32 %v302, %v302
  %v1845 = vmul.f32 %v303, %v303
  %v1846 = vmul.f32 %v304, %v304
  %v1847 = vmul.f32 %v305, %v305
  %v1848 = vmul.f32 %v306, %v306
  %v1849 = vmul.f32 %v307, %v307
  %v1850 = vmul.f32 %v308, %v308
  %v1851 = vmul.f32 %v309, %v309
  %v1852 = vmul.f32 %v310, %v310
  %v1853 = vmul.f32 %v311, %v311
  %v1854 = vmul.f32 %v312, %v312
  %v1855 = vmul.f32 %v313, %v313
  %v1856 = vmul.f32 %v314, %v314
  %v1857 = vmul.f32 %v315, %v315
  %v1858 = vmul.f32 %v316, %v316
  %v1859 = vmul.f32 %v317, %v317
  %v1860 = vmul.f32 %v318, %v318
  %v1861 = vmul.f32 %v319, %v319
  %v1862 = vmul.f32 %v320, %v320
  %v1863 = vmul.f32 %v321, %v321
  %v1864 = vmul.f32 %v322, %v322
  %v1865 = vmul.f32 %v323, %v323
  %v1866 = vmul.f32 %v324, %v324
  %v1867 = vmul.f32 %v325, %v325
  %v1868 = vmul.f32 %v326, %v326
  %v1869 = vmul.f32 %v327, %v327
  %v1870 = vmul.f32 %v328, %v328
  %v1871 = vmul.f32 %v329, %v329
  %v1872 = vmul.f32 %v330, %v330
  %v1873 = vmul.f32 %v331, %v331
  %v1874 = vmul.f32 %v332, %v332
  %v1875 = vmul.f32 %v333, %v333
  %v1876 = vmul.f32 %v334, %v334
  %v1877 = vmul.f32 %v335, %v335
  %v1878 = vmul.f32 %v336, %v336
  %v1879 = vmul.f32 %v337, %v337
  %v1880 = vmul.f32 %v338, %v338
  %v1881 = vmul.f32 %v339, %v339
  %v1882 = vmul.f32 %v340, %v340
  %v1883 = vmul.f32 %v341, %v341
  %v1884 = vmul.f32 %v342, %v342
  %v1885 = vmul.f32 %v343, %v343
  %v1886 = vmul.f32 %v344, %v344
  %v1887 = vmul.f32 %v345, %v345
  %v1888 = vmul.f32 %v346, %v346
  %v1889 = vmul.f32 %v347, %v347
  %v1890 = vmul.f32 %v348, %v348
  %v1891 = vmul.f32 %v349, %v349
  %v1892 = vmul.f32 %v350, %v350
  %v1893 = vmul.f32 %v351, %v351
  %v1894 = vmul.f32 %v352, %v352
  %v1895 = vmul.f32 %v353, %v353
  %v1896 = vmul.f32 %v354, %v354
  %v1897 = vmul.f32 %v355, %v355
  %v1898 = vmul.f32 %v356, %v356
  %v1899 = vmul.f32 %v357, %v357
  %v1900 = vmul.f32 %v358, %v358
  %v1901 = vmul.f32 %v359, %v359
  %v1902 = vmul.f32 %v360, %v360
  %v1903 = vmul.f32 %v361, %v361
  %v1904 = vmul.f32 %v362, %v362
  %v1905 = vmul.f32 %v363, %v363
  %v1906 = vmul.f32 %v364, %v364
  %v1907 = vmul.f32 %v365, %v365
  %v1908 = vmul.f32 %v366, %v366
  %v1909 = vmul.f32 %v367, %v367
  %v1910 = vmul.f32 %v368, %v368
  %v1911 = vmul.f32 %v369, %v369
  %v1912 = vmul.f32 %v370, %v370
  %v1913 = vmul.f32 %v371, %v371
  %v1914 = vmul.f32 %v372, %v372
  %v1915 = vmul.f32 %v373, %v373
  %v1916 = vmul.f32 %v374, %v374
  %v1917 = vmul.f32 %v375, %v375
  %v1918 = vmul.f32 %v376, %v376
  %v1919 = vmul.f32 %v377, %v377
  %v1920 = vmul.f32 %v378, %v378
  %v1921 = vmul.f32 %v379, %v379
  %v1922 = vmul.f32 %v380, %v380
  %v1923 = vmul.f32 %v381, %v381
  %v1924 = vmul.f32 %v382, %v382
  %v1925 = vmul.f32 %v383, %v383
  %v1926 = vmul.f32 %v384, %v384
  %v1927 = vmul.f32 %v385, %v385
  %v1928 = vmul.f32 %v386, %v386
  %v1929 = vmul.f32 %v387, %v387
  %v1930 = vmul.f32 %v388, %v388
  %v1931 = vmul.f32 %v389, %v389
  %v1932 = vmul.f32 %v390, %v390
  %v1933 = vmul.f32 %v391, %v391
  %v1934 = vmul.f32 %v392, %v392
  %v1935 = vmul.f32 %v393, %v393
  %v1936 = vmul.f32 %v394, %v394
  %v1937 = vmul.f32 %v395, %v395
  %v1938 = vmul.f32 %v396, %v396
  %v1939 = vmul.f32 %v397, %v397
  %v1940 = vmul.f32 %v398, %v398
  %v1941 = vmul.f32 %v399, %v399
  %v1942 = vmul.f32 %v400, %v400
  %v1943 = vmul.f32 %v401, %v401
  %v1944 = vmul.f32 %v402, %v402
  %v1945 = vmul.f32 %v403, %v403
  %v1946 = vmul.f32 %v404, %v404
  %v1947 = vmul.f32 %v405, %v405
  %v1948 = vmul.f32 %v406, %v406
  %v1949 = vmul.f32 %v407, %v407
  %v1950 = vmul.f32 %v408, %v408
  %v1951 = vmul.f32 %v409, %v409
  %v1952 = vmul.f32 %v410, %v410
  %v1953 = vmul.f32 %v411, %v411
  %v1954 = vmul.f32 %v412, %v412
  %v1955 = vmul.f32 %v413, %v413
  %v1956 = vmul.f32 %v414, %v414
  %v1957 = vmul.f32 %v415, %v415
  %v1958 = vmul.f32 %v416, %v416
  %v1959 = vmul.f32 %v417, %v417
  %v1960 = vmul.f32 %v418, %v418
  %v1961 = vmul.f32 %v419, %v419
  %v1962 = vmul.f32 %v420, %v420
  %v1963 = vmul.f32 %v421, %v421
  %v1964 = vmul.f32 %v422, %v422
  %v1965 = vmul.f32 %v423, %v423
  %v1966 = vmul.f32 %v424, %v424
  %v1967 = vmul.f32 %v425, %v425
  %v1968 = vmul.f32 %v426, %v426
  %v1969 = vmul.f32 %v427, %v427
  %v1970 = vmul.f32 %v428, %v428
  %v1971 = vmul.f32 %v429, %v429
  %v1972 = vmul.f32 %v430, %v430
  %v1973 = vmul.f32 %v431, %v431
  %v1974 = vmul.f32 %v432, %v432
  %v1975 = vmul.f32 %v433, %v433
  %v1976 = vmul.f32 %v434, %v434
  %v1977 = vmul.f32 %v435, %v435
  %v1978 = vmul.f32 %v436, %v436
  %v1979 = vmul.f32 %v437, %v437
  %v1980 = vmul.f32 %v438, %v438
  %v1981 = vmul.f32 %v439, %v439
  %v1982 = vmul.f32 %v440, %v440
  %v1983 = vmul.f32 %v441, %v441
  %v1984 = vmul.f32 %v442, %v442
  %v1985 = vmul.f32 %v443, %v443
  %v1986 = vmul.f32 %v444, %v444
  %v1987 = vmul.f32 %v445, %v445
  %v1988 = vmul.f32 %v446, %v446
  %v1989 = vmul.f32 %v447, %v447
  %v1990 = vmul.f32 %v448, %v448
  %v1991 = vmul.f32 %v449, %v449
  %v1992 = vmul.f32 %v450, %v450
  %v1993 = vmul.f32 %v451, %v451
  %v1994 = vmul.f32 %v452, %v452
  %v1995 = vmul.f32 %v453, %v453
  %v1996 = vmul.f32 %v454, %v454
  %v1997 = vmul.f32 %v455, %v455
  %v1998 = vmul.f32 %v456, %v456
  %v1999 = vmul.f32 %v457, %v457
  %v2000 = vmul.f32 %v458, %v458
  %v2001 = vmul.f32 %v459, %v459
  %v2002 = vmul.f32 %v460, %v460
  %v2003 = vmul.f32 %v461, %v461
  %v2004 = vmul.f32 %v462, %v462
  %v2005 = vmul.f32 %v463, %v463
  %v2006 = vmul.f32 %v464, %v464
  %v2007 = vmul.f32 %v465, %v465
  %v2008 = vmul.f32 %v466, %v466
  %v2009 = vmul.f32 %v467, %v467
  %v2010 = vmul.f32 %v468, %v468
  %v2011 = vmul.f32 %v469, %v469
  %v2012 = vmul.f32 %v470, %v470
  %v2013 = vmul.f32 %v471, %v471
  %v2014 = vmul.f32 %v472, %v472
  %v2015 = vmul.f32 %v473, %v473
  %v2016 = vmul.f32 %v474, %v474
  %v2017 = vmul.f32 %v475, %v475
  %v2018 = vmul.f32 %v476, %v476
  %v2019 = vmul.f32 %v477, %v477
  %v2020 = vmul.f32 %v478, %v478
  %v2021 = vmul.f32 %v479, %v479
  %v2022 = vmul.f32 %v480, %v480
  %v2023 = vmul.f32 %v481, %v481
  %v2024 = vmul.f32 %v482, %v482
  %v2025 = vmul.f32 %v483, %v483
  %v2026 = vmul.f32 %v484, %v484
  %v2027 = vmul.f32 %v485, %v485
  %v2028 = vmul.f32 %v486, %v486
  %v2029 = vmul.f32 %v487, %v487
  %v2030 = vmul.f32 %v488, %v488
  %v2031 = vmul.f32 %v489, %v489
  %v2032 = vmul.f32 %v490, %v490
  %v2033 = vmul.f32 %v491, %v491
  %v2034 = vmul.f32 %v492, %v492
  %v2035 = vmul.f32 %v493, %v493
  %v2036 = vmul.f32 %v494, %v494
  %v2037 = vmul.f32 %v495, %v495
  %v2038 = vmul.f32 %v496, %v496
  %v2039 = vmul.f32 %v497, %v497
  %v2040 = vmul.f32 %v498, %v498
  %v2041 = vmul.f32 %v499, %v499
  %v2042 = vmul.f32 %v500, %v500
  %v2043 = vmul.f32 %v501, %v501
  %v2044 = vmul.f32 %v502, %v502
  %v2045 = vmul.f32 %v503, %v503
  %v2046 = vmul.f32 %v504, %v504
  %v2047 = vmul.f32 %v505, %v505
  %v2048 = vmul.f32 %v506, %v506
  %v2049 = vmul.f32 %v507, %v507
  %v2050 = vmul.f32 %v508, %v508
  %v2051 = vmul.f32 %v509, %v509
  %v2052 = vmul.f32 %v510, %v510
  %v2053 = vmul.f32 %v511, %v511
  %v2054 = vmul.f32 %v512, %v512
  %v2055 = vmul.f32 %v513, %v513
  %v2056 = vmul.f32 %v514, %v514
  %v2057 = vmul.f32 %v515, %v515
  %v2058 = vmul.f32 %v516, %v516
  %v2059 = vmul.f32 %v517, %v517
  %v2060 = vmul.f32 %v518, %v518
  %v2061 = vmul.f32 %v519, %v519
  %v2062 = vmul.f32 %v520, %v520
  %v2063 = vmul.f32 %v521, %v521
  %v2064 = vmul.f32 %v522, %v522
  %v2065 = vmul.f32 %v523, %v523
  %v2066 = vmul.f32 %v524, %v524
  %v2067 = vmul.f32 %v525, %v525
  %v2068 = vmul.f32 %v526, %v526
  %v2069 = vmul.f32 %v527, %v527
  %v2070 = vmul.f32 %v528, %v528
  %v2071 = vmul.f32 %v529, %v529
  %v2072 = vmul.f32 %v530, %v530
  %v2073 = vmul.f32 %v531, %v531
  %v2074 = vmul.f32 %v532, %v532
  %v2075 = vmul.f32 %v533, %v533
  %v2076 = vmul.f32 %v534, %v534
  %v2077 = vmul.f32 %v535, %v535
  %v2078 = vmul.f32 %v536, %v536
  %v2079 = vmul.f32 %v537, %v537
  %v2080 = vmul.f32 %v538, %v538
  %v2081 = vmul.f32 %v539, %v539
  %v2082 = vmul.f32 %v540, %v540
  %v2083 = vmul.f32 %v541, %v541
  %v2084 = vsel %vm542, %v1572, 0.0
  %v2085 = vsel %vm542, %v1573, 0.0
  %v2086 = vadd.f32 %v2084, %v2085
  %v2087 = vsel %vm542, %v1574, 0.0
  %v2088 = vadd.f32 %v2086, %v2087
  %v2089 = vsel %vm542, %v1575, 0.0
  %v2090 = vadd.f32 %v2088, %v2089
  %v2091 = vsel %vm542, %v1576, 0.0
  %v2092 = vadd.f32 %v2090, %v2091
  %v2093 = vsel %vm542, %v1577, 0.0
  %v2094 = vadd.f32 %v2092, %v2093
  %v2095 = vsel %vm542, %v1578, 0.0
  %v2096 = vadd.f32 %v2094, %v2095
  %v2097 = vsel %vm542, %v1579, 0.0
  %v2098 = vadd.f32 %v2096, %v2097
  %v2099 = vsel %vm542, %v1580, 0.0
  %v2100 = vadd.f32 %v2098, %v2099
  %v2101 = vsel %vm542, %v1581, 0.0
  %v2102 = vadd.f32 %v2100, %v2101
  %v2103 = vsel %vm542, %v1582, 0.0
  %v2104 = vadd.f32 %v2102, %v2103
  %v2105 = vsel %vm542, %v1583, 0.0
  %v2106 = vadd.f32 %v2104, %v2105
  %v2107 = vsel %vm542, %v1584, 0.0
  %v2108 = vadd.f32 %v2106, %v2107
  %v2109 = vsel %vm542, %v1585, 0.0
  %v2110 = vadd.f32 %v2108, %v2109
  %v2111 = vsel %vm542, %v1586, 0.0
  %v2112 = vadd.f32 %v2110, %v2111
  %v2113 = vsel %vm542, %v1587, 0.0
  %v2114 = vadd.f32 %v2112, %v2113
  %v2115 = vsel %vm542, %v1588, 0.0
  %v2116 = vadd.f32 %v2114, %v2115
  %v2117 = vsel %vm542, %v1589, 0.0
  %v2118 = vadd.f32 %v2116, %v2117
  %v2119 = vsel %vm542, %v1590, 0.0
  %v2120 = vadd.f32 %v2118, %v2119
  %v2121 = vsel %vm542, %v1591, 0.0
  %v2122 = vadd.f32 %v2120, %v2121
  %v2123 = vsel %vm542, %v1592, 0.0
  %v2124 = vadd.f32 %v2122, %v2123
  %v2125 = vsel %vm542, %v1593, 0.0
  %v2126 = vadd.f32 %v2124, %v2125
  %v2127 = vsel %vm542, %v1594, 0.0
  %v2128 = vadd.f32 %v2126, %v2127
  %v2129 = vsel %vm542, %v1595, 0.0
  %v2130 = vadd.f32 %v2128, %v2129
  %v2131 = vsel %vm542, %v1596, 0.0
  %v2132 = vadd.f32 %v2130, %v2131
  %v2133 = vsel %vm542, %v1597, 0.0
  %v2134 = vadd.f32 %v2132, %v2133
  %v2135 = vsel %vm542, %v1598, 0.0
  %v2136 = vadd.f32 %v2134, %v2135
  %v2137 = vsel %vm542, %v1599, 0.0
  %v2138 = vadd.f32 %v2136, %v2137
  %v2139 = vsel %vm542, %v1600, 0.0
  %v2140 = vadd.f32 %v2138, %v2139
  %v2141 = vsel %vm542, %v1601, 0.0
  %v2142 = vadd.f32 %v2140, %v2141
  %v2143 = vsel %vm542, %v1602, 0.0
  %v2144 = vadd.f32 %v2142, %v2143
  %v2145 = vsel %vm542, %v1603, 0.0
  %v2146 = vadd.f32 %v2144, %v2145
  %v2147 = vsel %vm542, %v1604, 0.0
  %v2148 = vadd.f32 %v2146, %v2147
  %v2149 = vsel %vm542, %v1605, 0.0
  %v2150 = vadd.f32 %v2148, %v2149
  %v2151 = vsel %vm542, %v1606, 0.0
  %v2152 = vadd.f32 %v2150, %v2151
  %v2153 = vsel %vm542, %v1607, 0.0
  %v2154 = vadd.f32 %v2152, %v2153
  %v2155 = vsel %vm542, %v1608, 0.0
  %v2156 = vadd.f32 %v2154, %v2155
  %v2157 = vsel %vm542, %v1609, 0.0
  %v2158 = vadd.f32 %v2156, %v2157
  %v2159 = vsel %vm542, %v1610, 0.0
  %v2160 = vadd.f32 %v2158, %v2159
  %v2161 = vsel %vm542, %v1611, 0.0
  %v2162 = vadd.f32 %v2160, %v2161
  %v2163 = vsel %vm542, %v1612, 0.0
  %v2164 = vadd.f32 %v2162, %v2163
  %v2165 = vsel %vm542, %v1613, 0.0
  %v2166 = vadd.f32 %v2164, %v2165
  %v2167 = vsel %vm542, %v1614, 0.0
  %v2168 = vadd.f32 %v2166, %v2167
  %v2169 = vsel %vm542, %v1615, 0.0
  %v2170 = vadd.f32 %v2168, %v2169
  %v2171 = vsel %vm542, %v1616, 0.0
  %v2172 = vadd.f32 %v2170, %v2171
  %v2173 = vsel %vm542, %v1617, 0.0
  %v2174 = vadd.f32 %v2172, %v2173
  %v2175 = vsel %vm542, %v1618, 0.0
  %v2176 = vadd.f32 %v2174, %v2175
  %v2177 = vsel %vm542, %v1619, 0.0
  %v2178 = vadd.f32 %v2176, %v2177
  %v2179 = vsel %vm542, %v1620, 0.0
  %v2180 = vadd.f32 %v2178, %v2179
  %v2181 = vsel %vm542, %v1621, 0.0
  %v2182 = vadd.f32 %v2180, %v2181
  %v2183 = vsel %vm542, %v1622, 0.0
  %v2184 = vadd.f32 %v2182, %v2183
  %v2185 = vsel %vm542, %v1623, 0.0
  %v2186 = vadd.f32 %v2184, %v2185
  %v2187 = vsel %vm542, %v1624, 0.0
  %v2188 = vadd.f32 %v2186, %v2187
  %v2189 = vsel %vm542, %v1625, 0.0
  %v2190 = vadd.f32 %v2188, %v2189
  %v2191 = vsel %vm542, %v1626, 0.0
  %v2192 = vadd.f32 %v2190, %v2191
  %v2193 = vsel %vm542, %v1627, 0.0
  %v2194 = vadd.f32 %v2192, %v2193
  %v2195 = vsel %vm542, %v1628, 0.0
  %v2196 = vadd.f32 %v2194, %v2195
  %v2197 = vsel %vm542, %v1629, 0.0
  %v2198 = vadd.f32 %v2196, %v2197
  %v2199 = vsel %vm542, %v1630, 0.0
  %v2200 = vadd.f32 %v2198, %v2199
  %v2201 = vsel %vm542, %v1631, 0.0
  %v2202 = vadd.f32 %v2200, %v2201
  %v2203 = vsel %vm542, %v1632, 0.0
  %v2204 = vadd.f32 %v2202, %v2203
  %v2205 = vsel %vm542, %v1633, 0.0
  %v2206 = vadd.f32 %v2204, %v2205
  %v2207 = vsel %vm542, %v1634, 0.0
  %v2208 = vadd.f32 %v2206, %v2207
  %v2209 = vsel %vm542, %v1635, 0.0
  %v2210 = vadd.f32 %v2208, %v2209
  %v2211 = vsel %vm542, %v1636, 0.0
  %v2212 = vadd.f32 %v2210, %v2211
  %v2213 = vsel %vm542, %v1637, 0.0
  %v2214 = vadd.f32 %v2212, %v2213
  %v2215 = vsel %vm542, %v1638, 0.0
  %v2216 = vadd.f32 %v2214, %v2215
  %v2217 = vsel %vm542, %v1639, 0.0
  %v2218 = vadd.f32 %v2216, %v2217
  %v2219 = vsel %vm542, %v1640, 0.0
  %v2220 = vadd.f32 %v2218, %v2219
  %v2221 = vsel %vm542, %v1641, 0.0
  %v2222 = vadd.f32 %v2220, %v2221
  %v2223 = vsel %vm542, %v1642, 0.0
  %v2224 = vadd.f32 %v2222, %v2223
  %v2225 = vsel %vm542, %v1643, 0.0
  %v2226 = vadd.f32 %v2224, %v2225
  %v2227 = vsel %vm542, %v1644, 0.0
  %v2228 = vadd.f32 %v2226, %v2227
  %v2229 = vsel %vm542, %v1645, 0.0
  %v2230 = vadd.f32 %v2228, %v2229
  %v2231 = vsel %vm542, %v1646, 0.0
  %v2232 = vadd.f32 %v2230, %v2231
  %v2233 = vsel %vm542, %v1647, 0.0
  %v2234 = vadd.f32 %v2232, %v2233
  %v2235 = vsel %vm542, %v1648, 0.0
  %v2236 = vadd.f32 %v2234, %v2235
  %v2237 = vsel %vm542, %v1649, 0.0
  %v2238 = vadd.f32 %v2236, %v2237
  %v2239 = vsel %vm542, %v1650, 0.0
  %v2240 = vadd.f32 %v2238, %v2239
  %v2241 = vsel %vm542, %v1651, 0.0
  %v2242 = vadd.f32 %v2240, %v2241
  %v2243 = vsel %vm542, %v1652, 0.0
  %v2244 = vadd.f32 %v2242, %v2243
  %v2245 = vsel %vm542, %v1653, 0.0
  %v2246 = vadd.f32 %v2244, %v2245
  %v2247 = vsel %vm542, %v1654, 0.0
  %v2248 = vadd.f32 %v2246, %v2247
  %v2249 = vsel %vm542, %v1655, 0.0
  %v2250 = vadd.f32 %v2248, %v2249
  %v2251 = vsel %vm542, %v1656, 0.0
  %v2252 = vadd.f32 %v2250, %v2251
  %v2253 = vsel %vm542, %v1657, 0.0
  %v2254 = vadd.f32 %v2252, %v2253
  %v2255 = vsel %vm542, %v1658, 0.0
  %v2256 = vadd.f32 %v2254, %v2255
  %v2257 = vsel %vm542, %v1659, 0.0
  %v2258 = vadd.f32 %v2256, %v2257
  %v2259 = vsel %vm542, %v1660, 0.0
  %v2260 = vadd.f32 %v2258, %v2259
  %v2261 = vsel %vm542, %v1661, 0.0
  %v2262 = vadd.f32 %v2260, %v2261
  %v2263 = vsel %vm542, %v1662, 0.0
  %v2264 = vadd.f32 %v2262, %v2263
  %v2265 = vsel %vm542, %v1663, 0.0
  %v2266 = vadd.f32 %v2264, %v2265
  %v2267 = vsel %vm542, %v1664, 0.0
  %v2268 = vadd.f32 %v2266, %v2267
  %v2269 = vsel %vm542, %v1665, 0.0
  %v2270 = vadd.f32 %v2268, %v2269
  %v2271 = vsel %vm542, %v1666, 0.0
  %v2272 = vadd.f32 %v2270, %v2271
  %v2273 = vsel %vm542, %v1667, 0.0
  %v2274 = vadd.f32 %v2272, %v2273
  %v2275 = vsel %vm542, %v1668, 0.0
  %v2276 = vadd.f32 %v2274, %v2275
  %v2277 = vsel %vm542, %v1669, 0.0
  %v2278 = vadd.f32 %v2276, %v2277
  %v2279 = vsel %vm542, %v1670, 0.0
  %v2280 = vadd.f32 %v2278, %v2279
  %v2281 = vsel %vm542, %v1671, 0.0
  %v2282 = vadd.f32 %v2280, %v2281
  %v2283 = vsel %vm542, %v1672, 0.0
  %v2284 = vadd.f32 %v2282, %v2283
  %v2285 = vsel %vm542, %v1673, 0.0
  %v2286 = vadd.f32 %v2284, %v2285
  %v2287 = vsel %vm542, %v1674, 0.0
  %v2288 = vadd.f32 %v2286, %v2287
  %v2289 = vsel %vm542, %v1675, 0.0
  %v2290 = vadd.f32 %v2288, %v2289
  %v2291 = vsel %vm542, %v1676, 0.0
  %v2292 = vadd.f32 %v2290, %v2291
  %v2293 = vsel %vm542, %v1677, 0.0
  %v2294 = vadd.f32 %v2292, %v2293
  %v2295 = vsel %vm542, %v1678, 0.0
  %v2296 = vadd.f32 %v2294, %v2295
  %v2297 = vsel %vm542, %v1679, 0.0
  %v2298 = vadd.f32 %v2296, %v2297
  %v2299 = vsel %vm542, %v1680, 0.0
  %v2300 = vadd.f32 %v2298, %v2299
  %v2301 = vsel %vm542, %v1681, 0.0
  %v2302 = vadd.f32 %v2300, %v2301
  %v2303 = vsel %vm542, %v1682, 0.0
  %v2304 = vadd.f32 %v2302, %v2303
  %v2305 = vsel %vm542, %v1683, 0.0
  %v2306 = vadd.f32 %v2304, %v2305
  %v2307 = vsel %vm542, %v1684, 0.0
  %v2308 = vadd.f32 %v2306, %v2307
  %v2309 = vsel %vm542, %v1685, 0.0
  %v2310 = vadd.f32 %v2308, %v2309
  %v2311 = vsel %vm542, %v1686, 0.0
  %v2312 = vadd.f32 %v2310, %v2311
  %v2313 = vsel %vm542, %v1687, 0.0
  %v2314 = vadd.f32 %v2312, %v2313
  %v2315 = vsel %vm542, %v1688, 0.0
  %v2316 = vadd.f32 %v2314, %v2315
  %v2317 = vsel %vm542, %v1689, 0.0
  %v2318 = vadd.f32 %v2316, %v2317
  %v2319 = vsel %vm542, %v1690, 0.0
  %v2320 = vadd.f32 %v2318, %v2319
  %v2321 = vsel %vm542, %v1691, 0.0
  %v2322 = vadd.f32 %v2320, %v2321
  %v2323 = vsel %vm542, %v1692, 0.0
  %v2324 = vadd.f32 %v2322, %v2323
  %v2325 = vsel %vm542, %v1693, 0.0
  %v2326 = vadd.f32 %v2324, %v2325
  %v2327 = vsel %vm542, %v1694, 0.0
  %v2328 = vadd.f32 %v2326, %v2327
  %v2329 = vsel %vm542, %v1695, 0.0
  %v2330 = vadd.f32 %v2328, %v2329
  %v2331 = vsel %vm542, %v1696, 0.0
  %v2332 = vadd.f32 %v2330, %v2331
  %v2333 = vsel %vm542, %v1697, 0.0
  %v2334 = vadd.f32 %v2332, %v2333
  %v2335 = vsel %vm542, %v1698, 0.0
  %v2336 = vadd.f32 %v2334, %v2335
  %v2337 = vsel %vm542, %v1699, 0.0
  %v2338 = vadd.f32 %v2336, %v2337
  %v2339 = vsel %vm542, %v1700, 0.0
  %v2340 = vadd.f32 %v2338, %v2339
  %v2341 = vsel %vm542, %v1701, 0.0
  %v2342 = vadd.f32 %v2340, %v2341
  %v2343 = vsel %vm542, %v1702, 0.0
  %v2344 = vadd.f32 %v2342, %v2343
  %v2345 = vsel %vm542, %v1703, 0.0
  %v2346 = vadd.f32 %v2344, %v2345
  %v2347 = vsel %vm542, %v1704, 0.0
  %v2348 = vadd.f32 %v2346, %v2347
  %v2349 = vsel %vm542, %v1705, 0.0
  %v2350 = vadd.f32 %v2348, %v2349
  %v2351 = vsel %vm542, %v1706, 0.0
  %v2352 = vadd.f32 %v2350, %v2351
  %v2353 = vsel %vm542, %v1707, 0.0
  %v2354 = vadd.f32 %v2352, %v2353
  %v2355 = vsel %vm542, %v1708, 0.0
  %v2356 = vadd.f32 %v2354, %v2355
  %v2357 = vsel %vm542, %v1709, 0.0
  %v2358 = vadd.f32 %v2356, %v2357
  %v2359 = vsel %vm542, %v1710, 0.0
  %v2360 = vadd.f32 %v2358, %v2359
  %v2361 = vsel %vm542, %v1711, 0.0
  %v2362 = vadd.f32 %v2360, %v2361
  %v2363 = vsel %vm542, %v1712, 0.0
  %v2364 = vadd.f32 %v2362, %v2363
  %v2365 = vsel %vm542, %v1713, 0.0
  %v2366 = vadd.f32 %v2364, %v2365
  %v2367 = vsel %vm542, %v1714, 0.0
  %v2368 = vadd.f32 %v2366, %v2367
  %v2369 = vsel %vm542, %v1715, 0.0
  %v2370 = vadd.f32 %v2368, %v2369
  %v2371 = vsel %vm542, %v1716, 0.0
  %v2372 = vadd.f32 %v2370, %v2371
  %v2373 = vsel %vm542, %v1717, 0.0
  %v2374 = vadd.f32 %v2372, %v2373
  %v2375 = vsel %vm542, %v1718, 0.0
  %v2376 = vadd.f32 %v2374, %v2375
  %v2377 = vsel %vm542, %v1719, 0.0
  %v2378 = vadd.f32 %v2376, %v2377
  %v2379 = vsel %vm542, %v1720, 0.0
  %v2380 = vadd.f32 %v2378, %v2379
  %v2381 = vsel %vm542, %v1721, 0.0
  %v2382 = vadd.f32 %v2380, %v2381
  %v2383 = vsel %vm542, %v1722, 0.0
  %v2384 = vadd.f32 %v2382, %v2383
  %v2385 = vsel %vm542, %v1723, 0.0
  %v2386 = vadd.f32 %v2384, %v2385
  %v2387 = vsel %vm542, %v1724, 0.0
  %v2388 = vadd.f32 %v2386, %v2387
  %v2389 = vsel %vm542, %v1725, 0.0
  %v2390 = vadd.f32 %v2388, %v2389
  %v2391 = vsel %vm542, %v1726, 0.0
  %v2392 = vadd.f32 %v2390, %v2391
  %v2393 = vsel %vm542, %v1727, 0.0
  %v2394 = vadd.f32 %v2392, %v2393
  %v2395 = vsel %vm542, %v1728, 0.0
  %v2396 = vadd.f32 %v2394, %v2395
  %v2397 = vsel %vm542, %v1729, 0.0
  %v2398 = vadd.f32 %v2396, %v2397
  %v2399 = vsel %vm542, %v1730, 0.0
  %v2400 = vadd.f32 %v2398, %v2399
  %v2401 = vsel %vm542, %v1731, 0.0
  %v2402 = vadd.f32 %v2400, %v2401
  %v2403 = vsel %vm542, %v1732, 0.0
  %v2404 = vadd.f32 %v2402, %v2403
  %v2405 = vsel %vm542, %v1733, 0.0
  %v2406 = vadd.f32 %v2404, %v2405
  %v2407 = vsel %vm542, %v1734, 0.0
  %v2408 = vadd.f32 %v2406, %v2407
  %v2409 = vsel %vm542, %v1735, 0.0
  %v2410 = vadd.f32 %v2408, %v2409
  %v2411 = vsel %vm542, %v1736, 0.0
  %v2412 = vadd.f32 %v2410, %v2411
  %v2413 = vsel %vm542, %v1737, 0.0
  %v2414 = vadd.f32 %v2412, %v2413
  %v2415 = vsel %vm542, %v1738, 0.0
  %v2416 = vadd.f32 %v2414, %v2415
  %v2417 = vsel %vm542, %v1739, 0.0
  %v2418 = vadd.f32 %v2416, %v2417
  %v2419 = vsel %vm542, %v1740, 0.0
  %v2420 = vadd.f32 %v2418, %v2419
  %v2421 = vsel %vm542, %v1741, 0.0
  %v2422 = vadd.f32 %v2420, %v2421
  %v2423 = vsel %vm542, %v1742, 0.0
  %v2424 = vadd.f32 %v2422, %v2423
  %v2425 = vsel %vm542, %v1743, 0.0
  %v2426 = vadd.f32 %v2424, %v2425
  %v2427 = vsel %vm542, %v1744, 0.0
  %v2428 = vadd.f32 %v2426, %v2427
  %v2429 = vsel %vm542, %v1745, 0.0
  %v2430 = vadd.f32 %v2428, %v2429
  %v2431 = vsel %vm542, %v1746, 0.0
  %v2432 = vadd.f32 %v2430, %v2431
  %v2433 = vsel %vm542, %v1747, 0.0
  %v2434 = vadd.f32 %v2432, %v2433
  %v2435 = vsel %vm542, %v1748, 0.0
  %v2436 = vadd.f32 %v2434, %v2435
  %v2437 = vsel %vm542, %v1749, 0.0
  %v2438 = vadd.f32 %v2436, %v2437
  %v2439 = vsel %vm542, %v1750, 0.0
  %v2440 = vadd.f32 %v2438, %v2439
  %v2441 = vsel %vm542, %v1751, 0.0
  %v2442 = vadd.f32 %v2440, %v2441
  %v2443 = vsel %vm542, %v1752, 0.0
  %v2444 = vadd.f32 %v2442, %v2443
  %v2445 = vsel %vm542, %v1753, 0.0
  %v2446 = vadd.f32 %v2444, %v2445
  %v2447 = vsel %vm542, %v1754, 0.0
  %v2448 = vadd.f32 %v2446, %v2447
  %v2449 = vsel %vm542, %v1755, 0.0
  %v2450 = vadd.f32 %v2448, %v2449
  %v2451 = vsel %vm542, %v1756, 0.0
  %v2452 = vadd.f32 %v2450, %v2451
  %v2453 = vsel %vm542, %v1757, 0.0
  %v2454 = vadd.f32 %v2452, %v2453
  %v2455 = vsel %vm542, %v1758, 0.0
  %v2456 = vadd.f32 %v2454, %v2455
  %v2457 = vsel %vm542, %v1759, 0.0
  %v2458 = vadd.f32 %v2456, %v2457
  %v2459 = vsel %vm542, %v1760, 0.0
  %v2460 = vadd.f32 %v2458, %v2459
  %v2461 = vsel %vm542, %v1761, 0.0
  %v2462 = vadd.f32 %v2460, %v2461
  %v2463 = vsel %vm542, %v1762, 0.0
  %v2464 = vadd.f32 %v2462, %v2463
  %v2465 = vsel %vm542, %v1763, 0.0
  %v2466 = vadd.f32 %v2464, %v2465
  %v2467 = vsel %vm542, %v1764, 0.0
  %v2468 = vadd.f32 %v2466, %v2467
  %v2469 = vsel %vm542, %v1765, 0.0
  %v2470 = vadd.f32 %v2468, %v2469
  %v2471 = vsel %vm542, %v1766, 0.0
  %v2472 = vadd.f32 %v2470, %v2471
  %v2473 = vsel %vm542, %v1767, 0.0
  %v2474 = vadd.f32 %v2472, %v2473
  %v2475 = vsel %vm542, %v1768, 0.0
  %v2476 = vadd.f32 %v2474, %v2475
  %v2477 = vsel %vm542, %v1769, 0.0
  %v2478 = vadd.f32 %v2476, %v2477
  %v2479 = vsel %vm542, %v1770, 0.0
  %v2480 = vadd.f32 %v2478, %v2479
  %v2481 = vsel %vm542, %v1771, 0.0
  %v2482 = vadd.f32 %v2480, %v2481
  %v2483 = vsel %vm542, %v1772, 0.0
  %v2484 = vadd.f32 %v2482, %v2483
  %v2485 = vsel %vm542, %v1773, 0.0
  %v2486 = vadd.f32 %v2484, %v2485
  %v2487 = vsel %vm542, %v1774, 0.0
  %v2488 = vadd.f32 %v2486, %v2487
  %v2489 = vsel %vm542, %v1775, 0.0
  %v2490 = vadd.f32 %v2488, %v2489
  %v2491 = vsel %vm542, %v1776, 0.0
  %v2492 = vadd.f32 %v2490, %v2491
  %v2493 = vsel %vm542, %v1777, 0.0
  %v2494 = vadd.f32 %v2492, %v2493
  %v2495 = vsel %vm542, %v1778, 0.0
  %v2496 = vadd.f32 %v2494, %v2495
  %v2497 = vsel %vm542, %v1779, 0.0
  %v2498 = vadd.f32 %v2496, %v2497
  %v2499 = vsel %vm542, %v1780, 0.0
  %v2500 = vadd.f32 %v2498, %v2499
  %v2501 = vsel %vm542, %v1781, 0.0
  %v2502 = vadd.f32 %v2500, %v2501
  %v2503 = vsel %vm542, %v1782, 0.0
  %v2504 = vadd.f32 %v2502, %v2503
  %v2505 = vsel %vm542, %v1783, 0.0
  %v2506 = vadd.f32 %v2504, %v2505
  %v2507 = vsel %vm542, %v1784, 0.0
  %v2508 = vadd.f32 %v2506, %v2507
  %v2509 = vsel %vm542, %v1785, 0.0
  %v2510 = vadd.f32 %v2508, %v2509
  %v2511 = vsel %vm542, %v1786, 0.0
  %v2512 = vadd.f32 %v2510, %v2511
  %v2513 = vsel %vm542, %v1787, 0.0
  %v2514 = vadd.f32 %v2512, %v2513
  %v2515 = vsel %vm542, %v1788, 0.0
  %v2516 = vadd.f32 %v2514, %v2515
  %v2517 = vsel %vm542, %v1789, 0.0
  %v2518 = vadd.f32 %v2516, %v2517
  %v2519 = vsel %vm542, %v1790, 0.0
  %v2520 = vadd.f32 %v2518, %v2519
  %v2521 = vsel %vm542, %v1791, 0.0
  %v2522 = vadd.f32 %v2520, %v2521
  %v2523 = vsel %vm542, %v1792, 0.0
  %v2524 = vadd.f32 %v2522, %v2523
  %v2525 = vsel %vm542, %v1793, 0.0
  %v2526 = vadd.f32 %v2524, %v2525
  %v2527 = vsel %vm542, %v1794, 0.0
  %v2528 = vadd.f32 %v2526, %v2527
  %v2529 = vsel %vm542, %v1795, 0.0
  %v2530 = vadd.f32 %v2528, %v2529
  %v2531 = vsel %vm542, %v1796, 0.0
  %v2532 = vadd.f32 %v2530, %v2531
  %v2533 = vsel %vm542, %v1797, 0.0
  %v2534 = vadd.f32 %v2532, %v2533
  %v2535 = vsel %vm542, %v1798, 0.0
  %v2536 = vadd.f32 %v2534, %v2535
  %v2537 = vsel %vm542, %v1799, 0.0
  %v2538 = vadd.f32 %v2536, %v2537
  %v2539 = vsel %vm542, %v1800, 0.0
  %v2540 = vadd.f32 %v2538, %v2539
  %v2541 = vsel %vm542, %v1801, 0.0
  %v2542 = vadd.f32 %v2540, %v2541
  %v2543 = vsel %vm542, %v1802, 0.0
  %v2544 = vadd.f32 %v2542, %v2543
  %v2545 = vsel %vm542, %v1803, 0.0
  %v2546 = vadd.f32 %v2544, %v2545
  %v2547 = vsel %vm542, %v1804, 0.0
  %v2548 = vadd.f32 %v2546, %v2547
  %v2549 = vsel %vm542, %v1805, 0.0
  %v2550 = vadd.f32 %v2548, %v2549
  %v2551 = vsel %vm542, %v1806, 0.0
  %v2552 = vadd.f32 %v2550, %v2551
  %v2553 = vsel %vm542, %v1807, 0.0
  %v2554 = vadd.f32 %v2552, %v2553
  %v2555 = vsel %vm542, %v1808, 0.0
  %v2556 = vadd.f32 %v2554, %v2555
  %v2557 = vsel %vm542, %v1809, 0.0
  %v2558 = vadd.f32 %v2556, %v2557
  %v2559 = vsel %vm542, %v1810, 0.0
  %v2560 = vadd.f32 %v2558, %v2559
  %v2561 = vsel %vm542, %v1811, 0.0
  %v2562 = vadd.f32 %v2560, %v2561
  %v2563 = vsel %vm542, %v1812, 0.0
  %v2564 = vadd.f32 %v2562, %v2563
  %v2565 = vsel %vm542, %v1813, 0.0
  %v2566 = vadd.f32 %v2564, %v2565
  %v2567 = vsel %vm542, %v1814, 0.0
  %v2568 = vadd.f32 %v2566, %v2567
  %v2569 = vsel %vm542, %v1815, 0.0
  %v2570 = vadd.f32 %v2568, %v2569
  %v2571 = vsel %vm542, %v1816, 0.0
  %v2572 = vadd.f32 %v2570, %v2571
  %v2573 = vsel %vm542, %v1817, 0.0
  %v2574 = vadd.f32 %v2572, %v2573
  %v2575 = vsel %vm542, %v1818, 0.0
  %v2576 = vadd.f32 %v2574, %v2575
  %v2577 = vsel %vm542, %v1819, 0.0
  %v2578 = vadd.f32 %v2576, %v2577
  %v2579 = vsel %vm542, %v1820, 0.0
  %v2580 = vadd.f32 %v2578, %v2579
  %v2581 = vsel %vm542, %v1821, 0.0
  %v2582 = vadd.f32 %v2580, %v2581
  %v2583 = vsel %vm542, %v1822, 0.0
  %v2584 = vadd.f32 %v2582, %v2583
  %v2585 = vsel %vm542, %v1823, 0.0
  %v2586 = vadd.f32 %v2584, %v2585
  %v2587 = vsel %vm542, %v1824, 0.0
  %v2588 = vadd.f32 %v2586, %v2587
  %v2589 = vsel %vm542, %v1825, 0.0
  %v2590 = vadd.f32 %v2588, %v2589
  %v2591 = vsel %vm542, %v1826, 0.0
  %v2592 = vadd.f32 %v2590, %v2591
  %v2593 = vsel %vm542, %v1827, 0.0
  %v2594 = vadd.f32 %v2592, %v2593
  %v2595 = vsel %vm542, %v1828, 0.0
  %v2596 = vadd.f32 %v2594, %v2595
  %v2597 = vsel %vm542, %v1829, 0.0
  %v2598 = vadd.f32 %v2596, %v2597
  %v2599 = vsel %vm542, %v1830, 0.0
  %v2600 = vadd.f32 %v2598, %v2599
  %v2601 = vsel %vm542, %v1831, 0.0
  %v2602 = vadd.f32 %v2600, %v2601
  %v2603 = vsel %vm542, %v1832, 0.0
  %v2604 = vadd.f32 %v2602, %v2603
  %v2605 = vsel %vm542, %v1833, 0.0
  %v2606 = vadd.f32 %v2604, %v2605
  %v2607 = vsel %vm542, %v1834, 0.0
  %v2608 = vadd.f32 %v2606, %v2607
  %v2609 = vsel %vm542, %v1835, 0.0
  %v2610 = vadd.f32 %v2608, %v2609
  %v2611 = vsel %vm542, %v1836, 0.0
  %v2612 = vadd.f32 %v2610, %v2611
  %v2613 = vsel %vm542, %v1837, 0.0
  %v2614 = vadd.f32 %v2612, %v2613
  %v2615 = vsel %vm542, %v1838, 0.0
  %v2616 = vadd.f32 %v2614, %v2615
  %v2617 = vsel %vm542, %v1839, 0.0
  %v2618 = vadd.f32 %v2616, %v2617
  %v2619 = vsel %vm542, %v1840, 0.0
  %v2620 = vadd.f32 %v2618, %v2619
  %v2621 = vsel %vm542, %v1841, 0.0
  %v2622 = vadd.f32 %v2620, %v2621
  %v2623 = vsel %vm542, %v1842, 0.0
  %v2624 = vadd.f32 %v2622, %v2623
  %v2625 = vsel %vm542, %v1843, 0.0
  %v2626 = vadd.f32 %v2624, %v2625
  %v2627 = vsel %vm542, %v1844, 0.0
  %v2628 = vadd.f32 %v2626, %v2627
  %v2629 = vsel %vm542, %v1845, 0.0
  %v2630 = vadd.f32 %v2628, %v2629
  %v2631 = vsel %vm542, %v1846, 0.0
  %v2632 = vadd.f32 %v2630, %v2631
  %v2633 = vsel %vm542, %v1847, 0.0
  %v2634 = vadd.f32 %v2632, %v2633
  %v2635 = vsel %vm542, %v1848, 0.0
  %v2636 = vadd.f32 %v2634, %v2635
  %v2637 = vsel %vm542, %v1849, 0.0
  %v2638 = vadd.f32 %v2636, %v2637
  %v2639 = vsel %vm542, %v1850, 0.0
  %v2640 = vadd.f32 %v2638, %v2639
  %v2641 = vsel %vm542, %v1851, 0.0
  %v2642 = vadd.f32 %v2640, %v2641
  %v2643 = vsel %vm542, %v1852, 0.0
  %v2644 = vadd.f32 %v2642, %v2643
  %v2645 = vsel %vm542, %v1853, 0.0
  %v2646 = vadd.f32 %v2644, %v2645
  %v2647 = vsel %vm542, %v1854, 0.0
  %v2648 = vadd.f32 %v2646, %v2647
  %v2649 = vsel %vm542, %v1855, 0.0
  %v2650 = vadd.f32 %v2648, %v2649
  %v2651 = vsel %vm542, %v1856, 0.0
  %v2652 = vadd.f32 %v2650, %v2651
  %v2653 = vsel %vm542, %v1857, 0.0
  %v2654 = vadd.f32 %v2652, %v2653
  %v2655 = vsel %vm542, %v1858, 0.0
  %v2656 = vadd.f32 %v2654, %v2655
  %v2657 = vsel %vm542, %v1859, 0.0
  %v2658 = vadd.f32 %v2656, %v2657
  %v2659 = vsel %vm542, %v1860, 0.0
  %v2660 = vadd.f32 %v2658, %v2659
  %v2661 = vsel %vm542, %v1861, 0.0
  %v2662 = vadd.f32 %v2660, %v2661
  %v2663 = vsel %vm542, %v1862, 0.0
  %v2664 = vadd.f32 %v2662, %v2663
  %v2665 = vsel %vm542, %v1863, 0.0
  %v2666 = vadd.f32 %v2664, %v2665
  %v2667 = vsel %vm542, %v1864, 0.0
  %v2668 = vadd.f32 %v2666, %v2667
  %v2669 = vsel %vm542, %v1865, 0.0
  %v2670 = vadd.f32 %v2668, %v2669
  %v2671 = vsel %vm542, %v1866, 0.0
  %v2672 = vadd.f32 %v2670, %v2671
  %v2673 = vsel %vm542, %v1867, 0.0
  %v2674 = vadd.f32 %v2672, %v2673
  %v2675 = vsel %vm542, %v1868, 0.0
  %v2676 = vadd.f32 %v2674, %v2675
  %v2677 = vsel %vm542, %v1869, 0.0
  %v2678 = vadd.f32 %v2676, %v2677
  %v2679 = vsel %vm542, %v1870, 0.0
  %v2680 = vadd.f32 %v2678, %v2679
  %v2681 = vsel %vm542, %v1871, 0.0
  %v2682 = vadd.f32 %v2680, %v2681
  %v2683 = vsel %vm542, %v1872, 0.0
  %v2684 = vadd.f32 %v2682, %v2683
  %v2685 = vsel %vm542, %v1873, 0.0
  %v2686 = vadd.f32 %v2684, %v2685
  %v2687 = vsel %vm542, %v1874, 0.0
  %v2688 = vadd.f32 %v2686, %v2687
  %v2689 = vsel %vm542, %v1875, 0.0
  %v2690 = vadd.f32 %v2688, %v2689
  %v2691 = vsel %vm542, %v1876, 0.0
  %v2692 = vadd.f32 %v2690, %v2691
  %v2693 = vsel %vm542, %v1877, 0.0
  %v2694 = vadd.f32 %v2692, %v2693
  %v2695 = vsel %vm542, %v1878, 0.0
  %v2696 = vadd.f32 %v2694, %v2695
  %v2697 = vsel %vm542, %v1879, 0.0
  %v2698 = vadd.f32 %v2696, %v2697
  %v2699 = vsel %vm542, %v1880, 0.0
  %v2700 = vadd.f32 %v2698, %v2699
  %v2701 = vsel %vm542, %v1881, 0.0
  %v2702 = vadd.f32 %v2700, %v2701
  %v2703 = vsel %vm542, %v1882, 0.0
  %v2704 = vadd.f32 %v2702, %v2703
  %v2705 = vsel %vm542, %v1883, 0.0
  %v2706 = vadd.f32 %v2704, %v2705
  %v2707 = vsel %vm542, %v1884, 0.0
  %v2708 = vadd.f32 %v2706, %v2707
  %v2709 = vsel %vm542, %v1885, 0.0
  %v2710 = vadd.f32 %v2708, %v2709
  %v2711 = vsel %vm542, %v1886, 0.0
  %v2712 = vadd.f32 %v2710, %v2711
  %v2713 = vsel %vm542, %v1887, 0.0
  %v2714 = vadd.f32 %v2712, %v2713
  %v2715 = vsel %vm542, %v1888, 0.0
  %v2716 = vadd.f32 %v2714, %v2715
  %v2717 = vsel %vm542, %v1889, 0.0
  %v2718 = vadd.f32 %v2716, %v2717
  %v2719 = vsel %vm542, %v1890, 0.0
  %v2720 = vadd.f32 %v2718, %v2719
  %v2721 = vsel %vm542, %v1891, 0.0
  %v2722 = vadd.f32 %v2720, %v2721
  %v2723 = vsel %vm542, %v1892, 0.0
  %v2724 = vadd.f32 %v2722, %v2723
  %v2725 = vsel %vm542, %v1893, 0.0
  %v2726 = vadd.f32 %v2724, %v2725
  %v2727 = vsel %vm542, %v1894, 0.0
  %v2728 = vadd.f32 %v2726, %v2727
  %v2729 = vsel %vm542, %v1895, 0.0
  %v2730 = vadd.f32 %v2728, %v2729
  %v2731 = vsel %vm542, %v1896, 0.0
  %v2732 = vadd.f32 %v2730, %v2731
  %v2733 = vsel %vm542, %v1897, 0.0
  %v2734 = vadd.f32 %v2732, %v2733
  %v2735 = vsel %vm542, %v1898, 0.0
  %v2736 = vadd.f32 %v2734, %v2735
  %v2737 = vsel %vm542, %v1899, 0.0
  %v2738 = vadd.f32 %v2736, %v2737
  %v2739 = vsel %vm542, %v1900, 0.0
  %v2740 = vadd.f32 %v2738, %v2739
  %v2741 = vsel %vm542, %v1901, 0.0
  %v2742 = vadd.f32 %v2740, %v2741
  %v2743 = vsel %vm542, %v1902, 0.0
  %v2744 = vadd.f32 %v2742, %v2743
  %v2745 = vsel %vm542, %v1903, 0.0
  %v2746 = vadd.f32 %v2744, %v2745
  %v2747 = vsel %vm542, %v1904, 0.0
  %v2748 = vadd.f32 %v2746, %v2747
  %v2749 = vsel %vm542, %v1905, 0.0
  %v2750 = vadd.f32 %v2748, %v2749
  %v2751 = vsel %vm542, %v1906, 0.0
  %v2752 = vadd.f32 %v2750, %v2751
  %v2753 = vsel %vm542, %v1907, 0.0
  %v2754 = vadd.f32 %v2752, %v2753
  %v2755 = vsel %vm542, %v1908, 0.0
  %v2756 = vadd.f32 %v2754, %v2755
  %v2757 = vsel %vm542, %v1909, 0.0
  %v2758 = vadd.f32 %v2756, %v2757
  %v2759 = vsel %vm542, %v1910, 0.0
  %v2760 = vadd.f32 %v2758, %v2759
  %v2761 = vsel %vm542, %v1911, 0.0
  %v2762 = vadd.f32 %v2760, %v2761
  %v2763 = vsel %vm542, %v1912, 0.0
  %v2764 = vadd.f32 %v2762, %v2763
  %v2765 = vsel %vm542, %v1913, 0.0
  %v2766 = vadd.f32 %v2764, %v2765
  %v2767 = vsel %vm542, %v1914, 0.0
  %v2768 = vadd.f32 %v2766, %v2767
  %v2769 = vsel %vm542, %v1915, 0.0
  %v2770 = vadd.f32 %v2768, %v2769
  %v2771 = vsel %vm542, %v1916, 0.0
  %v2772 = vadd.f32 %v2770, %v2771
  %v2773 = vsel %vm542, %v1917, 0.0
  %v2774 = vadd.f32 %v2772, %v2773
  %v2775 = vsel %vm542, %v1918, 0.0
  %v2776 = vadd.f32 %v2774, %v2775
  %v2777 = vsel %vm542, %v1919, 0.0
  %v2778 = vadd.f32 %v2776, %v2777
  %v2779 = vsel %vm542, %v1920, 0.0
  %v2780 = vadd.f32 %v2778, %v2779
  %v2781 = vsel %vm542, %v1921, 0.0
  %v2782 = vadd.f32 %v2780, %v2781
  %v2783 = vsel %vm542, %v1922, 0.0
  %v2784 = vadd.f32 %v2782, %v2783
  %v2785 = vsel %vm542, %v1923, 0.0
  %v2786 = vadd.f32 %v2784, %v2785
  %v2787 = vsel %vm542, %v1924, 0.0
  %v2788 = vadd.f32 %v2786, %v2787
  %v2789 = vsel %vm542, %v1925, 0.0
  %v2790 = vadd.f32 %v2788, %v2789
  %v2791 = vsel %vm542, %v1926, 0.0
  %v2792 = vadd.f32 %v2790, %v2791
  %v2793 = vsel %vm542, %v1927, 0.0
  %v2794 = vadd.f32 %v2792, %v2793
  %v2795 = vsel %vm542, %v1928, 0.0
  %v2796 = vadd.f32 %v2794, %v2795
  %v2797 = vsel %vm542, %v1929, 0.0
  %v2798 = vadd.f32 %v2796, %v2797
  %v2799 = vsel %vm542, %v1930, 0.0
  %v2800 = vadd.f32 %v2798, %v2799
  %v2801 = vsel %vm542, %v1931, 0.0
  %v2802 = vadd.f32 %v2800, %v2801
  %v2803 = vsel %vm542, %v1932, 0.0
  %v2804 = vadd.f32 %v2802, %v2803
  %v2805 = vsel %vm542, %v1933, 0.0
  %v2806 = vadd.f32 %v2804, %v2805
  %v2807 = vsel %vm542, %v1934, 0.0
  %v2808 = vadd.f32 %v2806, %v2807
  %v2809 = vsel %vm542, %v1935, 0.0
  %v2810 = vadd.f32 %v2808, %v2809
  %v2811 = vsel %vm542, %v1936, 0.0
  %v2812 = vadd.f32 %v2810, %v2811
  %v2813 = vsel %vm542, %v1937, 0.0
  %v2814 = vadd.f32 %v2812, %v2813
  %v2815 = vsel %vm542, %v1938, 0.0
  %v2816 = vadd.f32 %v2814, %v2815
  %v2817 = vsel %vm542, %v1939, 0.0
  %v2818 = vadd.f32 %v2816, %v2817
  %v2819 = vsel %vm542, %v1940, 0.0
  %v2820 = vadd.f32 %v2818, %v2819
  %v2821 = vsel %vm542, %v1941, 0.0
  %v2822 = vadd.f32 %v2820, %v2821
  %v2823 = vsel %vm542, %v1942, 0.0
  %v2824 = vadd.f32 %v2822, %v2823
  %v2825 = vsel %vm542, %v1943, 0.0
  %v2826 = vadd.f32 %v2824, %v2825
  %v2827 = vsel %vm542, %v1944, 0.0
  %v2828 = vadd.f32 %v2826, %v2827
  %v2829 = vsel %vm542, %v1945, 0.0
  %v2830 = vadd.f32 %v2828, %v2829
  %v2831 = vsel %vm542, %v1946, 0.0
  %v2832 = vadd.f32 %v2830, %v2831
  %v2833 = vsel %vm542, %v1947, 0.0
  %v2834 = vadd.f32 %v2832, %v2833
  %v2835 = vsel %vm542, %v1948, 0.0
  %v2836 = vadd.f32 %v2834, %v2835
  %v2837 = vsel %vm542, %v1949, 0.0
  %v2838 = vadd.f32 %v2836, %v2837
  %v2839 = vsel %vm542, %v1950, 0.0
  %v2840 = vadd.f32 %v2838, %v2839
  %v2841 = vsel %vm542, %v1951, 0.0
  %v2842 = vadd.f32 %v2840, %v2841
  %v2843 = vsel %vm542, %v1952, 0.0
  %v2844 = vadd.f32 %v2842, %v2843
  %v2845 = vsel %vm542, %v1953, 0.0
  %v2846 = vadd.f32 %v2844, %v2845
  %v2847 = vsel %vm542, %v1954, 0.0
  %v2848 = vadd.f32 %v2846, %v2847
  %v2849 = vsel %vm542, %v1955, 0.0
  %v2850 = vadd.f32 %v2848, %v2849
  %v2851 = vsel %vm542, %v1956, 0.0
  %v2852 = vadd.f32 %v2850, %v2851
  %v2853 = vsel %vm542, %v1957, 0.0
  %v2854 = vadd.f32 %v2852, %v2853
  %v2855 = vsel %vm542, %v1958, 0.0
  %v2856 = vadd.f32 %v2854, %v2855
  %v2857 = vsel %vm542, %v1959, 0.0
  %v2858 = vadd.f32 %v2856, %v2857
  %v2859 = vsel %vm542, %v1960, 0.0
  %v2860 = vadd.f32 %v2858, %v2859
  %v2861 = vsel %vm542, %v1961, 0.0
  %v2862 = vadd.f32 %v2860, %v2861
  %v2863 = vsel %vm542, %v1962, 0.0
  %v2864 = vadd.f32 %v2862, %v2863
  %v2865 = vsel %vm542, %v1963, 0.0
  %v2866 = vadd.f32 %v2864, %v2865
  %v2867 = vsel %vm542, %v1964, 0.0
  %v2868 = vadd.f32 %v2866, %v2867
  %v2869 = vsel %vm542, %v1965, 0.0
  %v2870 = vadd.f32 %v2868, %v2869
  %v2871 = vsel %vm542, %v1966, 0.0
  %v2872 = vadd.f32 %v2870, %v2871
  %v2873 = vsel %vm542, %v1967, 0.0
  %v2874 = vadd.f32 %v2872, %v2873
  %v2875 = vsel %vm542, %v1968, 0.0
  %v2876 = vadd.f32 %v2874, %v2875
  %v2877 = vsel %vm542, %v1969, 0.0
  %v2878 = vadd.f32 %v2876, %v2877
  %v2879 = vsel %vm542, %v1970, 0.0
  %v2880 = vadd.f32 %v2878, %v2879
  %v2881 = vsel %vm542, %v1971, 0.0
  %v2882 = vadd.f32 %v2880, %v2881
  %v2883 = vsel %vm542, %v1972, 0.0
  %v2884 = vadd.f32 %v2882, %v2883
  %v2885 = vsel %vm542, %v1973, 0.0
  %v2886 = vadd.f32 %v2884, %v2885
  %v2887 = vsel %vm542, %v1974, 0.0
  %v2888 = vadd.f32 %v2886, %v2887
  %v2889 = vsel %vm542, %v1975, 0.0
  %v2890 = vadd.f32 %v2888, %v2889
  %v2891 = vsel %vm542, %v1976, 0.0
  %v2892 = vadd.f32 %v2890, %v2891
  %v2893 = vsel %vm542, %v1977, 0.0
  %v2894 = vadd.f32 %v2892, %v2893
  %v2895 = vsel %vm542, %v1978, 0.0
  %v2896 = vadd.f32 %v2894, %v2895
  %v2897 = vsel %vm542, %v1979, 0.0
  %v2898 = vadd.f32 %v2896, %v2897
  %v2899 = vsel %vm542, %v1980, 0.0
  %v2900 = vadd.f32 %v2898, %v2899
  %v2901 = vsel %vm542, %v1981, 0.0
  %v2902 = vadd.f32 %v2900, %v2901
  %v2903 = vsel %vm542, %v1982, 0.0
  %v2904 = vadd.f32 %v2902, %v2903
  %v2905 = vsel %vm542, %v1983, 0.0
  %v2906 = vadd.f32 %v2904, %v2905
  %v2907 = vsel %vm542, %v1984, 0.0
  %v2908 = vadd.f32 %v2906, %v2907
  %v2909 = vsel %vm542, %v1985, 0.0
  %v2910 = vadd.f32 %v2908, %v2909
  %v2911 = vsel %vm542, %v1986, 0.0
  %v2912 = vadd.f32 %v2910, %v2911
  %v2913 = vsel %vm542, %v1987, 0.0
  %v2914 = vadd.f32 %v2912, %v2913
  %v2915 = vsel %vm542, %v1988, 0.0
  %v2916 = vadd.f32 %v2914, %v2915
  %v2917 = vsel %vm542, %v1989, 0.0
  %v2918 = vadd.f32 %v2916, %v2917
  %v2919 = vsel %vm542, %v1990, 0.0
  %v2920 = vadd.f32 %v2918, %v2919
  %v2921 = vsel %vm542, %v1991, 0.0
  %v2922 = vadd.f32 %v2920, %v2921
  %v2923 = vsel %vm542, %v1992, 0.0
  %v2924 = vadd.f32 %v2922, %v2923
  %v2925 = vsel %vm542, %v1993, 0.0
  %v2926 = vadd.f32 %v2924, %v2925
  %v2927 = vsel %vm542, %v1994, 0.0
  %v2928 = vadd.f32 %v2926, %v2927
  %v2929 = vsel %vm542, %v1995, 0.0
  %v2930 = vadd.f32 %v2928, %v2929
  %v2931 = vsel %vm542, %v1996, 0.0
  %v2932 = vadd.f32 %v2930, %v2931
  %v2933 = vsel %vm542, %v1997, 0.0
  %v2934 = vadd.f32 %v2932, %v2933
  %v2935 = vsel %vm542, %v1998, 0.0
  %v2936 = vadd.f32 %v2934, %v2935
  %v2937 = vsel %vm542, %v1999, 0.0
  %v2938 = vadd.f32 %v2936, %v2937
  %v2939 = vsel %vm542, %v2000, 0.0
  %v2940 = vadd.f32 %v2938, %v2939
  %v2941 = vsel %vm542, %v2001, 0.0
  %v2942 = vadd.f32 %v2940, %v2941
  %v2943 = vsel %vm542, %v2002, 0.0
  %v2944 = vadd.f32 %v2942, %v2943
  %v2945 = vsel %vm542, %v2003, 0.0
  %v2946 = vadd.f32 %v2944, %v2945
  %v2947 = vsel %vm542, %v2004, 0.0
  %v2948 = vadd.f32 %v2946, %v2947
  %v2949 = vsel %vm542, %v2005, 0.0
  %v2950 = vadd.f32 %v2948, %v2949
  %v2951 = vsel %vm542, %v2006, 0.0
  %v2952 = vadd.f32 %v2950, %v2951
  %v2953 = vsel %vm542, %v2007, 0.0
  %v2954 = vadd.f32 %v2952, %v2953
  %v2955 = vsel %vm542, %v2008, 0.0
  %v2956 = vadd.f32 %v2954, %v2955
  %v2957 = vsel %vm542, %v2009, 0.0
  %v2958 = vadd.f32 %v2956, %v2957
  %v2959 = vsel %vm542, %v2010, 0.0
  %v2960 = vadd.f32 %v2958, %v2959
  %v2961 = vsel %vm542, %v2011, 0.0
  %v2962 = vadd.f32 %v2960, %v2961
  %v2963 = vsel %vm542, %v2012, 0.0
  %v2964 = vadd.f32 %v2962, %v2963
  %v2965 = vsel %vm542, %v2013, 0.0
  %v2966 = vadd.f32 %v2964, %v2965
  %v2967 = vsel %vm542, %v2014, 0.0
  %v2968 = vadd.f32 %v2966, %v2967
  %v2969 = vsel %vm542, %v2015, 0.0
  %v2970 = vadd.f32 %v2968, %v2969
  %v2971 = vsel %vm542, %v2016, 0.0
  %v2972 = vadd.f32 %v2970, %v2971
  %v2973 = vsel %vm542, %v2017, 0.0
  %v2974 = vadd.f32 %v2972, %v2973
  %v2975 = vsel %vm542, %v2018, 0.0
  %v2976 = vadd.f32 %v2974, %v2975
  %v2977 = vsel %vm542, %v2019, 0.0
  %v2978 = vadd.f32 %v2976, %v2977
  %v2979 = vsel %vm542, %v2020, 0.0
  %v2980 = vadd.f32 %v2978, %v2979
  %v2981 = vsel %vm542, %v2021, 0.0
  %v2982 = vadd.f32 %v2980, %v2981
  %v2983 = vsel %vm542, %v2022, 0.0
  %v2984 = vadd.f32 %v2982, %v2983
  %v2985 = vsel %vm542, %v2023, 0.0
  %v2986 = vadd.f32 %v2984, %v2985
  %v2987 = vsel %vm542, %v2024, 0.0
  %v2988 = vadd.f32 %v2986, %v2987
  %v2989 = vsel %vm542, %v2025, 0.0
  %v2990 = vadd.f32 %v2988, %v2989
  %v2991 = vsel %vm542, %v2026, 0.0
  %v2992 = vadd.f32 %v2990, %v2991
  %v2993 = vsel %vm542, %v2027, 0.0
  %v2994 = vadd.f32 %v2992, %v2993
  %v2995 = vsel %vm542, %v2028, 0.0
  %v2996 = vadd.f32 %v2994, %v2995
  %v2997 = vsel %vm542, %v2029, 0.0
  %v2998 = vadd.f32 %v2996, %v2997
  %v2999 = vsel %vm542, %v2030, 0.0
  %v3000 = vadd.f32 %v2998, %v2999
  %v3001 = vsel %vm542, %v2031, 0.0
  %v3002 = vadd.f32 %v3000, %v3001
  %v3003 = vsel %vm542, %v2032, 0.0
  %v3004 = vadd.f32 %v3002, %v3003
  %v3005 = vsel %vm542, %v2033, 0.0
  %v3006 = vadd.f32 %v3004, %v3005
  %v3007 = vsel %vm542, %v2034, 0.0
  %v3008 = vadd.f32 %v3006, %v3007
  %v3009 = vsel %vm542, %v2035, 0.0
  %v3010 = vadd.f32 %v3008, %v3009
  %v3011 = vsel %vm542, %v2036, 0.0
  %v3012 = vadd.f32 %v3010, %v3011
  %v3013 = vsel %vm542, %v2037, 0.0
  %v3014 = vadd.f32 %v3012, %v3013
  %v3015 = vsel %vm542, %v2038, 0.0
  %v3016 = vadd.f32 %v3014, %v3015
  %v3017 = vsel %vm542, %v2039, 0.0
  %v3018 = vadd.f32 %v3016, %v3017
  %v3019 = vsel %vm542, %v2040, 0.0
  %v3020 = vadd.f32 %v3018, %v3019
  %v3021 = vsel %vm542, %v2041, 0.0
  %v3022 = vadd.f32 %v3020, %v3021
  %v3023 = vsel %vm542, %v2042, 0.0
  %v3024 = vadd.f32 %v3022, %v3023
  %v3025 = vsel %vm542, %v2043, 0.0
  %v3026 = vadd.f32 %v3024, %v3025
  %v3027 = vsel %vm542, %v2044, 0.0
  %v3028 = vadd.f32 %v3026, %v3027
  %v3029 = vsel %vm542, %v2045, 0.0
  %v3030 = vadd.f32 %v3028, %v3029
  %v3031 = vsel %vm542, %v2046, 0.0
  %v3032 = vadd.f32 %v3030, %v3031
  %v3033 = vsel %vm542, %v2047, 0.0
  %v3034 = vadd.f32 %v3032, %v3033
  %v3035 = vsel %vm542, %v2048, 0.0
  %v3036 = vadd.f32 %v3034, %v3035
  %v3037 = vsel %vm542, %v2049, 0.0
  %v3038 = vadd.f32 %v3036, %v3037
  %v3039 = vsel %vm542, %v2050, 0.0
  %v3040 = vadd.f32 %v3038, %v3039
  %v3041 = vsel %vm542, %v2051, 0.0
  %v3042 = vadd.f32 %v3040, %v3041
  %v3043 = vsel %vm542, %v2052, 0.0
  %v3044 = vadd.f32 %v3042, %v3043
  %v3045 = vsel %vm542, %v2053, 0.0
  %v3046 = vadd.f32 %v3044, %v3045
  %v3047 = vsel %vm542, %v2054, 0.0
  %v3048 = vadd.f32 %v3046, %v3047
  %v3049 = vsel %vm542, %v2055, 0.0
  %v3050 = vadd.f32 %v3048, %v3049
  %v3051 = vsel %vm542, %v2056, 0.0
  %v3052 = vadd.f32 %v3050, %v3051
  %v3053 = vsel %vm542, %v2057, 0.0
  %v3054 = vadd.f32 %v3052, %v3053
  %v3055 = vsel %vm542, %v2058, 0.0
  %v3056 = vadd.f32 %v3054, %v3055
  %v3057 = vsel %vm542, %v2059, 0.0
  %v3058 = vadd.f32 %v3056, %v3057
  %v3059 = vsel %vm542, %v2060, 0.0
  %v3060 = vadd.f32 %v3058, %v3059
  %v3061 = vsel %vm542, %v2061, 0.0
  %v3062 = vadd.f32 %v3060, %v3061
  %v3063 = vsel %vm542, %v2062, 0.0
  %v3064 = vadd.f32 %v3062, %v3063
  %v3065 = vsel %vm542, %v2063, 0.0
  %v3066 = vadd.f32 %v3064, %v3065
  %v3067 = vsel %vm542, %v2064, 0.0
  %v3068 = vadd.f32 %v3066, %v3067
  %v3069 = vsel %vm542, %v2065, 0.0
  %v3070 = vadd.f32 %v3068, %v3069
  %v3071 = vsel %vm542, %v2066, 0.0
  %v3072 = vadd.f32 %v3070, %v3071
  %v3073 = vsel %vm542, %v2067, 0.0
  %v3074 = vadd.f32 %v3072, %v3073
  %v3075 = vsel %vm542, %v2068, 0.0
  %v3076 = vadd.f32 %v3074, %v3075
  %v3077 = vsel %vm542, %v2069, 0.0
  %v3078 = vadd.f32 %v3076, %v3077
  %v3079 = vsel %vm542, %v2070, 0.0
  %v3080 = vadd.f32 %v3078, %v3079
  %v3081 = vsel %vm542, %v2071, 0.0
  %v3082 = vadd.f32 %v3080, %v3081
  %v3083 = vsel %vm542, %v2072, 0.0
  %v3084 = vadd.f32 %v3082, %v3083
  %v3085 = vsel %vm542, %v2073, 0.0
  %v3086 = vadd.f32 %v3084, %v3085
  %v3087 = vsel %vm542, %v2074, 0.0
  %v3088 = vadd.f32 %v3086, %v3087
  %v3089 = vsel %vm542, %v2075, 0.0
  %v3090 = vadd.f32 %v3088, %v3089
  %v3091 = vsel %vm542, %v2076, 0.0
  %v3092 = vadd.f32 %v3090, %v3091
  %v3093 = vsel %vm542, %v2077, 0.0
  %v3094 = vadd.f32 %v3092, %v3093
  %v3095 = vsel %vm542, %v2078, 0.0
  %v3096 = vadd.f32 %v3094, %v3095
  %v3097 = vsel %vm542, %v2079, 0.0
  %v3098 = vadd.f32 %v3096, %v3097
  %v3099 = vsel %vm542, %v2080, 0.0
  %v3100 = vadd.f32 %v3098, %v3099
  %v3101 = vsel %vm542, %v2081, 0.0
  %v3102 = vadd.f32 %v3100, %v3101
  %v3103 = vsel %vm542, %v2082, 0.0
  %v3104 = vadd.f32 %v3102, %v3103
  %v3105 = vsel %vm542, %v2083, 0.0
  %v3106 = vadd.f32 %v3104, %v3105
  %v3107 = vrot.slane %v3106, 4
  %v3108 = vadd.f32 %v3106, %v3107
  %v3109 = vrot.slane %v3108, 2
  %v3110 = vadd.f32 %v3108, %v3109
  %v3111 = vrot.slane %v3110, 1
  %v3112 = vadd.f32 %v3110, %v3111
  %v3113 = vrcp.pop 4096.0
  %v3114 = vmul.f32 %v1571, %v3113
  %v3115 = vmul.f32 %v3112, %v3113
  %v3116 = vmul.f32 %v3114, %v3114
  %v3117 = vsub.f32 %v3115, %v3116
  %v3118 = vadd.f32 %v3117, 1e-05
  %v3119 = vrsqrt.pop %v3118
  %v3120 = vmul.f32 %v3119, %v28
  %v3121 = vmul.f32 %v3114, %v3120
  %v3122 = vsub.f32 %v29, %v3121
  %v3123 = vlaneseq
  %v3124 = vshrl.u32 %v3123, 7
  %v3125 = vsub.s32 0, %v3124
  %v3126 = vrot.slane %v3120, %v3125
  %v3127 = vmul.f32 %v30, %v3126
  %v3128 = vmul.f32 %v31, %v3126
  %v3129 = vmul.f32 %v32, %v3126
  %v3130 = vmul.f32 %v33, %v3126
  %v3131 = vmul.f32 %v34, %v3126
  %v3132 = vmul.f32 %v35, %v3126
  %v3133 = vmul.f32 %v36, %v3126
  %v3134 = vmul.f32 %v37, %v3126
  %v3135 = vmul.f32 %v38, %v3126
  %v3136 = vmul.f32 %v39, %v3126
  %v3137 = vmul.f32 %v40, %v3126
  %v3138 = vmul.f32 %v41, %v3126
  %v3139 = vmul.f32 %v42, %v3126
  %v3140 = vmul.f32 %v43, %v3126
  %v3141 = vmul.f32 %v44, %v3126
  %v3142 = vmul.f32 %v45, %v3126
  %v3143 = vmul.f32 %v46, %v3126
  %v3144 = vmul.f32 %v47, %v3126
  %v3145 = vmul.f32 %v48, %v3126
  %v3146 = vmul.f32 %v49, %v3126
  %v3147 = vmul.f32 %v50, %v3126
  %v3148 = vmul.f32 %v51, %v3126
  %v3149 = vmul.f32 %v52, %v3126
  %v3150 = vmul.f32 %v53, %v3126
  %v3151 = vmul.f32 %v54, %v3126
  %v3152 = vmul.f32 %v55, %v3126
  %v3153 = vmul.f32 %v56, %v3126
  %v3154 = vmul.f32 %v57, %v3126
  %v3155 = vmul.f32 %v58, %v3126
  %v3156 = vmul.f32 %v59, %v3126
  %v3157 = vmul.f32 %v60, %v3126
  %v3158 = vmul.f32 %v61, %v3126
  %v3159 = vmul.f32 %v62, %v3126
  %v3160 = vmul.f32 %v63, %v3126
  %v3161 = vmul.f32 %v64, %v3126
  %v3162 = vmul.f32 %v65, %v3126
  %v3163 = vmul.f32 %v66, %v3126
  %v3164 = vmul.f32 %v67, %v3126
  %v3165 = vmul.f32 %v68, %v3126
  %v3166 = vmul.f32 %v69, %v3126
  %v3167 = vmul.f32 %v70, %v3126
  %v3168 = vmul.f32 %v71, %v3126
  %v3169 = vmul.f32 %v72, %v3126
  %v3170 = vmul.f32 %v73, %v3126
  %v3171 = vmul.f32 %v74, %v3126
  %v3172 = vmul.f32 %v75, %v3126
  %v3173 = vmul.f32 %v76, %v3126
  %v3174 = vmul.f32 %v77, %v3126
  %v3175 = vmul.f32 %v78, %v3126
  %v3176 = vmul.f32 %v79, %v3126
  %v3177 = vmul.f32 %v80, %v3126
  %v3178 = vmul.f32 %v81, %v3126
  %v3179 = vmul.f32 %v82, %v3126
  %v3180 = vmul.f32 %v83, %v3126
  %v3181 = vmul.f32 %v84, %v3126
  %v3182 = vmul.f32 %v85, %v3126
  %v3183 = vmul.f32 %v86, %v3126
  %v3184 = vmul.f32 %v87, %v3126
  %v3185 = vmul.f32 %v88, %v3126
  %v3186 = vmul.f32 %v89, %v3126
  %v3187 = vmul.f32 %v90, %v3126
  %v3188 = vmul.f32 %v91, %v3126
  %v3189 = vmul.f32 %v92, %v3126
  %v3190 = vmul.f32 %v93, %v3126
  %v3191 = vmul.f32 %v94, %v3126
  %v3192 = vmul.f32 %v95, %v3126
  %v3193 = vmul.f32 %v96, %v3126
  %v3194 = vmul.f32 %v97, %v3126
  %v3195 = vmul.f32 %v98, %v3126
  %v3196 = vmul.f32 %v99, %v3126
  %v3197 = vmul.f32 %v100, %v3126
  %v3198 = vmul.f32 %v101, %v3126
  %v3199 = vmul.f32 %v102, %v3126
  %v3200 = vmul.f32 %v103, %v3126
  %v3201 = vmul.f32 %v104, %v3126
  %v3202 = vmul.f32 %v105, %v3126
  %v3203 = vmul.f32 %v106, %v3126
  %v3204 = vmul.f32 %v107, %v3126
  %v3205 = vmul.f32 %v108, %v3126
  %v3206 = vmul.f32 %v109, %v3126
  %v3207 = vmul.f32 %v110, %v3126
  %v3208 = vmul.f32 %v111, %v3126
  %v3209 = vmul.f32 %v112, %v3126
  %v3210 = vmul.f32 %v113, %v3126
  %v3211 = vmul.f32 %v114, %v3126
  %v3212 = vmul.f32 %v115, %v3126
  %v3213 = vmul.f32 %v116, %v3126
  %v3214 = vmul.f32 %v117, %v3126
  %v3215 = vmul.f32 %v118, %v3126
  %v3216 = vmul.f32 %v119, %v3126
  %v3217 = vmul.f32 %v120, %v3126
  %v3218 = vmul.f32 %v121, %v3126
  %v3219 = vmul.f32 %v122, %v3126
  %v3220 = vmul.f32 %v123, %v3126
  %v3221 = vmul.f32 %v124, %v3126
  %v3222 = vmul.f32 %v125, %v3126
  %v3223 = vmul.f32 %v126, %v3126
  %v3224 = vmul.f32 %v127, %v3126
  %v3225 = vmul.f32 %v128, %v3126
  %v3226 = vmul.f32 %v129, %v3126
  %v3227 = vmul.f32 %v130, %v3126
  %v3228 = vmul.f32 %v131, %v3126
  %v3229 = vmul.f32 %v132, %v3126
  %v3230 = vmul.f32 %v133, %v3126
  %v3231 = vmul.f32 %v134, %v3126
  %v3232 = vmul.f32 %v135, %v3126
  %v3233 = vmul.f32 %v136, %v3126
  %v3234 = vmul.f32 %v137, %v3126
  %v3235 = vmul.f32 %v138, %v3126
  %v3236 = vmul.f32 %v139, %v3126
  %v3237 = vmul.f32 %v140, %v3126
  %v3238 = vmul.f32 %v141, %v3126
  %v3239 = vmul.f32 %v142, %v3126
  %v3240 = vmul.f32 %v143, %v3126
  %v3241 = vmul.f32 %v144, %v3126
  %v3242 = vmul.f32 %v145, %v3126
  %v3243 = vmul.f32 %v146, %v3126
  %v3244 = vmul.f32 %v147, %v3126
  %v3245 = vmul.f32 %v148, %v3126
  %v3246 = vmul.f32 %v149, %v3126
  %v3247 = vmul.f32 %v150, %v3126
  %v3248 = vmul.f32 %v151, %v3126
  %v3249 = vmul.f32 %v152, %v3126
  %v3250 = vmul.f32 %v153, %v3126
  %v3251 = vmul.f32 %v154, %v3126
  %v3252 = vmul.f32 %v155, %v3126
  %v3253 = vmul.f32 %v156, %v3126
  %v3254 = vmul.f32 %v157, %v3126
  %v3255 = vmul.f32 %v158, %v3126
  %v3256 = vmul.f32 %v159, %v3126
  %v3257 = vmul.f32 %v160, %v3126
  %v3258 = vmul.f32 %v161, %v3126
  %v3259 = vmul.f32 %v162, %v3126
  %v3260 = vmul.f32 %v163, %v3126
  %v3261 = vmul.f32 %v164, %v3126
  %v3262 = vmul.f32 %v165, %v3126
  %v3263 = vmul.f32 %v166, %v3126
  %v3264 = vmul.f32 %v167, %v3126
  %v3265 = vmul.f32 %v168, %v3126
  %v3266 = vmul.f32 %v169, %v3126
  %v3267 = vmul.f32 %v170, %v3126
  %v3268 = vmul.f32 %v171, %v3126
  %v3269 = vmul.f32 %v172, %v3126
  %v3270 = vmul.f32 %v173, %v3126
  %v3271 = vmul.f32 %v174, %v3126
  %v3272 = vmul.f32 %v175, %v3126
  %v3273 = vmul.f32 %v176, %v3126
  %v3274 = vmul.f32 %v177, %v3126
  %v3275 = vmul.f32 %v178, %v3126
  %v3276 = vmul.f32 %v179, %v3126
  %v3277 = vmul.f32 %v180, %v3126
  %v3278 = vmul.f32 %v181, %v3126
  %v3279 = vmul.f32 %v182, %v3126
  %v3280 = vmul.f32 %v183, %v3126
  %v3281 = vmul.f32 %v184, %v3126
  %v3282 = vmul.f32 %v185, %v3126
  %v3283 = vmul.f32 %v186, %v3126
  %v3284 = vmul.f32 %v187, %v3126
  %v3285 = vmul.f32 %v188, %v3126
  %v3286 = vmul.f32 %v189, %v3126
  %v3287 = vmul.f32 %v190, %v3126
  %v3288 = vmul.f32 %v191, %v3126
  %v3289 = vmul.f32 %v192, %v3126
  %v3290 = vmul.f32 %v193, %v3126
  %v3291 = vmul.f32 %v194, %v3126
  %v3292 = vmul.f32 %v195, %v3126
  %v3293 = vmul.f32 %v196, %v3126
  %v3294 = vmul.f32 %v197, %v3126
  %v3295 = vmul.f32 %v198, %v3126
  %v3296 = vmul.f32 %v199, %v3126
  %v3297 = vmul.f32 %v200, %v3126
  %v3298 = vmul.f32 %v201, %v3126
  %v3299 = vmul.f32 %v202, %v3126
  %v3300 = vmul.f32 %v203, %v3126
  %v3301 = vmul.f32 %v204, %v3126
  %v3302 = vmul.f32 %v205, %v3126
  %v3303 = vmul.f32 %v206, %v3126
  %v3304 = vmul.f32 %v207, %v3126
  %v3305 = vmul.f32 %v208, %v3126
  %v3306 = vmul.f32 %v209, %v3126
  %v3307 = vmul.f32 %v210, %v3126
  %v3308 = vmul.f32 %v211, %v3126
  %v3309 = vmul.f32 %v212, %v3126
  %v3310 = vmul.f32 %v213, %v3126
  %v3311 = vmul.f32 %v214, %v3126
  %v3312 = vmul.f32 %v215, %v3126
  %v3313 = vmul.f32 %v216, %v3126
  %v3314 = vmul.f32 %v217, %v3126
  %v3315 = vmul.f32 %v218, %v3126
  %v3316 = vmul.f32 %v219, %v3126
  %v3317 = vmul.f32 %v220, %v3126
  %v3318 = vmul.f32 %v221, %v3126
  %v3319 = vmul.f32 %v222, %v3126
  %v3320 = vmul.f32 %v223, %v3126
  %v3321 = vmul.f32 %v224, %v3126
  %v3322 = vmul.f32 %v225, %v3126
  %v3323 = vmul.f32 %v226, %v3126
  %v3324 = vmul.f32 %v227, %v3126
  %v3325 = vmul.f32 %v228, %v3126
  %v3326 = vmul.f32 %v229, %v3126
  %v3327 = vmul.f32 %v230, %v3126
  %v3328 = vmul.f32 %v231, %v3126
  %v3329 = vmul.f32 %v232, %v3126
  %v3330 = vmul.f32 %v233, %v3126
  %v3331 = vmul.f32 %v234, %v3126
  %v3332 = vmul.f32 %v235, %v3126
  %v3333 = vmul.f32 %v236, %v3126
  %v3334 = vmul.f32 %v237, %v3126
  %v3335 = vmul.f32 %v238, %v3126
  %v3336 = vmul.f32 %v239, %v3126
  %v3337 = vmul.f32 %v240, %v3126
  %v3338 = vmul.f32 %v241, %v3126
  %v3339 = vmul.f32 %v242, %v3126
  %v3340 = vmul.f32 %v243, %v3126
  %v3341 = vmul.f32 %v244, %v3126
  %v3342 = vmul.f32 %v245, %v3126
  %v3343 = vmul.f32 %v246, %v3126
  %v3344 = vmul.f32 %v247, %v3126
  %v3345 = vmul.f32 %v248, %v3126
  %v3346 = vmul.f32 %v249, %v3126
  %v3347 = vmul.f32 %v250, %v3126
  %v3348 = vmul.f32 %v251, %v3126
  %v3349 = vmul.f32 %v252, %v3126
  %v3350 = vmul.f32 %v253, %v3126
  %v3351 = vmul.f32 %v254, %v3126
  %v3352 = vmul.f32 %v255, %v3126
  %v3353 = vmul.f32 %v256, %v3126
  %v3354 = vmul.f32 %v257, %v3126
  %v3355 = vmul.f32 %v258, %v3126
  %v3356 = vmul.f32 %v259, %v3126
  %v3357 = vmul.f32 %v260, %v3126
  %v3358 = vmul.f32 %v261, %v3126
  %v3359 = vmul.f32 %v262, %v3126
  %v3360 = vmul.f32 %v263, %v3126
  %v3361 = vmul.f32 %v264, %v3126
  %v3362 = vmul.f32 %v265, %v3126
  %v3363 = vmul.f32 %v266, %v3126
  %v3364 = vmul.f32 %v267, %v3126
  %v3365 = vmul.f32 %v268, %v3126
  %v3366 = vmul.f32 %v269, %v3126
  %v3367 = vmul.f32 %v270, %v3126
  %v3368 = vmul.f32 %v271, %v3126
  %v3369 = vmul.f32 %v272, %v3126
  %v3370 = vmul.f32 %v273, %v3126
  %v3371 = vmul.f32 %v274, %v3126
  %v3372 = vmul.f32 %v275, %v3126
  %v3373 = vmul.f32 %v276, %v3126
  %v3374 = vmul.f32 %v277, %v3126
  %v3375 = vmul.f32 %v278, %v3126
  %v3376 = vmul.f32 %v279, %v3126
  %v3377 = vmul.f32 %v280, %v3126
  %v3378 = vmul.f32 %v281, %v3126
  %v3379 = vmul.f32 %v282, %v3126
  %v3380 = vmul.f32 %v283, %v3126
  %v3381 = vmul.f32 %v284, %v3126
  %v3382 = vmul.f32 %v285, %v3126
  %v3383 = vmul.f32 %v286, %v3126
  %v3384 = vmul.f32 %v287, %v3126
  %v3385 = vmul.f32 %v288, %v3126
  %v3386 = vmul.f32 %v289, %v3126
  %v3387 = vmul.f32 %v290, %v3126
  %v3388 = vmul.f32 %v291, %v3126
  %v3389 = vmul.f32 %v292, %v3126
  %v3390 = vmul.f32 %v293, %v3126
  %v3391 = vmul.f32 %v294, %v3126
  %v3392 = vmul.f32 %v295, %v3126
  %v3393 = vmul.f32 %v296, %v3126
  %v3394 = vmul.f32 %v297, %v3126
  %v3395 = vmul.f32 %v298, %v3126
  %v3396 = vmul.f32 %v299, %v3126
  %v3397 = vmul.f32 %v300, %v3126
  %v3398 = vmul.f32 %v301, %v3126
  %v3399 = vmul.f32 %v302, %v3126
  %v3400 = vmul.f32 %v303, %v3126
  %v3401 = vmul.f32 %v304, %v3126
  %v3402 = vmul.f32 %v305, %v3126
  %v3403 = vmul.f32 %v306, %v3126
  %v3404 = vmul.f32 %v307, %v3126
  %v3405 = vmul.f32 %v308, %v3126
  %v3406 = vmul.f32 %v309, %v3126
  %v3407 = vmul.f32 %v310, %v3126
  %v3408 = vmul.f32 %v311, %v3126
  %v3409 = vmul.f32 %v312, %v3126
  %v3410 = vmul.f32 %v313, %v3126
  %v3411 = vmul.f32 %v314, %v3126
  %v3412 = vmul.f32 %v315, %v3126
  %v3413 = vmul.f32 %v316, %v3126
  %v3414 = vmul.f32 %v317, %v3126
  %v3415 = vmul.f32 %v318, %v3126
  %v3416 = vmul.f32 %v319, %v3126
  %v3417 = vmul.f32 %v320, %v3126
  %v3418 = vmul.f32 %v321, %v3126
  %v3419 = vmul.f32 %v322, %v3126
  %v3420 = vmul.f32 %v323, %v3126
  %v3421 = vmul.f32 %v324, %v3126
  %v3422 = vmul.f32 %v325, %v3126
  %v3423 = vmul.f32 %v326, %v3126
  %v3424 = vmul.f32 %v327, %v3126
  %v3425 = vmul.f32 %v328, %v3126
  %v3426 = vmul.f32 %v329, %v3126
  %v3427 = vmul.f32 %v330, %v3126
  %v3428 = vmul.f32 %v331, %v3126
  %v3429 = vmul.f32 %v332, %v3126
  %v3430 = vmul.f32 %v333, %v3126
  %v3431 = vmul.f32 %v334, %v3126
  %v3432 = vmul.f32 %v335, %v3126
  %v3433 = vmul.f32 %v336, %v3126
  %v3434 = vmul.f32 %v337, %v3126
  %v3435 = vmul.f32 %v338, %v3126
  %v3436 = vmul.f32 %v339, %v3126
  %v3437 = vmul.f32 %v340, %v3126
  %v3438 = vmul.f32 %v341, %v3126
  %v3439 = vmul.f32 %v342, %v3126
  %v3440 = vmul.f32 %v343, %v3126
  %v3441 = vmul.f32 %v344, %v3126
  %v3442 = vmul.f32 %v345, %v3126
  %v3443 = vmul.f32 %v346, %v3126
  %v3444 = vmul.f32 %v347, %v3126
  %v3445 = vmul.f32 %v348, %v3126
  %v3446 = vmul.f32 %v349, %v3126
  %v3447 = vmul.f32 %v350, %v3126
  %v3448 = vmul.f32 %v351, %v3126
  %v3449 = vmul.f32 %v352, %v3126
  %v3450 = vmul.f32 %v353, %v3126
  %v3451 = vmul.f32 %v354, %v3126
  %v3452 = vmul.f32 %v355, %v3126
  %v3453 = vmul.f32 %v356, %v3126
  %v3454 = vmul.f32 %v357, %v3126
  %v3455 = vmul.f32 %v358, %v3126
  %v3456 = vmul.f32 %v359, %v3126
  %v3457 = vmul.f32 %v360, %v3126
  %v3458 = vmul.f32 %v361, %v3126
  %v3459 = vmul.f32 %v362, %v3126
  %v3460 = vmul.f32 %v363, %v3126
  %v3461 = vmul.f32 %v364, %v3126
  %v3462 = vmul.f32 %v365, %v3126
  %v3463 = vmul.f32 %v366, %v3126
  %v3464 = vmul.f32 %v367, %v3126
  %v3465 = vmul.f32 %v368, %v3126
  %v3466 = vmul.f32 %v369, %v3126
  %v3467 = vmul.f32 %v370, %v3126
  %v3468 = vmul.f32 %v371, %v3126
  %v3469 = vmul.f32 %v372, %v3126
  %v3470 = vmul.f32 %v373, %v3126
  %v3471 = vmul.f32 %v374, %v3126
  %v3472 = vmul.f32 %v375, %v3126
  %v3473 = vmul.f32 %v376, %v3126
  %v3474 = vmul.f32 %v377, %v3126
  %v3475 = vmul.f32 %v378, %v3126
  %v3476 = vmul.f32 %v379, %v3126
  %v3477 = vmul.f32 %v380, %v3126
  %v3478 = vmul.f32 %v381, %v3126
  %v3479 = vmul.f32 %v382, %v3126
  %v3480 = vmul.f32 %v383, %v3126
  %v3481 = vmul.f32 %v384, %v3126
  %v3482 = vmul.f32 %v385, %v3126
  %v3483 = vmul.f32 %v386, %v3126
  %v3484 = vmul.f32 %v387, %v3126
  %v3485 = vmul.f32 %v388, %v3126
  %v3486 = vmul.f32 %v389, %v3126
  %v3487 = vmul.f32 %v390, %v3126
  %v3488 = vmul.f32 %v391, %v3126
  %v3489 = vmul.f32 %v392, %v3126
  %v3490 = vmul.f32 %v393, %v3126
  %v3491 = vmul.f32 %v394, %v3126
  %v3492 = vmul.f32 %v395, %v3126
  %v3493 = vmul.f32 %v396, %v3126
  %v3494 = vmul.f32 %v397, %v3126
  %v3495 = vmul.f32 %v398, %v3126
  %v3496 = vmul.f32 %v399, %v3126
  %v3497 = vmul.f32 %v400, %v3126
  %v3498 = vmul.f32 %v401, %v3126
  %v3499 = vmul.f32 %v402, %v3126
  %v3500 = vmul.f32 %v403, %v3126
  %v3501 = vmul.f32 %v404, %v3126
  %v3502 = vmul.f32 %v405, %v3126
  %v3503 = vmul.f32 %v406, %v3126
  %v3504 = vmul.f32 %v407, %v3126
  %v3505 = vmul.f32 %v408, %v3126
  %v3506 = vmul.f32 %v409, %v3126
  %v3507 = vmul.f32 %v410, %v3126
  %v3508 = vmul.f32 %v411, %v3126
  %v3509 = vmul.f32 %v412, %v3126
  %v3510 = vmul.f32 %v413, %v3126
  %v3511 = vmul.f32 %v414, %v3126
  %v3512 = vmul.f32 %v415, %v3126
  %v3513 = vmul.f32 %v416, %v3126
  %v3514 = vmul.f32 %v417, %v3126
  %v3515 = vmul.f32 %v418, %v3126
  %v3516 = vmul.f32 %v419, %v3126
  %v3517 = vmul.f32 %v420, %v3126
  %v3518 = vmul.f32 %v421, %v3126
  %v3519 = vmul.f32 %v422, %v3126
  %v3520 = vmul.f32 %v423, %v3126
  %v3521 = vmul.f32 %v424, %v3126
  %v3522 = vmul.f32 %v425, %v3126
  %v3523 = vmul.f32 %v426, %v3126
  %v3524 = vmul.f32 %v427, %v3126
  %v3525 = vmul.f32 %v428, %v3126
  %v3526 = vmul.f32 %v429, %v3126
  %v3527 = vmul.f32 %v430, %v3126
  %v3528 = vmul.f32 %v431, %v3126
  %v3529 = vmul.f32 %v432, %v3126
  %v3530 = vmul.f32 %v433, %v3126
  %v3531 = vmul.f32 %v434, %v3126
  %v3532 = vmul.f32 %v435, %v3126
  %v3533 = vmul.f32 %v436, %v3126
  %v3534 = vmul.f32 %v437, %v3126
  %v3535 = vmul.f32 %v438, %v3126
  %v3536 = vmul.f32 %v439, %v3126
  %v3537 = vmul.f32 %v440, %v3126
  %v3538 = vmul.f32 %v441, %v3126
  %v3539 = vmul.f32 %v442, %v3126
  %v3540 = vmul.f32 %v443, %v3126
  %v3541 = vmul.f32 %v444, %v3126
  %v3542 = vmul.f32 %v445, %v3126
  %v3543 = vmul.f32 %v446, %v3126
  %v3544 = vmul.f32 %v447, %v3126
  %v3545 = vmul.f32 %v448, %v3126
  %v3546 = vmul.f32 %v449, %v3126
  %v3547 = vmul.f32 %v450, %v3126
  %v3548 = vmul.f32 %v451, %v3126
  %v3549 = vmul.f32 %v452, %v3126
  %v3550 = vmul.f32 %v453, %v3126
  %v3551 = vmul.f32 %v454, %v3126
  %v3552 = vmul.f32 %v455, %v3126
  %v3553 = vmul.f32 %v456, %v3126
  %v3554 = vmul.f32 %v457, %v3126
  %v3555 = vmul.f32 %v458, %v3126
  %v3556 = vmul.f32 %v459, %v3126
  %v3557 = vmul.f32 %v460, %v3126
  %v3558 = vmul.f32 %v461, %v3126
  %v3559 = vmul.f32 %v462, %v3126
  %v3560 = vmul.f32 %v463, %v3126
  %v3561 = vmul.f32 %v464, %v3126
  %v3562 = vmul.f32 %v465, %v3126
  %v3563 = vmul.f32 %v466, %v3126
  %v3564 = vmul.f32 %v467, %v3126
  %v3565 = vmul.f32 %v468, %v3126
  %v3566 = vmul.f32 %v469, %v3126
  %v3567 = vmul.f32 %v470, %v3126
  %v3568 = vmul.f32 %v471, %v3126
  %v3569 = vmul.f32 %v472, %v3126
  %v3570 = vmul.f32 %v473, %v3126
  %v3571 = vmul.f32 %v474, %v3126
  %v3572 = vmul.f32 %v475, %v3126
  %v3573 = vmul.f32 %v476, %v3126
  %v3574 = vmul.f32 %v477, %v3126
  %v3575 = vmul.f32 %v478, %v3126
  %v3576 = vmul.f32 %v479, %v3126
  %v3577 = vmul.f32 %v480, %v3126
  %v3578 = vmul.f32 %v481, %v3126
  %v3579 = vmul.f32 %v482, %v3126
  %v3580 = vmul.f32 %v483, %v3126
  %v3581 = vmul.f32 %v484, %v3126
  %v3582 = vmul.f32 %v485, %v3126
  %v3583 = vmul.f32 %v486, %v3126
  %v3584 = vmul.f32 %v487, %v3126
  %v3585 = vmul.f32 %v488, %v3126
  %v3586 = vmul.f32 %v489, %v3126
  %v3587 = vmul.f32 %v490, %v3126
  %v3588 = vmul.f32 %v491, %v3126
  %v3589 = vmul.f32 %v492, %v3126
  %v3590 = vmul.f32 %v493, %v3126
  %v3591 = vmul.f32 %v494, %v3126
  %v3592 = vmul.f32 %v495, %v3126
  %v3593 = vmul.f32 %v496, %v3126
  %v3594 = vmul.f32 %v497, %v3126
  %v3595 = vmul.f32 %v498, %v3126
  %v3596 = vmul.f32 %v499, %v3126
  %v3597 = vmul.f32 %v500, %v3126
  %v3598 = vmul.f32 %v501, %v3126
  %v3599 = vmul.f32 %v502, %v3126
  %v3600 = vmul.f32 %v503, %v3126
  %v3601 = vmul.f32 %v504, %v3126
  %v3602 = vmul.f32 %v505, %v3126
  %v3603 = vmul.f32 %v506, %v3126
  %v3604 = vmul.f32 %v507, %v3126
  %v3605 = vmul.f32 %v508, %v3126
  %v3606 = vmul.f32 %v509, %v3126
  %v3607 = vmul.f32 %v510, %v3126
  %v3608 = vmul.f32 %v511, %v3126
  %v3609 = vmul.f32 %v512, %v3126
  %v3610 = vmul.f32 %v513, %v3126
  %v3611 = vmul.f32 %v514, %v3126
  %v3612 = vmul.f32 %v515, %v3126
  %v3613 = vmul.f32 %v516, %v3126
  %v3614 = vmul.f32 %v517, %v3126
  %v3615 = vmul.f32 %v518, %v3126
  %v3616 = vmul.f32 %v519, %v3126
  %v3617 = vmul.f32 %v520, %v3126
  %v3618 = vmul.f32 %v521, %v3126
  %v3619 = vmul.f32 %v522, %v3126
  %v3620 = vmul.f32 %v523, %v3126
  %v3621 = vmul.f32 %v524, %v3126
  %v3622 = vmul.f32 %v525, %v3126
  %v3623 = vmul.f32 %v526, %v3126
  %v3624 = vmul.f32 %v527, %v3126
  %v3625 = vmul.f32 %v528, %v3126
  %v3626 = vmul.f32 %v529, %v3126
  %v3627 = vmul.f32 %v530, %v3126
  %v3628 = vmul.f32 %v531, %v3126
  %v3629 = vmul.f32 %v532, %v3126
  %v3630 = vmul.f32 %v533, %v3126
  %v3631 = vmul.f32 %v534, %v3126
  %v3632 = vmul.f32 %v535, %v3126
  %v3633 = vmul.f32 %v536, %v3126
  %v3634 = vmul.f32 %v537, %v3126
  %v3635 = vmul.f32 %v538, %v3126
  %v3636 = vmul.f32 %v539, %v3126
  %v3637 = vmul.f32 %v540, %v3126
  %v3638 = vmul.f32 %v541, %v3126
  %v3640 = vlaneseq
  %v3641 = vshrl.u32 %v3640, 7
  %v3642 = vsub.s32 0, %v3641
  %v3643 = vrot.slane %v3122, %v3642
  %v3645 = vadd.f32 %v3127, %v3643
  %v3646 = vadd.f32 %v3128, %v3643
  %v3647 = vadd.f32 %v3129, %v3643
  %v3648 = vadd.f32 %v3130, %v3643
  %v3649 = vadd.f32 %v3131, %v3643
  %v3650 = vadd.f32 %v3132, %v3643
  %v3651 = vadd.f32 %v3133, %v3643
  %v3652 = vadd.f32 %v3134, %v3643
  %v3653 = vadd.f32 %v3135, %v3643
  %v3654 = vadd.f32 %v3136, %v3643
  %v3655 = vadd.f32 %v3137, %v3643
  %v3656 = vadd.f32 %v3138, %v3643
  %v3657 = vadd.f32 %v3139, %v3643
  %v3658 = vadd.f32 %v3140, %v3643
  %v3659 = vadd.f32 %v3141, %v3643
  %v3660 = vadd.f32 %v3142, %v3643
  %v3661 = vadd.f32 %v3143, %v3643
  %v3662 = vadd.f32 %v3144, %v3643
  %v3663 = vadd.f32 %v3145, %v3643
  %v3664 = vadd.f32 %v3146, %v3643
  %v3665 = vadd.f32 %v3147, %v3643
  %v3666 = vadd.f32 %v3148, %v3643
  %v3667 = vadd.f32 %v3149, %v3643
  %v3668 = vadd.f32 %v3150, %v3643
  %v3669 = vadd.f32 %v3151, %v3643
  %v3670 = vadd.f32 %v3152, %v3643
  %v3671 = vadd.f32 %v3153, %v3643
  %v3672 = vadd.f32 %v3154, %v3643
  %v3673 = vadd.f32 %v3155, %v3643
  %v3674 = vadd.f32 %v3156, %v3643
  %v3675 = vadd.f32 %v3157, %v3643
  %v3676 = vadd.f32 %v3158, %v3643
  %v3677 = vadd.f32 %v3159, %v3643
  %v3678 = vadd.f32 %v3160, %v3643
  %v3679 = vadd.f32 %v3161, %v3643
  %v3680 = vadd.f32 %v3162, %v3643
  %v3681 = vadd.f32 %v3163, %v3643
  %v3682 = vadd.f32 %v3164, %v3643
  %v3683 = vadd.f32 %v3165, %v3643
  %v3684 = vadd.f32 %v3166, %v3643
  %v3685 = vadd.f32 %v3167, %v3643
  %v3686 = vadd.f32 %v3168, %v3643
  %v3687 = vadd.f32 %v3169, %v3643
  %v3688 = vadd.f32 %v3170, %v3643
  %v3689 = vadd.f32 %v3171, %v3643
  %v3690 = vadd.f32 %v3172, %v3643
  %v3691 = vadd.f32 %v3173, %v3643
  %v3692 = vadd.f32 %v3174, %v3643
  %v3693 = vadd.f32 %v3175, %v3643
  %v3694 = vadd.f32 %v3176, %v3643
  %v3695 = vadd.f32 %v3177, %v3643
  %v3696 = vadd.f32 %v3178, %v3643
  %v3697 = vadd.f32 %v3179, %v3643
  %v3698 = vadd.f32 %v3180, %v3643
  %v3699 = vadd.f32 %v3181, %v3643
  %v3700 = vadd.f32 %v3182, %v3643
  %v3701 = vadd.f32 %v3183, %v3643
  %v3702 = vadd.f32 %v3184, %v3643
  %v3703 = vadd.f32 %v3185, %v3643
  %v3704 = vadd.f32 %v3186, %v3643
  %v3705 = vadd.f32 %v3187, %v3643
  %v3706 = vadd.f32 %v3188, %v3643
  %v3707 = vadd.f32 %v3189, %v3643
  %v3708 = vadd.f32 %v3190, %v3643
  %v3709 = vadd.f32 %v3191, %v3643
  %v3710 = vadd.f32 %v3192, %v3643
  %v3711 = vadd.f32 %v3193, %v3643
  %v3712 = vadd.f32 %v3194, %v3643
  %v3713 = vadd.f32 %v3195, %v3643
  %v3714 = vadd.f32 %v3196, %v3643
  %v3715 = vadd.f32 %v3197, %v3643
  %v3716 = vadd.f32 %v3198, %v3643
  %v3717 = vadd.f32 %v3199, %v3643
  %v3718 = vadd.f32 %v3200, %v3643
  %v3719 = vadd.f32 %v3201, %v3643
  %v3720 = vadd.f32 %v3202, %v3643
  %v3721 = vadd.f32 %v3203, %v3643
  %v3722 = vadd.f32 %v3204, %v3643
  %v3723 = vadd.f32 %v3205, %v3643
  %v3724 = vadd.f32 %v3206, %v3643
  %v3725 = vadd.f32 %v3207, %v3643
  %v3726 = vadd.f32 %v3208, %v3643
  %v3727 = vadd.f32 %v3209, %v3643
  %v3728 = vadd.f32 %v3210, %v3643
  %v3729 = vadd.f32 %v3211, %v3643
  %v3730 = vadd.f32 %v3212, %v3643
  %v3731 = vadd.f32 %v3213, %v3643
  %v3732 = vadd.f32 %v3214, %v3643
  %v3733 = vadd.f32 %v3215, %v3643
  %v3734 = vadd.f32 %v3216, %v3643
  %v3735 = vadd.f32 %v3217, %v3643
  %v3736 = vadd.f32 %v3218, %v3643
  %v3737 = vadd.f32 %v3219, %v3643
  %v3738 = vadd.f32 %v3220, %v3643
  %v3739 = vadd.f32 %v3221, %v3643
  %v3740 = vadd.f32 %v3222, %v3643
  %v3741 = vadd.f32 %v3223, %v3643
  %v3742 = vadd.f32 %v3224, %v3643
  %v3743 = vadd.f32 %v3225, %v3643
  %v3744 = vadd.f32 %v3226, %v3643
  %v3745 = vadd.f32 %v3227, %v3643
  %v3746 = vadd.f32 %v3228, %v3643
  %v3747 = vadd.f32 %v3229, %v3643
  %v3748 = vadd.f32 %v3230, %v3643
  %v3749 = vadd.f32 %v3231, %v3643
  %v3750 = vadd.f32 %v3232, %v3643
  %v3751 = vadd.f32 %v3233, %v3643
  %v3752 = vadd.f32 %v3234, %v3643
  %v3753 = vadd.f32 %v3235, %v3643
  %v3754 = vadd.f32 %v3236, %v3643
  %v3755 = vadd.f32 %v3237, %v3643
  %v3756 = vadd.f32 %v3238, %v3643
  %v3757 = vadd.f32 %v3239, %v3643
  %v3758 = vadd.f32 %v3240, %v3643
  %v3759 = vadd.f32 %v3241, %v3643
  %v3760 = vadd.f32 %v3242, %v3643
  %v3761 = vadd.f32 %v3243, %v3643
  %v3762 = vadd.f32 %v3244, %v3643
  %v3763 = vadd.f32 %v3245, %v3643
  %v3764 = vadd.f32 %v3246, %v3643
  %v3765 = vadd.f32 %v3247, %v3643
  %v3766 = vadd.f32 %v3248, %v3643
  %v3767 = vadd.f32 %v3249, %v3643
  %v3768 = vadd.f32 %v3250, %v3643
  %v3769 = vadd.f32 %v3251, %v3643
  %v3770 = vadd.f32 %v3252, %v3643
  %v3771 = vadd.f32 %v3253, %v3643
  %v3772 = vadd.f32 %v3254, %v3643
  %v3773 = vadd.f32 %v3255, %v3643
  %v3774 = vadd.f32 %v3256, %v3643
  %v3775 = vadd.f32 %v3257, %v3643
  %v3776 = vadd.f32 %v3258, %v3643
  %v3777 = vadd.f32 %v3259, %v3643
  %v3778 = vadd.f32 %v3260, %v3643
  %v3779 = vadd.f32 %v3261, %v3643
  %v3780 = vadd.f32 %v3262, %v3643
  %v3781 = vadd.f32 %v3263, %v3643
  %v3782 = vadd.f32 %v3264, %v3643
  %v3783 = vadd.f32 %v3265, %v3643
  %v3784 = vadd.f32 %v3266, %v3643
  %v3785 = vadd.f32 %v3267, %v3643
  %v3786 = vadd.f32 %v3268, %v3643
  %v3787 = vadd.f32 %v3269, %v3643
  %v3788 = vadd.f32 %v3270, %v3643
  %v3789 = vadd.f32 %v3271, %v3643
  %v3790 = vadd.f32 %v3272, %v3643
  %v3791 = vadd.f32 %v3273, %v3643
  %v3792 = vadd.f32 %v3274, %v3643
  %v3793 = vadd.f32 %v3275, %v3643
  %v3794 = vadd.f32 %v3276, %v3643
  %v3795 = vadd.f32 %v3277, %v3643
  %v3796 = vadd.f32 %v3278, %v3643
  %v3797 = vadd.f32 %v3279, %v3643
  %v3798 = vadd.f32 %v3280, %v3643
  %v3799 = vadd.f32 %v3281, %v3643
  %v3800 = vadd.f32 %v3282, %v3643
  %v3801 = vadd.f32 %v3283, %v3643
  %v3802 = vadd.f32 %v3284, %v3643
  %v3803 = vadd.f32 %v3285, %v3643
  %v3804 = vadd.f32 %v3286, %v3643
  %v3805 = vadd.f32 %v3287, %v3643
  %v3806 = vadd.f32 %v3288, %v3643
  %v3807 = vadd.f32 %v3289, %v3643
  %v3808 = vadd.f32 %v3290, %v3643
  %v3809 = vadd.f32 %v3291, %v3643
  %v3810 = vadd.f32 %v3292, %v3643
  %v3811 = vadd.f32 %v3293, %v3643
  %v3812 = vadd.f32 %v3294, %v3643
  %v3813 = vadd.f32 %v3295, %v3643
  %v3814 = vadd.f32 %v3296, %v3643
  %v3815 = vadd.f32 %v3297, %v3643
  %v3816 = vadd.f32 %v3298, %v3643
  %v3817 = vadd.f32 %v3299, %v3643
  %v3818 = vadd.f32 %v3300, %v3643
  %v3819 = vadd.f32 %v3301, %v3643
  %v3820 = vadd.f32 %v3302, %v3643
  %v3821 = vadd.f32 %v3303, %v3643
  %v3822 = vadd.f32 %v3304, %v3643
  %v3823 = vadd.f32 %v3305, %v3643
  %v3824 = vadd.f32 %v3306, %v3643
  %v3825 = vadd.f32 %v3307, %v3643
  %v3826 = vadd.f32 %v3308, %v3643
  %v3827 = vadd.f32 %v3309, %v3643
  %v3828 = vadd.f32 %v3310, %v3643
  %v3829 = vadd.f32 %v3311, %v3643
  %v3830 = vadd.f32 %v3312, %v3643
  %v3831 = vadd.f32 %v3313, %v3643
  %v3832 = vadd.f32 %v3314, %v3643
  %v3833 = vadd.f32 %v3315, %v3643
  %v3834 = vadd.f32 %v3316, %v3643
  %v3835 = vadd.f32 %v3317, %v3643
  %v3836 = vadd.f32 %v3318, %v3643
  %v3837 = vadd.f32 %v3319, %v3643
  %v3838 = vadd.f32 %v3320, %v3643
  %v3839 = vadd.f32 %v3321, %v3643
  %v3840 = vadd.f32 %v3322, %v3643
  %v3841 = vadd.f32 %v3323, %v3643
  %v3842 = vadd.f32 %v3324, %v3643
  %v3843 = vadd.f32 %v3325, %v3643
  %v3844 = vadd.f32 %v3326, %v3643
  %v3845 = vadd.f32 %v3327, %v3643
  %v3846 = vadd.f32 %v3328, %v3643
  %v3847 = vadd.f32 %v3329, %v3643
  %v3848 = vadd.f32 %v3330, %v3643
  %v3849 = vadd.f32 %v3331, %v3643
  %v3850 = vadd.f32 %v3332, %v3643
  %v3851 = vadd.f32 %v3333, %v3643
  %v3852 = vadd.f32 %v3334, %v3643
  %v3853 = vadd.f32 %v3335, %v3643
  %v3854 = vadd.f32 %v3336, %v3643
  %v3855 = vadd.f32 %v3337, %v3643
  %v3856 = vadd.f32 %v3338, %v3643
  %v3857 = vadd.f32 %v3339, %v3643
  %v3858 = vadd.f32 %v3340, %v3643
  %v3859 = vadd.f32 %v3341, %v3643
  %v3860 = vadd.f32 %v3342, %v3643
  %v3861 = vadd.f32 %v3343, %v3643
  %v3862 = vadd.f32 %v3344, %v3643
  %v3863 = vadd.f32 %v3345, %v3643
  %v3864 = vadd.f32 %v3346, %v3643
  %v3865 = vadd.f32 %v3347, %v3643
  %v3866 = vadd.f32 %v3348, %v3643
  %v3867 = vadd.f32 %v3349, %v3643
  %v3868 = vadd.f32 %v3350, %v3643
  %v3869 = vadd.f32 %v3351, %v3643
  %v3870 = vadd.f32 %v3352, %v3643
  %v3871 = vadd.f32 %v3353, %v3643
  %v3872 = vadd.f32 %v3354, %v3643
  %v3873 = vadd.f32 %v3355, %v3643
  %v3874 = vadd.f32 %v3356, %v3643
  %v3875 = vadd.f32 %v3357, %v3643
  %v3876 = vadd.f32 %v3358, %v3643
  %v3877 = vadd.f32 %v3359, %v3643
  %v3878 = vadd.f32 %v3360, %v3643
  %v3879 = vadd.f32 %v3361, %v3643
  %v3880 = vadd.f32 %v3362, %v3643
  %v3881 = vadd.f32 %v3363, %v3643
  %v3882 = vadd.f32 %v3364, %v3643
  %v3883 = vadd.f32 %v3365, %v3643
  %v3884 = vadd.f32 %v3366, %v3643
  %v3885 = vadd.f32 %v3367, %v3643
  %v3886 = vadd.f32 %v3368, %v3643
  %v3887 = vadd.f32 %v3369, %v3643
  %v3888 = vadd.f32 %v3370, %v3643
  %v3889 = vadd.f32 %v3371, %v3643
  %v3890 = vadd.f32 %v3372, %v3643
  %v3891 = vadd.f32 %v3373, %v3643
  %v3892 = vadd.f32 %v3374, %v3643
  %v3893 = vadd.f32 %v3375, %v3643
  %v3894 = vadd.f32 %v3376, %v3643
  %v3895 = vadd.f32 %v3377, %v3643
  %v3896 = vadd.f32 %v3378, %v3643
  %v3897 = vadd.f32 %v3379, %v3643
  %v3898 = vadd.f32 %v3380, %v3643
  %v3899 = vadd.f32 %v3381, %v3643
  %v3900 = vadd.f32 %v3382, %v3643
  %v3901 = vadd.f32 %v3383, %v3643
  %v3902 = vadd.f32 %v3384, %v3643
  %v3903 = vadd.f32 %v3385, %v3643
  %v3904 = vadd.f32 %v3386, %v3643
  %v3905 = vadd.f32 %v3387, %v3643
  %v3906 = vadd.f32 %v3388, %v3643
  %v3907 = vadd.f32 %v3389, %v3643
  %v3908 = vadd.f32 %v3390, %v3643
  %v3909 = vadd.f32 %v3391, %v3643
  %v3910 = vadd.f32 %v3392, %v3643
  %v3911 = vadd.f32 %v3393, %v3643
  %v3912 = vadd.f32 %v3394, %v3643
  %v3913 = vadd.f32 %v3395, %v3643
  %v3914 = vadd.f32 %v3396, %v3643
  %v3915 = vadd.f32 %v3397, %v3643
  %v3916 = vadd.f32 %v3398, %v3643
  %v3917 = vadd.f32 %v3399, %v3643
  %v3918 = vadd.f32 %v3400, %v3643
  %v3919 = vadd.f32 %v3401, %v3643
  %v3920 = vadd.f32 %v3402, %v3643
  %v3921 = vadd.f32 %v3403, %v3643
  %v3922 = vadd.f32 %v3404, %v3643
  %v3923 = vadd.f32 %v3405, %v3643
  %v3924 = vadd.f32 %v3406, %v3643
  %v3925 = vadd.f32 %v3407, %v3643
  %v3926 = vadd.f32 %v3408, %v3643
  %v3927 = vadd.f32 %v3409, %v3643
  %v3928 = vadd.f32 %v3410, %v3643
  %v3929 = vadd.f32 %v3411, %v3643
  %v3930 = vadd.f32 %v3412, %v3643
  %v3931 = vadd.f32 %v3413, %v3643
  %v3932 = vadd.f32 %v3414, %v3643
  %v3933 = vadd.f32 %v3415, %v3643
  %v3934 = vadd.f32 %v3416, %v3643
  %v3935 = vadd.f32 %v3417, %v3643
  %v3936 = vadd.f32 %v3418, %v3643
  %v3937 = vadd.f32 %v3419, %v3643
  %v3938 = vadd.f32 %v3420, %v3643
  %v3939 = vadd.f32 %v3421, %v3643
  %v3940 = vadd.f32 %v3422, %v3643
  %v3941 = vadd.f32 %v3423, %v3643
  %v3942 = vadd.f32 %v3424, %v3643
  %v3943 = vadd.f32 %v3425, %v3643
  %v3944 = vadd.f32 %v3426, %v3643
  %v3945 = vadd.f32 %v3427, %v3643
  %v3946 = vadd.f32 %v3428, %v3643
  %v3947 = vadd.f32 %v3429, %v3643
  %v3948 = vadd.f32 %v3430, %v3643
  %v3949 = vadd.f32 %v3431, %v3643
  %v3950 = vadd.f32 %v3432, %v3643
  %v3951 = vadd.f32 %v3433, %v3643
  %v3952 = vadd.f32 %v3434, %v3643
  %v3953 = vadd.f32 %v3435, %v3643
  %v3954 = vadd.f32 %v3436, %v3643
  %v3955 = vadd.f32 %v3437, %v3643
  %v3956 = vadd.f32 %v3438, %v3643
  %v3957 = vadd.f32 %v3439, %v3643
  %v3958 = vadd.f32 %v3440, %v3643
  %v3959 = vadd.f32 %v3441, %v3643
  %v3960 = vadd.f32 %v3442, %v3643
  %v3961 = vadd.f32 %v3443, %v3643
  %v3962 = vadd.f32 %v3444, %v3643
  %v3963 = vadd.f32 %v3445, %v3643
  %v3964 = vadd.f32 %v3446, %v3643
  %v3965 = vadd.f32 %v3447, %v3643
  %v3966 = vadd.f32 %v3448, %v3643
  %v3967 = vadd.f32 %v3449, %v3643
  %v3968 = vadd.f32 %v3450, %v3643
  %v3969 = vadd.f32 %v3451, %v3643
  %v3970 = vadd.f32 %v3452, %v3643
  %v3971 = vadd.f32 %v3453, %v3643
  %v3972 = vadd.f32 %v3454, %v3643
  %v3973 = vadd.f32 %v3455, %v3643
  %v3974 = vadd.f32 %v3456, %v3643
  %v3975 = vadd.f32 %v3457, %v3643
  %v3976 = vadd.f32 %v3458, %v3643
  %v3977 = vadd.f32 %v3459, %v3643
  %v3978 = vadd.f32 %v3460, %v3643
  %v3979 = vadd.f32 %v3461, %v3643
  %v3980 = vadd.f32 %v3462, %v3643
  %v3981 = vadd.f32 %v3463, %v3643
  %v3982 = vadd.f32 %v3464, %v3643
  %v3983 = vadd.f32 %v3465, %v3643
  %v3984 = vadd.f32 %v3466, %v3643
  %v3985 = vadd.f32 %v3467, %v3643
  %v3986 = vadd.f32 %v3468, %v3643
  %v3987 = vadd.f32 %v3469, %v3643
  %v3988 = vadd.f32 %v3470, %v3643
  %v3989 = vadd.f32 %v3471, %v3643
  %v3990 = vadd.f32 %v3472, %v3643
  %v3991 = vadd.f32 %v3473, %v3643
  %v3992 = vadd.f32 %v3474, %v3643
  %v3993 = vadd.f32 %v3475, %v3643
  %v3994 = vadd.f32 %v3476, %v3643
  %v3995 = vadd.f32 %v3477, %v3643
  %v3996 = vadd.f32 %v3478, %v3643
  %v3997 = vadd.f32 %v3479, %v3643
  %v3998 = vadd.f32 %v3480, %v3643
  %v3999 = vadd.f32 %v3481, %v3643
  %v4000 = vadd.f32 %v3482, %v3643
  %v4001 = vadd.f32 %v3483, %v3643
  %v4002 = vadd.f32 %v3484, %v3643
  %v4003 = vadd.f32 %v3485, %v3643
  %v4004 = vadd.f32 %v3486, %v3643
  %v4005 = vadd.f32 %v3487, %v3643
  %v4006 = vadd.f32 %v3488, %v3643
  %v4007 = vadd.f32 %v3489, %v3643
  %v4008 = vadd.f32 %v3490, %v3643
  %v4009 = vadd.f32 %v3491, %v3643
  %v4010 = vadd.f32 %v3492, %v3643
  %v4011 = vadd.f32 %v3493, %v3643
  %v4012 = vadd.f32 %v3494, %v3643
  %v4013 = vadd.f32 %v3495, %v3643
  %v4014 = vadd.f32 %v3496, %v3643
  %v4015 = vadd.f32 %v3497, %v3643
  %v4016 = vadd.f32 %v3498, %v3643
  %v4017 = vadd.f32 %v3499, %v3643
  %v4018 = vadd.f32 %v3500, %v3643
  %v4019 = vadd.f32 %v3501, %v3643
  %v4020 = vadd.f32 %v3502, %v3643
  %v4021 = vadd.f32 %v3503, %v3643
  %v4022 = vadd.f32 %v3504, %v3643
  %v4023 = vadd.f32 %v3505, %v3643
  %v4024 = vadd.f32 %v3506, %v3643
  %v4025 = vadd.f32 %v3507, %v3643
  %v4026 = vadd.f32 %v3508, %v3643
  %v4027 = vadd.f32 %v3509, %v3643
  %v4028 = vadd.f32 %v3510, %v3643
  %v4029 = vadd.f32 %v3511, %v3643
  %v4030 = vadd.f32 %v3512, %v3643
  %v4031 = vadd.f32 %v3513, %v3643
  %v4032 = vadd.f32 %v3514, %v3643
  %v4033 = vadd.f32 %v3515, %v3643
  %v4034 = vadd.f32 %v3516, %v3643
  %v4035 = vadd.f32 %v3517, %v3643
  %v4036 = vadd.f32 %v3518, %v3643
  %v4037 = vadd.f32 %v3519, %v3643
  %v4038 = vadd.f32 %v3520, %v3643
  %v4039 = vadd.f32 %v3521, %v3643
  %v4040 = vadd.f32 %v3522, %v3643
  %v4041 = vadd.f32 %v3523, %v3643
  %v4042 = vadd.f32 %v3524, %v3643
  %v4043 = vadd.f32 %v3525, %v3643
  %v4044 = vadd.f32 %v3526, %v3643
  %v4045 = vadd.f32 %v3527, %v3643
  %v4046 = vadd.f32 %v3528, %v3643
  %v4047 = vadd.f32 %v3529, %v3643
  %v4048 = vadd.f32 %v3530, %v3643
  %v4049 = vadd.f32 %v3531, %v3643
  %v4050 = vadd.f32 %v3532, %v3643
  %v4051 = vadd.f32 %v3533, %v3643
  %v4052 = vadd.f32 %v3534, %v3643
  %v4053 = vadd.f32 %v3535, %v3643
  %v4054 = vadd.f32 %v3536, %v3643
  %v4055 = vadd.f32 %v3537, %v3643
  %v4056 = vadd.f32 %v3538, %v3643
  %v4057 = vadd.f32 %v3539, %v3643
  %v4058 = vadd.f32 %v3540, %v3643
  %v4059 = vadd.f32 %v3541, %v3643
  %v4060 = vadd.f32 %v3542, %v3643
  %v4061 = vadd.f32 %v3543, %v3643
  %v4062 = vadd.f32 %v3544, %v3643
  %v4063 = vadd.f32 %v3545, %v3643
  %v4064 = vadd.f32 %v3546, %v3643
  %v4065 = vadd.f32 %v3547, %v3643
  %v4066 = vadd.f32 %v3548, %v3643
  %v4067 = vadd.f32 %v3549, %v3643
  %v4068 = vadd.f32 %v3550, %v3643
  %v4069 = vadd.f32 %v3551, %v3643
  %v4070 = vadd.f32 %v3552, %v3643
  %v4071 = vadd.f32 %v3553, %v3643
  %v4072 = vadd.f32 %v3554, %v3643
  %v4073 = vadd.f32 %v3555, %v3643
  %v4074 = vadd.f32 %v3556, %v3643
  %v4075 = vadd.f32 %v3557, %v3643
  %v4076 = vadd.f32 %v3558, %v3643
  %v4077 = vadd.f32 %v3559, %v3643
  %v4078 = vadd.f32 %v3560, %v3643
  %v4079 = vadd.f32 %v3561, %v3643
  %v4080 = vadd.f32 %v3562, %v3643
  %v4081 = vadd.f32 %v3563, %v3643
  %v4082 = vadd.f32 %v3564, %v3643
  %v4083 = vadd.f32 %v3565, %v3643
  %v4084 = vadd.f32 %v3566, %v3643
  %v4085 = vadd.f32 %v3567, %v3643
  %v4086 = vadd.f32 %v3568, %v3643
  %v4087 = vadd.f32 %v3569, %v3643
  %v4088 = vadd.f32 %v3570, %v3643
  %v4089 = vadd.f32 %v3571, %v3643
  %v4090 = vadd.f32 %v3572, %v3643
  %v4091 = vadd.f32 %v3573, %v3643
  %v4092 = vadd.f32 %v3574, %v3643
  %v4093 = vadd.f32 %v3575, %v3643
  %v4094 = vadd.f32 %v3576, %v3643
  %v4095 = vadd.f32 %v3577, %v3643
  %v4096 = vadd.f32 %v3578, %v3643
  %v4097 = vadd.f32 %v3579, %v3643
  %v4098 = vadd.f32 %v3580, %v3643
  %v4099 = vadd.f32 %v3581, %v3643
  %v4100 = vadd.f32 %v3582, %v3643
  %v4101 = vadd.f32 %v3583, %v3643
  %v4102 = vadd.f32 %v3584, %v3643
  %v4103 = vadd.f32 %v3585, %v3643
  %v4104 = vadd.f32 %v3586, %v3643
  %v4105 = vadd.f32 %v3587, %v3643
  %v4106 = vadd.f32 %v3588, %v3643
  %v4107 = vadd.f32 %v3589, %v3643
  %v4108 = vadd.f32 %v3590, %v3643
  %v4109 = vadd.f32 %v3591, %v3643
  %v4110 = vadd.f32 %v3592, %v3643
  %v4111 = vadd.f32 %v3593, %v3643
  %v4112 = vadd.f32 %v3594, %v3643
  %v4113 = vadd.f32 %v3595, %v3643
  %v4114 = vadd.f32 %v3596, %v3643
  %v4115 = vadd.f32 %v3597, %v3643
  %v4116 = vadd.f32 %v3598, %v3643
  %v4117 = vadd.f32 %v3599, %v3643
  %v4118 = vadd.f32 %v3600, %v3643
  %v4119 = vadd.f32 %v3601, %v3643
  %v4120 = vadd.f32 %v3602, %v3643
  %v4121 = vadd.f32 %v3603, %v3643
  %v4122 = vadd.f32 %v3604, %v3643
  %v4123 = vadd.f32 %v3605, %v3643
  %v4124 = vadd.f32 %v3606, %v3643
  %v4125 = vadd.f32 %v3607, %v3643
  %v4126 = vadd.f32 %v3608, %v3643
  %v4127 = vadd.f32 %v3609, %v3643
  %v4128 = vadd.f32 %v3610, %v3643
  %v4129 = vadd.f32 %v3611, %v3643
  %v4130 = vadd.f32 %v3612, %v3643
  %v4131 = vadd.f32 %v3613, %v3643
  %v4132 = vadd.f32 %v3614, %v3643
  %v4133 = vadd.f32 %v3615, %v3643
  %v4134 = vadd.f32 %v3616, %v3643
  %v4135 = vadd.f32 %v3617, %v3643
  %v4136 = vadd.f32 %v3618, %v3643
  %v4137 = vadd.f32 %v3619, %v3643
  %v4138 = vadd.f32 %v3620, %v3643
  %v4139 = vadd.f32 %v3621, %v3643
  %v4140 = vadd.f32 %v3622, %v3643
  %v4141 = vadd.f32 %v3623, %v3643
  %v4142 = vadd.f32 %v3624, %v3643
  %v4143 = vadd.f32 %v3625, %v3643
  %v4144 = vadd.f32 %v3626, %v3643
  %v4145 = vadd.f32 %v3627, %v3643
  %v4146 = vadd.f32 %v3628, %v3643
  %v4147 = vadd.f32 %v3629, %v3643
  %v4148 = vadd.f32 %v3630, %v3643
  %v4149 = vadd.f32 %v3631, %v3643
  %v4150 = vadd.f32 %v3632, %v3643
  %v4151 = vadd.f32 %v3633, %v3643
  %v4152 = vadd.f32 %v3634, %v3643
  %v4153 = vadd.f32 %v3635, %v3643
  %v4154 = vadd.f32 %v3636, %v3643
  %v4155 = vadd.f32 %v3637, %v3643
  %v4156 = vadd.f32 %v3638, %v3643
  %v4157 = vmax.f32 %v3645, 0.0
  %v4158 = vmax.f32 %v3646, 0.0
  %v4159 = vmax.f32 %v3647, 0.0
  %v4160 = vmax.f32 %v3648, 0.0
  %v4161 = vmax.f32 %v3649, 0.0
  %v4162 = vmax.f32 %v3650, 0.0
  %v4163 = vmax.f32 %v3651, 0.0
  %v4164 = vmax.f32 %v3652, 0.0
  %v4165 = vmax.f32 %v3653, 0.0
  %v4166 = vmax.f32 %v3654, 0.0
  %v4167 = vmax.f32 %v3655, 0.0
  %v4168 = vmax.f32 %v3656, 0.0
  %v4169 = vmax.f32 %v3657, 0.0
  %v4170 = vmax.f32 %v3658, 0.0
  %v4171 = vmax.f32 %v3659, 0.0
  %v4172 = vmax.f32 %v3660, 0.0
  %v4173 = vmax.f32 %v3661, 0.0
  %v4174 = vmax.f32 %v3662, 0.0
  %v4175 = vmax.f32 %v3663, 0.0
  %v4176 = vmax.f32 %v3664, 0.0
  %v4177 = vmax.f32 %v3665, 0.0
  %v4178 = vmax.f32 %v3666, 0.0
  %v4179 = vmax.f32 %v3667, 0.0
  %v4180 = vmax.f32 %v3668, 0.0
  %v4181 = vmax.f32 %v3669, 0.0
  %v4182 = vmax.f32 %v3670, 0.0
  %v4183 = vmax.f32 %v3671, 0.0
  %v4184 = vmax.f32 %v3672, 0.0
  %v4185 = vmax.f32 %v3673, 0.0
  %v4186 = vmax.f32 %v3674, 0.0
  %v4187 = vmax.f32 %v3675, 0.0
  %v4188 = vmax.f32 %v3676, 0.0
  %v4189 = vmax.f32 %v3677, 0.0
  %v4190 = vmax.f32 %v3678, 0.0
  %v4191 = vmax.f32 %v3679, 0.0
  %v4192 = vmax.f32 %v3680, 0.0
  %v4193 = vmax.f32 %v3681, 0.0
  %v4194 = vmax.f32 %v3682, 0.0
  %v4195 = vmax.f32 %v3683, 0.0
  %v4196 = vmax.f32 %v3684, 0.0
  %v4197 = vmax.f32 %v3685, 0.0
  %v4198 = vmax.f32 %v3686, 0.0
  %v4199 = vmax.f32 %v3687, 0.0
  %v4200 = vmax.f32 %v3688, 0.0
  %v4201 = vmax.f32 %v3689, 0.0
  %v4202 = vmax.f32 %v3690, 0.0
  %v4203 = vmax.f32 %v3691, 0.0
  %v4204 = vmax.f32 %v3692, 0.0
  %v4205 = vmax.f32 %v3693, 0.0
  %v4206 = vmax.f32 %v3694, 0.0
  %v4207 = vmax.f32 %v3695, 0.0
  %v4208 = vmax.f32 %v3696, 0.0
  %v4209 = vmax.f32 %v3697, 0.0
  %v4210 = vmax.f32 %v3698, 0.0
  %v4211 = vmax.f32 %v3699, 0.0
  %v4212 = vmax.f32 %v3700, 0.0
  %v4213 = vmax.f32 %v3701, 0.0
  %v4214 = vmax.f32 %v3702, 0.0
  %v4215 = vmax.f32 %v3703, 0.0
  %v4216 = vmax.f32 %v3704, 0.0
  %v4217 = vmax.f32 %v3705, 0.0
  %v4218 = vmax.f32 %v3706, 0.0
  %v4219 = vmax.f32 %v3707, 0.0
  %v4220 = vmax.f32 %v3708, 0.0
  %v4221 = vmax.f32 %v3709, 0.0
  %v4222 = vmax.f32 %v3710, 0.0
  %v4223 = vmax.f32 %v3711, 0.0
  %v4224 = vmax.f32 %v3712, 0.0
  %v4225 = vmax.f32 %v3713, 0.0
  %v4226 = vmax.f32 %v3714, 0.0
  %v4227 = vmax.f32 %v3715, 0.0
  %v4228 = vmax.f32 %v3716, 0.0
  %v4229 = vmax.f32 %v3717, 0.0
  %v4230 = vmax.f32 %v3718, 0.0
  %v4231 = vmax.f32 %v3719, 0.0
  %v4232 = vmax.f32 %v3720, 0.0
  %v4233 = vmax.f32 %v3721, 0.0
  %v4234 = vmax.f32 %v3722, 0.0
  %v4235 = vmax.f32 %v3723, 0.0
  %v4236 = vmax.f32 %v3724, 0.0
  %v4237 = vmax.f32 %v3725, 0.0
  %v4238 = vmax.f32 %v3726, 0.0
  %v4239 = vmax.f32 %v3727, 0.0
  %v4240 = vmax.f32 %v3728, 0.0
  %v4241 = vmax.f32 %v3729, 0.0
  %v4242 = vmax.f32 %v3730, 0.0
  %v4243 = vmax.f32 %v3731, 0.0
  %v4244 = vmax.f32 %v3732, 0.0
  %v4245 = vmax.f32 %v3733, 0.0
  %v4246 = vmax.f32 %v3734, 0.0
  %v4247 = vmax.f32 %v3735, 0.0
  %v4248 = vmax.f32 %v3736, 0.0
  %v4249 = vmax.f32 %v3737, 0.0
  %v4250 = vmax.f32 %v3738, 0.0
  %v4251 = vmax.f32 %v3739, 0.0
  %v4252 = vmax.f32 %v3740, 0.0
  %v4253 = vmax.f32 %v3741, 0.0
  %v4254 = vmax.f32 %v3742, 0.0
  %v4255 = vmax.f32 %v3743, 0.0
  %v4256 = vmax.f32 %v3744, 0.0
  %v4257 = vmax.f32 %v3745, 0.0
  %v4258 = vmax.f32 %v3746, 0.0
  %v4259 = vmax.f32 %v3747, 0.0
  %v4260 = vmax.f32 %v3748, 0.0
  %v4261 = vmax.f32 %v3749, 0.0
  %v4262 = vmax.f32 %v3750, 0.0
  %v4263 = vmax.f32 %v3751, 0.0
  %v4264 = vmax.f32 %v3752, 0.0
  %v4265 = vmax.f32 %v3753, 0.0
  %v4266 = vmax.f32 %v3754, 0.0
  %v4267 = vmax.f32 %v3755, 0.0
  %v4268 = vmax.f32 %v3756, 0.0
  %v4269 = vmax.f32 %v3757, 0.0
  %v4270 = vmax.f32 %v3758, 0.0
  %v4271 = vmax.f32 %v3759, 0.0
  %v4272 = vmax.f32 %v3760, 0.0
  %v4273 = vmax.f32 %v3761, 0.0
  %v4274 = vmax.f32 %v3762, 0.0
  %v4275 = vmax.f32 %v3763, 0.0
  %v4276 = vmax.f32 %v3764, 0.0
  %v4277 = vmax.f32 %v3765, 0.0
  %v4278 = vmax.f32 %v3766, 0.0
  %v4279 = vmax.f32 %v3767, 0.0
  %v4280 = vmax.f32 %v3768, 0.0
  %v4281 = vmax.f32 %v3769, 0.0
  %v4282 = vmax.f32 %v3770, 0.0
  %v4283 = vmax.f32 %v3771, 0.0
  %v4284 = vmax.f32 %v3772, 0.0
  %v4285 = vmax.f32 %v3773, 0.0
  %v4286 = vmax.f32 %v3774, 0.0
  %v4287 = vmax.f32 %v3775, 0.0
  %v4288 = vmax.f32 %v3776, 0.0
  %v4289 = vmax.f32 %v3777, 0.0
  %v4290 = vmax.f32 %v3778, 0.0
  %v4291 = vmax.f32 %v3779, 0.0
  %v4292 = vmax.f32 %v3780, 0.0
  %v4293 = vmax.f32 %v3781, 0.0
  %v4294 = vmax.f32 %v3782, 0.0
  %v4295 = vmax.f32 %v3783, 0.0
  %v4296 = vmax.f32 %v3784, 0.0
  %v4297 = vmax.f32 %v3785, 0.0
  %v4298 = vmax.f32 %v3786, 0.0
  %v4299 = vmax.f32 %v3787, 0.0
  %v4300 = vmax.f32 %v3788, 0.0
  %v4301 = vmax.f32 %v3789, 0.0
  %v4302 = vmax.f32 %v3790, 0.0
  %v4303 = vmax.f32 %v3791, 0.0
  %v4304 = vmax.f32 %v3792, 0.0
  %v4305 = vmax.f32 %v3793, 0.0
  %v4306 = vmax.f32 %v3794, 0.0
  %v4307 = vmax.f32 %v3795, 0.0
  %v4308 = vmax.f32 %v3796, 0.0
  %v4309 = vmax.f32 %v3797, 0.0
  %v4310 = vmax.f32 %v3798, 0.0
  %v4311 = vmax.f32 %v3799, 0.0
  %v4312 = vmax.f32 %v3800, 0.0
  %v4313 = vmax.f32 %v3801, 0.0
  %v4314 = vmax.f32 %v3802, 0.0
  %v4315 = vmax.f32 %v3803, 0.0
  %v4316 = vmax.f32 %v3804, 0.0
  %v4317 = vmax.f32 %v3805, 0.0
  %v4318 = vmax.f32 %v3806, 0.0
  %v4319 = vmax.f32 %v3807, 0.0
  %v4320 = vmax.f32 %v3808, 0.0
  %v4321 = vmax.f32 %v3809, 0.0
  %v4322 = vmax.f32 %v3810, 0.0
  %v4323 = vmax.f32 %v3811, 0.0
  %v4324 = vmax.f32 %v3812, 0.0
  %v4325 = vmax.f32 %v3813, 0.0
  %v4326 = vmax.f32 %v3814, 0.0
  %v4327 = vmax.f32 %v3815, 0.0
  %v4328 = vmax.f32 %v3816, 0.0
  %v4329 = vmax.f32 %v3817, 0.0
  %v4330 = vmax.f32 %v3818, 0.0
  %v4331 = vmax.f32 %v3819, 0.0
  %v4332 = vmax.f32 %v3820, 0.0
  %v4333 = vmax.f32 %v3821, 0.0
  %v4334 = vmax.f32 %v3822, 0.0
  %v4335 = vmax.f32 %v3823, 0.0
  %v4336 = vmax.f32 %v3824, 0.0
  %v4337 = vmax.f32 %v3825, 0.0
  %v4338 = vmax.f32 %v3826, 0.0
  %v4339 = vmax.f32 %v3827, 0.0
  %v4340 = vmax.f32 %v3828, 0.0
  %v4341 = vmax.f32 %v3829, 0.0
  %v4342 = vmax.f32 %v3830, 0.0
  %v4343 = vmax.f32 %v3831, 0.0
  %v4344 = vmax.f32 %v3832, 0.0
  %v4345 = vmax.f32 %v3833, 0.0
  %v4346 = vmax.f32 %v3834, 0.0
  %v4347 = vmax.f32 %v3835, 0.0
  %v4348 = vmax.f32 %v3836, 0.0
  %v4349 = vmax.f32 %v3837, 0.0
  %v4350 = vmax.f32 %v3838, 0.0
  %v4351 = vmax.f32 %v3839, 0.0
  %v4352 = vmax.f32 %v3840, 0.0
  %v4353 = vmax.f32 %v3841, 0.0
  %v4354 = vmax.f32 %v3842, 0.0
  %v4355 = vmax.f32 %v3843, 0.0
  %v4356 = vmax.f32 %v3844, 0.0
  %v4357 = vmax.f32 %v3845, 0.0
  %v4358 = vmax.f32 %v3846, 0.0
  %v4359 = vmax.f32 %v3847, 0.0
  %v4360 = vmax.f32 %v3848, 0.0
  %v4361 = vmax.f32 %v3849, 0.0
  %v4362 = vmax.f32 %v3850, 0.0
  %v4363 = vmax.f32 %v3851, 0.0
  %v4364 = vmax.f32 %v3852, 0.0
  %v4365 = vmax.f32 %v3853, 0.0
  %v4366 = vmax.f32 %v3854, 0.0
  %v4367 = vmax.f32 %v3855, 0.0
  %v4368 = vmax.f32 %v3856, 0.0
  %v4369 = vmax.f32 %v3857, 0.0
  %v4370 = vmax.f32 %v3858, 0.0
  %v4371 = vmax.f32 %v3859, 0.0
  %v4372 = vmax.f32 %v3860, 0.0
  %v4373 = vmax.f32 %v3861, 0.0
  %v4374 = vmax.f32 %v3862, 0.0
  %v4375 = vmax.f32 %v3863, 0.0
  %v4376 = vmax.f32 %v3864, 0.0
  %v4377 = vmax.f32 %v3865, 0.0
  %v4378 = vmax.f32 %v3866, 0.0
  %v4379 = vmax.f32 %v3867, 0.0
  %v4380 = vmax.f32 %v3868, 0.0
  %v4381 = vmax.f32 %v3869, 0.0
  %v4382 = vmax.f32 %v3870, 0.0
  %v4383 = vmax.f32 %v3871, 0.0
  %v4384 = vmax.f32 %v3872, 0.0
  %v4385 = vmax.f32 %v3873, 0.0
  %v4386 = vmax.f32 %v3874, 0.0
  %v4387 = vmax.f32 %v3875, 0.0
  %v4388 = vmax.f32 %v3876, 0.0
  %v4389 = vmax.f32 %v3877, 0.0
  %v4390 = vmax.f32 %v3878, 0.0
  %v4391 = vmax.f32 %v3879, 0.0
  %v4392 = vmax.f32 %v3880, 0.0
  %v4393 = vmax.f32 %v3881, 0.0
  %v4394 = vmax.f32 %v3882, 0.0
  %v4395 = vmax.f32 %v3883, 0.0
  %v4396 = vmax.f32 %v3884, 0.0
  %v4397 = vmax.f32 %v3885, 0.0
  %v4398 = vmax.f32 %v3886, 0.0
  %v4399 = vmax.f32 %v3887, 0.0
  %v4400 = vmax.f32 %v3888, 0.0
  %v4401 = vmax.f32 %v3889, 0.0
  %v4402 = vmax.f32 %v3890, 0.0
  %v4403 = vmax.f32 %v3891, 0.0
  %v4404 = vmax.f32 %v3892, 0.0
  %v4405 = vmax.f32 %v3893, 0.0
  %v4406 = vmax.f32 %v3894, 0.0
  %v4407 = vmax.f32 %v3895, 0.0
  %v4408 = vmax.f32 %v3896, 0.0
  %v4409 = vmax.f32 %v3897, 0.0
  %v4410 = vmax.f32 %v3898, 0.0
  %v4411 = vmax.f32 %v3899, 0.0
  %v4412 = vmax.f32 %v3900, 0.0
  %v4413 = vmax.f32 %v3901, 0.0
  %v4414 = vmax.f32 %v3902, 0.0
  %v4415 = vmax.f32 %v3903, 0.0
  %v4416 = vmax.f32 %v3904, 0.0
  %v4417 = vmax.f32 %v3905, 0.0
  %v4418 = vmax.f32 %v3906, 0.0
  %v4419 = vmax.f32 %v3907, 0.0
  %v4420 = vmax.f32 %v3908, 0.0
  %v4421 = vmax.f32 %v3909, 0.0
  %v4422 = vmax.f32 %v3910, 0.0
  %v4423 = vmax.f32 %v3911, 0.0
  %v4424 = vmax.f32 %v3912, 0.0
  %v4425 = vmax.f32 %v3913, 0.0
  %v4426 = vmax.f32 %v3914, 0.0
  %v4427 = vmax.f32 %v3915, 0.0
  %v4428 = vmax.f32 %v3916, 0.0
  %v4429 = vmax.f32 %v3917, 0.0
  %v4430 = vmax.f32 %v3918, 0.0
  %v4431 = vmax.f32 %v3919, 0.0
  %v4432 = vmax.f32 %v3920, 0.0
  %v4433 = vmax.f32 %v3921, 0.0
  %v4434 = vmax.f32 %v3922, 0.0
  %v4435 = vmax.f32 %v3923, 0.0
  %v4436 = vmax.f32 %v3924, 0.0
  %v4437 = vmax.f32 %v3925, 0.0
  %v4438 = vmax.f32 %v3926, 0.0
  %v4439 = vmax.f32 %v3927, 0.0
  %v4440 = vmax.f32 %v3928, 0.0
  %v4441 = vmax.f32 %v3929, 0.0
  %v4442 = vmax.f32 %v3930, 0.0
  %v4443 = vmax.f32 %v3931, 0.0
  %v4444 = vmax.f32 %v3932, 0.0
  %v4445 = vmax.f32 %v3933, 0.0
  %v4446 = vmax.f32 %v3934, 0.0
  %v4447 = vmax.f32 %v3935, 0.0
  %v4448 = vmax.f32 %v3936, 0.0
  %v4449 = vmax.f32 %v3937, 0.0
  %v4450 = vmax.f32 %v3938, 0.0
  %v4451 = vmax.f32 %v3939, 0.0
  %v4452 = vmax.f32 %v3940, 0.0
  %v4453 = vmax.f32 %v3941, 0.0
  %v4454 = vmax.f32 %v3942, 0.0
  %v4455 = vmax.f32 %v3943, 0.0
  %v4456 = vmax.f32 %v3944, 0.0
  %v4457 = vmax.f32 %v3945, 0.0
  %v4458 = vmax.f32 %v3946, 0.0
  %v4459 = vmax.f32 %v3947, 0.0
  %v4460 = vmax.f32 %v3948, 0.0
  %v4461 = vmax.f32 %v3949, 0.0
  %v4462 = vmax.f32 %v3950, 0.0
  %v4463 = vmax.f32 %v3951, 0.0
  %v4464 = vmax.f32 %v3952, 0.0
  %v4465 = vmax.f32 %v3953, 0.0
  %v4466 = vmax.f32 %v3954, 0.0
  %v4467 = vmax.f32 %v3955, 0.0
  %v4468 = vmax.f32 %v3956, 0.0
  %v4469 = vmax.f32 %v3957, 0.0
  %v4470 = vmax.f32 %v3958, 0.0
  %v4471 = vmax.f32 %v3959, 0.0
  %v4472 = vmax.f32 %v3960, 0.0
  %v4473 = vmax.f32 %v3961, 0.0
  %v4474 = vmax.f32 %v3962, 0.0
  %v4475 = vmax.f32 %v3963, 0.0
  %v4476 = vmax.f32 %v3964, 0.0
  %v4477 = vmax.f32 %v3965, 0.0
  %v4478 = vmax.f32 %v3966, 0.0
  %v4479 = vmax.f32 %v3967, 0.0
  %v4480 = vmax.f32 %v3968, 0.0
  %v4481 = vmax.f32 %v3969, 0.0
  %v4482 = vmax.f32 %v3970, 0.0
  %v4483 = vmax.f32 %v3971, 0.0
  %v4484 = vmax.f32 %v3972, 0.0
  %v4485 = vmax.f32 %v3973, 0.0
  %v4486 = vmax.f32 %v3974, 0.0
  %v4487 = vmax.f32 %v3975, 0.0
  %v4488 = vmax.f32 %v3976, 0.0
  %v4489 = vmax.f32 %v3977, 0.0
  %v4490 = vmax.f32 %v3978, 0.0
  %v4491 = vmax.f32 %v3979, 0.0
  %v4492 = vmax.f32 %v3980, 0.0
  %v4493 = vmax.f32 %v3981, 0.0
  %v4494 = vmax.f32 %v3982, 0.0
  %v4495 = vmax.f32 %v3983, 0.0
  %v4496 = vmax.f32 %v3984, 0.0
  %v4497 = vmax.f32 %v3985, 0.0
  %v4498 = vmax.f32 %v3986, 0.0
  %v4499 = vmax.f32 %v3987, 0.0
  %v4500 = vmax.f32 %v3988, 0.0
  %v4501 = vmax.f32 %v3989, 0.0
  %v4502 = vmax.f32 %v3990, 0.0
  %v4503 = vmax.f32 %v3991, 0.0
  %v4504 = vmax.f32 %v3992, 0.0
  %v4505 = vmax.f32 %v3993, 0.0
  %v4506 = vmax.f32 %v3994, 0.0
  %v4507 = vmax.f32 %v3995, 0.0
  %v4508 = vmax.f32 %v3996, 0.0
  %v4509 = vmax.f32 %v3997, 0.0
  %v4510 = vmax.f32 %v3998, 0.0
  %v4511 = vmax.f32 %v3999, 0.0
  %v4512 = vmax.f32 %v4000, 0.0
  %v4513 = vmax.f32 %v4001, 0.0
  %v4514 = vmax.f32 %v4002, 0.0
  %v4515 = vmax.f32 %v4003, 0.0
  %v4516 = vmax.f32 %v4004, 0.0
  %v4517 = vmax.f32 %v4005, 0.0
  %v4518 = vmax.f32 %v4006, 0.0
  %v4519 = vmax.f32 %v4007, 0.0
  %v4520 = vmax.f32 %v4008, 0.0
  %v4521 = vmax.f32 %v4009, 0.0
  %v4522 = vmax.f32 %v4010, 0.0
  %v4523 = vmax.f32 %v4011, 0.0
  %v4524 = vmax.f32 %v4012, 0.0
  %v4525 = vmax.f32 %v4013, 0.0
  %v4526 = vmax.f32 %v4014, 0.0
  %v4527 = vmax.f32 %v4015, 0.0
  %v4528 = vmax.f32 %v4016, 0.0
  %v4529 = vmax.f32 %v4017, 0.0
  %v4530 = vmax.f32 %v4018, 0.0
  %v4531 = vmax.f32 %v4019, 0.0
  %v4532 = vmax.f32 %v4020, 0.0
  %v4533 = vmax.f32 %v4021, 0.0
  %v4534 = vmax.f32 %v4022, 0.0
  %v4535 = vmax.f32 %v4023, 0.0
  %v4536 = vmax.f32 %v4024, 0.0
  %v4537 = vmax.f32 %v4025, 0.0
  %v4538 = vmax.f32 %v4026, 0.0
  %v4539 = vmax.f32 %v4027, 0.0
  %v4540 = vmax.f32 %v4028, 0.0
  %v4541 = vmax.f32 %v4029, 0.0
  %v4542 = vmax.f32 %v4030, 0.0
  %v4543 = vmax.f32 %v4031, 0.0
  %v4544 = vmax.f32 %v4032, 0.0
  %v4545 = vmax.f32 %v4033, 0.0
  %v4546 = vmax.f32 %v4034, 0.0
  %v4547 = vmax.f32 %v4035, 0.0
  %v4548 = vmax.f32 %v4036, 0.0
  %v4549 = vmax.f32 %v4037, 0.0
  %v4550 = vmax.f32 %v4038, 0.0
  %v4551 = vmax.f32 %v4039, 0.0
  %v4552 = vmax.f32 %v4040, 0.0
  %v4553 = vmax.f32 %v4041, 0.0
  %v4554 = vmax.f32 %v4042, 0.0
  %v4555 = vmax.f32 %v4043, 0.0
  %v4556 = vmax.f32 %v4044, 0.0
  %v4557 = vmax.f32 %v4045, 0.0
  %v4558 = vmax.f32 %v4046, 0.0
  %v4559 = vmax.f32 %v4047, 0.0
  %v4560 = vmax.f32 %v4048, 0.0
  %v4561 = vmax.f32 %v4049, 0.0
  %v4562 = vmax.f32 %v4050, 0.0
  %v4563 = vmax.f32 %v4051, 0.0
  %v4564 = vmax.f32 %v4052, 0.0
  %v4565 = vmax.f32 %v4053, 0.0
  %v4566 = vmax.f32 %v4054, 0.0
  %v4567 = vmax.f32 %v4055, 0.0
  %v4568 = vmax.f32 %v4056, 0.0
  %v4569 = vmax.f32 %v4057, 0.0
  %v4570 = vmax.f32 %v4058, 0.0
  %v4571 = vmax.f32 %v4059, 0.0
  %v4572 = vmax.f32 %v4060, 0.0
  %v4573 = vmax.f32 %v4061, 0.0
  %v4574 = vmax.f32 %v4062, 0.0
  %v4575 = vmax.f32 %v4063, 0.0
  %v4576 = vmax.f32 %v4064, 0.0
  %v4577 = vmax.f32 %v4065, 0.0
  %v4578 = vmax.f32 %v4066, 0.0
  %v4579 = vmax.f32 %v4067, 0.0
  %v4580 = vmax.f32 %v4068, 0.0
  %v4581 = vmax.f32 %v4069, 0.0
  %v4582 = vmax.f32 %v4070, 0.0
  %v4583 = vmax.f32 %v4071, 0.0
  %v4584 = vmax.f32 %v4072, 0.0
  %v4585 = vmax.f32 %v4073, 0.0
  %v4586 = vmax.f32 %v4074, 0.0
  %v4587 = vmax.f32 %v4075, 0.0
  %v4588 = vmax.f32 %v4076, 0.0
  %v4589 = vmax.f32 %v4077, 0.0
  %v4590 = vmax.f32 %v4078, 0.0
  %v4591 = vmax.f32 %v4079, 0.0
  %v4592 = vmax.f32 %v4080, 0.0
  %v4593 = vmax.f32 %v4081, 0.0
  %v4594 = vmax.f32 %v4082, 0.0
  %v4595 = vmax.f32 %v4083, 0.0
  %v4596 = vmax.f32 %v4084, 0.0
  %v4597 = vmax.f32 %v4085, 0.0
  %v4598 = vmax.f32 %v4086, 0.0
  %v4599 = vmax.f32 %v4087, 0.0
  %v4600 = vmax.f32 %v4088, 0.0
  %v4601 = vmax.f32 %v4089, 0.0
  %v4602 = vmax.f32 %v4090, 0.0
  %v4603 = vmax.f32 %v4091, 0.0
  %v4604 = vmax.f32 %v4092, 0.0
  %v4605 = vmax.f32 %v4093, 0.0
  %v4606 = vmax.f32 %v4094, 0.0
  %v4607 = vmax.f32 %v4095, 0.0
  %v4608 = vmax.f32 %v4096, 0.0
  %v4609 = vmax.f32 %v4097, 0.0
  %v4610 = vmax.f32 %v4098, 0.0
  %v4611 = vmax.f32 %v4099, 0.0
  %v4612 = vmax.f32 %v4100, 0.0
  %v4613 = vmax.f32 %v4101, 0.0
  %v4614 = vmax.f32 %v4102, 0.0
  %v4615 = vmax.f32 %v4103, 0.0
  %v4616 = vmax.f32 %v4104, 0.0
  %v4617 = vmax.f32 %v4105, 0.0
  %v4618 = vmax.f32 %v4106, 0.0
  %v4619 = vmax.f32 %v4107, 0.0
  %v4620 = vmax.f32 %v4108, 0.0
  %v4621 = vmax.f32 %v4109, 0.0
  %v4622 = vmax.f32 %v4110, 0.0
  %v4623 = vmax.f32 %v4111, 0.0
  %v4624 = vmax.f32 %v4112, 0.0
  %v4625 = vmax.f32 %v4113, 0.0
  %v4626 = vmax.f32 %v4114, 0.0
  %v4627 = vmax.f32 %v4115, 0.0
  %v4628 = vmax.f32 %v4116, 0.0
  %v4629 = vmax.f32 %v4117, 0.0
  %v4630 = vmax.f32 %v4118, 0.0
  %v4631 = vmax.f32 %v4119, 0.0
  %v4632 = vmax.f32 %v4120, 0.0
  %v4633 = vmax.f32 %v4121, 0.0
  %v4634 = vmax.f32 %v4122, 0.0
  %v4635 = vmax.f32 %v4123, 0.0
  %v4636 = vmax.f32 %v4124, 0.0
  %v4637 = vmax.f32 %v4125, 0.0
  %v4638 = vmax.f32 %v4126, 0.0
  %v4639 = vmax.f32 %v4127, 0.0
  %v4640 = vmax.f32 %v4128, 0.0
  %v4641 = vmax.f32 %v4129, 0.0
  %v4642 = vmax.f32 %v4130, 0.0
  %v4643 = vmax.f32 %v4131, 0.0
  %v4644 = vmax.f32 %v4132, 0.0
  %v4645 = vmax.f32 %v4133, 0.0
  %v4646 = vmax.f32 %v4134, 0.0
  %v4647 = vmax.f32 %v4135, 0.0
  %v4648 = vmax.f32 %v4136, 0.0
  %v4649 = vmax.f32 %v4137, 0.0
  %v4650 = vmax.f32 %v4138, 0.0
  %v4651 = vmax.f32 %v4139, 0.0
  %v4652 = vmax.f32 %v4140, 0.0
  %v4653 = vmax.f32 %v4141, 0.0
  %v4654 = vmax.f32 %v4142, 0.0
  %v4655 = vmax.f32 %v4143, 0.0
  %v4656 = vmax.f32 %v4144, 0.0
  %v4657 = vmax.f32 %v4145, 0.0
  %v4658 = vmax.f32 %v4146, 0.0
  %v4659 = vmax.f32 %v4147, 0.0
  %v4660 = vmax.f32 %v4148, 0.0
  %v4661 = vmax.f32 %v4149, 0.0
  %v4662 = vmax.f32 %v4150, 0.0
  %v4663 = vmax.f32 %v4151, 0.0
  %v4664 = vmax.f32 %v4152, 0.0
  %v4665 = vmax.f32 %v4153, 0.0
  %v4666 = vmax.f32 %v4154, 0.0
  %v4667 = vmax.f32 %v4155, 0.0
  %v4668 = vmax.f32 %v4156, 0.0
  %4669 = vst.msk [vmem:[%s5] sm:$0xff] %vm542, %v4157
  %4670 = vst.msk [vmem:[%s5 + $0x8] sm:$0xff] %vm542, %v4158
  %4671 = vst.msk [vmem:[%s5 + $0x10] sm:$0xff] %vm542, %v4159
  %4672 = vst.msk [vmem:[%s5 + $0x18] sm:$0xff] %vm542, %v4160
  %4673 = vst.msk [vmem:[%s5 + $0x20] sm:$0xff] %vm542, %v4161
  %4674 = vst.msk [vmem:[%s5 + $0x28] sm:$0xff] %vm542, %v4162
  %4675 = vst.msk [vmem:[%s5 + $0x30] sm:$0xff] %vm542, %v4163
  %4676 = vst.msk [vmem:[%s5 + $0x38] sm:$0xff] %vm542, %v4164
  %4677 = vst.msk [vmem:[%s5 + $0x40] sm:$0xff] %vm542, %v4165
  %4678 = vst.msk [vmem:[%s5 + $0x48] sm:$0xff] %vm542, %v4166
  %4679 = vst.msk [vmem:[%s5 + $0x50] sm:$0xff] %vm542, %v4167
  %4680 = vst.msk [vmem:[%s5 + $0x58] sm:$0xff] %vm542, %v4168
  %4681 = vst.msk [vmem:[%s5 + $0x60] sm:$0xff] %vm542, %v4169
  %4682 = vst.msk [vmem:[%s5 + $0x68] sm:$0xff] %vm542, %v4170
  %4683 = vst.msk [vmem:[%s5 + $0x70] sm:$0xff] %vm542, %v4171
  %4684 = vst.msk [vmem:[%s5 + $0x78] sm:$0xff] %vm542, %v4172
  %4685 = vst.msk [vmem:[%s5 + $0x80] sm:$0xff] %vm542, %v4173
  %4686 = vst.msk [vmem:[%s5 + $0x88] sm:$0xff] %vm542, %v4174
  %4687 = vst.msk [vmem:[%s5 + $0x90] sm:$0xff] %vm542, %v4175
  %4688 = vst.msk [vmem:[%s5 + $0x98] sm:$0xff] %vm542, %v4176
  %4689 = vst.msk [vmem:[%s5 + $0xa0] sm:$0xff] %vm542, %v4177
  %4690 = vst.msk [vmem:[%s5 + $0xa8] sm:$0xff] %vm542, %v4178
  %4691 = vst.msk [vmem:[%s5 + $0xb0] sm:$0xff] %vm542, %v4179
  %4692 = vst.msk [vmem:[%s5 + $0xb8] sm:$0xff] %vm542, %v4180
  %4693 = vst.msk [vmem:[%s5 + $0xc0] sm:$0xff] %vm542, %v4181
  %4694 = vst.msk [vmem:[%s5 + $0xc8] sm:$0xff] %vm542, %v4182
  %4695 = vst.msk [vmem:[%s5 + $0xd0] sm:$0xff] %vm542, %v4183
  %4696 = vst.msk [vmem:[%s5 + $0xd8] sm:$0xff] %vm542, %v4184
  %4697 = vst.msk [vmem:[%s5 + $0xe0] sm:$0xff] %vm542, %v4185
  %4698 = vst.msk [vmem:[%s5 + $0xe8] sm:$0xff] %vm542, %v4186
  %4699 = vst.msk [vmem:[%s5 + $0xf0] sm:$0xff] %vm542, %v4187
  %4700 = vst.msk [vmem:[%s5 + $0xf8] sm:$0xff] %vm542, %v4188
  %4701 = vst.msk [vmem:[%s5 + $0x100] sm:$0xff] %vm542, %v4189
  %4702 = vst.msk [vmem:[%s5 + $0x108] sm:$0xff] %vm542, %v4190
  %4703 = vst.msk [vmem:[%s5 + $0x110] sm:$0xff] %vm542, %v4191
  %4704 = vst.msk [vmem:[%s5 + $0x118] sm:$0xff] %vm542, %v4192
  %4705 = vst.msk [vmem:[%s5 + $0x120] sm:$0xff] %vm542, %v4193
  %4706 = vst.msk [vmem:[%s5 + $0x128] sm:$0xff] %vm542, %v4194
  %4707 = vst.msk [vmem:[%s5 + $0x130] sm:$0xff] %vm542, %v4195
  %4708 = vst.msk [vmem:[%s5 + $0x138] sm:$0xff] %vm542, %v4196
  %4709 = vst.msk [vmem:[%s5 + $0x140] sm:$0xff] %vm542, %v4197
  %4710 = vst.msk [vmem:[%s5 + $0x148] sm:$0xff] %vm542, %v4198
  %4711 = vst.msk [vmem:[%s5 + $0x150] sm:$0xff] %vm542, %v4199
  %4712 = vst.msk [vmem:[%s5 + $0x158] sm:$0xff] %vm542, %v4200
  %4713 = vst.msk [vmem:[%s5 + $0x160] sm:$0xff] %vm542, %v4201
  %4714 = vst.msk [vmem:[%s5 + $0x168] sm:$0xff] %vm542, %v4202
  %4715 = vst.msk [vmem:[%s5 + $0x170] sm:$0xff] %vm542, %v4203
  %4716 = vst.msk [vmem:[%s5 + $0x178] sm:$0xff] %vm542, %v4204
  %4717 = vst.msk [vmem:[%s5 + $0x180] sm:$0xff] %vm542, %v4205
  %4718 = vst.msk [vmem:[%s5 + $0x188] sm:$0xff] %vm542, %v4206
  %4719 = vst.msk [vmem:[%s5 + $0x190] sm:$0xff] %vm542, %v4207
  %4720 = vst.msk [vmem:[%s5 + $0x198] sm:$0xff] %vm542, %v4208
  %4721 = vst.msk [vmem:[%s5 + $0x1a0] sm:$0xff] %vm542, %v4209
  %4722 = vst.msk [vmem:[%s5 + $0x1a8] sm:$0xff] %vm542, %v4210
  %4723 = vst.msk [vmem:[%s5 + $0x1b0] sm:$0xff] %vm542, %v4211
  %4724 = vst.msk [vmem:[%s5 + $0x1b8] sm:$0xff] %vm542, %v4212
  %4725 = vst.msk [vmem:[%s5 + $0x1c0] sm:$0xff] %vm542, %v4213
  %4726 = vst.msk [vmem:[%s5 + $0x1c8] sm:$0xff] %vm542, %v4214
  %4727 = vst.msk [vmem:[%s5 + $0x1d0] sm:$0xff] %vm542, %v4215
  %4728 = vst.msk [vmem:[%s5 + $0x1d8] sm:$0xff] %vm542, %v4216
  %4729 = vst.msk [vmem:[%s5 + $0x1e0] sm:$0xff] %vm542, %v4217
  %4730 = vst.msk [vmem:[%s5 + $0x1e8] sm:$0xff] %vm542, %v4218
  %4731 = vst.msk [vmem:[%s5 + $0x1f0] sm:$0xff] %vm542, %v4219
  %4732 = vst.msk [vmem:[%s5 + $0x1f8] sm:$0xff] %vm542, %v4220
  %4733 = vst.msk [vmem:[%s5 + $0x200] sm:$0xff] %vm542, %v4221
  %4734 = vst.msk [vmem:[%s5 + $0x208] sm:$0xff] %vm542, %v4222
  %4735 = vst.msk [vmem:[%s5 + $0x210] sm:$0xff] %vm542, %v4223
  %4736 = vst.msk [vmem:[%s5 + $0x218] sm:$0xff] %vm542, %v4224
  %4737 = vst.msk [vmem:[%s5 + $0x220] sm:$0xff] %vm542, %v4225
  %4738 = vst.msk [vmem:[%s5 + $0x228] sm:$0xff] %vm542, %v4226
  %4739 = vst.msk [vmem:[%s5 + $0x230] sm:$0xff] %vm542, %v4227
  %4740 = vst.msk [vmem:[%s5 + $0x238] sm:$0xff] %vm542, %v4228
  %4741 = vst.msk [vmem:[%s5 + $0x240] sm:$0xff] %vm542, %v4229
  %4742 = vst.msk [vmem:[%s5 + $0x248] sm:$0xff] %vm542, %v4230
  %4743 = vst.msk [vmem:[%s5 + $0x250] sm:$0xff] %vm542, %v4231
  %4744 = vst.msk [vmem:[%s5 + $0x258] sm:$0xff] %vm542, %v4232
  %4745 = vst.msk [vmem:[%s5 + $0x260] sm:$0xff] %vm542, %v4233
  %4746 = vst.msk [vmem:[%s5 + $0x268] sm:$0xff] %vm542, %v4234
  %4747 = vst.msk [vmem:[%s5 + $0x270] sm:$0xff] %vm542, %v4235
  %4748 = vst.msk [vmem:[%s5 + $0x278] sm:$0xff] %vm542, %v4236
  %4749 = vst.msk [vmem:[%s5 + $0x280] sm:$0xff] %vm542, %v4237
  %4750 = vst.msk [vmem:[%s5 + $0x288] sm:$0xff] %vm542, %v4238
  %4751 = vst.msk [vmem:[%s5 + $0x290] sm:$0xff] %vm542, %v4239
  %4752 = vst.msk [vmem:[%s5 + $0x298] sm:$0xff] %vm542, %v4240
  %4753 = vst.msk [vmem:[%s5 + $0x2a0] sm:$0xff] %vm542, %v4241
  %4754 = vst.msk [vmem:[%s5 + $0x2a8] sm:$0xff] %vm542, %v4242
  %4755 = vst.msk [vmem:[%s5 + $0x2b0] sm:$0xff] %vm542, %v4243
  %4756 = vst.msk [vmem:[%s5 + $0x2b8] sm:$0xff] %vm542, %v4244
  %4757 = vst.msk [vmem:[%s5 + $0x2c0] sm:$0xff] %vm542, %v4245
  %4758 = vst.msk [vmem:[%s5 + $0x2c8] sm:$0xff] %vm542, %v4246
  %4759 = vst.msk [vmem:[%s5 + $0x2d0] sm:$0xff] %vm542, %v4247
  %4760 = vst.msk [vmem:[%s5 + $0x2d8] sm:$0xff] %vm542, %v4248
  %4761 = vst.msk [vmem:[%s5 + $0x2e0] sm:$0xff] %vm542, %v4249
  %4762 = vst.msk [vmem:[%s5 + $0x2e8] sm:$0xff] %vm542, %v4250
  %4763 = vst.msk [vmem:[%s5 + $0x2f0] sm:$0xff] %vm542, %v4251
  %4764 = vst.msk [vmem:[%s5 + $0x2f8] sm:$0xff] %vm542, %v4252
  %4765 = vst.msk [vmem:[%s5 + $0x300] sm:$0xff] %vm542, %v4253
  %4766 = vst.msk [vmem:[%s5 + $0x308] sm:$0xff] %vm542, %v4254
  %4767 = vst.msk [vmem:[%s5 + $0x310] sm:$0xff] %vm542, %v4255
  %4768 = vst.msk [vmem:[%s5 + $0x318] sm:$0xff] %vm542, %v4256
  %4769 = vst.msk [vmem:[%s5 + $0x320] sm:$0xff] %vm542, %v4257
  %4770 = vst.msk [vmem:[%s5 + $0x328] sm:$0xff] %vm542, %v4258
  %4771 = vst.msk [vmem:[%s5 + $0x330] sm:$0xff] %vm542, %v4259
  %4772 = vst.msk [vmem:[%s5 + $0x338] sm:$0xff] %vm542, %v4260
  %4773 = vst.msk [vmem:[%s5 + $0x340] sm:$0xff] %vm542, %v4261
  %4774 = vst.msk [vmem:[%s5 + $0x348] sm:$0xff] %vm542, %v4262
  %4775 = vst.msk [vmem:[%s5 + $0x350] sm:$0xff] %vm542, %v4263
  %4776 = vst.msk [vmem:[%s5 + $0x358] sm:$0xff] %vm542, %v4264
  %4777 = vst.msk [vmem:[%s5 + $0x360] sm:$0xff] %vm542, %v4265
  %4778 = vst.msk [vmem:[%s5 + $0x368] sm:$0xff] %vm542, %v4266
  %4779 = vst.msk [vmem:[%s5 + $0x370] sm:$0xff] %vm542, %v4267
  %4780 = vst.msk [vmem:[%s5 + $0x378] sm:$0xff] %vm542, %v4268
  %4781 = vst.msk [vmem:[%s5 + $0x380] sm:$0xff] %vm542, %v4269
  %4782 = vst.msk [vmem:[%s5 + $0x388] sm:$0xff] %vm542, %v4270
  %4783 = vst.msk [vmem:[%s5 + $0x390] sm:$0xff] %vm542, %v4271
  %4784 = vst.msk [vmem:[%s5 + $0x398] sm:$0xff] %vm542, %v4272
  %4785 = vst.msk [vmem:[%s5 + $0x3a0] sm:$0xff] %vm542, %v4273
  %4786 = vst.msk [vmem:[%s5 + $0x3a8] sm:$0xff] %vm542, %v4274
  %4787 = vst.msk [vmem:[%s5 + $0x3b0] sm:$0xff] %vm542, %v4275
  %4788 = vst.msk [vmem:[%s5 + $0x3b8] sm:$0xff] %vm542, %v4276
  %4789 = vst.msk [vmem:[%s5 + $0x3c0] sm:$0xff] %vm542, %v4277
  %4790 = vst.msk [vmem:[%s5 + $0x3c8] sm:$0xff] %vm542, %v4278
  %4791 = vst.msk [vmem:[%s5 + $0x3d0] sm:$0xff] %vm542, %v4279
  %4792 = vst.msk [vmem:[%s5 + $0x3d8] sm:$0xff] %vm542, %v4280
  %4793 = vst.msk [vmem:[%s5 + $0x3e0] sm:$0xff] %vm542, %v4281
  %4794 = vst.msk [vmem:[%s5 + $0x3e8] sm:$0xff] %vm542, %v4282
  %4795 = vst.msk [vmem:[%s5 + $0x3f0] sm:$0xff] %vm542, %v4283
  %4796 = vst.msk [vmem:[%s5 + $0x3f8] sm:$0xff] %vm542, %v4284
  %4797 = vst.msk [vmem:[%s5 + $0x400] sm:$0xff] %vm542, %v4285
  %4798 = vst.msk [vmem:[%s5 + $0x408] sm:$0xff] %vm542, %v4286
  %4799 = vst.msk [vmem:[%s5 + $0x410] sm:$0xff] %vm542, %v4287
  %4800 = vst.msk [vmem:[%s5 + $0x418] sm:$0xff] %vm542, %v4288
  %4801 = vst.msk [vmem:[%s5 + $0x420] sm:$0xff] %vm542, %v4289
  %4802 = vst.msk [vmem:[%s5 + $0x428] sm:$0xff] %vm542, %v4290
  %4803 = vst.msk [vmem:[%s5 + $0x430] sm:$0xff] %vm542, %v4291
  %4804 = vst.msk [vmem:[%s5 + $0x438] sm:$0xff] %vm542, %v4292
  %4805 = vst.msk [vmem:[%s5 + $0x440] sm:$0xff] %vm542, %v4293
  %4806 = vst.msk [vmem:[%s5 + $0x448] sm:$0xff] %vm542, %v4294
  %4807 = vst.msk [vmem:[%s5 + $0x450] sm:$0xff] %vm542, %v4295
  %4808 = vst.msk [vmem:[%s5 + $0x458] sm:$0xff] %vm542, %v4296
  %4809 = vst.msk [vmem:[%s5 + $0x460] sm:$0xff] %vm542, %v4297
  %4810 = vst.msk [vmem:[%s5 + $0x468] sm:$0xff] %vm542, %v4298
  %4811 = vst.msk [vmem:[%s5 + $0x470] sm:$0xff] %vm542, %v4299
  %4812 = vst.msk [vmem:[%s5 + $0x478] sm:$0xff] %vm542, %v4300
  %4813 = vst.msk [vmem:[%s5 + $0x480] sm:$0xff] %vm542, %v4301
  %4814 = vst.msk [vmem:[%s5 + $0x488] sm:$0xff] %vm542, %v4302
  %4815 = vst.msk [vmem:[%s5 + $0x490] sm:$0xff] %vm542, %v4303
  %4816 = vst.msk [vmem:[%s5 + $0x498] sm:$0xff] %vm542, %v4304
  %4817 = vst.msk [vmem:[%s5 + $0x4a0] sm:$0xff] %vm542, %v4305
  %4818 = vst.msk [vmem:[%s5 + $0x4a8] sm:$0xff] %vm542, %v4306
  %4819 = vst.msk [vmem:[%s5 + $0x4b0] sm:$0xff] %vm542, %v4307
  %4820 = vst.msk [vmem:[%s5 + $0x4b8] sm:$0xff] %vm542, %v4308
  %4821 = vst.msk [vmem:[%s5 + $0x4c0] sm:$0xff] %vm542, %v4309
  %4822 = vst.msk [vmem:[%s5 + $0x4c8] sm:$0xff] %vm542, %v4310
  %4823 = vst.msk [vmem:[%s5 + $0x4d0] sm:$0xff] %vm542, %v4311
  %4824 = vst.msk [vmem:[%s5 + $0x4d8] sm:$0xff] %vm542, %v4312
  %4825 = vst.msk [vmem:[%s5 + $0x4e0] sm:$0xff] %vm542, %v4313
  %4826 = vst.msk [vmem:[%s5 + $0x4e8] sm:$0xff] %vm542, %v4314
  %4827 = vst.msk [vmem:[%s5 + $0x4f0] sm:$0xff] %vm542, %v4315
  %4828 = vst.msk [vmem:[%s5 + $0x4f8] sm:$0xff] %vm542, %v4316
  %4829 = vst.msk [vmem:[%s5 + $0x500] sm:$0xff] %vm542, %v4317
  %4830 = vst.msk [vmem:[%s5 + $0x508] sm:$0xff] %vm542, %v4318
  %4831 = vst.msk [vmem:[%s5 + $0x510] sm:$0xff] %vm542, %v4319
  %4832 = vst.msk [vmem:[%s5 + $0x518] sm:$0xff] %vm542, %v4320
  %4833 = vst.msk [vmem:[%s5 + $0x520] sm:$0xff] %vm542, %v4321
  %4834 = vst.msk [vmem:[%s5 + $0x528] sm:$0xff] %vm542, %v4322
  %4835 = vst.msk [vmem:[%s5 + $0x530] sm:$0xff] %vm542, %v4323
  %4836 = vst.msk [vmem:[%s5 + $0x538] sm:$0xff] %vm542, %v4324
  %4837 = vst.msk [vmem:[%s5 + $0x540] sm:$0xff] %vm542, %v4325
  %4838 = vst.msk [vmem:[%s5 + $0x548] sm:$0xff] %vm542, %v4326
  %4839 = vst.msk [vmem:[%s5 + $0x550] sm:$0xff] %vm542, %v4327
  %4840 = vst.msk [vmem:[%s5 + $0x558] sm:$0xff] %vm542, %v4328
  %4841 = vst.msk [vmem:[%s5 + $0x560] sm:$0xff] %vm542, %v4329
  %4842 = vst.msk [vmem:[%s5 + $0x568] sm:$0xff] %vm542, %v4330
  %4843 = vst.msk [vmem:[%s5 + $0x570] sm:$0xff] %vm542, %v4331
  %4844 = vst.msk [vmem:[%s5 + $0x578] sm:$0xff] %vm542, %v4332
  %4845 = vst.msk [vmem:[%s5 + $0x580] sm:$0xff] %vm542, %v4333
  %4846 = vst.msk [vmem:[%s5 + $0x588] sm:$0xff] %vm542, %v4334
  %4847 = vst.msk [vmem:[%s5 + $0x590] sm:$0xff] %vm542, %v4335
  %4848 = vst.msk [vmem:[%s5 + $0x598] sm:$0xff] %vm542, %v4336
  %4849 = vst.msk [vmem:[%s5 + $0x5a0] sm:$0xff] %vm542, %v4337
  %4850 = vst.msk [vmem:[%s5 + $0x5a8] sm:$0xff] %vm542, %v4338
  %4851 = vst.msk [vmem:[%s5 + $0x5b0] sm:$0xff] %vm542, %v4339
  %4852 = vst.msk [vmem:[%s5 + $0x5b8] sm:$0xff] %vm542, %v4340
  %4853 = vst.msk [vmem:[%s5 + $0x5c0] sm:$0xff] %vm542, %v4341
  %4854 = vst.msk [vmem:[%s5 + $0x5c8] sm:$0xff] %vm542, %v4342
  %4855 = vst.msk [vmem:[%s5 + $0x5d0] sm:$0xff] %vm542, %v4343
  %4856 = vst.msk [vmem:[%s5 + $0x5d8] sm:$0xff] %vm542, %v4344
  %4857 = vst.msk [vmem:[%s5 + $0x5e0] sm:$0xff] %vm542, %v4345
  %4858 = vst.msk [vmem:[%s5 + $0x5e8] sm:$0xff] %vm542, %v4346
  %4859 = vst.msk [vmem:[%s5 + $0x5f0] sm:$0xff] %vm542, %v4347
  %4860 = vst.msk [vmem:[%s5 + $0x5f8] sm:$0xff] %vm542, %v4348
  %4861 = vst.msk [vmem:[%s5 + $0x600] sm:$0xff] %vm542, %v4349
  %4862 = vst.msk [vmem:[%s5 + $0x608] sm:$0xff] %vm542, %v4350
  %4863 = vst.msk [vmem:[%s5 + $0x610] sm:$0xff] %vm542, %v4351
  %4864 = vst.msk [vmem:[%s5 + $0x618] sm:$0xff] %vm542, %v4352
  %4865 = vst.msk [vmem:[%s5 + $0x620] sm:$0xff] %vm542, %v4353
  %4866 = vst.msk [vmem:[%s5 + $0x628] sm:$0xff] %vm542, %v4354
  %4867 = vst.msk [vmem:[%s5 + $0x630] sm:$0xff] %vm542, %v4355
  %4868 = vst.msk [vmem:[%s5 + $0x638] sm:$0xff] %vm542, %v4356
  %4869 = vst.msk [vmem:[%s5 + $0x640] sm:$0xff] %vm542, %v4357
  %4870 = vst.msk [vmem:[%s5 + $0x648] sm:$0xff] %vm542, %v4358
  %4871 = vst.msk [vmem:[%s5 + $0x650] sm:$0xff] %vm542, %v4359
  %4872 = vst.msk [vmem:[%s5 + $0x658] sm:$0xff] %vm542, %v4360
  %4873 = vst.msk [vmem:[%s5 + $0x660] sm:$0xff] %vm542, %v4361
  %4874 = vst.msk [vmem:[%s5 + $0x668] sm:$0xff] %vm542, %v4362
  %4875 = vst.msk [vmem:[%s5 + $0x670] sm:$0xff] %vm542, %v4363
  %4876 = vst.msk [vmem:[%s5 + $0x678] sm:$0xff] %vm542, %v4364
  %4877 = vst.msk [vmem:[%s5 + $0x680] sm:$0xff] %vm542, %v4365
  %4878 = vst.msk [vmem:[%s5 + $0x688] sm:$0xff] %vm542, %v4366
  %4879 = vst.msk [vmem:[%s5 + $0x690] sm:$0xff] %vm542, %v4367
  %4880 = vst.msk [vmem:[%s5 + $0x698] sm:$0xff] %vm542, %v4368
  %4881 = vst.msk [vmem:[%s5 + $0x6a0] sm:$0xff] %vm542, %v4369
  %4882 = vst.msk [vmem:[%s5 + $0x6a8] sm:$0xff] %vm542, %v4370
  %4883 = vst.msk [vmem:[%s5 + $0x6b0] sm:$0xff] %vm542, %v4371
  %4884 = vst.msk [vmem:[%s5 + $0x6b8] sm:$0xff] %vm542, %v4372
  %4885 = vst.msk [vmem:[%s5 + $0x6c0] sm:$0xff] %vm542, %v4373
  %4886 = vst.msk [vmem:[%s5 + $0x6c8] sm:$0xff] %vm542, %v4374
  %4887 = vst.msk [vmem:[%s5 + $0x6d0] sm:$0xff] %vm542, %v4375
  %4888 = vst.msk [vmem:[%s5 + $0x6d8] sm:$0xff] %vm542, %v4376
  %4889 = vst.msk [vmem:[%s5 + $0x6e0] sm:$0xff] %vm542, %v4377
  %4890 = vst.msk [vmem:[%s5 + $0x6e8] sm:$0xff] %vm542, %v4378
  %4891 = vst.msk [vmem:[%s5 + $0x6f0] sm:$0xff] %vm542, %v4379
  %4892 = vst.msk [vmem:[%s5 + $0x6f8] sm:$0xff] %vm542, %v4380
  %4893 = vst.msk [vmem:[%s5 + $0x700] sm:$0xff] %vm542, %v4381
  %4894 = vst.msk [vmem:[%s5 + $0x708] sm:$0xff] %vm542, %v4382
  %4895 = vst.msk [vmem:[%s5 + $0x710] sm:$0xff] %vm542, %v4383
  %4896 = vst.msk [vmem:[%s5 + $0x718] sm:$0xff] %vm542, %v4384
  %4897 = vst.msk [vmem:[%s5 + $0x720] sm:$0xff] %vm542, %v4385
  %4898 = vst.msk [vmem:[%s5 + $0x728] sm:$0xff] %vm542, %v4386
  %4899 = vst.msk [vmem:[%s5 + $0x730] sm:$0xff] %vm542, %v4387
  %4900 = vst.msk [vmem:[%s5 + $0x738] sm:$0xff] %vm542, %v4388
  %4901 = vst.msk [vmem:[%s5 + $0x740] sm:$0xff] %vm542, %v4389
  %4902 = vst.msk [vmem:[%s5 + $0x748] sm:$0xff] %vm542, %v4390
  %4903 = vst.msk [vmem:[%s5 + $0x750] sm:$0xff] %vm542, %v4391
  %4904 = vst.msk [vmem:[%s5 + $0x758] sm:$0xff] %vm542, %v4392
  %4905 = vst.msk [vmem:[%s5 + $0x760] sm:$0xff] %vm542, %v4393
  %4906 = vst.msk [vmem:[%s5 + $0x768] sm:$0xff] %vm542, %v4394
  %4907 = vst.msk [vmem:[%s5 + $0x770] sm:$0xff] %vm542, %v4395
  %4908 = vst.msk [vmem:[%s5 + $0x778] sm:$0xff] %vm542, %v4396
  %4909 = vst.msk [vmem:[%s5 + $0x780] sm:$0xff] %vm542, %v4397
  %4910 = vst.msk [vmem:[%s5 + $0x788] sm:$0xff] %vm542, %v4398
  %4911 = vst.msk [vmem:[%s5 + $0x790] sm:$0xff] %vm542, %v4399
  %4912 = vst.msk [vmem:[%s5 + $0x798] sm:$0xff] %vm542, %v4400
  %4913 = vst.msk [vmem:[%s5 + $0x7a0] sm:$0xff] %vm542, %v4401
  %4914 = vst.msk [vmem:[%s5 + $0x7a8] sm:$0xff] %vm542, %v4402
  %4915 = vst.msk [vmem:[%s5 + $0x7b0] sm:$0xff] %vm542, %v4403
  %4916 = vst.msk [vmem:[%s5 + $0x7b8] sm:$0xff] %vm542, %v4404
  %4917 = vst.msk [vmem:[%s5 + $0x7c0] sm:$0xff] %vm542, %v4405
  %4918 = vst.msk [vmem:[%s5 + $0x7c8] sm:$0xff] %vm542, %v4406
  %4919 = vst.msk [vmem:[%s5 + $0x7d0] sm:$0xff] %vm542, %v4407
  %4920 = vst.msk [vmem:[%s5 + $0x7d8] sm:$0xff] %vm542, %v4408
  %4921 = vst.msk [vmem:[%s5 + $0x7e0] sm:$0xff] %vm542, %v4409
  %4922 = vst.msk [vmem:[%s5 + $0x7e8] sm:$0xff] %vm542, %v4410
  %4923 = vst.msk [vmem:[%s5 + $0x7f0] sm:$0xff] %vm542, %v4411
  %4924 = vst.msk [vmem:[%s5 + $0x7f8] sm:$0xff] %vm542, %v4412
  %4925 = vst.msk [vmem:[%s5 + $0x800] sm:$0xff] %vm542, %v4413
  %4926 = vst.msk [vmem:[%s5 + $0x808] sm:$0xff] %vm542, %v4414
  %4927 = vst.msk [vmem:[%s5 + $0x810] sm:$0xff] %vm542, %v4415
  %4928 = vst.msk [vmem:[%s5 + $0x818] sm:$0xff] %vm542, %v4416
  %4929 = vst.msk [vmem:[%s5 + $0x820] sm:$0xff] %vm542, %v4417
  %4930 = vst.msk [vmem:[%s5 + $0x828] sm:$0xff] %vm542, %v4418
  %4931 = vst.msk [vmem:[%s5 + $0x830] sm:$0xff] %vm542, %v4419
  %4932 = vst.msk [vmem:[%s5 + $0x838] sm:$0xff] %vm542, %v4420
  %4933 = vst.msk [vmem:[%s5 + $0x840] sm:$0xff] %vm542, %v4421
  %4934 = vst.msk [vmem:[%s5 + $0x848] sm:$0xff] %vm542, %v4422
  %4935 = vst.msk [vmem:[%s5 + $0x850] sm:$0xff] %vm542, %v4423
  %4936 = vst.msk [vmem:[%s5 + $0x858] sm:$0xff] %vm542, %v4424
  %4937 = vst.msk [vmem:[%s5 + $0x860] sm:$0xff] %vm542, %v4425
  %4938 = vst.msk [vmem:[%s5 + $0x868] sm:$0xff] %vm542, %v4426
  %4939 = vst.msk [vmem:[%s5 + $0x870] sm:$0xff] %vm542, %v4427
  %4940 = vst.msk [vmem:[%s5 + $0x878] sm:$0xff] %vm542, %v4428
  %4941 = vst.msk [vmem:[%s5 + $0x880] sm:$0xff] %vm542, %v4429
  %4942 = vst.msk [vmem:[%s5 + $0x888] sm:$0xff] %vm542, %v4430
  %4943 = vst.msk [vmem:[%s5 + $0x890] sm:$0xff] %vm542, %v4431
  %4944 = vst.msk [vmem:[%s5 + $0x898] sm:$0xff] %vm542, %v4432
  %4945 = vst.msk [vmem:[%s5 + $0x8a0] sm:$0xff] %vm542, %v4433
  %4946 = vst.msk [vmem:[%s5 + $0x8a8] sm:$0xff] %vm542, %v4434
  %4947 = vst.msk [vmem:[%s5 + $0x8b0] sm:$0xff] %vm542, %v4435
  %4948 = vst.msk [vmem:[%s5 + $0x8b8] sm:$0xff] %vm542, %v4436
  %4949 = vst.msk [vmem:[%s5 + $0x8c0] sm:$0xff] %vm542, %v4437
  %4950 = vst.msk [vmem:[%s5 + $0x8c8] sm:$0xff] %vm542, %v4438
  %4951 = vst.msk [vmem:[%s5 + $0x8d0] sm:$0xff] %vm542, %v4439
  %4952 = vst.msk [vmem:[%s5 + $0x8d8] sm:$0xff] %vm542, %v4440
  %4953 = vst.msk [vmem:[%s5 + $0x8e0] sm:$0xff] %vm542, %v4441
  %4954 = vst.msk [vmem:[%s5 + $0x8e8] sm:$0xff] %vm542, %v4442
  %4955 = vst.msk [vmem:[%s5 + $0x8f0] sm:$0xff] %vm542, %v4443
  %4956 = vst.msk [vmem:[%s5 + $0x8f8] sm:$0xff] %vm542, %v4444
  %4957 = vst.msk [vmem:[%s5 + $0x900] sm:$0xff] %vm542, %v4445
  %4958 = vst.msk [vmem:[%s5 + $0x908] sm:$0xff] %vm542, %v4446
  %4959 = vst.msk [vmem:[%s5 + $0x910] sm:$0xff] %vm542, %v4447
  %4960 = vst.msk [vmem:[%s5 + $0x918] sm:$0xff] %vm542, %v4448
  %4961 = vst.msk [vmem:[%s5 + $0x920] sm:$0xff] %vm542, %v4449
  %4962 = vst.msk [vmem:[%s5 + $0x928] sm:$0xff] %vm542, %v4450
  %4963 = vst.msk [vmem:[%s5 + $0x930] sm:$0xff] %vm542, %v4451
  %4964 = vst.msk [vmem:[%s5 + $0x938] sm:$0xff] %vm542, %v4452
  %4965 = vst.msk [vmem:[%s5 + $0x940] sm:$0xff] %vm542, %v4453
  %4966 = vst.msk [vmem:[%s5 + $0x948] sm:$0xff] %vm542, %v4454
  %4967 = vst.msk [vmem:[%s5 + $0x950] sm:$0xff] %vm542, %v4455
  %4968 = vst.msk [vmem:[%s5 + $0x958] sm:$0xff] %vm542, %v4456
  %4969 = vst.msk [vmem:[%s5 + $0x960] sm:$0xff] %vm542, %v4457
  %4970 = vst.msk [vmem:[%s5 + $0x968] sm:$0xff] %vm542, %v4458
  %4971 = vst.msk [vmem:[%s5 + $0x970] sm:$0xff] %vm542, %v4459
  %4972 = vst.msk [vmem:[%s5 + $0x978] sm:$0xff] %vm542, %v4460
  %4973 = vst.msk [vmem:[%s5 + $0x980] sm:$0xff] %vm542, %v4461
  %4974 = vst.msk [vmem:[%s5 + $0x988] sm:$0xff] %vm542, %v4462
  %4975 = vst.msk [vmem:[%s5 + $0x990] sm:$0xff] %vm542, %v4463
  %4976 = vst.msk [vmem:[%s5 + $0x998] sm:$0xff] %vm542, %v4464
  %4977 = vst.msk [vmem:[%s5 + $0x9a0] sm:$0xff] %vm542, %v4465
  %4978 = vst.msk [vmem:[%s5 + $0x9a8] sm:$0xff] %vm542, %v4466
  %4979 = vst.msk [vmem:[%s5 + $0x9b0] sm:$0xff] %vm542, %v4467
  %4980 = vst.msk [vmem:[%s5 + $0x9b8] sm:$0xff] %vm542, %v4468
  %4981 = vst.msk [vmem:[%s5 + $0x9c0] sm:$0xff] %vm542, %v4469
  %4982 = vst.msk [vmem:[%s5 + $0x9c8] sm:$0xff] %vm542, %v4470
  %4983 = vst.msk [vmem:[%s5 + $0x9d0] sm:$0xff] %vm542, %v4471
  %4984 = vst.msk [vmem:[%s5 + $0x9d8] sm:$0xff] %vm542, %v4472
  %4985 = vst.msk [vmem:[%s5 + $0x9e0] sm:$0xff] %vm542, %v4473
  %4986 = vst.msk [vmem:[%s5 + $0x9e8] sm:$0xff] %vm542, %v4474
  %4987 = vst.msk [vmem:[%s5 + $0x9f0] sm:$0xff] %vm542, %v4475
  %4988 = vst.msk [vmem:[%s5 + $0x9f8] sm:$0xff] %vm542, %v4476
  %4989 = vst.msk [vmem:[%s5 + $0xa00] sm:$0xff] %vm542, %v4477
  %4990 = vst.msk [vmem:[%s5 + $0xa08] sm:$0xff] %vm542, %v4478
  %4991 = vst.msk [vmem:[%s5 + $0xa10] sm:$0xff] %vm542, %v4479
  %4992 = vst.msk [vmem:[%s5 + $0xa18] sm:$0xff] %vm542, %v4480
  %4993 = vst.msk [vmem:[%s5 + $0xa20] sm:$0xff] %vm542, %v4481
  %4994 = vst.msk [vmem:[%s5 + $0xa28] sm:$0xff] %vm542, %v4482
  %4995 = vst.msk [vmem:[%s5 + $0xa30] sm:$0xff] %vm542, %v4483
  %4996 = vst.msk [vmem:[%s5 + $0xa38] sm:$0xff] %vm542, %v4484
  %4997 = vst.msk [vmem:[%s5 + $0xa40] sm:$0xff] %vm542, %v4485
  %4998 = vst.msk [vmem:[%s5 + $0xa48] sm:$0xff] %vm542, %v4486
  %4999 = vst.msk [vmem:[%s5 + $0xa50] sm:$0xff] %vm542, %v4487
  %5000 = vst.msk [vmem:[%s5 + $0xa58] sm:$0xff] %vm542, %v4488
  %5001 = vst.msk [vmem:[%s5 + $0xa60] sm:$0xff] %vm542, %v4489
  %5002 = vst.msk [vmem:[%s5 + $0xa68] sm:$0xff] %vm542, %v4490
  %5003 = vst.msk [vmem:[%s5 + $0xa70] sm:$0xff] %vm542, %v4491
  %5004 = vst.msk [vmem:[%s5 + $0xa78] sm:$0xff] %vm542, %v4492
  %5005 = vst.msk [vmem:[%s5 + $0xa80] sm:$0xff] %vm542, %v4493
  %5006 = vst.msk [vmem:[%s5 + $0xa88] sm:$0xff] %vm542, %v4494
  %5007 = vst.msk [vmem:[%s5 + $0xa90] sm:$0xff] %vm542, %v4495
  %5008 = vst.msk [vmem:[%s5 + $0xa98] sm:$0xff] %vm542, %v4496
  %5009 = vst.msk [vmem:[%s5 + $0xaa0] sm:$0xff] %vm542, %v4497
  %5010 = vst.msk [vmem:[%s5 + $0xaa8] sm:$0xff] %vm542, %v4498
  %5011 = vst.msk [vmem:[%s5 + $0xab0] sm:$0xff] %vm542, %v4499
  %5012 = vst.msk [vmem:[%s5 + $0xab8] sm:$0xff] %vm542, %v4500
  %5013 = vst.msk [vmem:[%s5 + $0xac0] sm:$0xff] %vm542, %v4501
  %5014 = vst.msk [vmem:[%s5 + $0xac8] sm:$0xff] %vm542, %v4502
  %5015 = vst.msk [vmem:[%s5 + $0xad0] sm:$0xff] %vm542, %v4503
  %5016 = vst.msk [vmem:[%s5 + $0xad8] sm:$0xff] %vm542, %v4504
  %5017 = vst.msk [vmem:[%s5 + $0xae0] sm:$0xff] %vm542, %v4505
  %5018 = vst.msk [vmem:[%s5 + $0xae8] sm:$0xff] %vm542, %v4506
  %5019 = vst.msk [vmem:[%s5 + $0xaf0] sm:$0xff] %vm542, %v4507
  %5020 = vst.msk [vmem:[%s5 + $0xaf8] sm:$0xff] %vm542, %v4508
  %5021 = vst.msk [vmem:[%s5 + $0xb00] sm:$0xff] %vm542, %v4509
  %5022 = vst.msk [vmem:[%s5 + $0xb08] sm:$0xff] %vm542, %v4510
  %5023 = vst.msk [vmem:[%s5 + $0xb10] sm:$0xff] %vm542, %v4511
  %5024 = vst.msk [vmem:[%s5 + $0xb18] sm:$0xff] %vm542, %v4512
  %5025 = vst.msk [vmem:[%s5 + $0xb20] sm:$0xff] %vm542, %v4513
  %5026 = vst.msk [vmem:[%s5 + $0xb28] sm:$0xff] %vm542, %v4514
  %5027 = vst.msk [vmem:[%s5 + $0xb30] sm:$0xff] %vm542, %v4515
  %5028 = vst.msk [vmem:[%s5 + $0xb38] sm:$0xff] %vm542, %v4516
  %5029 = vst.msk [vmem:[%s5 + $0xb40] sm:$0xff] %vm542, %v4517
  %5030 = vst.msk [vmem:[%s5 + $0xb48] sm:$0xff] %vm542, %v4518
  %5031 = vst.msk [vmem:[%s5 + $0xb50] sm:$0xff] %vm542, %v4519
  %5032 = vst.msk [vmem:[%s5 + $0xb58] sm:$0xff] %vm542, %v4520
  %5033 = vst.msk [vmem:[%s5 + $0xb60] sm:$0xff] %vm542, %v4521
  %5034 = vst.msk [vmem:[%s5 + $0xb68] sm:$0xff] %vm542, %v4522
  %5035 = vst.msk [vmem:[%s5 + $0xb70] sm:$0xff] %vm542, %v4523
  %5036 = vst.msk [vmem:[%s5 + $0xb78] sm:$0xff] %vm542, %v4524
  %5037 = vst.msk [vmem:[%s5 + $0xb80] sm:$0xff] %vm542, %v4525
  %5038 = vst.msk [vmem:[%s5 + $0xb88] sm:$0xff] %vm542, %v4526
  %5039 = vst.msk [vmem:[%s5 + $0xb90] sm:$0xff] %vm542, %v4527
  %5040 = vst.msk [vmem:[%s5 + $0xb98] sm:$0xff] %vm542, %v4528
  %5041 = vst.msk [vmem:[%s5 + $0xba0] sm:$0xff] %vm542, %v4529
  %5042 = vst.msk [vmem:[%s5 + $0xba8] sm:$0xff] %vm542, %v4530
  %5043 = vst.msk [vmem:[%s5 + $0xbb0] sm:$0xff] %vm542, %v4531
  %5044 = vst.msk [vmem:[%s5 + $0xbb8] sm:$0xff] %vm542, %v4532
  %5045 = vst.msk [vmem:[%s5 + $0xbc0] sm:$0xff] %vm542, %v4533
  %5046 = vst.msk [vmem:[%s5 + $0xbc8] sm:$0xff] %vm542, %v4534
  %5047 = vst.msk [vmem:[%s5 + $0xbd0] sm:$0xff] %vm542, %v4535
  %5048 = vst.msk [vmem:[%s5 + $0xbd8] sm:$0xff] %vm542, %v4536
  %5049 = vst.msk [vmem:[%s5 + $0xbe0] sm:$0xff] %vm542, %v4537
  %5050 = vst.msk [vmem:[%s5 + $0xbe8] sm:$0xff] %vm542, %v4538
  %5051 = vst.msk [vmem:[%s5 + $0xbf0] sm:$0xff] %vm542, %v4539
  %5052 = vst.msk [vmem:[%s5 + $0xbf8] sm:$0xff] %vm542, %v4540
  %5053 = vst.msk [vmem:[%s5 + $0xc00] sm:$0xff] %vm542, %v4541
  %5054 = vst.msk [vmem:[%s5 + $0xc08] sm:$0xff] %vm542, %v4542
  %5055 = vst.msk [vmem:[%s5 + $0xc10] sm:$0xff] %vm542, %v4543
  %5056 = vst.msk [vmem:[%s5 + $0xc18] sm:$0xff] %vm542, %v4544
  %5057 = vst.msk [vmem:[%s5 + $0xc20] sm:$0xff] %vm542, %v4545
  %5058 = vst.msk [vmem:[%s5 + $0xc28] sm:$0xff] %vm542, %v4546
  %5059 = vst.msk [vmem:[%s5 + $0xc30] sm:$0xff] %vm542, %v4547
  %5060 = vst.msk [vmem:[%s5 + $0xc38] sm:$0xff] %vm542, %v4548
  %5061 = vst.msk [vmem:[%s5 + $0xc40] sm:$0xff] %vm542, %v4549
  %5062 = vst.msk [vmem:[%s5 + $0xc48] sm:$0xff] %vm542, %v4550
  %5063 = vst.msk [vmem:[%s5 + $0xc50] sm:$0xff] %vm542, %v4551
  %5064 = vst.msk [vmem:[%s5 + $0xc58] sm:$0xff] %vm542, %v4552
  %5065 = vst.msk [vmem:[%s5 + $0xc60] sm:$0xff] %vm542, %v4553
  %5066 = vst.msk [vmem:[%s5 + $0xc68] sm:$0xff] %vm542, %v4554
  %5067 = vst.msk [vmem:[%s5 + $0xc70] sm:$0xff] %vm542, %v4555
  %5068 = vst.msk [vmem:[%s5 + $0xc78] sm:$0xff] %vm542, %v4556
  %5069 = vst.msk [vmem:[%s5 + $0xc80] sm:$0xff] %vm542, %v4557
  %5070 = vst.msk [vmem:[%s5 + $0xc88] sm:$0xff] %vm542, %v4558
  %5071 = vst.msk [vmem:[%s5 + $0xc90] sm:$0xff] %vm542, %v4559
  %5072 = vst.msk [vmem:[%s5 + $0xc98] sm:$0xff] %vm542, %v4560
  %5073 = vst.msk [vmem:[%s5 + $0xca0] sm:$0xff] %vm542, %v4561
  %5074 = vst.msk [vmem:[%s5 + $0xca8] sm:$0xff] %vm542, %v4562
  %5075 = vst.msk [vmem:[%s5 + $0xcb0] sm:$0xff] %vm542, %v4563
  %5076 = vst.msk [vmem:[%s5 + $0xcb8] sm:$0xff] %vm542, %v4564
  %5077 = vst.msk [vmem:[%s5 + $0xcc0] sm:$0xff] %vm542, %v4565
  %5078 = vst.msk [vmem:[%s5 + $0xcc8] sm:$0xff] %vm542, %v4566
  %5079 = vst.msk [vmem:[%s5 + $0xcd0] sm:$0xff] %vm542, %v4567
  %5080 = vst.msk [vmem:[%s5 + $0xcd8] sm:$0xff] %vm542, %v4568
  %5081 = vst.msk [vmem:[%s5 + $0xce0] sm:$0xff] %vm542, %v4569
  %5082 = vst.msk [vmem:[%s5 + $0xce8] sm:$0xff] %vm542, %v4570
  %5083 = vst.msk [vmem:[%s5 + $0xcf0] sm:$0xff] %vm542, %v4571
  %5084 = vst.msk [vmem:[%s5 + $0xcf8] sm:$0xff] %vm542, %v4572
  %5085 = vst.msk [vmem:[%s5 + $0xd00] sm:$0xff] %vm542, %v4573
  %5086 = vst.msk [vmem:[%s5 + $0xd08] sm:$0xff] %vm542, %v4574
  %5087 = vst.msk [vmem:[%s5 + $0xd10] sm:$0xff] %vm542, %v4575
  %5088 = vst.msk [vmem:[%s5 + $0xd18] sm:$0xff] %vm542, %v4576
  %5089 = vst.msk [vmem:[%s5 + $0xd20] sm:$0xff] %vm542, %v4577
  %5090 = vst.msk [vmem:[%s5 + $0xd28] sm:$0xff] %vm542, %v4578
  %5091 = vst.msk [vmem:[%s5 + $0xd30] sm:$0xff] %vm542, %v4579
  %5092 = vst.msk [vmem:[%s5 + $0xd38] sm:$0xff] %vm542, %v4580
  %5093 = vst.msk [vmem:[%s5 + $0xd40] sm:$0xff] %vm542, %v4581
  %5094 = vst.msk [vmem:[%s5 + $0xd48] sm:$0xff] %vm542, %v4582
  %5095 = vst.msk [vmem:[%s5 + $0xd50] sm:$0xff] %vm542, %v4583
  %5096 = vst.msk [vmem:[%s5 + $0xd58] sm:$0xff] %vm542, %v4584
  %5097 = vst.msk [vmem:[%s5 + $0xd60] sm:$0xff] %vm542, %v4585
  %5098 = vst.msk [vmem:[%s5 + $0xd68] sm:$0xff] %vm542, %v4586
  %5099 = vst.msk [vmem:[%s5 + $0xd70] sm:$0xff] %vm542, %v4587
  %5100 = vst.msk [vmem:[%s5 + $0xd78] sm:$0xff] %vm542, %v4588
  %5101 = vst.msk [vmem:[%s5 + $0xd80] sm:$0xff] %vm542, %v4589
  %5102 = vst.msk [vmem:[%s5 + $0xd88] sm:$0xff] %vm542, %v4590
  %5103 = vst.msk [vmem:[%s5 + $0xd90] sm:$0xff] %vm542, %v4591
  %5104 = vst.msk [vmem:[%s5 + $0xd98] sm:$0xff] %vm542, %v4592
  %5105 = vst.msk [vmem:[%s5 + $0xda0] sm:$0xff] %vm542, %v4593
  %5106 = vst.msk [vmem:[%s5 + $0xda8] sm:$0xff] %vm542, %v4594
  %5107 = vst.msk [vmem:[%s5 + $0xdb0] sm:$0xff] %vm542, %v4595
  %5108 = vst.msk [vmem:[%s5 + $0xdb8] sm:$0xff] %vm542, %v4596
  %5109 = vst.msk [vmem:[%s5 + $0xdc0] sm:$0xff] %vm542, %v4597
  %5110 = vst.msk [vmem:[%s5 + $0xdc8] sm:$0xff] %vm542, %v4598
  %5111 = vst.msk [vmem:[%s5 + $0xdd0] sm:$0xff] %vm542, %v4599
  %5112 = vst.msk [vmem:[%s5 + $0xdd8] sm:$0xff] %vm542, %v4600
  %5113 = vst.msk [vmem:[%s5 + $0xde0] sm:$0xff] %vm542, %v4601
  %5114 = vst.msk [vmem:[%s5 + $0xde8] sm:$0xff] %vm542, %v4602
  %5115 = vst.msk [vmem:[%s5 + $0xdf0] sm:$0xff] %vm542, %v4603
  %5116 = vst.msk [vmem:[%s5 + $0xdf8] sm:$0xff] %vm542, %v4604
  %5117 = vst.msk [vmem:[%s5 + $0xe00] sm:$0xff] %vm542, %v4605
  %5118 = vst.msk [vmem:[%s5 + $0xe08] sm:$0xff] %vm542, %v4606
  %5119 = vst.msk [vmem:[%s5 + $0xe10] sm:$0xff] %vm542, %v4607
  %5120 = vst.msk [vmem:[%s5 + $0xe18] sm:$0xff] %vm542, %v4608
  %5121 = vst.msk [vmem:[%s5 + $0xe20] sm:$0xff] %vm542, %v4609
  %5122 = vst.msk [vmem:[%s5 + $0xe28] sm:$0xff] %vm542, %v4610
  %5123 = vst.msk [vmem:[%s5 + $0xe30] sm:$0xff] %vm542, %v4611
  %5124 = vst.msk [vmem:[%s5 + $0xe38] sm:$0xff] %vm542, %v4612
  %5125 = vst.msk [vmem:[%s5 + $0xe40] sm:$0xff] %vm542, %v4613
  %5126 = vst.msk [vmem:[%s5 + $0xe48] sm:$0xff] %vm542, %v4614
  %5127 = vst.msk [vmem:[%s5 + $0xe50] sm:$0xff] %vm542, %v4615
  %5128 = vst.msk [vmem:[%s5 + $0xe58] sm:$0xff] %vm542, %v4616
  %5129 = vst.msk [vmem:[%s5 + $0xe60] sm:$0xff] %vm542, %v4617
  %5130 = vst.msk [vmem:[%s5 + $0xe68] sm:$0xff] %vm542, %v4618
  %5131 = vst.msk [vmem:[%s5 + $0xe70] sm:$0xff] %vm542, %v4619
  %5132 = vst.msk [vmem:[%s5 + $0xe78] sm:$0xff] %vm542, %v4620
  %5133 = vst.msk [vmem:[%s5 + $0xe80] sm:$0xff] %vm542, %v4621
  %5134 = vst.msk [vmem:[%s5 + $0xe88] sm:$0xff] %vm542, %v4622
  %5135 = vst.msk [vmem:[%s5 + $0xe90] sm:$0xff] %vm542, %v4623
  %5136 = vst.msk [vmem:[%s5 + $0xe98] sm:$0xff] %vm542, %v4624
  %5137 = vst.msk [vmem:[%s5 + $0xea0] sm:$0xff] %vm542, %v4625
  %5138 = vst.msk [vmem:[%s5 + $0xea8] sm:$0xff] %vm542, %v4626
  %5139 = vst.msk [vmem:[%s5 + $0xeb0] sm:$0xff] %vm542, %v4627
  %5140 = vst.msk [vmem:[%s5 + $0xeb8] sm:$0xff] %vm542, %v4628
  %5141 = vst.msk [vmem:[%s5 + $0xec0] sm:$0xff] %vm542, %v4629
  %5142 = vst.msk [vmem:[%s5 + $0xec8] sm:$0xff] %vm542, %v4630
  %5143 = vst.msk [vmem:[%s5 + $0xed0] sm:$0xff] %vm542, %v4631
  %5144 = vst.msk [vmem:[%s5 + $0xed8] sm:$0xff] %vm542, %v4632
  %5145 = vst.msk [vmem:[%s5 + $0xee0] sm:$0xff] %vm542, %v4633
  %5146 = vst.msk [vmem:[%s5 + $0xee8] sm:$0xff] %vm542, %v4634
  %5147 = vst.msk [vmem:[%s5 + $0xef0] sm:$0xff] %vm542, %v4635
  %5148 = vst.msk [vmem:[%s5 + $0xef8] sm:$0xff] %vm542, %v4636
  %5149 = vst.msk [vmem:[%s5 + $0xf00] sm:$0xff] %vm542, %v4637
  %5150 = vst.msk [vmem:[%s5 + $0xf08] sm:$0xff] %vm542, %v4638
  %5151 = vst.msk [vmem:[%s5 + $0xf10] sm:$0xff] %vm542, %v4639
  %5152 = vst.msk [vmem:[%s5 + $0xf18] sm:$0xff] %vm542, %v4640
  %5153 = vst.msk [vmem:[%s5 + $0xf20] sm:$0xff] %vm542, %v4641
  %5154 = vst.msk [vmem:[%s5 + $0xf28] sm:$0xff] %vm542, %v4642
  %5155 = vst.msk [vmem:[%s5 + $0xf30] sm:$0xff] %vm542, %v4643
  %5156 = vst.msk [vmem:[%s5 + $0xf38] sm:$0xff] %vm542, %v4644
  %5157 = vst.msk [vmem:[%s5 + $0xf40] sm:$0xff] %vm542, %v4645
  %5158 = vst.msk [vmem:[%s5 + $0xf48] sm:$0xff] %vm542, %v4646
  %5159 = vst.msk [vmem:[%s5 + $0xf50] sm:$0xff] %vm542, %v4647
  %5160 = vst.msk [vmem:[%s5 + $0xf58] sm:$0xff] %vm542, %v4648
  %5161 = vst.msk [vmem:[%s5 + $0xf60] sm:$0xff] %vm542, %v4649
  %5162 = vst.msk [vmem:[%s5 + $0xf68] sm:$0xff] %vm542, %v4650
  %5163 = vst.msk [vmem:[%s5 + $0xf70] sm:$0xff] %vm542, %v4651
  %5164 = vst.msk [vmem:[%s5 + $0xf78] sm:$0xff] %vm542, %v4652
  %5165 = vst.msk [vmem:[%s5 + $0xf80] sm:$0xff] %vm542, %v4653
  %5166 = vst.msk [vmem:[%s5 + $0xf88] sm:$0xff] %vm542, %v4654
  %5167 = vst.msk [vmem:[%s5 + $0xf90] sm:$0xff] %vm542, %v4655
  %5168 = vst.msk [vmem:[%s5 + $0xf98] sm:$0xff] %vm542, %v4656
  %5169 = vst.msk [vmem:[%s5 + $0xfa0] sm:$0xff] %vm542, %v4657
  %5170 = vst.msk [vmem:[%s5 + $0xfa8] sm:$0xff] %vm542, %v4658
  %5171 = vst.msk [vmem:[%s5 + $0xfb0] sm:$0xff] %vm542, %v4659
  %5172 = vst.msk [vmem:[%s5 + $0xfb8] sm:$0xff] %vm542, %v4660
  %5173 = vst.msk [vmem:[%s5 + $0xfc0] sm:$0xff] %vm542, %v4661
  %5174 = vst.msk [vmem:[%s5 + $0xfc8] sm:$0xff] %vm542, %v4662
  %5175 = vst.msk [vmem:[%s5 + $0xfd0] sm:$0xff] %vm542, %v4663
  %5176 = vst.msk [vmem:[%s5 + $0xfd8] sm:$0xff] %vm542, %v4664
  %5177 = vst.msk [vmem:[%s5 + $0xfe0] sm:$0xff] %vm542, %v4665
  %5178 = vst.msk [vmem:[%s5 + $0xfe8] sm:$0xff] %vm542, %v4666
  %5179 = vst.msk [vmem:[%s5 + $0xff0] sm:$0xff] %vm542, %v4667
  %5180 = vst.msk [vmem:[%s5 + $0xff8] sm:$0xff] %vm542, %v4668
  %v5181 = vld [vmem:[%s0 + $0x1000] sm:$0xff]
  %v5182 = vld [vmem:[%s0 + $0x1008] sm:$0xff]
  %v5183 = vld [vmem:[%s0 + $0x1010] sm:$0xff]
  %v5184 = vld [vmem:[%s0 + $0x1018] sm:$0xff]
  %v5185 = vld [vmem:[%s0 + $0x1020] sm:$0xff]
  %v5186 = vld [vmem:[%s0 + $0x1028] sm:$0xff]
  %v5187 = vld [vmem:[%s0 + $0x1030] sm:$0xff]
  %v5188 = vld [vmem:[%s0 + $0x1038] sm:$0xff]
  %v5189 = vld [vmem:[%s0 + $0x1040] sm:$0xff]
  %v5190 = vld [vmem:[%s0 + $0x1048] sm:$0xff]
  %v5191 = vld [vmem:[%s0 + $0x1050] sm:$0xff]
  %v5192 = vld [vmem:[%s0 + $0x1058] sm:$0xff]
  %v5193 = vld [vmem:[%s0 + $0x1060] sm:$0xff]
  %v5194 = vld [vmem:[%s0 + $0x1068] sm:$0xff]
  %v5195 = vld [vmem:[%s0 + $0x1070] sm:$0xff]
  %v5196 = vld [vmem:[%s0 + $0x1078] sm:$0xff]
  %v5197 = vld [vmem:[%s0 + $0x1080] sm:$0xff]
  %v5198 = vld [vmem:[%s0 + $0x1088] sm:$0xff]
  %v5199 = vld [vmem:[%s0 + $0x1090] sm:$0xff]
  %v5200 = vld [vmem:[%s0 + $0x1098] sm:$0xff]
  %v5201 = vld [vmem:[%s0 + $0x10a0] sm:$0xff]
  %v5202 = vld [vmem:[%s0 + $0x10a8] sm:$0xff]
  %v5203 = vld [vmem:[%s0 + $0x10b0] sm:$0xff]
  %v5204 = vld [vmem:[%s0 + $0x10b8] sm:$0xff]
  %v5205 = vld [vmem:[%s0 + $0x10c0] sm:$0xff]
  %v5206 = vld [vmem:[%s0 + $0x10c8] sm:$0xff]
  %v5207 = vld [vmem:[%s0 + $0x10d0] sm:$0xff]
  %v5208 = vld [vmem:[%s0 + $0x10d8] sm:$0xff]
  %v5209 = vld [vmem:[%s0 + $0x10e0] sm:$0xff]
  %v5210 = vld [vmem:[%s0 + $0x10e8] sm:$0xff]
  %v5211 = vld [vmem:[%s0 + $0x10f0] sm:$0xff]
  %v5212 = vld [vmem:[%s0 + $0x10f8] sm:$0xff]
  %v5213 = vld [vmem:[%s0 + $0x1100] sm:$0xff]
  %v5214 = vld [vmem:[%s0 + $0x1108] sm:$0xff]
  %v5215 = vld [vmem:[%s0 + $0x1110] sm:$0xff]
  %v5216 = vld [vmem:[%s0 + $0x1118] sm:$0xff]
  %v5217 = vld [vmem:[%s0 + $0x1120] sm:$0xff]
  %v5218 = vld [vmem:[%s0 + $0x1128] sm:$0xff]
  %v5219 = vld [vmem:[%s0 + $0x1130] sm:$0xff]
  %v5220 = vld [vmem:[%s0 + $0x1138] sm:$0xff]
  %v5221 = vld [vmem:[%s0 + $0x1140] sm:$0xff]
  %v5222 = vld [vmem:[%s0 + $0x1148] sm:$0xff]
  %v5223 = vld [vmem:[%s0 + $0x1150] sm:$0xff]
  %v5224 = vld [vmem:[%s0 + $0x1158] sm:$0xff]
  %v5225 = vld [vmem:[%s0 + $0x1160] sm:$0xff]
  %v5226 = vld [vmem:[%s0 + $0x1168] sm:$0xff]
  %v5227 = vld [vmem:[%s0 + $0x1170] sm:$0xff]
  %v5228 = vld [vmem:[%s0 + $0x1178] sm:$0xff]
  %v5229 = vld [vmem:[%s0 + $0x1180] sm:$0xff]
  %v5230 = vld [vmem:[%s0 + $0x1188] sm:$0xff]
  %v5231 = vld [vmem:[%s0 + $0x1190] sm:$0xff]
  %v5232 = vld [vmem:[%s0 + $0x1198] sm:$0xff]
  %v5233 = vld [vmem:[%s0 + $0x11a0] sm:$0xff]
  %v5234 = vld [vmem:[%s0 + $0x11a8] sm:$0xff]
  %v5235 = vld [vmem:[%s0 + $0x11b0] sm:$0xff]
  %v5236 = vld [vmem:[%s0 + $0x11b8] sm:$0xff]
  %v5237 = vld [vmem:[%s0 + $0x11c0] sm:$0xff]
  %v5238 = vld [vmem:[%s0 + $0x11c8] sm:$0xff]
  %v5239 = vld [vmem:[%s0 + $0x11d0] sm:$0xff]
  %v5240 = vld [vmem:[%s0 + $0x11d8] sm:$0xff]
  %v5241 = vld [vmem:[%s0 + $0x11e0] sm:$0xff]
  %v5242 = vld [vmem:[%s0 + $0x11e8] sm:$0xff]
  %v5243 = vld [vmem:[%s0 + $0x11f0] sm:$0xff]
  %v5244 = vld [vmem:[%s0 + $0x11f8] sm:$0xff]
  %v5245 = vld [vmem:[%s0 + $0x1200] sm:$0xff]
  %v5246 = vld [vmem:[%s0 + $0x1208] sm:$0xff]
  %v5247 = vld [vmem:[%s0 + $0x1210] sm:$0xff]
  %v5248 = vld [vmem:[%s0 + $0x1218] sm:$0xff]
  %v5249 = vld [vmem:[%s0 + $0x1220] sm:$0xff]
  %v5250 = vld [vmem:[%s0 + $0x1228] sm:$0xff]
  %v5251 = vld [vmem:[%s0 + $0x1230] sm:$0xff]
  %v5252 = vld [vmem:[%s0 + $0x1238] sm:$0xff]
  %v5253 = vld [vmem:[%s0 + $0x1240] sm:$0xff]
  %v5254 = vld [vmem:[%s0 + $0x1248] sm:$0xff]
  %v5255 = vld [vmem:[%s0 + $0x1250] sm:$0xff]
  %v5256 = vld [vmem:[%s0 + $0x1258] sm:$0xff]
  %v5257 = vld [vmem:[%s0 + $0x1260] sm:$0xff]
  %v5258 = vld [vmem:[%s0 + $0x1268] sm:$0xff]
  %v5259 = vld [vmem:[%s0 + $0x1270] sm:$0xff]
  %v5260 = vld [vmem:[%s0 + $0x1278] sm:$0xff]
  %v5261 = vld [vmem:[%s0 + $0x1280] sm:$0xff]
  %v5262 = vld [vmem:[%s0 + $0x1288] sm:$0xff]
  %v5263 = vld [vmem:[%s0 + $0x1290] sm:$0xff]
  %v5264 = vld [vmem:[%s0 + $0x1298] sm:$0xff]
  %v5265 = vld [vmem:[%s0 + $0x12a0] sm:$0xff]
  %v5266 = vld [vmem:[%s0 + $0x12a8] sm:$0xff]
  %v5267 = vld [vmem:[%s0 + $0x12b0] sm:$0xff]
  %v5268 = vld [vmem:[%s0 + $0x12b8] sm:$0xff]
  %v5269 = vld [vmem:[%s0 + $0x12c0] sm:$0xff]
  %v5270 = vld [vmem:[%s0 + $0x12c8] sm:$0xff]
  %v5271 = vld [vmem:[%s0 + $0x12d0] sm:$0xff]
  %v5272 = vld [vmem:[%s0 + $0x12d8] sm:$0xff]
  %v5273 = vld [vmem:[%s0 + $0x12e0] sm:$0xff]
  %v5274 = vld [vmem:[%s0 + $0x12e8] sm:$0xff]
  %v5275 = vld [vmem:[%s0 + $0x12f0] sm:$0xff]
  %v5276 = vld [vmem:[%s0 + $0x12f8] sm:$0xff]
  %v5277 = vld [vmem:[%s0 + $0x1300] sm:$0xff]
  %v5278 = vld [vmem:[%s0 + $0x1308] sm:$0xff]
  %v5279 = vld [vmem:[%s0 + $0x1310] sm:$0xff]
  %v5280 = vld [vmem:[%s0 + $0x1318] sm:$0xff]
  %v5281 = vld [vmem:[%s0 + $0x1320] sm:$0xff]
  %v5282 = vld [vmem:[%s0 + $0x1328] sm:$0xff]
  %v5283 = vld [vmem:[%s0 + $0x1330] sm:$0xff]
  %v5284 = vld [vmem:[%s0 + $0x1338] sm:$0xff]
  %v5285 = vld [vmem:[%s0 + $0x1340] sm:$0xff]
  %v5286 = vld [vmem:[%s0 + $0x1348] sm:$0xff]
  %v5287 = vld [vmem:[%s0 + $0x1350] sm:$0xff]
  %v5288 = vld [vmem:[%s0 + $0x1358] sm:$0xff]
  %v5289 = vld [vmem:[%s0 + $0x1360] sm:$0xff]
  %v5290 = vld [vmem:[%s0 + $0x1368] sm:$0xff]
  %v5291 = vld [vmem:[%s0 + $0x1370] sm:$0xff]
  %v5292 = vld [vmem:[%s0 + $0x1378] sm:$0xff]
  %v5293 = vld [vmem:[%s0 + $0x1380] sm:$0xff]
  %v5294 = vld [vmem:[%s0 + $0x1388] sm:$0xff]
  %v5295 = vld [vmem:[%s0 + $0x1390] sm:$0xff]
  %v5296 = vld [vmem:[%s0 + $0x1398] sm:$0xff]
  %v5297 = vld [vmem:[%s0 + $0x13a0] sm:$0xff]
  %v5298 = vld [vmem:[%s0 + $0x13a8] sm:$0xff]
  %v5299 = vld [vmem:[%s0 + $0x13b0] sm:$0xff]
  %v5300 = vld [vmem:[%s0 + $0x13b8] sm:$0xff]
  %v5301 = vld [vmem:[%s0 + $0x13c0] sm:$0xff]
  %v5302 = vld [vmem:[%s0 + $0x13c8] sm:$0xff]
  %v5303 = vld [vmem:[%s0 + $0x13d0] sm:$0xff]
  %v5304 = vld [vmem:[%s0 + $0x13d8] sm:$0xff]
  %v5305 = vld [vmem:[%s0 + $0x13e0] sm:$0xff]
  %v5306 = vld [vmem:[%s0 + $0x13e8] sm:$0xff]
  %v5307 = vld [vmem:[%s0 + $0x13f0] sm:$0xff]
  %v5308 = vld [vmem:[%s0 + $0x13f8] sm:$0xff]
  %v5309 = vld [vmem:[%s0 + $0x1400] sm:$0xff]
  %v5310 = vld [vmem:[%s0 + $0x1408] sm:$0xff]
  %v5311 = vld [vmem:[%s0 + $0x1410] sm:$0xff]
  %v5312 = vld [vmem:[%s0 + $0x1418] sm:$0xff]
  %v5313 = vld [vmem:[%s0 + $0x1420] sm:$0xff]
  %v5314 = vld [vmem:[%s0 + $0x1428] sm:$0xff]
  %v5315 = vld [vmem:[%s0 + $0x1430] sm:$0xff]
  %v5316 = vld [vmem:[%s0 + $0x1438] sm:$0xff]
  %v5317 = vld [vmem:[%s0 + $0x1440] sm:$0xff]
  %v5318 = vld [vmem:[%s0 + $0x1448] sm:$0xff]
  %v5319 = vld [vmem:[%s0 + $0x1450] sm:$0xff]
  %v5320 = vld [vmem:[%s0 + $0x1458] sm:$0xff]
  %v5321 = vld [vmem:[%s0 + $0x1460] sm:$0xff]
  %v5322 = vld [vmem:[%s0 + $0x1468] sm:$0xff]
  %v5323 = vld [vmem:[%s0 + $0x1470] sm:$0xff]
  %v5324 = vld [vmem:[%s0 + $0x1478] sm:$0xff]
  %v5325 = vld [vmem:[%s0 + $0x1480] sm:$0xff]
  %v5326 = vld [vmem:[%s0 + $0x1488] sm:$0xff]
  %v5327 = vld [vmem:[%s0 + $0x1490] sm:$0xff]
  %v5328 = vld [vmem:[%s0 + $0x1498] sm:$0xff]
  %v5329 = vld [vmem:[%s0 + $0x14a0] sm:$0xff]
  %v5330 = vld [vmem:[%s0 + $0x14a8] sm:$0xff]
  %v5331 = vld [vmem:[%s0 + $0x14b0] sm:$0xff]
  %v5332 = vld [vmem:[%s0 + $0x14b8] sm:$0xff]
  %v5333 = vld [vmem:[%s0 + $0x14c0] sm:$0xff]
  %v5334 = vld [vmem:[%s0 + $0x14c8] sm:$0xff]
  %v5335 = vld [vmem:[%s0 + $0x14d0] sm:$0xff]
  %v5336 = vld [vmem:[%s0 + $0x14d8] sm:$0xff]
  %v5337 = vld [vmem:[%s0 + $0x14e0] sm:$0xff]
  %v5338 = vld [vmem:[%s0 + $0x14e8] sm:$0xff]
  %v5339 = vld [vmem:[%s0 + $0x14f0] sm:$0xff]
  %v5340 = vld [vmem:[%s0 + $0x14f8] sm:$0xff]
  %v5341 = vld [vmem:[%s0 + $0x1500] sm:$0xff]
  %v5342 = vld [vmem:[%s0 + $0x1508] sm:$0xff]
  %v5343 = vld [vmem:[%s0 + $0x1510] sm:$0xff]
  %v5344 = vld [vmem:[%s0 + $0x1518] sm:$0xff]
  %v5345 = vld [vmem:[%s0 + $0x1520] sm:$0xff]
  %v5346 = vld [vmem:[%s0 + $0x1528] sm:$0xff]
  %v5347 = vld [vmem:[%s0 + $0x1530] sm:$0xff]
  %v5348 = vld [vmem:[%s0 + $0x1538] sm:$0xff]
  %v5349 = vld [vmem:[%s0 + $0x1540] sm:$0xff]
  %v5350 = vld [vmem:[%s0 + $0x1548] sm:$0xff]
  %v5351 = vld [vmem:[%s0 + $0x1550] sm:$0xff]
  %v5352 = vld [vmem:[%s0 + $0x1558] sm:$0xff]
  %v5353 = vld [vmem:[%s0 + $0x1560] sm:$0xff]
  %v5354 = vld [vmem:[%s0 + $0x1568] sm:$0xff]
  %v5355 = vld [vmem:[%s0 + $0x1570] sm:$0xff]
  %v5356 = vld [vmem:[%s0 + $0x1578] sm:$0xff]
  %v5357 = vld [vmem:[%s0 + $0x1580] sm:$0xff]
  %v5358 = vld [vmem:[%s0 + $0x1588] sm:$0xff]
  %v5359 = vld [vmem:[%s0 + $0x1590] sm:$0xff]
  %v5360 = vld [vmem:[%s0 + $0x1598] sm:$0xff]
  %v5361 = vld [vmem:[%s0 + $0x15a0] sm:$0xff]
  %v5362 = vld [vmem:[%s0 + $0x15a8] sm:$0xff]
  %v5363 = vld [vmem:[%s0 + $0x15b0] sm:$0xff]
  %v5364 = vld [vmem:[%s0 + $0x15b8] sm:$0xff]
  %v5365 = vld [vmem:[%s0 + $0x15c0] sm:$0xff]
  %v5366 = vld [vmem:[%s0 + $0x15c8] sm:$0xff]
  %v5367 = vld [vmem:[%s0 + $0x15d0] sm:$0xff]
  %v5368 = vld [vmem:[%s0 + $0x15d8] sm:$0xff]
  %v5369 = vld [vmem:[%s0 + $0x15e0] sm:$0xff]
  %v5370 = vld [vmem:[%s0 + $0x15e8] sm:$0xff]
  %v5371 = vld [vmem:[%s0 + $0x15f0] sm:$0xff]
  %v5372 = vld [vmem:[%s0 + $0x15f8] sm:$0xff]
  %v5373 = vld [vmem:[%s0 + $0x1600] sm:$0xff]
  %v5374 = vld [vmem:[%s0 + $0x1608] sm:$0xff]
  %v5375 = vld [vmem:[%s0 + $0x1610] sm:$0xff]
  %v5376 = vld [vmem:[%s0 + $0x1618] sm:$0xff]
  %v5377 = vld [vmem:[%s0 + $0x1620] sm:$0xff]
  %v5378 = vld [vmem:[%s0 + $0x1628] sm:$0xff]
  %v5379 = vld [vmem:[%s0 + $0x1630] sm:$0xff]
  %v5380 = vld [vmem:[%s0 + $0x1638] sm:$0xff]
  %v5381 = vld [vmem:[%s0 + $0x1640] sm:$0xff]
  %v5382 = vld [vmem:[%s0 + $0x1648] sm:$0xff]
  %v5383 = vld [vmem:[%s0 + $0x1650] sm:$0xff]
  %v5384 = vld [vmem:[%s0 + $0x1658] sm:$0xff]
  %v5385 = vld [vmem:[%s0 + $0x1660] sm:$0xff]
  %v5386 = vld [vmem:[%s0 + $0x1668] sm:$0xff]
  %v5387 = vld [vmem:[%s0 + $0x1670] sm:$0xff]
  %v5388 = vld [vmem:[%s0 + $0x1678] sm:$0xff]
  %v5389 = vld [vmem:[%s0 + $0x1680] sm:$0xff]
  %v5390 = vld [vmem:[%s0 + $0x1688] sm:$0xff]
  %v5391 = vld [vmem:[%s0 + $0x1690] sm:$0xff]
  %v5392 = vld [vmem:[%s0 + $0x1698] sm:$0xff]
  %v5393 = vld [vmem:[%s0 + $0x16a0] sm:$0xff]
  %v5394 = vld [vmem:[%s0 + $0x16a8] sm:$0xff]
  %v5395 = vld [vmem:[%s0 + $0x16b0] sm:$0xff]
  %v5396 = vld [vmem:[%s0 + $0x16b8] sm:$0xff]
  %v5397 = vld [vmem:[%s0 + $0x16c0] sm:$0xff]
  %v5398 = vld [vmem:[%s0 + $0x16c8] sm:$0xff]
  %v5399 = vld [vmem:[%s0 + $0x16d0] sm:$0xff]
  %v5400 = vld [vmem:[%s0 + $0x16d8] sm:$0xff]
  %v5401 = vld [vmem:[%s0 + $0x16e0] sm:$0xff]
  %v5402 = vld [vmem:[%s0 + $0x16e8] sm:$0xff]
  %v5403 = vld [vmem:[%s0 + $0x16f0] sm:$0xff]
  %v5404 = vld [vmem:[%s0 + $0x16f8] sm:$0xff]
  %v5405 = vld [vmem:[%s0 + $0x1700] sm:$0xff]
  %v5406 = vld [vmem:[%s0 + $0x1708] sm:$0xff]
  %v5407 = vld [vmem:[%s0 + $0x1710] sm:$0xff]
  %v5408 = vld [vmem:[%s0 + $0x1718] sm:$0xff]
  %v5409 = vld [vmem:[%s0 + $0x1720] sm:$0xff]
  %v5410 = vld [vmem:[%s0 + $0x1728] sm:$0xff]
  %v5411 = vld [vmem:[%s0 + $0x1730] sm:$0xff]
  %v5412 = vld [vmem:[%s0 + $0x1738] sm:$0xff]
  %v5413 = vld [vmem:[%s0 + $0x1740] sm:$0xff]
  %v5414 = vld [vmem:[%s0 + $0x1748] sm:$0xff]
  %v5415 = vld [vmem:[%s0 + $0x1750] sm:$0xff]
  %v5416 = vld [vmem:[%s0 + $0x1758] sm:$0xff]
  %v5417 = vld [vmem:[%s0 + $0x1760] sm:$0xff]
  %v5418 = vld [vmem:[%s0 + $0x1768] sm:$0xff]
  %v5419 = vld [vmem:[%s0 + $0x1770] sm:$0xff]
  %v5420 = vld [vmem:[%s0 + $0x1778] sm:$0xff]
  %v5421 = vld [vmem:[%s0 + $0x1780] sm:$0xff]
  %v5422 = vld [vmem:[%s0 + $0x1788] sm:$0xff]
  %v5423 = vld [vmem:[%s0 + $0x1790] sm:$0xff]
  %v5424 = vld [vmem:[%s0 + $0x1798] sm:$0xff]
  %v5425 = vld [vmem:[%s0 + $0x17a0] sm:$0xff]
  %v5426 = vld [vmem:[%s0 + $0x17a8] sm:$0xff]
  %v5427 = vld [vmem:[%s0 + $0x17b0] sm:$0xff]
  %v5428 = vld [vmem:[%s0 + $0x17b8] sm:$0xff]
  %v5429 = vld [vmem:[%s0 + $0x17c0] sm:$0xff]
  %v5430 = vld [vmem:[%s0 + $0x17c8] sm:$0xff]
  %v5431 = vld [vmem:[%s0 + $0x17d0] sm:$0xff]
  %v5432 = vld [vmem:[%s0 + $0x17d8] sm:$0xff]
  %v5433 = vld [vmem:[%s0 + $0x17e0] sm:$0xff]
  %v5434 = vld [vmem:[%s0 + $0x17e8] sm:$0xff]
  %v5435 = vld [vmem:[%s0 + $0x17f0] sm:$0xff]
  %v5436 = vld [vmem:[%s0 + $0x17f8] sm:$0xff]
  %v5437 = vld [vmem:[%s0 + $0x1800] sm:$0xff]
  %v5438 = vld [vmem:[%s0 + $0x1808] sm:$0xff]
  %v5439 = vld [vmem:[%s0 + $0x1810] sm:$0xff]
  %v5440 = vld [vmem:[%s0 + $0x1818] sm:$0xff]
  %v5441 = vld [vmem:[%s0 + $0x1820] sm:$0xff]
  %v5442 = vld [vmem:[%s0 + $0x1828] sm:$0xff]
  %v5443 = vld [vmem:[%s0 + $0x1830] sm:$0xff]
  %v5444 = vld [vmem:[%s0 + $0x1838] sm:$0xff]
  %v5445 = vld [vmem:[%s0 + $0x1840] sm:$0xff]
  %v5446 = vld [vmem:[%s0 + $0x1848] sm:$0xff]
  %v5447 = vld [vmem:[%s0 + $0x1850] sm:$0xff]
  %v5448 = vld [vmem:[%s0 + $0x1858] sm:$0xff]
  %v5449 = vld [vmem:[%s0 + $0x1860] sm:$0xff]
  %v5450 = vld [vmem:[%s0 + $0x1868] sm:$0xff]
  %v5451 = vld [vmem:[%s0 + $0x1870] sm:$0xff]
  %v5452 = vld [vmem:[%s0 + $0x1878] sm:$0xff]
  %v5453 = vld [vmem:[%s0 + $0x1880] sm:$0xff]
  %v5454 = vld [vmem:[%s0 + $0x1888] sm:$0xff]
  %v5455 = vld [vmem:[%s0 + $0x1890] sm:$0xff]
  %v5456 = vld [vmem:[%s0 + $0x1898] sm:$0xff]
  %v5457 = vld [vmem:[%s0 + $0x18a0] sm:$0xff]
  %v5458 = vld [vmem:[%s0 + $0x18a8] sm:$0xff]
  %v5459 = vld [vmem:[%s0 + $0x18b0] sm:$0xff]
  %v5460 = vld [vmem:[%s0 + $0x18b8] sm:$0xff]
  %v5461 = vld [vmem:[%s0 + $0x18c0] sm:$0xff]
  %v5462 = vld [vmem:[%s0 + $0x18c8] sm:$0xff]
  %v5463 = vld [vmem:[%s0 + $0x18d0] sm:$0xff]
  %v5464 = vld [vmem:[%s0 + $0x18d8] sm:$0xff]
  %v5465 = vld [vmem:[%s0 + $0x18e0] sm:$0xff]
  %v5466 = vld [vmem:[%s0 + $0x18e8] sm:$0xff]
  %v5467 = vld [vmem:[%s0 + $0x18f0] sm:$0xff]
  %v5468 = vld [vmem:[%s0 + $0x18f8] sm:$0xff]
  %v5469 = vld [vmem:[%s0 + $0x1900] sm:$0xff]
  %v5470 = vld [vmem:[%s0 + $0x1908] sm:$0xff]
  %v5471 = vld [vmem:[%s0 + $0x1910] sm:$0xff]
  %v5472 = vld [vmem:[%s0 + $0x1918] sm:$0xff]
  %v5473 = vld [vmem:[%s0 + $0x1920] sm:$0xff]
  %v5474 = vld [vmem:[%s0 + $0x1928] sm:$0xff]
  %v5475 = vld [vmem:[%s0 + $0x1930] sm:$0xff]
  %v5476 = vld [vmem:[%s0 + $0x1938] sm:$0xff]
  %v5477 = vld [vmem:[%s0 + $0x1940] sm:$0xff]
  %v5478 = vld [vmem:[%s0 + $0x1948] sm:$0xff]
  %v5479 = vld [vmem:[%s0 + $0x1950] sm:$0xff]
  %v5480 = vld [vmem:[%s0 + $0x1958] sm:$0xff]
  %v5481 = vld [vmem:[%s0 + $0x1960] sm:$0xff]
  %v5482 = vld [vmem:[%s0 + $0x1968] sm:$0xff]
  %v5483 = vld [vmem:[%s0 + $0x1970] sm:$0xff]
  %v5484 = vld [vmem:[%s0 + $0x1978] sm:$0xff]
  %v5485 = vld [vmem:[%s0 + $0x1980] sm:$0xff]
  %v5486 = vld [vmem:[%s0 + $0x1988] sm:$0xff]
  %v5487 = vld [vmem:[%s0 + $0x1990] sm:$0xff]
  %v5488 = vld [vmem:[%s0 + $0x1998] sm:$0xff]
  %v5489 = vld [vmem:[%s0 + $0x19a0] sm:$0xff]
  %v5490 = vld [vmem:[%s0 + $0x19a8] sm:$0xff]
  %v5491 = vld [vmem:[%s0 + $0x19b0] sm:$0xff]
  %v5492 = vld [vmem:[%s0 + $0x19b8] sm:$0xff]
  %v5493 = vld [vmem:[%s0 + $0x19c0] sm:$0xff]
  %v5494 = vld [vmem:[%s0 + $0x19c8] sm:$0xff]
  %v5495 = vld [vmem:[%s0 + $0x19d0] sm:$0xff]
  %v5496 = vld [vmem:[%s0 + $0x19d8] sm:$0xff]
  %v5497 = vld [vmem:[%s0 + $0x19e0] sm:$0xff]
  %v5498 = vld [vmem:[%s0 + $0x19e8] sm:$0xff]
  %v5499 = vld [vmem:[%s0 + $0x19f0] sm:$0xff]
  %v5500 = vld [vmem:[%s0 + $0x19f8] sm:$0xff]
  %v5501 = vld [vmem:[%s0 + $0x1a00] sm:$0xff]
  %v5502 = vld [vmem:[%s0 + $0x1a08] sm:$0xff]
  %v5503 = vld [vmem:[%s0 + $0x1a10] sm:$0xff]
  %v5504 = vld [vmem:[%s0 + $0x1a18] sm:$0xff]
  %v5505 = vld [vmem:[%s0 + $0x1a20] sm:$0xff]
  %v5506 = vld [vmem:[%s0 + $0x1a28] sm:$0xff]
  %v5507 = vld [vmem:[%s0 + $0x1a30] sm:$0xff]
  %v5508 = vld [vmem:[%s0 + $0x1a38] sm:$0xff]
  %v5509 = vld [vmem:[%s0 + $0x1a40] sm:$0xff]
  %v5510 = vld [vmem:[%s0 + $0x1a48] sm:$0xff]
  %v5511 = vld [vmem:[%s0 + $0x1a50] sm:$0xff]
  %v5512 = vld [vmem:[%s0 + $0x1a58] sm:$0xff]
  %v5513 = vld [vmem:[%s0 + $0x1a60] sm:$0xff]
  %v5514 = vld [vmem:[%s0 + $0x1a68] sm:$0xff]
  %v5515 = vld [vmem:[%s0 + $0x1a70] sm:$0xff]
  %v5516 = vld [vmem:[%s0 + $0x1a78] sm:$0xff]
  %v5517 = vld [vmem:[%s0 + $0x1a80] sm:$0xff]
  %v5518 = vld [vmem:[%s0 + $0x1a88] sm:$0xff]
  %v5519 = vld [vmem:[%s0 + $0x1a90] sm:$0xff]
  %v5520 = vld [vmem:[%s0 + $0x1a98] sm:$0xff]
  %v5521 = vld [vmem:[%s0 + $0x1aa0] sm:$0xff]
  %v5522 = vld [vmem:[%s0 + $0x1aa8] sm:$0xff]
  %v5523 = vld [vmem:[%s0 + $0x1ab0] sm:$0xff]
  %v5524 = vld [vmem:[%s0 + $0x1ab8] sm:$0xff]
  %v5525 = vld [vmem:[%s0 + $0x1ac0] sm:$0xff]
  %v5526 = vld [vmem:[%s0 + $0x1ac8] sm:$0xff]
  %v5527 = vld [vmem:[%s0 + $0x1ad0] sm:$0xff]
  %v5528 = vld [vmem:[%s0 + $0x1ad8] sm:$0xff]
  %v5529 = vld [vmem:[%s0 + $0x1ae0] sm:$0xff]
  %v5530 = vld [vmem:[%s0 + $0x1ae8] sm:$0xff]
  %v5531 = vld [vmem:[%s0 + $0x1af0] sm:$0xff]
  %v5532 = vld [vmem:[%s0 + $0x1af8] sm:$0xff]
  %v5533 = vld [vmem:[%s0 + $0x1b00] sm:$0xff]
  %v5534 = vld [vmem:[%s0 + $0x1b08] sm:$0xff]
  %v5535 = vld [vmem:[%s0 + $0x1b10] sm:$0xff]
  %v5536 = vld [vmem:[%s0 + $0x1b18] sm:$0xff]
  %v5537 = vld [vmem:[%s0 + $0x1b20] sm:$0xff]
  %v5538 = vld [vmem:[%s0 + $0x1b28] sm:$0xff]
  %v5539 = vld [vmem:[%s0 + $0x1b30] sm:$0xff]
  %v5540 = vld [vmem:[%s0 + $0x1b38] sm:$0xff]
  %v5541 = vld [vmem:[%s0 + $0x1b40] sm:$0xff]
  %v5542 = vld [vmem:[%s0 + $0x1b48] sm:$0xff]
  %v5543 = vld [vmem:[%s0 + $0x1b50] sm:$0xff]
  %v5544 = vld [vmem:[%s0 + $0x1b58] sm:$0xff]
  %v5545 = vld [vmem:[%s0 + $0x1b60] sm:$0xff]
  %v5546 = vld [vmem:[%s0 + $0x1b68] sm:$0xff]
  %v5547 = vld [vmem:[%s0 + $0x1b70] sm:$0xff]
  %v5548 = vld [vmem:[%s0 + $0x1b78] sm:$0xff]
  %v5549 = vld [vmem:[%s0 + $0x1b80] sm:$0xff]
  %v5550 = vld [vmem:[%s0 + $0x1b88] sm:$0xff]
  %v5551 = vld [vmem:[%s0 + $0x1b90] sm:$0xff]
  %v5552 = vld [vmem:[%s0 + $0x1b98] sm:$0xff]
  %v5553 = vld [vmem:[%s0 + $0x1ba0] sm:$0xff]
  %v5554 = vld [vmem:[%s0 + $0x1ba8] sm:$0xff]
  %v5555 = vld [vmem:[%s0 + $0x1bb0] sm:$0xff]
  %v5556 = vld [vmem:[%s0 + $0x1bb8] sm:$0xff]
  %v5557 = vld [vmem:[%s0 + $0x1bc0] sm:$0xff]
  %v5558 = vld [vmem:[%s0 + $0x1bc8] sm:$0xff]
  %v5559 = vld [vmem:[%s0 + $0x1bd0] sm:$0xff]
  %v5560 = vld [vmem:[%s0 + $0x1bd8] sm:$0xff]
  %v5561 = vld [vmem:[%s0 + $0x1be0] sm:$0xff]
  %v5562 = vld [vmem:[%s0 + $0x1be8] sm:$0xff]
  %v5563 = vld [vmem:[%s0 + $0x1bf0] sm:$0xff]
  %v5564 = vld [vmem:[%s0 + $0x1bf8] sm:$0xff]
  %v5565 = vld [vmem:[%s0 + $0x1c00] sm:$0xff]
  %v5566 = vld [vmem:[%s0 + $0x1c08] sm:$0xff]
  %v5567 = vld [vmem:[%s0 + $0x1c10] sm:$0xff]
  %v5568 = vld [vmem:[%s0 + $0x1c18] sm:$0xff]
  %v5569 = vld [vmem:[%s0 + $0x1c20] sm:$0xff]
  %v5570 = vld [vmem:[%s0 + $0x1c28] sm:$0xff]
  %v5571 = vld [vmem:[%s0 + $0x1c30] sm:$0xff]
  %v5572 = vld [vmem:[%s0 + $0x1c38] sm:$0xff]
  %v5573 = vld [vmem:[%s0 + $0x1c40] sm:$0xff]
  %v5574 = vld [vmem:[%s0 + $0x1c48] sm:$0xff]
  %v5575 = vld [vmem:[%s0 + $0x1c50] sm:$0xff]
  %v5576 = vld [vmem:[%s0 + $0x1c58] sm:$0xff]
  %v5577 = vld [vmem:[%s0 + $0x1c60] sm:$0xff]
  %v5578 = vld [vmem:[%s0 + $0x1c68] sm:$0xff]
  %v5579 = vld [vmem:[%s0 + $0x1c70] sm:$0xff]
  %v5580 = vld [vmem:[%s0 + $0x1c78] sm:$0xff]
  %v5581 = vld [vmem:[%s0 + $0x1c80] sm:$0xff]
  %v5582 = vld [vmem:[%s0 + $0x1c88] sm:$0xff]
  %v5583 = vld [vmem:[%s0 + $0x1c90] sm:$0xff]
  %v5584 = vld [vmem:[%s0 + $0x1c98] sm:$0xff]
  %v5585 = vld [vmem:[%s0 + $0x1ca0] sm:$0xff]
  %v5586 = vld [vmem:[%s0 + $0x1ca8] sm:$0xff]
  %v5587 = vld [vmem:[%s0 + $0x1cb0] sm:$0xff]
  %v5588 = vld [vmem:[%s0 + $0x1cb8] sm:$0xff]
  %v5589 = vld [vmem:[%s0 + $0x1cc0] sm:$0xff]
  %v5590 = vld [vmem:[%s0 + $0x1cc8] sm:$0xff]
  %v5591 = vld [vmem:[%s0 + $0x1cd0] sm:$0xff]
  %v5592 = vld [vmem:[%s0 + $0x1cd8] sm:$0xff]
  %v5593 = vld [vmem:[%s0 + $0x1ce0] sm:$0xff]
  %v5594 = vld [vmem:[%s0 + $0x1ce8] sm:$0xff]
  %v5595 = vld [vmem:[%s0 + $0x1cf0] sm:$0xff]
  %v5596 = vld [vmem:[%s0 + $0x1cf8] sm:$0xff]
  %v5597 = vld [vmem:[%s0 + $0x1d00] sm:$0xff]
  %v5598 = vld [vmem:[%s0 + $0x1d08] sm:$0xff]
  %v5599 = vld [vmem:[%s0 + $0x1d10] sm:$0xff]
  %v5600 = vld [vmem:[%s0 + $0x1d18] sm:$0xff]
  %v5601 = vld [vmem:[%s0 + $0x1d20] sm:$0xff]
  %v5602 = vld [vmem:[%s0 + $0x1d28] sm:$0xff]
  %v5603 = vld [vmem:[%s0 + $0x1d30] sm:$0xff]
  %v5604 = vld [vmem:[%s0 + $0x1d38] sm:$0xff]
  %v5605 = vld [vmem:[%s0 + $0x1d40] sm:$0xff]
  %v5606 = vld [vmem:[%s0 + $0x1d48] sm:$0xff]
  %v5607 = vld [vmem:[%s0 + $0x1d50] sm:$0xff]
  %v5608 = vld [vmem:[%s0 + $0x1d58] sm:$0xff]
  %v5609 = vld [vmem:[%s0 + $0x1d60] sm:$0xff]
  %v5610 = vld [vmem:[%s0 + $0x1d68] sm:$0xff]
  %v5611 = vld [vmem:[%s0 + $0x1d70] sm:$0xff]
  %v5612 = vld [vmem:[%s0 + $0x1d78] sm:$0xff]
  %v5613 = vld [vmem:[%s0 + $0x1d80] sm:$0xff]
  %v5614 = vld [vmem:[%s0 + $0x1d88] sm:$0xff]
  %v5615 = vld [vmem:[%s0 + $0x1d90] sm:$0xff]
  %v5616 = vld [vmem:[%s0 + $0x1d98] sm:$0xff]
  %v5617 = vld [vmem:[%s0 + $0x1da0] sm:$0xff]
  %v5618 = vld [vmem:[%s0 + $0x1da8] sm:$0xff]
  %v5619 = vld [vmem:[%s0 + $0x1db0] sm:$0xff]
  %v5620 = vld [vmem:[%s0 + $0x1db8] sm:$0xff]
  %v5621 = vld [vmem:[%s0 + $0x1dc0] sm:$0xff]
  %v5622 = vld [vmem:[%s0 + $0x1dc8] sm:$0xff]
  %v5623 = vld [vmem:[%s0 + $0x1dd0] sm:$0xff]
  %v5624 = vld [vmem:[%s0 + $0x1dd8] sm:$0xff]
  %v5625 = vld [vmem:[%s0 + $0x1de0] sm:$0xff]
  %v5626 = vld [vmem:[%s0 + $0x1de8] sm:$0xff]
  %v5627 = vld [vmem:[%s0 + $0x1df0] sm:$0xff]
  %v5628 = vld [vmem:[%s0 + $0x1df8] sm:$0xff]
  %v5629 = vld [vmem:[%s0 + $0x1e00] sm:$0xff]
  %v5630 = vld [vmem:[%s0 + $0x1e08] sm:$0xff]
  %v5631 = vld [vmem:[%s0 + $0x1e10] sm:$0xff]
  %v5632 = vld [vmem:[%s0 + $0x1e18] sm:$0xff]
  %v5633 = vld [vmem:[%s0 + $0x1e20] sm:$0xff]
  %v5634 = vld [vmem:[%s0 + $0x1e28] sm:$0xff]
  %v5635 = vld [vmem:[%s0 + $0x1e30] sm:$0xff]
  %v5636 = vld [vmem:[%s0 + $0x1e38] sm:$0xff]
  %v5637 = vld [vmem:[%s0 + $0x1e40] sm:$0xff]
  %v5638 = vld [vmem:[%s0 + $0x1e48] sm:$0xff]
  %v5639 = vld [vmem:[%s0 + $0x1e50] sm:$0xff]
  %v5640 = vld [vmem:[%s0 + $0x1e58] sm:$0xff]
  %v5641 = vld [vmem:[%s0 + $0x1e60] sm:$0xff]
  %v5642 = vld [vmem:[%s0 + $0x1e68] sm:$0xff]
  %v5643 = vld [vmem:[%s0 + $0x1e70] sm:$0xff]
  %v5644 = vld [vmem:[%s0 + $0x1e78] sm:$0xff]
  %v5645 = vld [vmem:[%s0 + $0x1e80] sm:$0xff]
  %v5646 = vld [vmem:[%s0 + $0x1e88] sm:$0xff]
  %v5647 = vld [vmem:[%s0 + $0x1e90] sm:$0xff]
  %v5648 = vld [vmem:[%s0 + $0x1e98] sm:$0xff]
  %v5649 = vld [vmem:[%s0 + $0x1ea0] sm:$0xff]
  %v5650 = vld [vmem:[%s0 + $0x1ea8] sm:$0xff]
  %v5651 = vld [vmem:[%s0 + $0x1eb0] sm:$0xff]
  %v5652 = vld [vmem:[%s0 + $0x1eb8] sm:$0xff]
  %v5653 = vld [vmem:[%s0 + $0x1ec0] sm:$0xff]
  %v5654 = vld [vmem:[%s0 + $0x1ec8] sm:$0xff]
  %v5655 = vld [vmem:[%s0 + $0x1ed0] sm:$0xff]
  %v5656 = vld [vmem:[%s0 + $0x1ed8] sm:$0xff]
  %v5657 = vld [vmem:[%s0 + $0x1ee0] sm:$0xff]
  %v5658 = vld [vmem:[%s0 + $0x1ee8] sm:$0xff]
  %v5659 = vld [vmem:[%s0 + $0x1ef0] sm:$0xff]
  %v5660 = vld [vmem:[%s0 + $0x1ef8] sm:$0xff]
  %v5661 = vld [vmem:[%s0 + $0x1f00] sm:$0xff]
  %v5662 = vld [vmem:[%s0 + $0x1f08] sm:$0xff]
  %v5663 = vld [vmem:[%s0 + $0x1f10] sm:$0xff]
  %v5664 = vld [vmem:[%s0 + $0x1f18] sm:$0xff]
  %v5665 = vld [vmem:[%s0 + $0x1f20] sm:$0xff]
  %v5666 = vld [vmem:[%s0 + $0x1f28] sm:$0xff]
  %v5667 = vld [vmem:[%s0 + $0x1f30] sm:$0xff]
  %v5668 = vld [vmem:[%s0 + $0x1f38] sm:$0xff]
  %v5669 = vld [vmem:[%s0 + $0x1f40] sm:$0xff]
  %v5670 = vld [vmem:[%s0 + $0x1f48] sm:$0xff]
  %v5671 = vld [vmem:[%s0 + $0x1f50] sm:$0xff]
  %v5672 = vld [vmem:[%s0 + $0x1f58] sm:$0xff]
  %v5673 = vld [vmem:[%s0 + $0x1f60] sm:$0xff]
  %v5674 = vld [vmem:[%s0 + $0x1f68] sm:$0xff]
  %v5675 = vld [vmem:[%s0 + $0x1f70] sm:$0xff]
  %v5676 = vld [vmem:[%s0 + $0x1f78] sm:$0xff]
  %v5677 = vld [vmem:[%s0 + $0x1f80] sm:$0xff]
  %v5678 = vld [vmem:[%s0 + $0x1f88] sm:$0xff]
  %v5679 = vld [vmem:[%s0 + $0x1f90] sm:$0xff]
  %v5680 = vld [vmem:[%s0 + $0x1f98] sm:$0xff]
  %v5681 = vld [vmem:[%s0 + $0x1fa0] sm:$0xff]
  %v5682 = vld [vmem:[%s0 + $0x1fa8] sm:$0xff]
  %v5683 = vld [vmem:[%s0 + $0x1fb0] sm:$0xff]
  %v5684 = vld [vmem:[%s0 + $0x1fb8] sm:$0xff]
  %v5685 = vld [vmem:[%s0 + $0x1fc0] sm:$0xff]
  %v5686 = vld [vmem:[%s0 + $0x1fc8] sm:$0xff]
  %v5687 = vld [vmem:[%s0 + $0x1fd0] sm:$0xff]
  %v5688 = vld [vmem:[%s0 + $0x1fd8] sm:$0xff]
  %v5689 = vld [vmem:[%s0 + $0x1fe0] sm:$0xff]
  %v5690 = vld [vmem:[%s0 + $0x1fe8] sm:$0xff]
  %v5691 = vld [vmem:[%s0 + $0x1ff0] sm:$0xff]
  %v5692 = vld [vmem:[%s0 + $0x1ff8] sm:$0xff]
  %v5693 = vsel %vm542, %v5181, 0.0
  %v5694 = vsel %vm542, %v5182, 0.0
  %v5695 = vadd.f32 %v5693, %v5694
  %v5696 = vsel %vm542, %v5183, 0.0
  %v5697 = vadd.f32 %v5695, %v5696
  %v5698 = vsel %vm542, %v5184, 0.0
  %v5699 = vadd.f32 %v5697, %v5698
  %v5700 = vsel %vm542, %v5185, 0.0
  %v5701 = vadd.f32 %v5699, %v5700
  %v5702 = vsel %vm542, %v5186, 0.0
  %v5703 = vadd.f32 %v5701, %v5702
  %v5704 = vsel %vm542, %v5187, 0.0
  %v5705 = vadd.f32 %v5703, %v5704
  %v5706 = vsel %vm542, %v5188, 0.0
  %v5707 = vadd.f32 %v5705, %v5706
  %v5708 = vsel %vm542, %v5189, 0.0
  %v5709 = vadd.f32 %v5707, %v5708
  %v5710 = vsel %vm542, %v5190, 0.0
  %v5711 = vadd.f32 %v5709, %v5710
  %v5712 = vsel %vm542, %v5191, 0.0
  %v5713 = vadd.f32 %v5711, %v5712
  %v5714 = vsel %vm542, %v5192, 0.0
  %v5715 = vadd.f32 %v5713, %v5714
  %v5716 = vsel %vm542, %v5193, 0.0
  %v5717 = vadd.f32 %v5715, %v5716
  %v5718 = vsel %vm542, %v5194, 0.0
  %v5719 = vadd.f32 %v5717, %v5718
  %v5720 = vsel %vm542, %v5195, 0.0
  %v5721 = vadd.f32 %v5719, %v5720
  %v5722 = vsel %vm542, %v5196, 0.0
  %v5723 = vadd.f32 %v5721, %v5722
  %v5724 = vsel %vm542, %v5197, 0.0
  %v5725 = vadd.f32 %v5723, %v5724
  %v5726 = vsel %vm542, %v5198, 0.0
  %v5727 = vadd.f32 %v5725, %v5726
  %v5728 = vsel %vm542, %v5199, 0.0
  %v5729 = vadd.f32 %v5727, %v5728
  %v5730 = vsel %vm542, %v5200, 0.0
  %v5731 = vadd.f32 %v5729, %v5730
  %v5732 = vsel %vm542, %v5201, 0.0
  %v5733 = vadd.f32 %v5731, %v5732
  %v5734 = vsel %vm542, %v5202, 0.0
  %v5735 = vadd.f32 %v5733, %v5734
  %v5736 = vsel %vm542, %v5203, 0.0
  %v5737 = vadd.f32 %v5735, %v5736
  %v5738 = vsel %vm542, %v5204, 0.0
  %v5739 = vadd.f32 %v5737, %v5738
  %v5740 = vsel %vm542, %v5205, 0.0
  %v5741 = vadd.f32 %v5739, %v5740
  %v5742 = vsel %vm542, %v5206, 0.0
  %v5743 = vadd.f32 %v5741, %v5742
  %v5744 = vsel %vm542, %v5207, 0.0
  %v5745 = vadd.f32 %v5743, %v5744
  %v5746 = vsel %vm542, %v5208, 0.0
  %v5747 = vadd.f32 %v5745, %v5746
  %v5748 = vsel %vm542, %v5209, 0.0
  %v5749 = vadd.f32 %v5747, %v5748
  %v5750 = vsel %vm542, %v5210, 0.0
  %v5751 = vadd.f32 %v5749, %v5750
  %v5752 = vsel %vm542, %v5211, 0.0
  %v5753 = vadd.f32 %v5751, %v5752
  %v5754 = vsel %vm542, %v5212, 0.0
  %v5755 = vadd.f32 %v5753, %v5754
  %v5756 = vsel %vm542, %v5213, 0.0
  %v5757 = vadd.f32 %v5755, %v5756
  %v5758 = vsel %vm542, %v5214, 0.0
  %v5759 = vadd.f32 %v5757, %v5758
  %v5760 = vsel %vm542, %v5215, 0.0
  %v5761 = vadd.f32 %v5759, %v5760
  %v5762 = vsel %vm542, %v5216, 0.0
  %v5763 = vadd.f32 %v5761, %v5762
  %v5764 = vsel %vm542, %v5217, 0.0
  %v5765 = vadd.f32 %v5763, %v5764
  %v5766 = vsel %vm542, %v5218, 0.0
  %v5767 = vadd.f32 %v5765, %v5766
  %v5768 = vsel %vm542, %v5219, 0.0
  %v5769 = vadd.f32 %v5767, %v5768
  %v5770 = vsel %vm542, %v5220, 0.0
  %v5771 = vadd.f32 %v5769, %v5770
  %v5772 = vsel %vm542, %v5221, 0.0
  %v5773 = vadd.f32 %v5771, %v5772
  %v5774 = vsel %vm542, %v5222, 0.0
  %v5775 = vadd.f32 %v5773, %v5774
  %v5776 = vsel %vm542, %v5223, 0.0
  %v5777 = vadd.f32 %v5775, %v5776
  %v5778 = vsel %vm542, %v5224, 0.0
  %v5779 = vadd.f32 %v5777, %v5778
  %v5780 = vsel %vm542, %v5225, 0.0
  %v5781 = vadd.f32 %v5779, %v5780
  %v5782 = vsel %vm542, %v5226, 0.0
  %v5783 = vadd.f32 %v5781, %v5782
  %v5784 = vsel %vm542, %v5227, 0.0
  %v5785 = vadd.f32 %v5783, %v5784
  %v5786 = vsel %vm542, %v5228, 0.0
  %v5787 = vadd.f32 %v5785, %v5786
  %v5788 = vsel %vm542, %v5229, 0.0
  %v5789 = vadd.f32 %v5787, %v5788
  %v5790 = vsel %vm542, %v5230, 0.0
  %v5791 = vadd.f32 %v5789, %v5790
  %v5792 = vsel %vm542, %v5231, 0.0
  %v5793 = vadd.f32 %v5791, %v5792
  %v5794 = vsel %vm542, %v5232, 0.0
  %v5795 = vadd.f32 %v5793, %v5794
  %v5796 = vsel %vm542, %v5233, 0.0
  %v5797 = vadd.f32 %v5795, %v5796
  %v5798 = vsel %vm542, %v5234, 0.0
  %v5799 = vadd.f32 %v5797, %v5798
  %v5800 = vsel %vm542, %v5235, 0.0
  %v5801 = vadd.f32 %v5799, %v5800
  %v5802 = vsel %vm542, %v5236, 0.0
  %v5803 = vadd.f32 %v5801, %v5802
  %v5804 = vsel %vm542, %v5237, 0.0
  %v5805 = vadd.f32 %v5803, %v5804
  %v5806 = vsel %vm542, %v5238, 0.0
  %v5807 = vadd.f32 %v5805, %v5806
  %v5808 = vsel %vm542, %v5239, 0.0
  %v5809 = vadd.f32 %v5807, %v5808
  %v5810 = vsel %vm542, %v5240, 0.0
  %v5811 = vadd.f32 %v5809, %v5810
  %v5812 = vsel %vm542, %v5241, 0.0
  %v5813 = vadd.f32 %v5811, %v5812
  %v5814 = vsel %vm542, %v5242, 0.0
  %v5815 = vadd.f32 %v5813, %v5814
  %v5816 = vsel %vm542, %v5243, 0.0
  %v5817 = vadd.f32 %v5815, %v5816
  %v5818 = vsel %vm542, %v5244, 0.0
  %v5819 = vadd.f32 %v5817, %v5818
  %v5820 = vsel %vm542, %v5245, 0.0
  %v5821 = vadd.f32 %v5819, %v5820
  %v5822 = vsel %vm542, %v5246, 0.0
  %v5823 = vadd.f32 %v5821, %v5822
  %v5824 = vsel %vm542, %v5247, 0.0
  %v5825 = vadd.f32 %v5823, %v5824
  %v5826 = vsel %vm542, %v5248, 0.0
  %v5827 = vadd.f32 %v5825, %v5826
  %v5828 = vsel %vm542, %v5249, 0.0
  %v5829 = vadd.f32 %v5827, %v5828
  %v5830 = vsel %vm542, %v5250, 0.0
  %v5831 = vadd.f32 %v5829, %v5830
  %v5832 = vsel %vm542, %v5251, 0.0
  %v5833 = vadd.f32 %v5831, %v5832
  %v5834 = vsel %vm542, %v5252, 0.0
  %v5835 = vadd.f32 %v5833, %v5834
  %v5836 = vsel %vm542, %v5253, 0.0
  %v5837 = vadd.f32 %v5835, %v5836
  %v5838 = vsel %vm542, %v5254, 0.0
  %v5839 = vadd.f32 %v5837, %v5838
  %v5840 = vsel %vm542, %v5255, 0.0
  %v5841 = vadd.f32 %v5839, %v5840
  %v5842 = vsel %vm542, %v5256, 0.0
  %v5843 = vadd.f32 %v5841, %v5842
  %v5844 = vsel %vm542, %v5257, 0.0
  %v5845 = vadd.f32 %v5843, %v5844
  %v5846 = vsel %vm542, %v5258, 0.0
  %v5847 = vadd.f32 %v5845, %v5846
  %v5848 = vsel %vm542, %v5259, 0.0
  %v5849 = vadd.f32 %v5847, %v5848
  %v5850 = vsel %vm542, %v5260, 0.0
  %v5851 = vadd.f32 %v5849, %v5850
  %v5852 = vsel %vm542, %v5261, 0.0
  %v5853 = vadd.f32 %v5851, %v5852
  %v5854 = vsel %vm542, %v5262, 0.0
  %v5855 = vadd.f32 %v5853, %v5854
  %v5856 = vsel %vm542, %v5263, 0.0
  %v5857 = vadd.f32 %v5855, %v5856
  %v5858 = vsel %vm542, %v5264, 0.0
  %v5859 = vadd.f32 %v5857, %v5858
  %v5860 = vsel %vm542, %v5265, 0.0
  %v5861 = vadd.f32 %v5859, %v5860
  %v5862 = vsel %vm542, %v5266, 0.0
  %v5863 = vadd.f32 %v5861, %v5862
  %v5864 = vsel %vm542, %v5267, 0.0
  %v5865 = vadd.f32 %v5863, %v5864
  %v5866 = vsel %vm542, %v5268, 0.0
  %v5867 = vadd.f32 %v5865, %v5866
  %v5868 = vsel %vm542, %v5269, 0.0
  %v5869 = vadd.f32 %v5867, %v5868
  %v5870 = vsel %vm542, %v5270, 0.0
  %v5871 = vadd.f32 %v5869, %v5870
  %v5872 = vsel %vm542, %v5271, 0.0
  %v5873 = vadd.f32 %v5871, %v5872
  %v5874 = vsel %vm542, %v5272, 0.0
  %v5875 = vadd.f32 %v5873, %v5874
  %v5876 = vsel %vm542, %v5273, 0.0
  %v5877 = vadd.f32 %v5875, %v5876
  %v5878 = vsel %vm542, %v5274, 0.0
  %v5879 = vadd.f32 %v5877, %v5878
  %v5880 = vsel %vm542, %v5275, 0.0
  %v5881 = vadd.f32 %v5879, %v5880
  %v5882 = vsel %vm542, %v5276, 0.0
  %v5883 = vadd.f32 %v5881, %v5882
  %v5884 = vsel %vm542, %v5277, 0.0
  %v5885 = vadd.f32 %v5883, %v5884
  %v5886 = vsel %vm542, %v5278, 0.0
  %v5887 = vadd.f32 %v5885, %v5886
  %v5888 = vsel %vm542, %v5279, 0.0
  %v5889 = vadd.f32 %v5887, %v5888
  %v5890 = vsel %vm542, %v5280, 0.0
  %v5891 = vadd.f32 %v5889, %v5890
  %v5892 = vsel %vm542, %v5281, 0.0
  %v5893 = vadd.f32 %v5891, %v5892
  %v5894 = vsel %vm542, %v5282, 0.0
  %v5895 = vadd.f32 %v5893, %v5894
  %v5896 = vsel %vm542, %v5283, 0.0
  %v5897 = vadd.f32 %v5895, %v5896
  %v5898 = vsel %vm542, %v5284, 0.0
  %v5899 = vadd.f32 %v5897, %v5898
  %v5900 = vsel %vm542, %v5285, 0.0
  %v5901 = vadd.f32 %v5899, %v5900
  %v5902 = vsel %vm542, %v5286, 0.0
  %v5903 = vadd.f32 %v5901, %v5902
  %v5904 = vsel %vm542, %v5287, 0.0
  %v5905 = vadd.f32 %v5903, %v5904
  %v5906 = vsel %vm542, %v5288, 0.0
  %v5907 = vadd.f32 %v5905, %v5906
  %v5908 = vsel %vm542, %v5289, 0.0
  %v5909 = vadd.f32 %v5907, %v5908
  %v5910 = vsel %vm542, %v5290, 0.0
  %v5911 = vadd.f32 %v5909, %v5910
  %v5912 = vsel %vm542, %v5291, 0.0
  %v5913 = vadd.f32 %v5911, %v5912
  %v5914 = vsel %vm542, %v5292, 0.0
  %v5915 = vadd.f32 %v5913, %v5914
  %v5916 = vsel %vm542, %v5293, 0.0
  %v5917 = vadd.f32 %v5915, %v5916
  %v5918 = vsel %vm542, %v5294, 0.0
  %v5919 = vadd.f32 %v5917, %v5918
  %v5920 = vsel %vm542, %v5295, 0.0
  %v5921 = vadd.f32 %v5919, %v5920
  %v5922 = vsel %vm542, %v5296, 0.0
  %v5923 = vadd.f32 %v5921, %v5922
  %v5924 = vsel %vm542, %v5297, 0.0
  %v5925 = vadd.f32 %v5923, %v5924
  %v5926 = vsel %vm542, %v5298, 0.0
  %v5927 = vadd.f32 %v5925, %v5926
  %v5928 = vsel %vm542, %v5299, 0.0
  %v5929 = vadd.f32 %v5927, %v5928
  %v5930 = vsel %vm542, %v5300, 0.0
  %v5931 = vadd.f32 %v5929, %v5930
  %v5932 = vsel %vm542, %v5301, 0.0
  %v5933 = vadd.f32 %v5931, %v5932
  %v5934 = vsel %vm542, %v5302, 0.0
  %v5935 = vadd.f32 %v5933, %v5934
  %v5936 = vsel %vm542, %v5303, 0.0
  %v5937 = vadd.f32 %v5935, %v5936
  %v5938 = vsel %vm542, %v5304, 0.0
  %v5939 = vadd.f32 %v5937, %v5938
  %v5940 = vsel %vm542, %v5305, 0.0
  %v5941 = vadd.f32 %v5939, %v5940
  %v5942 = vsel %vm542, %v5306, 0.0
  %v5943 = vadd.f32 %v5941, %v5942
  %v5944 = vsel %vm542, %v5307, 0.0
  %v5945 = vadd.f32 %v5943, %v5944
  %v5946 = vsel %vm542, %v5308, 0.0
  %v5947 = vadd.f32 %v5945, %v5946
  %v5948 = vsel %vm542, %v5309, 0.0
  %v5949 = vadd.f32 %v5947, %v5948
  %v5950 = vsel %vm542, %v5310, 0.0
  %v5951 = vadd.f32 %v5949, %v5950
  %v5952 = vsel %vm542, %v5311, 0.0
  %v5953 = vadd.f32 %v5951, %v5952
  %v5954 = vsel %vm542, %v5312, 0.0
  %v5955 = vadd.f32 %v5953, %v5954
  %v5956 = vsel %vm542, %v5313, 0.0
  %v5957 = vadd.f32 %v5955, %v5956
  %v5958 = vsel %vm542, %v5314, 0.0
  %v5959 = vadd.f32 %v5957, %v5958
  %v5960 = vsel %vm542, %v5315, 0.0
  %v5961 = vadd.f32 %v5959, %v5960
  %v5962 = vsel %vm542, %v5316, 0.0
  %v5963 = vadd.f32 %v5961, %v5962
  %v5964 = vsel %vm542, %v5317, 0.0
  %v5965 = vadd.f32 %v5963, %v5964
  %v5966 = vsel %vm542, %v5318, 0.0
  %v5967 = vadd.f32 %v5965, %v5966
  %v5968 = vsel %vm542, %v5319, 0.0
  %v5969 = vadd.f32 %v5967, %v5968
  %v5970 = vsel %vm542, %v5320, 0.0
  %v5971 = vadd.f32 %v5969, %v5970
  %v5972 = vsel %vm542, %v5321, 0.0
  %v5973 = vadd.f32 %v5971, %v5972
  %v5974 = vsel %vm542, %v5322, 0.0
  %v5975 = vadd.f32 %v5973, %v5974
  %v5976 = vsel %vm542, %v5323, 0.0
  %v5977 = vadd.f32 %v5975, %v5976
  %v5978 = vsel %vm542, %v5324, 0.0
  %v5979 = vadd.f32 %v5977, %v5978
  %v5980 = vsel %vm542, %v5325, 0.0
  %v5981 = vadd.f32 %v5979, %v5980
  %v5982 = vsel %vm542, %v5326, 0.0
  %v5983 = vadd.f32 %v5981, %v5982
  %v5984 = vsel %vm542, %v5327, 0.0
  %v5985 = vadd.f32 %v5983, %v5984
  %v5986 = vsel %vm542, %v5328, 0.0
  %v5987 = vadd.f32 %v5985, %v5986
  %v5988 = vsel %vm542, %v5329, 0.0
  %v5989 = vadd.f32 %v5987, %v5988
  %v5990 = vsel %vm542, %v5330, 0.0
  %v5991 = vadd.f32 %v5989, %v5990
  %v5992 = vsel %vm542, %v5331, 0.0
  %v5993 = vadd.f32 %v5991, %v5992
  %v5994 = vsel %vm542, %v5332, 0.0
  %v5995 = vadd.f32 %v5993, %v5994
  %v5996 = vsel %vm542, %v5333, 0.0
  %v5997 = vadd.f32 %v5995, %v5996
  %v5998 = vsel %vm542, %v5334, 0.0
  %v5999 = vadd.f32 %v5997, %v5998
  %v6000 = vsel %vm542, %v5335, 0.0
  %v6001 = vadd.f32 %v5999, %v6000
  %v6002 = vsel %vm542, %v5336, 0.0
  %v6003 = vadd.f32 %v6001, %v6002
  %v6004 = vsel %vm542, %v5337, 0.0
  %v6005 = vadd.f32 %v6003, %v6004
  %v6006 = vsel %vm542, %v5338, 0.0
  %v6007 = vadd.f32 %v6005, %v6006
  %v6008 = vsel %vm542, %v5339, 0.0
  %v6009 = vadd.f32 %v6007, %v6008
  %v6010 = vsel %vm542, %v5340, 0.0
  %v6011 = vadd.f32 %v6009, %v6010
  %v6012 = vsel %vm542, %v5341, 0.0
  %v6013 = vadd.f32 %v6011, %v6012
  %v6014 = vsel %vm542, %v5342, 0.0
  %v6015 = vadd.f32 %v6013, %v6014
  %v6016 = vsel %vm542, %v5343, 0.0
  %v6017 = vadd.f32 %v6015, %v6016
  %v6018 = vsel %vm542, %v5344, 0.0
  %v6019 = vadd.f32 %v6017, %v6018
  %v6020 = vsel %vm542, %v5345, 0.0
  %v6021 = vadd.f32 %v6019, %v6020
  %v6022 = vsel %vm542, %v5346, 0.0
  %v6023 = vadd.f32 %v6021, %v6022
  %v6024 = vsel %vm542, %v5347, 0.0
  %v6025 = vadd.f32 %v6023, %v6024
  %v6026 = vsel %vm542, %v5348, 0.0
  %v6027 = vadd.f32 %v6025, %v6026
  %v6028 = vsel %vm542, %v5349, 0.0
  %v6029 = vadd.f32 %v6027, %v6028
  %v6030 = vsel %vm542, %v5350, 0.0
  %v6031 = vadd.f32 %v6029, %v6030
  %v6032 = vsel %vm542, %v5351, 0.0
  %v6033 = vadd.f32 %v6031, %v6032
  %v6034 = vsel %vm542, %v5352, 0.0
  %v6035 = vadd.f32 %v6033, %v6034
  %v6036 = vsel %vm542, %v5353, 0.0
  %v6037 = vadd.f32 %v6035, %v6036
  %v6038 = vsel %vm542, %v5354, 0.0
  %v6039 = vadd.f32 %v6037, %v6038
  %v6040 = vsel %vm542, %v5355, 0.0
  %v6041 = vadd.f32 %v6039, %v6040
  %v6042 = vsel %vm542, %v5356, 0.0
  %v6043 = vadd.f32 %v6041, %v6042
  %v6044 = vsel %vm542, %v5357, 0.0
  %v6045 = vadd.f32 %v6043, %v6044
  %v6046 = vsel %vm542, %v5358, 0.0
  %v6047 = vadd.f32 %v6045, %v6046
  %v6048 = vsel %vm542, %v5359, 0.0
  %v6049 = vadd.f32 %v6047, %v6048
  %v6050 = vsel %vm542, %v5360, 0.0
  %v6051 = vadd.f32 %v6049, %v6050
  %v6052 = vsel %vm542, %v5361, 0.0
  %v6053 = vadd.f32 %v6051, %v6052
  %v6054 = vsel %vm542, %v5362, 0.0
  %v6055 = vadd.f32 %v6053, %v6054
  %v6056 = vsel %vm542, %v5363, 0.0
  %v6057 = vadd.f32 %v6055, %v6056
  %v6058 = vsel %vm542, %v5364, 0.0
  %v6059 = vadd.f32 %v6057, %v6058
  %v6060 = vsel %vm542, %v5365, 0.0
  %v6061 = vadd.f32 %v6059, %v6060
  %v6062 = vsel %vm542, %v5366, 0.0
  %v6063 = vadd.f32 %v6061, %v6062
  %v6064 = vsel %vm542, %v5367, 0.0
  %v6065 = vadd.f32 %v6063, %v6064
  %v6066 = vsel %vm542, %v5368, 0.0
  %v6067 = vadd.f32 %v6065, %v6066
  %v6068 = vsel %vm542, %v5369, 0.0
  %v6069 = vadd.f32 %v6067, %v6068
  %v6070 = vsel %vm542, %v5370, 0.0
  %v6071 = vadd.f32 %v6069, %v6070
  %v6072 = vsel %vm542, %v5371, 0.0
  %v6073 = vadd.f32 %v6071, %v6072
  %v6074 = vsel %vm542, %v5372, 0.0
  %v6075 = vadd.f32 %v6073, %v6074
  %v6076 = vsel %vm542, %v5373, 0.0
  %v6077 = vadd.f32 %v6075, %v6076
  %v6078 = vsel %vm542, %v5374, 0.0
  %v6079 = vadd.f32 %v6077, %v6078
  %v6080 = vsel %vm542, %v5375, 0.0
  %v6081 = vadd.f32 %v6079, %v6080
  %v6082 = vsel %vm542, %v5376, 0.0
  %v6083 = vadd.f32 %v6081, %v6082
  %v6084 = vsel %vm542, %v5377, 0.0
  %v6085 = vadd.f32 %v6083, %v6084
  %v6086 = vsel %vm542, %v5378, 0.0
  %v6087 = vadd.f32 %v6085, %v6086
  %v6088 = vsel %vm542, %v5379, 0.0
  %v6089 = vadd.f32 %v6087, %v6088
  %v6090 = vsel %vm542, %v5380, 0.0
  %v6091 = vadd.f32 %v6089, %v6090
  %v6092 = vsel %vm542, %v5381, 0.0
  %v6093 = vadd.f32 %v6091, %v6092
  %v6094 = vsel %vm542, %v5382, 0.0
  %v6095 = vadd.f32 %v6093, %v6094
  %v6096 = vsel %vm542, %v5383, 0.0
  %v6097 = vadd.f32 %v6095, %v6096
  %v6098 = vsel %vm542, %v5384, 0.0
  %v6099 = vadd.f32 %v6097, %v6098
  %v6100 = vsel %vm542, %v5385, 0.0
  %v6101 = vadd.f32 %v6099, %v6100
  %v6102 = vsel %vm542, %v5386, 0.0
  %v6103 = vadd.f32 %v6101, %v6102
  %v6104 = vsel %vm542, %v5387, 0.0
  %v6105 = vadd.f32 %v6103, %v6104
  %v6106 = vsel %vm542, %v5388, 0.0
  %v6107 = vadd.f32 %v6105, %v6106
  %v6108 = vsel %vm542, %v5389, 0.0
  %v6109 = vadd.f32 %v6107, %v6108
  %v6110 = vsel %vm542, %v5390, 0.0
  %v6111 = vadd.f32 %v6109, %v6110
  %v6112 = vsel %vm542, %v5391, 0.0
  %v6113 = vadd.f32 %v6111, %v6112
  %v6114 = vsel %vm542, %v5392, 0.0
  %v6115 = vadd.f32 %v6113, %v6114
  %v6116 = vsel %vm542, %v5393, 0.0
  %v6117 = vadd.f32 %v6115, %v6116
  %v6118 = vsel %vm542, %v5394, 0.0
  %v6119 = vadd.f32 %v6117, %v6118
  %v6120 = vsel %vm542, %v5395, 0.0
  %v6121 = vadd.f32 %v6119, %v6120
  %v6122 = vsel %vm542, %v5396, 0.0
  %v6123 = vadd.f32 %v6121, %v6122
  %v6124 = vsel %vm542, %v5397, 0.0
  %v6125 = vadd.f32 %v6123, %v6124
  %v6126 = vsel %vm542, %v5398, 0.0
  %v6127 = vadd.f32 %v6125, %v6126
  %v6128 = vsel %vm542, %v5399, 0.0
  %v6129 = vadd.f32 %v6127, %v6128
  %v6130 = vsel %vm542, %v5400, 0.0
  %v6131 = vadd.f32 %v6129, %v6130
  %v6132 = vsel %vm542, %v5401, 0.0
  %v6133 = vadd.f32 %v6131, %v6132
  %v6134 = vsel %vm542, %v5402, 0.0
  %v6135 = vadd.f32 %v6133, %v6134
  %v6136 = vsel %vm542, %v5403, 0.0
  %v6137 = vadd.f32 %v6135, %v6136
  %v6138 = vsel %vm542, %v5404, 0.0
  %v6139 = vadd.f32 %v6137, %v6138
  %v6140 = vsel %vm542, %v5405, 0.0
  %v6141 = vadd.f32 %v6139, %v6140
  %v6142 = vsel %vm542, %v5406, 0.0
  %v6143 = vadd.f32 %v6141, %v6142
  %v6144 = vsel %vm542, %v5407, 0.0
  %v6145 = vadd.f32 %v6143, %v6144
  %v6146 = vsel %vm542, %v5408, 0.0
  %v6147 = vadd.f32 %v6145, %v6146
  %v6148 = vsel %vm542, %v5409, 0.0
  %v6149 = vadd.f32 %v6147, %v6148
  %v6150 = vsel %vm542, %v5410, 0.0
  %v6151 = vadd.f32 %v6149, %v6150
  %v6152 = vsel %vm542, %v5411, 0.0
  %v6153 = vadd.f32 %v6151, %v6152
  %v6154 = vsel %vm542, %v5412, 0.0
  %v6155 = vadd.f32 %v6153, %v6154
  %v6156 = vsel %vm542, %v5413, 0.0
  %v6157 = vadd.f32 %v6155, %v6156
  %v6158 = vsel %vm542, %v5414, 0.0
  %v6159 = vadd.f32 %v6157, %v6158
  %v6160 = vsel %vm542, %v5415, 0.0
  %v6161 = vadd.f32 %v6159, %v6160
  %v6162 = vsel %vm542, %v5416, 0.0
  %v6163 = vadd.f32 %v6161, %v6162
  %v6164 = vsel %vm542, %v5417, 0.0
  %v6165 = vadd.f32 %v6163, %v6164
  %v6166 = vsel %vm542, %v5418, 0.0
  %v6167 = vadd.f32 %v6165, %v6166
  %v6168 = vsel %vm542, %v5419, 0.0
  %v6169 = vadd.f32 %v6167, %v6168
  %v6170 = vsel %vm542, %v5420, 0.0
  %v6171 = vadd.f32 %v6169, %v6170
  %v6172 = vsel %vm542, %v5421, 0.0
  %v6173 = vadd.f32 %v6171, %v6172
  %v6174 = vsel %vm542, %v5422, 0.0
  %v6175 = vadd.f32 %v6173, %v6174
  %v6176 = vsel %vm542, %v5423, 0.0
  %v6177 = vadd.f32 %v6175, %v6176
  %v6178 = vsel %vm542, %v5424, 0.0
  %v6179 = vadd.f32 %v6177, %v6178
  %v6180 = vsel %vm542, %v5425, 0.0
  %v6181 = vadd.f32 %v6179, %v6180
  %v6182 = vsel %vm542, %v5426, 0.0
  %v6183 = vadd.f32 %v6181, %v6182
  %v6184 = vsel %vm542, %v5427, 0.0
  %v6185 = vadd.f32 %v6183, %v6184
  %v6186 = vsel %vm542, %v5428, 0.0
  %v6187 = vadd.f32 %v6185, %v6186
  %v6188 = vsel %vm542, %v5429, 0.0
  %v6189 = vadd.f32 %v6187, %v6188
  %v6190 = vsel %vm542, %v5430, 0.0
  %v6191 = vadd.f32 %v6189, %v6190
  %v6192 = vsel %vm542, %v5431, 0.0
  %v6193 = vadd.f32 %v6191, %v6192
  %v6194 = vsel %vm542, %v5432, 0.0
  %v6195 = vadd.f32 %v6193, %v6194
  %v6196 = vsel %vm542, %v5433, 0.0
  %v6197 = vadd.f32 %v6195, %v6196
  %v6198 = vsel %vm542, %v5434, 0.0
  %v6199 = vadd.f32 %v6197, %v6198
  %v6200 = vsel %vm542, %v5435, 0.0
  %v6201 = vadd.f32 %v6199, %v6200
  %v6202 = vsel %vm542, %v5436, 0.0
  %v6203 = vadd.f32 %v6201, %v6202
  %v6204 = vsel %vm542, %v5437, 0.0
  %v6205 = vadd.f32 %v6203, %v6204
  %v6206 = vsel %vm542, %v5438, 0.0
  %v6207 = vadd.f32 %v6205, %v6206
  %v6208 = vsel %vm542, %v5439, 0.0
  %v6209 = vadd.f32 %v6207, %v6208
  %v6210 = vsel %vm542, %v5440, 0.0
  %v6211 = vadd.f32 %v6209, %v6210
  %v6212 = vsel %vm542, %v5441, 0.0
  %v6213 = vadd.f32 %v6211, %v6212
  %v6214 = vsel %vm542, %v5442, 0.0
  %v6215 = vadd.f32 %v6213, %v6214
  %v6216 = vsel %vm542, %v5443, 0.0
  %v6217 = vadd.f32 %v6215, %v6216
  %v6218 = vsel %vm542, %v5444, 0.0
  %v6219 = vadd.f32 %v6217, %v6218
  %v6220 = vsel %vm542, %v5445, 0.0
  %v6221 = vadd.f32 %v6219, %v6220
  %v6222 = vsel %vm542, %v5446, 0.0
  %v6223 = vadd.f32 %v6221, %v6222
  %v6224 = vsel %vm542, %v5447, 0.0
  %v6225 = vadd.f32 %v6223, %v6224
  %v6226 = vsel %vm542, %v5448, 0.0
  %v6227 = vadd.f32 %v6225, %v6226
  %v6228 = vsel %vm542, %v5449, 0.0
  %v6229 = vadd.f32 %v6227, %v6228
  %v6230 = vsel %vm542, %v5450, 0.0
  %v6231 = vadd.f32 %v6229, %v6230
  %v6232 = vsel %vm542, %v5451, 0.0
  %v6233 = vadd.f32 %v6231, %v6232
  %v6234 = vsel %vm542, %v5452, 0.0
  %v6235 = vadd.f32 %v6233, %v6234
  %v6236 = vsel %vm542, %v5453, 0.0
  %v6237 = vadd.f32 %v6235, %v6236
  %v6238 = vsel %vm542, %v5454, 0.0
  %v6239 = vadd.f32 %v6237, %v6238
  %v6240 = vsel %vm542, %v5455, 0.0
  %v6241 = vadd.f32 %v6239, %v6240
  %v6242 = vsel %vm542, %v5456, 0.0
  %v6243 = vadd.f32 %v6241, %v6242
  %v6244 = vsel %vm542, %v5457, 0.0
  %v6245 = vadd.f32 %v6243, %v6244
  %v6246 = vsel %vm542, %v5458, 0.0
  %v6247 = vadd.f32 %v6245, %v6246
  %v6248 = vsel %vm542, %v5459, 0.0
  %v6249 = vadd.f32 %v6247, %v6248
  %v6250 = vsel %vm542, %v5460, 0.0
  %v6251 = vadd.f32 %v6249, %v6250
  %v6252 = vsel %vm542, %v5461, 0.0
  %v6253 = vadd.f32 %v6251, %v6252
  %v6254 = vsel %vm542, %v5462, 0.0
  %v6255 = vadd.f32 %v6253, %v6254
  %v6256 = vsel %vm542, %v5463, 0.0
  %v6257 = vadd.f32 %v6255, %v6256
  %v6258 = vsel %vm542, %v5464, 0.0
  %v6259 = vadd.f32 %v6257, %v6258
  %v6260 = vsel %vm542, %v5465, 0.0
  %v6261 = vadd.f32 %v6259, %v6260
  %v6262 = vsel %vm542, %v5466, 0.0
  %v6263 = vadd.f32 %v6261, %v6262
  %v6264 = vsel %vm542, %v5467, 0.0
  %v6265 = vadd.f32 %v6263, %v6264
  %v6266 = vsel %vm542, %v5468, 0.0
  %v6267 = vadd.f32 %v6265, %v6266
  %v6268 = vsel %vm542, %v5469, 0.0
  %v6269 = vadd.f32 %v6267, %v6268
  %v6270 = vsel %vm542, %v5470, 0.0
  %v6271 = vadd.f32 %v6269, %v6270
  %v6272 = vsel %vm542, %v5471, 0.0
  %v6273 = vadd.f32 %v6271, %v6272
  %v6274 = vsel %vm542, %v5472, 0.0
  %v6275 = vadd.f32 %v6273, %v6274
  %v6276 = vsel %vm542, %v5473, 0.0
  %v6277 = vadd.f32 %v6275, %v6276
  %v6278 = vsel %vm542, %v5474, 0.0
  %v6279 = vadd.f32 %v6277, %v6278
  %v6280 = vsel %vm542, %v5475, 0.0
  %v6281 = vadd.f32 %v6279, %v6280
  %v6282 = vsel %vm542, %v5476, 0.0
  %v6283 = vadd.f32 %v6281, %v6282
  %v6284 = vsel %vm542, %v5477, 0.0
  %v6285 = vadd.f32 %v6283, %v6284
  %v6286 = vsel %vm542, %v5478, 0.0
  %v6287 = vadd.f32 %v6285, %v6286
  %v6288 = vsel %vm542, %v5479, 0.0
  %v6289 = vadd.f32 %v6287, %v6288
  %v6290 = vsel %vm542, %v5480, 0.0
  %v6291 = vadd.f32 %v6289, %v6290
  %v6292 = vsel %vm542, %v5481, 0.0
  %v6293 = vadd.f32 %v6291, %v6292
  %v6294 = vsel %vm542, %v5482, 0.0
  %v6295 = vadd.f32 %v6293, %v6294
  %v6296 = vsel %vm542, %v5483, 0.0
  %v6297 = vadd.f32 %v6295, %v6296
  %v6298 = vsel %vm542, %v5484, 0.0
  %v6299 = vadd.f32 %v6297, %v6298
  %v6300 = vsel %vm542, %v5485, 0.0
  %v6301 = vadd.f32 %v6299, %v6300
  %v6302 = vsel %vm542, %v5486, 0.0
  %v6303 = vadd.f32 %v6301, %v6302
  %v6304 = vsel %vm542, %v5487, 0.0
  %v6305 = vadd.f32 %v6303, %v6304
  %v6306 = vsel %vm542, %v5488, 0.0
  %v6307 = vadd.f32 %v6305, %v6306
  %v6308 = vsel %vm542, %v5489, 0.0
  %v6309 = vadd.f32 %v6307, %v6308
  %v6310 = vsel %vm542, %v5490, 0.0
  %v6311 = vadd.f32 %v6309, %v6310
  %v6312 = vsel %vm542, %v5491, 0.0
  %v6313 = vadd.f32 %v6311, %v6312
  %v6314 = vsel %vm542, %v5492, 0.0
  %v6315 = vadd.f32 %v6313, %v6314
  %v6316 = vsel %vm542, %v5493, 0.0
  %v6317 = vadd.f32 %v6315, %v6316
  %v6318 = vsel %vm542, %v5494, 0.0
  %v6319 = vadd.f32 %v6317, %v6318
  %v6320 = vsel %vm542, %v5495, 0.0
  %v6321 = vadd.f32 %v6319, %v6320
  %v6322 = vsel %vm542, %v5496, 0.0
  %v6323 = vadd.f32 %v6321, %v6322
  %v6324 = vsel %vm542, %v5497, 0.0
  %v6325 = vadd.f32 %v6323, %v6324
  %v6326 = vsel %vm542, %v5498, 0.0
  %v6327 = vadd.f32 %v6325, %v6326
  %v6328 = vsel %vm542, %v5499, 0.0
  %v6329 = vadd.f32 %v6327, %v6328
  %v6330 = vsel %vm542, %v5500, 0.0
  %v6331 = vadd.f32 %v6329, %v6330
  %v6332 = vsel %vm542, %v5501, 0.0
  %v6333 = vadd.f32 %v6331, %v6332
  %v6334 = vsel %vm542, %v5502, 0.0
  %v6335 = vadd.f32 %v6333, %v6334
  %v6336 = vsel %vm542, %v5503, 0.0
  %v6337 = vadd.f32 %v6335, %v6336
  %v6338 = vsel %vm542, %v5504, 0.0
  %v6339 = vadd.f32 %v6337, %v6338
  %v6340 = vsel %vm542, %v5505, 0.0
  %v6341 = vadd.f32 %v6339, %v6340
  %v6342 = vsel %vm542, %v5506, 0.0
  %v6343 = vadd.f32 %v6341, %v6342
  %v6344 = vsel %vm542, %v5507, 0.0
  %v6345 = vadd.f32 %v6343, %v6344
  %v6346 = vsel %vm542, %v5508, 0.0
  %v6347 = vadd.f32 %v6345, %v6346
  %v6348 = vsel %vm542, %v5509, 0.0
  %v6349 = vadd.f32 %v6347, %v6348
  %v6350 = vsel %vm542, %v5510, 0.0
  %v6351 = vadd.f32 %v6349, %v6350
  %v6352 = vsel %vm542, %v5511, 0.0
  %v6353 = vadd.f32 %v6351, %v6352
  %v6354 = vsel %vm542, %v5512, 0.0
  %v6355 = vadd.f32 %v6353, %v6354
  %v6356 = vsel %vm542, %v5513, 0.0
  %v6357 = vadd.f32 %v6355, %v6356
  %v6358 = vsel %vm542, %v5514, 0.0
  %v6359 = vadd.f32 %v6357, %v6358
  %v6360 = vsel %vm542, %v5515, 0.0
  %v6361 = vadd.f32 %v6359, %v6360
  %v6362 = vsel %vm542, %v5516, 0.0
  %v6363 = vadd.f32 %v6361, %v6362
  %v6364 = vsel %vm542, %v5517, 0.0
  %v6365 = vadd.f32 %v6363, %v6364
  %v6366 = vsel %vm542, %v5518, 0.0
  %v6367 = vadd.f32 %v6365, %v6366
  %v6368 = vsel %vm542, %v5519, 0.0
  %v6369 = vadd.f32 %v6367, %v6368
  %v6370 = vsel %vm542, %v5520, 0.0
  %v6371 = vadd.f32 %v6369, %v6370
  %v6372 = vsel %vm542, %v5521, 0.0
  %v6373 = vadd.f32 %v6371, %v6372
  %v6374 = vsel %vm542, %v5522, 0.0
  %v6375 = vadd.f32 %v6373, %v6374
  %v6376 = vsel %vm542, %v5523, 0.0
  %v6377 = vadd.f32 %v6375, %v6376
  %v6378 = vsel %vm542, %v5524, 0.0
  %v6379 = vadd.f32 %v6377, %v6378
  %v6380 = vsel %vm542, %v5525, 0.0
  %v6381 = vadd.f32 %v6379, %v6380
  %v6382 = vsel %vm542, %v5526, 0.0
  %v6383 = vadd.f32 %v6381, %v6382
  %v6384 = vsel %vm542, %v5527, 0.0
  %v6385 = vadd.f32 %v6383, %v6384
  %v6386 = vsel %vm542, %v5528, 0.0
  %v6387 = vadd.f32 %v6385, %v6386
  %v6388 = vsel %vm542, %v5529, 0.0
  %v6389 = vadd.f32 %v6387, %v6388
  %v6390 = vsel %vm542, %v5530, 0.0
  %v6391 = vadd.f32 %v6389, %v6390
  %v6392 = vsel %vm542, %v5531, 0.0
  %v6393 = vadd.f32 %v6391, %v6392
  %v6394 = vsel %vm542, %v5532, 0.0
  %v6395 = vadd.f32 %v6393, %v6394
  %v6396 = vsel %vm542, %v5533, 0.0
  %v6397 = vadd.f32 %v6395, %v6396
  %v6398 = vsel %vm542, %v5534, 0.0
  %v6399 = vadd.f32 %v6397, %v6398
  %v6400 = vsel %vm542, %v5535, 0.0
  %v6401 = vadd.f32 %v6399, %v6400
  %v6402 = vsel %vm542, %v5536, 0.0
  %v6403 = vadd.f32 %v6401, %v6402
  %v6404 = vsel %vm542, %v5537, 0.0
  %v6405 = vadd.f32 %v6403, %v6404
  %v6406 = vsel %vm542, %v5538, 0.0
  %v6407 = vadd.f32 %v6405, %v6406
  %v6408 = vsel %vm542, %v5539, 0.0
  %v6409 = vadd.f32 %v6407, %v6408
  %v6410 = vsel %vm542, %v5540, 0.0
  %v6411 = vadd.f32 %v6409, %v6410
  %v6412 = vsel %vm542, %v5541, 0.0
  %v6413 = vadd.f32 %v6411, %v6412
  %v6414 = vsel %vm542, %v5542, 0.0
  %v6415 = vadd.f32 %v6413, %v6414
  %v6416 = vsel %vm542, %v5543, 0.0
  %v6417 = vadd.f32 %v6415, %v6416
  %v6418 = vsel %vm542, %v5544, 0.0
  %v6419 = vadd.f32 %v6417, %v6418
  %v6420 = vsel %vm542, %v5545, 0.0
  %v6421 = vadd.f32 %v6419, %v6420
  %v6422 = vsel %vm542, %v5546, 0.0
  %v6423 = vadd.f32 %v6421, %v6422
  %v6424 = vsel %vm542, %v5547, 0.0
  %v6425 = vadd.f32 %v6423, %v6424
  %v6426 = vsel %vm542, %v5548, 0.0
  %v6427 = vadd.f32 %v6425, %v6426
  %v6428 = vsel %vm542, %v5549, 0.0
  %v6429 = vadd.f32 %v6427, %v6428
  %v6430 = vsel %vm542, %v5550, 0.0
  %v6431 = vadd.f32 %v6429, %v6430
  %v6432 = vsel %vm542, %v5551, 0.0
  %v6433 = vadd.f32 %v6431, %v6432
  %v6434 = vsel %vm542, %v5552, 0.0
  %v6435 = vadd.f32 %v6433, %v6434
  %v6436 = vsel %vm542, %v5553, 0.0
  %v6437 = vadd.f32 %v6435, %v6436
  %v6438 = vsel %vm542, %v5554, 0.0
  %v6439 = vadd.f32 %v6437, %v6438
  %v6440 = vsel %vm542, %v5555, 0.0
  %v6441 = vadd.f32 %v6439, %v6440
  %v6442 = vsel %vm542, %v5556, 0.0
  %v6443 = vadd.f32 %v6441, %v6442
  %v6444 = vsel %vm542, %v5557, 0.0
  %v6445 = vadd.f32 %v6443, %v6444
  %v6446 = vsel %vm542, %v5558, 0.0
  %v6447 = vadd.f32 %v6445, %v6446
  %v6448 = vsel %vm542, %v5559, 0.0
  %v6449 = vadd.f32 %v6447, %v6448
  %v6450 = vsel %vm542, %v5560, 0.0
  %v6451 = vadd.f32 %v6449, %v6450
  %v6452 = vsel %vm542, %v5561, 0.0
  %v6453 = vadd.f32 %v6451, %v6452
  %v6454 = vsel %vm542, %v5562, 0.0
  %v6455 = vadd.f32 %v6453, %v6454
  %v6456 = vsel %vm542, %v5563, 0.0
  %v6457 = vadd.f32 %v6455, %v6456
  %v6458 = vsel %vm542, %v5564, 0.0
  %v6459 = vadd.f32 %v6457, %v6458
  %v6460 = vsel %vm542, %v5565, 0.0
  %v6461 = vadd.f32 %v6459, %v6460
  %v6462 = vsel %vm542, %v5566, 0.0
  %v6463 = vadd.f32 %v6461, %v6462
  %v6464 = vsel %vm542, %v5567, 0.0
  %v6465 = vadd.f32 %v6463, %v6464
  %v6466 = vsel %vm542, %v5568, 0.0
  %v6467 = vadd.f32 %v6465, %v6466
  %v6468 = vsel %vm542, %v5569, 0.0
  %v6469 = vadd.f32 %v6467, %v6468
  %v6470 = vsel %vm542, %v5570, 0.0
  %v6471 = vadd.f32 %v6469, %v6470
  %v6472 = vsel %vm542, %v5571, 0.0
  %v6473 = vadd.f32 %v6471, %v6472
  %v6474 = vsel %vm542, %v5572, 0.0
  %v6475 = vadd.f32 %v6473, %v6474
  %v6476 = vsel %vm542, %v5573, 0.0
  %v6477 = vadd.f32 %v6475, %v6476
  %v6478 = vsel %vm542, %v5574, 0.0
  %v6479 = vadd.f32 %v6477, %v6478
  %v6480 = vsel %vm542, %v5575, 0.0
  %v6481 = vadd.f32 %v6479, %v6480
  %v6482 = vsel %vm542, %v5576, 0.0
  %v6483 = vadd.f32 %v6481, %v6482
  %v6484 = vsel %vm542, %v5577, 0.0
  %v6485 = vadd.f32 %v6483, %v6484
  %v6486 = vsel %vm542, %v5578, 0.0
  %v6487 = vadd.f32 %v6485, %v6486
  %v6488 = vsel %vm542, %v5579, 0.0
  %v6489 = vadd.f32 %v6487, %v6488
  %v6490 = vsel %vm542, %v5580, 0.0
  %v6491 = vadd.f32 %v6489, %v6490
  %v6492 = vsel %vm542, %v5581, 0.0
  %v6493 = vadd.f32 %v6491, %v6492
  %v6494 = vsel %vm542, %v5582, 0.0
  %v6495 = vadd.f32 %v6493, %v6494
  %v6496 = vsel %vm542, %v5583, 0.0
  %v6497 = vadd.f32 %v6495, %v6496
  %v6498 = vsel %vm542, %v5584, 0.0
  %v6499 = vadd.f32 %v6497, %v6498
  %v6500 = vsel %vm542, %v5585, 0.0
  %v6501 = vadd.f32 %v6499, %v6500
  %v6502 = vsel %vm542, %v5586, 0.0
  %v6503 = vadd.f32 %v6501, %v6502
  %v6504 = vsel %vm542, %v5587, 0.0
  %v6505 = vadd.f32 %v6503, %v6504
  %v6506 = vsel %vm542, %v5588, 0.0
  %v6507 = vadd.f32 %v6505, %v6506
  %v6508 = vsel %vm542, %v5589, 0.0
  %v6509 = vadd.f32 %v6507, %v6508
  %v6510 = vsel %vm542, %v5590, 0.0
  %v6511 = vadd.f32 %v6509, %v6510
  %v6512 = vsel %vm542, %v5591, 0.0
  %v6513 = vadd.f32 %v6511, %v6512
  %v6514 = vsel %vm542, %v5592, 0.0
  %v6515 = vadd.f32 %v6513, %v6514
  %v6516 = vsel %vm542, %v5593, 0.0
  %v6517 = vadd.f32 %v6515, %v6516
  %v6518 = vsel %vm542, %v5594, 0.0
  %v6519 = vadd.f32 %v6517, %v6518
  %v6520 = vsel %vm542, %v5595, 0.0
  %v6521 = vadd.f32 %v6519, %v6520
  %v6522 = vsel %vm542, %v5596, 0.0
  %v6523 = vadd.f32 %v6521, %v6522
  %v6524 = vsel %vm542, %v5597, 0.0
  %v6525 = vadd.f32 %v6523, %v6524
  %v6526 = vsel %vm542, %v5598, 0.0
  %v6527 = vadd.f32 %v6525, %v6526
  %v6528 = vsel %vm542, %v5599, 0.0
  %v6529 = vadd.f32 %v6527, %v6528
  %v6530 = vsel %vm542, %v5600, 0.0
  %v6531 = vadd.f32 %v6529, %v6530
  %v6532 = vsel %vm542, %v5601, 0.0
  %v6533 = vadd.f32 %v6531, %v6532
  %v6534 = vsel %vm542, %v5602, 0.0
  %v6535 = vadd.f32 %v6533, %v6534
  %v6536 = vsel %vm542, %v5603, 0.0
  %v6537 = vadd.f32 %v6535, %v6536
  %v6538 = vsel %vm542, %v5604, 0.0
  %v6539 = vadd.f32 %v6537, %v6538
  %v6540 = vsel %vm542, %v5605, 0.0
  %v6541 = vadd.f32 %v6539, %v6540
  %v6542 = vsel %vm542, %v5606, 0.0
  %v6543 = vadd.f32 %v6541, %v6542
  %v6544 = vsel %vm542, %v5607, 0.0
  %v6545 = vadd.f32 %v6543, %v6544
  %v6546 = vsel %vm542, %v5608, 0.0
  %v6547 = vadd.f32 %v6545, %v6546
  %v6548 = vsel %vm542, %v5609, 0.0
  %v6549 = vadd.f32 %v6547, %v6548
  %v6550 = vsel %vm542, %v5610, 0.0
  %v6551 = vadd.f32 %v6549, %v6550
  %v6552 = vsel %vm542, %v5611, 0.0
  %v6553 = vadd.f32 %v6551, %v6552
  %v6554 = vsel %vm542, %v5612, 0.0
  %v6555 = vadd.f32 %v6553, %v6554
  %v6556 = vsel %vm542, %v5613, 0.0
  %v6557 = vadd.f32 %v6555, %v6556
  %v6558 = vsel %vm542, %v5614, 0.0
  %v6559 = vadd.f32 %v6557, %v6558
  %v6560 = vsel %vm542, %v5615, 0.0
  %v6561 = vadd.f32 %v6559, %v6560
  %v6562 = vsel %vm542, %v5616, 0.0
  %v6563 = vadd.f32 %v6561, %v6562
  %v6564 = vsel %vm542, %v5617, 0.0
  %v6565 = vadd.f32 %v6563, %v6564
  %v6566 = vsel %vm542, %v5618, 0.0
  %v6567 = vadd.f32 %v6565, %v6566
  %v6568 = vsel %vm542, %v5619, 0.0
  %v6569 = vadd.f32 %v6567, %v6568
  %v6570 = vsel %vm542, %v5620, 0.0
  %v6571 = vadd.f32 %v6569, %v6570
  %v6572 = vsel %vm542, %v5621, 0.0
  %v6573 = vadd.f32 %v6571, %v6572
  %v6574 = vsel %vm542, %v5622, 0.0
  %v6575 = vadd.f32 %v6573, %v6574
  %v6576 = vsel %vm542, %v5623, 0.0
  %v6577 = vadd.f32 %v6575, %v6576
  %v6578 = vsel %vm542, %v5624, 0.0
  %v6579 = vadd.f32 %v6577, %v6578
  %v6580 = vsel %vm542, %v5625, 0.0
  %v6581 = vadd.f32 %v6579, %v6580
  %v6582 = vsel %vm542, %v5626, 0.0
  %v6583 = vadd.f32 %v6581, %v6582
  %v6584 = vsel %vm542, %v5627, 0.0
  %v6585 = vadd.f32 %v6583, %v6584
  %v6586 = vsel %vm542, %v5628, 0.0
  %v6587 = vadd.f32 %v6585, %v6586
  %v6588 = vsel %vm542, %v5629, 0.0
  %v6589 = vadd.f32 %v6587, %v6588
  %v6590 = vsel %vm542, %v5630, 0.0
  %v6591 = vadd.f32 %v6589, %v6590
  %v6592 = vsel %vm542, %v5631, 0.0
  %v6593 = vadd.f32 %v6591, %v6592
  %v6594 = vsel %vm542, %v5632, 0.0
  %v6595 = vadd.f32 %v6593, %v6594
  %v6596 = vsel %vm542, %v5633, 0.0
  %v6597 = vadd.f32 %v6595, %v6596
  %v6598 = vsel %vm542, %v5634, 0.0
  %v6599 = vadd.f32 %v6597, %v6598
  %v6600 = vsel %vm542, %v5635, 0.0
  %v6601 = vadd.f32 %v6599, %v6600
  %v6602 = vsel %vm542, %v5636, 0.0
  %v6603 = vadd.f32 %v6601, %v6602
  %v6604 = vsel %vm542, %v5637, 0.0
  %v6605 = vadd.f32 %v6603, %v6604
  %v6606 = vsel %vm542, %v5638, 0.0
  %v6607 = vadd.f32 %v6605, %v6606
  %v6608 = vsel %vm542, %v5639, 0.0
  %v6609 = vadd.f32 %v6607, %v6608
  %v6610 = vsel %vm542, %v5640, 0.0
  %v6611 = vadd.f32 %v6609, %v6610
  %v6612 = vsel %vm542, %v5641, 0.0
  %v6613 = vadd.f32 %v6611, %v6612
  %v6614 = vsel %vm542, %v5642, 0.0
  %v6615 = vadd.f32 %v6613, %v6614
  %v6616 = vsel %vm542, %v5643, 0.0
  %v6617 = vadd.f32 %v6615, %v6616
  %v6618 = vsel %vm542, %v5644, 0.0
  %v6619 = vadd.f32 %v6617, %v6618
  %v6620 = vsel %vm542, %v5645, 0.0
  %v6621 = vadd.f32 %v6619, %v6620
  %v6622 = vsel %vm542, %v5646, 0.0
  %v6623 = vadd.f32 %v6621, %v6622
  %v6624 = vsel %vm542, %v5647, 0.0
  %v6625 = vadd.f32 %v6623, %v6624
  %v6626 = vsel %vm542, %v5648, 0.0
  %v6627 = vadd.f32 %v6625, %v6626
  %v6628 = vsel %vm542, %v5649, 0.0
  %v6629 = vadd.f32 %v6627, %v6628
  %v6630 = vsel %vm542, %v5650, 0.0
  %v6631 = vadd.f32 %v6629, %v6630
  %v6632 = vsel %vm542, %v5651, 0.0
  %v6633 = vadd.f32 %v6631, %v6632
  %v6634 = vsel %vm542, %v5652, 0.0
  %v6635 = vadd.f32 %v6633, %v6634
  %v6636 = vsel %vm542, %v5653, 0.0
  %v6637 = vadd.f32 %v6635, %v6636
  %v6638 = vsel %vm542, %v5654, 0.0
  %v6639 = vadd.f32 %v6637, %v6638
  %v6640 = vsel %vm542, %v5655, 0.0
  %v6641 = vadd.f32 %v6639, %v6640
  %v6642 = vsel %vm542, %v5656, 0.0
  %v6643 = vadd.f32 %v6641, %v6642
  %v6644 = vsel %vm542, %v5657, 0.0
  %v6645 = vadd.f32 %v6643, %v6644
  %v6646 = vsel %vm542, %v5658, 0.0
  %v6647 = vadd.f32 %v6645, %v6646
  %v6648 = vsel %vm542, %v5659, 0.0
  %v6649 = vadd.f32 %v6647, %v6648
  %v6650 = vsel %vm542, %v5660, 0.0
  %v6651 = vadd.f32 %v6649, %v6650
  %v6652 = vsel %vm542, %v5661, 0.0
  %v6653 = vadd.f32 %v6651, %v6652
  %v6654 = vsel %vm542, %v5662, 0.0
  %v6655 = vadd.f32 %v6653, %v6654
  %v6656 = vsel %vm542, %v5663, 0.0
  %v6657 = vadd.f32 %v6655, %v6656
  %v6658 = vsel %vm542, %v5664, 0.0
  %v6659 = vadd.f32 %v6657, %v6658
  %v6660 = vsel %vm542, %v5665, 0.0
  %v6661 = vadd.f32 %v6659, %v6660
  %v6662 = vsel %vm542, %v5666, 0.0
  %v6663 = vadd.f32 %v6661, %v6662
  %v6664 = vsel %vm542, %v5667, 0.0
  %v6665 = vadd.f32 %v6663, %v6664
  %v6666 = vsel %vm542, %v5668, 0.0
  %v6667 = vadd.f32 %v6665, %v6666
  %v6668 = vsel %vm542, %v5669, 0.0
  %v6669 = vadd.f32 %v6667, %v6668
  %v6670 = vsel %vm542, %v5670, 0.0
  %v6671 = vadd.f32 %v6669, %v6670
  %v6672 = vsel %vm542, %v5671, 0.0
  %v6673 = vadd.f32 %v6671, %v6672
  %v6674 = vsel %vm542, %v5672, 0.0
  %v6675 = vadd.f32 %v6673, %v6674
  %v6676 = vsel %vm542, %v5673, 0.0
  %v6677 = vadd.f32 %v6675, %v6676
  %v6678 = vsel %vm542, %v5674, 0.0
  %v6679 = vadd.f32 %v6677, %v6678
  %v6680 = vsel %vm542, %v5675, 0.0
  %v6681 = vadd.f32 %v6679, %v6680
  %v6682 = vsel %vm542, %v5676, 0.0
  %v6683 = vadd.f32 %v6681, %v6682
  %v6684 = vsel %vm542, %v5677, 0.0
  %v6685 = vadd.f32 %v6683, %v6684
  %v6686 = vsel %vm542, %v5678, 0.0
  %v6687 = vadd.f32 %v6685, %v6686
  %v6688 = vsel %vm542, %v5679, 0.0
  %v6689 = vadd.f32 %v6687, %v6688
  %v6690 = vsel %vm542, %v5680, 0.0
  %v6691 = vadd.f32 %v6689, %v6690
  %v6692 = vsel %vm542, %v5681, 0.0
  %v6693 = vadd.f32 %v6691, %v6692
  %v6694 = vsel %vm542, %v5682, 0.0
  %v6695 = vadd.f32 %v6693, %v6694
  %v6696 = vsel %vm542, %v5683, 0.0
  %v6697 = vadd.f32 %v6695, %v6696
  %v6698 = vsel %vm542, %v5684, 0.0
  %v6699 = vadd.f32 %v6697, %v6698
  %v6700 = vsel %vm542, %v5685, 0.0
  %v6701 = vadd.f32 %v6699, %v6700
  %v6702 = vsel %vm542, %v5686, 0.0
  %v6703 = vadd.f32 %v6701, %v6702
  %v6704 = vsel %vm542, %v5687, 0.0
  %v6705 = vadd.f32 %v6703, %v6704
  %v6706 = vsel %vm542, %v5688, 0.0
  %v6707 = vadd.f32 %v6705, %v6706
  %v6708 = vsel %vm542, %v5689, 0.0
  %v6709 = vadd.f32 %v6707, %v6708
  %v6710 = vsel %vm542, %v5690, 0.0
  %v6711 = vadd.f32 %v6709, %v6710
  %v6712 = vsel %vm542, %v5691, 0.0
  %v6713 = vadd.f32 %v6711, %v6712
  %v6714 = vsel %vm542, %v5692, 0.0
  %v6715 = vadd.f32 %v6713, %v6714
  %v6716 = vrot.slane %v6715, 4
  %v6717 = vadd.f32 %v6715, %v6716
  %v6718 = vrot.slane %v6717, 2
  %v6719 = vadd.f32 %v6717, %v6718
  %v6720 = vrot.slane %v6719, 1
  %v6721 = vadd.f32 %v6719, %v6720
  %v6722 = vmul.f32 %v5181, %v5181
  %v6723 = vmul.f32 %v5182, %v5182
  %v6724 = vmul.f32 %v5183, %v5183
  %v6725 = vmul.f32 %v5184, %v5184
  %v6726 = vmul.f32 %v5185, %v5185
  %v6727 = vmul.f32 %v5186, %v5186
  %v6728 = vmul.f32 %v5187, %v5187
  %v6729 = vmul.f32 %v5188, %v5188
  %v6730 = vmul.f32 %v5189, %v5189
  %v6731 = vmul.f32 %v5190, %v5190
  %v6732 = vmul.f32 %v5191, %v5191
  %v6733 = vmul.f32 %v5192, %v5192
  %v6734 = vmul.f32 %v5193, %v5193
  %v6735 = vmul.f32 %v5194, %v5194
  %v6736 = vmul.f32 %v5195, %v5195
  %v6737 = vmul.f32 %v5196, %v5196
  %v6738 = vmul.f32 %v5197, %v5197
  %v6739 = vmul.f32 %v5198, %v5198
  %v6740 = vmul.f32 %v5199, %v5199
  %v6741 = vmul.f32 %v5200, %v5200
  %v6742 = vmul.f32 %v5201, %v5201
  %v6743 = vmul.f32 %v5202, %v5202
  %v6744 = vmul.f32 %v5203, %v5203
  %v6745 = vmul.f32 %v5204, %v5204
  %v6746 = vmul.f32 %v5205, %v5205
  %v6747 = vmul.f32 %v5206, %v5206
  %v6748 = vmul.f32 %v5207, %v5207
  %v6749 = vmul.f32 %v5208, %v5208
  %v6750 = vmul.f32 %v5209, %v5209
  %v6751 = vmul.f32 %v5210, %v5210
  %v6752 = vmul.f32 %v5211, %v5211
  %v6753 = vmul.f32 %v5212, %v5212
  %v6754 = vmul.f32 %v5213, %v5213
  %v6755 = vmul.f32 %v5214, %v5214
  %v6756 = vmul.f32 %v5215, %v5215
  %v6757 = vmul.f32 %v5216, %v5216
  %v6758 = vmul.f32 %v5217, %v5217
  %v6759 = vmul.f32 %v5218, %v5218
  %v6760 = vmul.f32 %v5219, %v5219
  %v6761 = vmul.f32 %v5220, %v5220
  %v6762 = vmul.f32 %v5221, %v5221
  %v6763 = vmul.f32 %v5222, %v5222
  %v6764 = vmul.f32 %v5223, %v5223
  %v6765 = vmul.f32 %v5224, %v5224
  %v6766 = vmul.f32 %v5225, %v5225
  %v6767 = vmul.f32 %v5226, %v5226
  %v6768 = vmul.f32 %v5227, %v5227
  %v6769 = vmul.f32 %v5228, %v5228
  %v6770 = vmul.f32 %v5229, %v5229
  %v6771 = vmul.f32 %v5230, %v5230
  %v6772 = vmul.f32 %v5231, %v5231
  %v6773 = vmul.f32 %v5232, %v5232
  %v6774 = vmul.f32 %v5233, %v5233
  %v6775 = vmul.f32 %v5234, %v5234
  %v6776 = vmul.f32 %v5235, %v5235
  %v6777 = vmul.f32 %v5236, %v5236
  %v6778 = vmul.f32 %v5237, %v5237
  %v6779 = vmul.f32 %v5238, %v5238
  %v6780 = vmul.f32 %v5239, %v5239
  %v6781 = vmul.f32 %v5240, %v5240
  %v6782 = vmul.f32 %v5241, %v5241
  %v6783 = vmul.f32 %v5242, %v5242
  %v6784 = vmul.f32 %v5243, %v5243
  %v6785 = vmul.f32 %v5244, %v5244
  %v6786 = vmul.f32 %v5245, %v5245
  %v6787 = vmul.f32 %v5246, %v5246
  %v6788 = vmul.f32 %v5247, %v5247
  %v6789 = vmul.f32 %v5248, %v5248
  %v6790 = vmul.f32 %v5249, %v5249
  %v6791 = vmul.f32 %v5250, %v5250
  %v6792 = vmul.f32 %v5251, %v5251
  %v6793 = vmul.f32 %v5252, %v5252
  %v6794 = vmul.f32 %v5253, %v5253
  %v6795 = vmul.f32 %v5254, %v5254
  %v6796 = vmul.f32 %v5255, %v5255
  %v6797 = vmul.f32 %v5256, %v5256
  %v6798 = vmul.f32 %v5257, %v5257
  %v6799 = vmul.f32 %v5258, %v5258
  %v6800 = vmul.f32 %v5259, %v5259
  %v6801 = vmul.f32 %v5260, %v5260
  %v6802 = vmul.f32 %v5261, %v5261
  %v6803 = vmul.f32 %v5262, %v5262
  %v6804 = vmul.f32 %v5263, %v5263
  %v6805 = vmul.f32 %v5264, %v5264
  %v6806 = vmul.f32 %v5265, %v5265
  %v6807 = vmul.f32 %v5266, %v5266
  %v6808 = vmul.f32 %v5267, %v5267
  %v6809 = vmul.f32 %v5268, %v5268
  %v6810 = vmul.f32 %v5269, %v5269
  %v6811 = vmul.f32 %v5270, %v5270
  %v6812 = vmul.f32 %v5271, %v5271
  %v6813 = vmul.f32 %v5272, %v5272
  %v6814 = vmul.f32 %v5273, %v5273
  %v6815 = vmul.f32 %v5274, %v5274
  %v6816 = vmul.f32 %v5275, %v5275
  %v6817 = vmul.f32 %v5276, %v5276
  %v6818 = vmul.f32 %v5277, %v5277
  %v6819 = vmul.f32 %v5278, %v5278
  %v6820 = vmul.f32 %v5279, %v5279
  %v6821 = vmul.f32 %v5280, %v5280
  %v6822 = vmul.f32 %v5281, %v5281
  %v6823 = vmul.f32 %v5282, %v5282
  %v6824 = vmul.f32 %v5283, %v5283
  %v6825 = vmul.f32 %v5284, %v5284
  %v6826 = vmul.f32 %v5285, %v5285
  %v6827 = vmul.f32 %v5286, %v5286
  %v6828 = vmul.f32 %v5287, %v5287
  %v6829 = vmul.f32 %v5288, %v5288
  %v6830 = vmul.f32 %v5289, %v5289
  %v6831 = vmul.f32 %v5290, %v5290
  %v6832 = vmul.f32 %v5291, %v5291
  %v6833 = vmul.f32 %v5292, %v5292
  %v6834 = vmul.f32 %v5293, %v5293
  %v6835 = vmul.f32 %v5294, %v5294
  %v6836 = vmul.f32 %v5295, %v5295
  %v6837 = vmul.f32 %v5296, %v5296
  %v6838 = vmul.f32 %v5297, %v5297
  %v6839 = vmul.f32 %v5298, %v5298
  %v6840 = vmul.f32 %v5299, %v5299
  %v6841 = vmul.f32 %v5300, %v5300
  %v6842 = vmul.f32 %v5301, %v5301
  %v6843 = vmul.f32 %v5302, %v5302
  %v6844 = vmul.f32 %v5303, %v5303
  %v6845 = vmul.f32 %v5304, %v5304
  %v6846 = vmul.f32 %v5305, %v5305
  %v6847 = vmul.f32 %v5306, %v5306
  %v6848 = vmul.f32 %v5307, %v5307
  %v6849 = vmul.f32 %v5308, %v5308
  %v6850 = vmul.f32 %v5309, %v5309
  %v6851 = vmul.f32 %v5310, %v5310
  %v6852 = vmul.f32 %v5311, %v5311
  %v6853 = vmul.f32 %v5312, %v5312
  %v6854 = vmul.f32 %v5313, %v5313
  %v6855 = vmul.f32 %v5314, %v5314
  %v6856 = vmul.f32 %v5315, %v5315
  %v6857 = vmul.f32 %v5316, %v5316
  %v6858 = vmul.f32 %v5317, %v5317
  %v6859 = vmul.f32 %v5318, %v5318
  %v6860 = vmul.f32 %v5319, %v5319
  %v6861 = vmul.f32 %v5320, %v5320
  %v6862 = vmul.f32 %v5321, %v5321
  %v6863 = vmul.f32 %v5322, %v5322
  %v6864 = vmul.f32 %v5323, %v5323
  %v6865 = vmul.f32 %v5324, %v5324
  %v6866 = vmul.f32 %v5325, %v5325
  %v6867 = vmul.f32 %v5326, %v5326
  %v6868 = vmul.f32 %v5327, %v5327
  %v6869 = vmul.f32 %v5328, %v5328
  %v6870 = vmul.f32 %v5329, %v5329
  %v6871 = vmul.f32 %v5330, %v5330
  %v6872 = vmul.f32 %v5331, %v5331
  %v6873 = vmul.f32 %v5332, %v5332
  %v6874 = vmul.f32 %v5333, %v5333
  %v6875 = vmul.f32 %v5334, %v5334
  %v6876 = vmul.f32 %v5335, %v5335
  %v6877 = vmul.f32 %v5336, %v5336
  %v6878 = vmul.f32 %v5337, %v5337
  %v6879 = vmul.f32 %v5338, %v5338
  %v6880 = vmul.f32 %v5339, %v5339
  %v6881 = vmul.f32 %v5340, %v5340
  %v6882 = vmul.f32 %v5341, %v5341
  %v6883 = vmul.f32 %v5342, %v5342
  %v6884 = vmul.f32 %v5343, %v5343
  %v6885 = vmul.f32 %v5344, %v5344
  %v6886 = vmul.f32 %v5345, %v5345
  %v6887 = vmul.f32 %v5346, %v5346
  %v6888 = vmul.f32 %v5347, %v5347
  %v6889 = vmul.f32 %v5348, %v5348
  %v6890 = vmul.f32 %v5349, %v5349
  %v6891 = vmul.f32 %v5350, %v5350
  %v6892 = vmul.f32 %v5351, %v5351
  %v6893 = vmul.f32 %v5352, %v5352
  %v6894 = vmul.f32 %v5353, %v5353
  %v6895 = vmul.f32 %v5354, %v5354
  %v6896 = vmul.f32 %v5355, %v5355
  %v6897 = vmul.f32 %v5356, %v5356
  %v6898 = vmul.f32 %v5357, %v5357
  %v6899 = vmul.f32 %v5358, %v5358
  %v6900 = vmul.f32 %v5359, %v5359
  %v6901 = vmul.f32 %v5360, %v5360
  %v6902 = vmul.f32 %v5361, %v5361
  %v6903 = vmul.f32 %v5362, %v5362
  %v6904 = vmul.f32 %v5363, %v5363
  %v6905 = vmul.f32 %v5364, %v5364
  %v6906 = vmul.f32 %v5365, %v5365
  %v6907 = vmul.f32 %v5366, %v5366
  %v6908 = vmul.f32 %v5367, %v5367
  %v6909 = vmul.f32 %v5368, %v5368
  %v6910 = vmul.f32 %v5369, %v5369
  %v6911 = vmul.f32 %v5370, %v5370
  %v6912 = vmul.f32 %v5371, %v5371
  %v6913 = vmul.f32 %v5372, %v5372
  %v6914 = vmul.f32 %v5373, %v5373
  %v6915 = vmul.f32 %v5374, %v5374
  %v6916 = vmul.f32 %v5375, %v5375
  %v6917 = vmul.f32 %v5376, %v5376
  %v6918 = vmul.f32 %v5377, %v5377
  %v6919 = vmul.f32 %v5378, %v5378
  %v6920 = vmul.f32 %v5379, %v5379
  %v6921 = vmul.f32 %v5380, %v5380
  %v6922 = vmul.f32 %v5381, %v5381
  %v6923 = vmul.f32 %v5382, %v5382
  %v6924 = vmul.f32 %v5383, %v5383
  %v6925 = vmul.f32 %v5384, %v5384
  %v6926 = vmul.f32 %v5385, %v5385
  %v6927 = vmul.f32 %v5386, %v5386
  %v6928 = vmul.f32 %v5387, %v5387
  %v6929 = vmul.f32 %v5388, %v5388
  %v6930 = vmul.f32 %v5389, %v5389
  %v6931 = vmul.f32 %v5390, %v5390
  %v6932 = vmul.f32 %v5391, %v5391
  %v6933 = vmul.f32 %v5392, %v5392
  %v6934 = vmul.f32 %v5393, %v5393
  %v6935 = vmul.f32 %v5394, %v5394
  %v6936 = vmul.f32 %v5395, %v5395
  %v6937 = vmul.f32 %v5396, %v5396
  %v6938 = vmul.f32 %v5397, %v5397
  %v6939 = vmul.f32 %v5398, %v5398
  %v6940 = vmul.f32 %v5399, %v5399
  %v6941 = vmul.f32 %v5400, %v5400
  %v6942 = vmul.f32 %v5401, %v5401
  %v6943 = vmul.f32 %v5402, %v5402
  %v6944 = vmul.f32 %v5403, %v5403
  %v6945 = vmul.f32 %v5404, %v5404
  %v6946 = vmul.f32 %v5405, %v5405
  %v6947 = vmul.f32 %v5406, %v5406
  %v6948 = vmul.f32 %v5407, %v5407
  %v6949 = vmul.f32 %v5408, %v5408
  %v6950 = vmul.f32 %v5409, %v5409
  %v6951 = vmul.f32 %v5410, %v5410
  %v6952 = vmul.f32 %v5411, %v5411
  %v6953 = vmul.f32 %v5412, %v5412
  %v6954 = vmul.f32 %v5413, %v5413
  %v6955 = vmul.f32 %v5414, %v5414
  %v6956 = vmul.f32 %v5415, %v5415
  %v6957 = vmul.f32 %v5416, %v5416
  %v6958 = vmul.f32 %v5417, %v5417
  %v6959 = vmul.f32 %v5418, %v5418
  %v6960 = vmul.f32 %v5419, %v5419
  %v6961 = vmul.f32 %v5420, %v5420
  %v6962 = vmul.f32 %v5421, %v5421
  %v6963 = vmul.f32 %v5422, %v5422
  %v6964 = vmul.f32 %v5423, %v5423
  %v6965 = vmul.f32 %v5424, %v5424
  %v6966 = vmul.f32 %v5425, %v5425
  %v6967 = vmul.f32 %v5426, %v5426
  %v6968 = vmul.f32 %v5427, %v5427
  %v6969 = vmul.f32 %v5428, %v5428
  %v6970 = vmul.f32 %v5429, %v5429
  %v6971 = vmul.f32 %v5430, %v5430
  %v6972 = vmul.f32 %v5431, %v5431
  %v6973 = vmul.f32 %v5432, %v5432
  %v6974 = vmul.f32 %v5433, %v5433
  %v6975 = vmul.f32 %v5434, %v5434
  %v6976 = vmul.f32 %v5435, %v5435
  %v6977 = vmul.f32 %v5436, %v5436
  %v6978 = vmul.f32 %v5437, %v5437
  %v6979 = vmul.f32 %v5438, %v5438
  %v6980 = vmul.f32 %v5439, %v5439
  %v6981 = vmul.f32 %v5440, %v5440
  %v6982 = vmul.f32 %v5441, %v5441
  %v6983 = vmul.f32 %v5442, %v5442
  %v6984 = vmul.f32 %v5443, %v5443
  %v6985 = vmul.f32 %v5444, %v5444
  %v6986 = vmul.f32 %v5445, %v5445
  %v6987 = vmul.f32 %v5446, %v5446
  %v6988 = vmul.f32 %v5447, %v5447
  %v6989 = vmul.f32 %v5448, %v5448
  %v6990 = vmul.f32 %v5449, %v5449
  %v6991 = vmul.f32 %v5450, %v5450
  %v6992 = vmul.f32 %v5451, %v5451
  %v6993 = vmul.f32 %v5452, %v5452
  %v6994 = vmul.f32 %v5453, %v5453
  %v6995 = vmul.f32 %v5454, %v5454
  %v6996 = vmul.f32 %v5455, %v5455
  %v6997 = vmul.f32 %v5456, %v5456
  %v6998 = vmul.f32 %v5457, %v5457
  %v6999 = vmul.f32 %v5458, %v5458
  %v7000 = vmul.f32 %v5459, %v5459
  %v7001 = vmul.f32 %v5460, %v5460
  %v7002 = vmul.f32 %v5461, %v5461
  %v7003 = vmul.f32 %v5462, %v5462
  %v7004 = vmul.f32 %v5463, %v5463
  %v7005 = vmul.f32 %v5464, %v5464
  %v7006 = vmul.f32 %v5465, %v5465
  %v7007 = vmul.f32 %v5466, %v5466
  %v7008 = vmul.f32 %v5467, %v5467
  %v7009 = vmul.f32 %v5468, %v5468
  %v7010 = vmul.f32 %v5469, %v5469
  %v7011 = vmul.f32 %v5470, %v5470
  %v7012 = vmul.f32 %v5471, %v5471
  %v7013 = vmul.f32 %v5472, %v5472
  %v7014 = vmul.f32 %v5473, %v5473
  %v7015 = vmul.f32 %v5474, %v5474
  %v7016 = vmul.f32 %v5475, %v5475
  %v7017 = vmul.f32 %v5476, %v5476
  %v7018 = vmul.f32 %v5477, %v5477
  %v7019 = vmul.f32 %v5478, %v5478
  %v7020 = vmul.f32 %v5479, %v5479
  %v7021 = vmul.f32 %v5480, %v5480
  %v7022 = vmul.f32 %v5481, %v5481
  %v7023 = vmul.f32 %v5482, %v5482
  %v7024 = vmul.f32 %v5483, %v5483
  %v7025 = vmul.f32 %v5484, %v5484
  %v7026 = vmul.f32 %v5485, %v5485
  %v7027 = vmul.f32 %v5486, %v5486
  %v7028 = vmul.f32 %v5487, %v5487
  %v7029 = vmul.f32 %v5488, %v5488
  %v7030 = vmul.f32 %v5489, %v5489
  %v7031 = vmul.f32 %v5490, %v5490
  %v7032 = vmul.f32 %v5491, %v5491
  %v7033 = vmul.f32 %v5492, %v5492
  %v7034 = vmul.f32 %v5493, %v5493
  %v7035 = vmul.f32 %v5494, %v5494
  %v7036 = vmul.f32 %v5495, %v5495
  %v7037 = vmul.f32 %v5496, %v5496
  %v7038 = vmul.f32 %v5497, %v5497
  %v7039 = vmul.f32 %v5498, %v5498
  %v7040 = vmul.f32 %v5499, %v5499
  %v7041 = vmul.f32 %v5500, %v5500
  %v7042 = vmul.f32 %v5501, %v5501
  %v7043 = vmul.f32 %v5502, %v5502
  %v7044 = vmul.f32 %v5503, %v5503
  %v7045 = vmul.f32 %v5504, %v5504
  %v7046 = vmul.f32 %v5505, %v5505
  %v7047 = vmul.f32 %v5506, %v5506
  %v7048 = vmul.f32 %v5507, %v5507
  %v7049 = vmul.f32 %v5508, %v5508
  %v7050 = vmul.f32 %v5509, %v5509
  %v7051 = vmul.f32 %v5510, %v5510
  %v7052 = vmul.f32 %v5511, %v5511
  %v7053 = vmul.f32 %v5512, %v5512
  %v7054 = vmul.f32 %v5513, %v5513
  %v7055 = vmul.f32 %v5514, %v5514
  %v7056 = vmul.f32 %v5515, %v5515
  %v7057 = vmul.f32 %v5516, %v5516
  %v7058 = vmul.f32 %v5517, %v5517
  %v7059 = vmul.f32 %v5518, %v5518
  %v7060 = vmul.f32 %v5519, %v5519
  %v7061 = vmul.f32 %v5520, %v5520
  %v7062 = vmul.f32 %v5521, %v5521
  %v7063 = vmul.f32 %v5522, %v5522
  %v7064 = vmul.f32 %v5523, %v5523
  %v7065 = vmul.f32 %v5524, %v5524
  %v7066 = vmul.f32 %v5525, %v5525
  %v7067 = vmul.f32 %v5526, %v5526
  %v7068 = vmul.f32 %v5527, %v5527
  %v7069 = vmul.f32 %v5528, %v5528
  %v7070 = vmul.f32 %v5529, %v5529
  %v7071 = vmul.f32 %v5530, %v5530
  %v7072 = vmul.f32 %v5531, %v5531
  %v7073 = vmul.f32 %v5532, %v5532
  %v7074 = vmul.f32 %v5533, %v5533
  %v7075 = vmul.f32 %v5534, %v5534
  %v7076 = vmul.f32 %v5535, %v5535
  %v7077 = vmul.f32 %v5536, %v5536
  %v7078 = vmul.f32 %v5537, %v5537
  %v7079 = vmul.f32 %v5538, %v5538
  %v7080 = vmul.f32 %v5539, %v5539
  %v7081 = vmul.f32 %v5540, %v5540
  %v7082 = vmul.f32 %v5541, %v5541
  %v7083 = vmul.f32 %v5542, %v5542
  %v7084 = vmul.f32 %v5543, %v5543
  %v7085 = vmul.f32 %v5544, %v5544
  %v7086 = vmul.f32 %v5545, %v5545
  %v7087 = vmul.f32 %v5546, %v5546
  %v7088 = vmul.f32 %v5547, %v5547
  %v7089 = vmul.f32 %v5548, %v5548
  %v7090 = vmul.f32 %v5549, %v5549
  %v7091 = vmul.f32 %v5550, %v5550
  %v7092 = vmul.f32 %v5551, %v5551
  %v7093 = vmul.f32 %v5552, %v5552
  %v7094 = vmul.f32 %v5553, %v5553
  %v7095 = vmul.f32 %v5554, %v5554
  %v7096 = vmul.f32 %v5555, %v5555
  %v7097 = vmul.f32 %v5556, %v5556
  %v7098 = vmul.f32 %v5557, %v5557
  %v7099 = vmul.f32 %v5558, %v5558
  %v7100 = vmul.f32 %v5559, %v5559
  %v7101 = vmul.f32 %v5560, %v5560
  %v7102 = vmul.f32 %v5561, %v5561
  %v7103 = vmul.f32 %v5562, %v5562
  %v7104 = vmul.f32 %v5563, %v5563
  %v7105 = vmul.f32 %v5564, %v5564
  %v7106 = vmul.f32 %v5565, %v5565
  %v7107 = vmul.f32 %v5566, %v5566
  %v7108 = vmul.f32 %v5567, %v5567
  %v7109 = vmul.f32 %v5568, %v5568
  %v7110 = vmul.f32 %v5569, %v5569
  %v7111 = vmul.f32 %v5570, %v5570
  %v7112 = vmul.f32 %v5571, %v5571
  %v7113 = vmul.f32 %v5572, %v5572
  %v7114 = vmul.f32 %v5573, %v5573
  %v7115 = vmul.f32 %v5574, %v5574
  %v7116 = vmul.f32 %v5575, %v5575
  %v7117 = vmul.f32 %v5576, %v5576
  %v7118 = vmul.f32 %v5577, %v5577
  %v7119 = vmul.f32 %v5578, %v5578
  %v7120 = vmul.f32 %v5579, %v5579
  %v7121 = vmul.f32 %v5580, %v5580
  %v7122 = vmul.f32 %v5581, %v5581
  %v7123 = vmul.f32 %v5582, %v5582
  %v7124 = vmul.f32 %v5583, %v5583
  %v7125 = vmul.f32 %v5584, %v5584
  %v7126 = vmul.f32 %v5585, %v5585
  %v7127 = vmul.f32 %v5586, %v5586
  %v7128 = vmul.f32 %v5587, %v5587
  %v7129 = vmul.f32 %v5588, %v5588
  %v7130 = vmul.f32 %v5589, %v5589
  %v7131 = vmul.f32 %v5590, %v5590
  %v7132 = vmul.f32 %v5591, %v5591
  %v7133 = vmul.f32 %v5592, %v5592
  %v7134 = vmul.f32 %v5593, %v5593
  %v7135 = vmul.f32 %v5594, %v5594
  %v7136 = vmul.f32 %v5595, %v5595
  %v7137 = vmul.f32 %v5596, %v5596
  %v7138 = vmul.f32 %v5597, %v5597
  %v7139 = vmul.f32 %v5598, %v5598
  %v7140 = vmul.f32 %v5599, %v5599
  %v7141 = vmul.f32 %v5600, %v5600
  %v7142 = vmul.f32 %v5601, %v5601
  %v7143 = vmul.f32 %v5602, %v5602
  %v7144 = vmul.f32 %v5603, %v5603
  %v7145 = vmul.f32 %v5604, %v5604
  %v7146 = vmul.f32 %v5605, %v5605
  %v7147 = vmul.f32 %v5606, %v5606
  %v7148 = vmul.f32 %v5607, %v5607
  %v7149 = vmul.f32 %v5608, %v5608
  %v7150 = vmul.f32 %v5609, %v5609
  %v7151 = vmul.f32 %v5610, %v5610
  %v7152 = vmul.f32 %v5611, %v5611
  %v7153 = vmul.f32 %v5612, %v5612
  %v7154 = vmul.f32 %v5613, %v5613
  %v7155 = vmul.f32 %v5614, %v5614
  %v7156 = vmul.f32 %v5615, %v5615
  %v7157 = vmul.f32 %v5616, %v5616
  %v7158 = vmul.f32 %v5617, %v5617
  %v7159 = vmul.f32 %v5618, %v5618
  %v7160 = vmul.f32 %v5619, %v5619
  %v7161 = vmul.f32 %v5620, %v5620
  %v7162 = vmul.f32 %v5621, %v5621
  %v7163 = vmul.f32 %v5622, %v5622
  %v7164 = vmul.f32 %v5623, %v5623
  %v7165 = vmul.f32 %v5624, %v5624
  %v7166 = vmul.f32 %v5625, %v5625
  %v7167 = vmul.f32 %v5626, %v5626
  %v7168 = vmul.f32 %v5627, %v5627
  %v7169 = vmul.f32 %v5628, %v5628
  %v7170 = vmul.f32 %v5629, %v5629
  %v7171 = vmul.f32 %v5630, %v5630
  %v7172 = vmul.f32 %v5631, %v5631
  %v7173 = vmul.f32 %v5632, %v5632
  %v7174 = vmul.f32 %v5633, %v5633
  %v7175 = vmul.f32 %v5634, %v5634
  %v7176 = vmul.f32 %v5635, %v5635
  %v7177 = vmul.f32 %v5636, %v5636
  %v7178 = vmul.f32 %v5637, %v5637
  %v7179 = vmul.f32 %v5638, %v5638
  %v7180 = vmul.f32 %v5639, %v5639
  %v7181 = vmul.f32 %v5640, %v5640
  %v7182 = vmul.f32 %v5641, %v5641
  %v7183 = vmul.f32 %v5642, %v5642
  %v7184 = vmul.f32 %v5643, %v5643
  %v7185 = vmul.f32 %v5644, %v5644
  %v7186 = vmul.f32 %v5645, %v5645
  %v7187 = vmul.f32 %v5646, %v5646
  %v7188 = vmul.f32 %v5647, %v5647
  %v7189 = vmul.f32 %v5648, %v5648
  %v7190 = vmul.f32 %v5649, %v5649
  %v7191 = vmul.f32 %v5650, %v5650
  %v7192 = vmul.f32 %v5651, %v5651
  %v7193 = vmul.f32 %v5652, %v5652
  %v7194 = vmul.f32 %v5653, %v5653
  %v7195 = vmul.f32 %v5654, %v5654
  %v7196 = vmul.f32 %v5655, %v5655
  %v7197 = vmul.f32 %v5656, %v5656
  %v7198 = vmul.f32 %v5657, %v5657
  %v7199 = vmul.f32 %v5658, %v5658
  %v7200 = vmul.f32 %v5659, %v5659
  %v7201 = vmul.f32 %v5660, %v5660
  %v7202 = vmul.f32 %v5661, %v5661
  %v7203 = vmul.f32 %v5662, %v5662
  %v7204 = vmul.f32 %v5663, %v5663
  %v7205 = vmul.f32 %v5664, %v5664
  %v7206 = vmul.f32 %v5665, %v5665
  %v7207 = vmul.f32 %v5666, %v5666
  %v7208 = vmul.f32 %v5667, %v5667
  %v7209 = vmul.f32 %v5668, %v5668
  %v7210 = vmul.f32 %v5669, %v5669
  %v7211 = vmul.f32 %v5670, %v5670
  %v7212 = vmul.f32 %v5671, %v5671
  %v7213 = vmul.f32 %v5672, %v5672
  %v7214 = vmul.f32 %v5673, %v5673
  %v7215 = vmul.f32 %v5674, %v5674
  %v7216 = vmul.f32 %v5675, %v5675
  %v7217 = vmul.f32 %v5676, %v5676
  %v7218 = vmul.f32 %v5677, %v5677
  %v7219 = vmul.f32 %v5678, %v5678
  %v7220 = vmul.f32 %v5679, %v5679
  %v7221 = vmul.f32 %v5680, %v5680
  %v7222 = vmul.f32 %v5681, %v5681
  %v7223 = vmul.f32 %v5682, %v5682
  %v7224 = vmul.f32 %v5683, %v5683
  %v7225 = vmul.f32 %v5684, %v5684
  %v7226 = vmul.f32 %v5685, %v5685
  %v7227 = vmul.f32 %v5686, %v5686
  %v7228 = vmul.f32 %v5687, %v5687
  %v7229 = vmul.f32 %v5688, %v5688
  %v7230 = vmul.f32 %v5689, %v5689
  %v7231 = vmul.f32 %v5690, %v5690
  %v7232 = vmul.f32 %v5691, %v5691
  %v7233 = vmul.f32 %v5692, %v5692
  %v7234 = vsel %vm542, %v6722, 0.0
  %v7235 = vsel %vm542, %v6723, 0.0
  %v7236 = vadd.f32 %v7234, %v7235
  %v7237 = vsel %vm542, %v6724, 0.0
  %v7238 = vadd.f32 %v7236, %v7237
  %v7239 = vsel %vm542, %v6725, 0.0
  %v7240 = vadd.f32 %v7238, %v7239
  %v7241 = vsel %vm542, %v6726, 0.0
  %v7242 = vadd.f32 %v7240, %v7241
  %v7243 = vsel %vm542, %v6727, 0.0
  %v7244 = vadd.f32 %v7242, %v7243
  %v7245 = vsel %vm542, %v6728, 0.0
  %v7246 = vadd.f32 %v7244, %v7245
  %v7247 = vsel %vm542, %v6729, 0.0
  %v7248 = vadd.f32 %v7246, %v7247
  %v7249 = vsel %vm542, %v6730, 0.0
  %v7250 = vadd.f32 %v7248, %v7249
  %v7251 = vsel %vm542, %v6731, 0.0
  %v7252 = vadd.f32 %v7250, %v7251
  %v7253 = vsel %vm542, %v6732, 0.0
  %v7254 = vadd.f32 %v7252, %v7253
  %v7255 = vsel %vm542, %v6733, 0.0
  %v7256 = vadd.f32 %v7254, %v7255
  %v7257 = vsel %vm542, %v6734, 0.0
  %v7258 = vadd.f32 %v7256, %v7257
  %v7259 = vsel %vm542, %v6735, 0.0
  %v7260 = vadd.f32 %v7258, %v7259
  %v7261 = vsel %vm542, %v6736, 0.0
  %v7262 = vadd.f32 %v7260, %v7261
  %v7263 = vsel %vm542, %v6737, 0.0
  %v7264 = vadd.f32 %v7262, %v7263
  %v7265 = vsel %vm542, %v6738, 0.0
  %v7266 = vadd.f32 %v7264, %v7265
  %v7267 = vsel %vm542, %v6739, 0.0
  %v7268 = vadd.f32 %v7266, %v7267
  %v7269 = vsel %vm542, %v6740, 0.0
  %v7270 = vadd.f32 %v7268, %v7269
  %v7271 = vsel %vm542, %v6741, 0.0
  %v7272 = vadd.f32 %v7270, %v7271
  %v7273 = vsel %vm542, %v6742, 0.0
  %v7274 = vadd.f32 %v7272, %v7273
  %v7275 = vsel %vm542, %v6743, 0.0
  %v7276 = vadd.f32 %v7274, %v7275
  %v7277 = vsel %vm542, %v6744, 0.0
  %v7278 = vadd.f32 %v7276, %v7277
  %v7279 = vsel %vm542, %v6745, 0.0
  %v7280 = vadd.f32 %v7278, %v7279
  %v7281 = vsel %vm542, %v6746, 0.0
  %v7282 = vadd.f32 %v7280, %v7281
  %v7283 = vsel %vm542, %v6747, 0.0
  %v7284 = vadd.f32 %v7282, %v7283
  %v7285 = vsel %vm542, %v6748, 0.0
  %v7286 = vadd.f32 %v7284, %v7285
  %v7287 = vsel %vm542, %v6749, 0.0
  %v7288 = vadd.f32 %v7286, %v7287
  %v7289 = vsel %vm542, %v6750, 0.0
  %v7290 = vadd.f32 %v7288, %v7289
  %v7291 = vsel %vm542, %v6751, 0.0
  %v7292 = vadd.f32 %v7290, %v7291
  %v7293 = vsel %vm542, %v6752, 0.0
  %v7294 = vadd.f32 %v7292, %v7293
  %v7295 = vsel %vm542, %v6753, 0.0
  %v7296 = vadd.f32 %v7294, %v7295
  %v7297 = vsel %vm542, %v6754, 0.0
  %v7298 = vadd.f32 %v7296, %v7297
  %v7299 = vsel %vm542, %v6755, 0.0
  %v7300 = vadd.f32 %v7298, %v7299
  %v7301 = vsel %vm542, %v6756, 0.0
  %v7302 = vadd.f32 %v7300, %v7301
  %v7303 = vsel %vm542, %v6757, 0.0
  %v7304 = vadd.f32 %v7302, %v7303
  %v7305 = vsel %vm542, %v6758, 0.0
  %v7306 = vadd.f32 %v7304, %v7305
  %v7307 = vsel %vm542, %v6759, 0.0
  %v7308 = vadd.f32 %v7306, %v7307
  %v7309 = vsel %vm542, %v6760, 0.0
  %v7310 = vadd.f32 %v7308, %v7309
  %v7311 = vsel %vm542, %v6761, 0.0
  %v7312 = vadd.f32 %v7310, %v7311
  %v7313 = vsel %vm542, %v6762, 0.0
  %v7314 = vadd.f32 %v7312, %v7313
  %v7315 = vsel %vm542, %v6763, 0.0
  %v7316 = vadd.f32 %v7314, %v7315
  %v7317 = vsel %vm542, %v6764, 0.0
  %v7318 = vadd.f32 %v7316, %v7317
  %v7319 = vsel %vm542, %v6765, 0.0
  %v7320 = vadd.f32 %v7318, %v7319
  %v7321 = vsel %vm542, %v6766, 0.0
  %v7322 = vadd.f32 %v7320, %v7321
  %v7323 = vsel %vm542, %v6767, 0.0
  %v7324 = vadd.f32 %v7322, %v7323
  %v7325 = vsel %vm542, %v6768, 0.0
  %v7326 = vadd.f32 %v7324, %v7325
  %v7327 = vsel %vm542, %v6769, 0.0
  %v7328 = vadd.f32 %v7326, %v7327
  %v7329 = vsel %vm542, %v6770, 0.0
  %v7330 = vadd.f32 %v7328, %v7329
  %v7331 = vsel %vm542, %v6771, 0.0
  %v7332 = vadd.f32 %v7330, %v7331
  %v7333 = vsel %vm542, %v6772, 0.0
  %v7334 = vadd.f32 %v7332, %v7333
  %v7335 = vsel %vm542, %v6773, 0.0
  %v7336 = vadd.f32 %v7334, %v7335
  %v7337 = vsel %vm542, %v6774, 0.0
  %v7338 = vadd.f32 %v7336, %v7337
  %v7339 = vsel %vm542, %v6775, 0.0
  %v7340 = vadd.f32 %v7338, %v7339
  %v7341 = vsel %vm542, %v6776, 0.0
  %v7342 = vadd.f32 %v7340, %v7341
  %v7343 = vsel %vm542, %v6777, 0.0
  %v7344 = vadd.f32 %v7342, %v7343
  %v7345 = vsel %vm542, %v6778, 0.0
  %v7346 = vadd.f32 %v7344, %v7345
  %v7347 = vsel %vm542, %v6779, 0.0
  %v7348 = vadd.f32 %v7346, %v7347
  %v7349 = vsel %vm542, %v6780, 0.0
  %v7350 = vadd.f32 %v7348, %v7349
  %v7351 = vsel %vm542, %v6781, 0.0
  %v7352 = vadd.f32 %v7350, %v7351
  %v7353 = vsel %vm542, %v6782, 0.0
  %v7354 = vadd.f32 %v7352, %v7353
  %v7355 = vsel %vm542, %v6783, 0.0
  %v7356 = vadd.f32 %v7354, %v7355
  %v7357 = vsel %vm542, %v6784, 0.0
  %v7358 = vadd.f32 %v7356, %v7357
  %v7359 = vsel %vm542, %v6785, 0.0
  %v7360 = vadd.f32 %v7358, %v7359
  %v7361 = vsel %vm542, %v6786, 0.0
  %v7362 = vadd.f32 %v7360, %v7361
  %v7363 = vsel %vm542, %v6787, 0.0
  %v7364 = vadd.f32 %v7362, %v7363
  %v7365 = vsel %vm542, %v6788, 0.0
  %v7366 = vadd.f32 %v7364, %v7365
  %v7367 = vsel %vm542, %v6789, 0.0
  %v7368 = vadd.f32 %v7366, %v7367
  %v7369 = vsel %vm542, %v6790, 0.0
  %v7370 = vadd.f32 %v7368, %v7369
  %v7371 = vsel %vm542, %v6791, 0.0
  %v7372 = vadd.f32 %v7370, %v7371
  %v7373 = vsel %vm542, %v6792, 0.0
  %v7374 = vadd.f32 %v7372, %v7373
  %v7375 = vsel %vm542, %v6793, 0.0
  %v7376 = vadd.f32 %v7374, %v7375
  %v7377 = vsel %vm542, %v6794, 0.0
  %v7378 = vadd.f32 %v7376, %v7377
  %v7379 = vsel %vm542, %v6795, 0.0
  %v7380 = vadd.f32 %v7378, %v7379
  %v7381 = vsel %vm542, %v6796, 0.0
  %v7382 = vadd.f32 %v7380, %v7381
  %v7383 = vsel %vm542, %v6797, 0.0
  %v7384 = vadd.f32 %v7382, %v7383
  %v7385 = vsel %vm542, %v6798, 0.0
  %v7386 = vadd.f32 %v7384, %v7385
  %v7387 = vsel %vm542, %v6799, 0.0
  %v7388 = vadd.f32 %v7386, %v7387
  %v7389 = vsel %vm542, %v6800, 0.0
  %v7390 = vadd.f32 %v7388, %v7389
  %v7391 = vsel %vm542, %v6801, 0.0
  %v7392 = vadd.f32 %v7390, %v7391
  %v7393 = vsel %vm542, %v6802, 0.0
  %v7394 = vadd.f32 %v7392, %v7393
  %v7395 = vsel %vm542, %v6803, 0.0
  %v7396 = vadd.f32 %v7394, %v7395
  %v7397 = vsel %vm542, %v6804, 0.0
  %v7398 = vadd.f32 %v7396, %v7397
  %v7399 = vsel %vm542, %v6805, 0.0
  %v7400 = vadd.f32 %v7398, %v7399
  %v7401 = vsel %vm542, %v6806, 0.0
  %v7402 = vadd.f32 %v7400, %v7401
  %v7403 = vsel %vm542, %v6807, 0.0
  %v7404 = vadd.f32 %v7402, %v7403
  %v7405 = vsel %vm542, %v6808, 0.0
  %v7406 = vadd.f32 %v7404, %v7405
  %v7407 = vsel %vm542, %v6809, 0.0
  %v7408 = vadd.f32 %v7406, %v7407
  %v7409 = vsel %vm542, %v6810, 0.0
  %v7410 = vadd.f32 %v7408, %v7409
  %v7411 = vsel %vm542, %v6811, 0.0
  %v7412 = vadd.f32 %v7410, %v7411
  %v7413 = vsel %vm542, %v6812, 0.0
  %v7414 = vadd.f32 %v7412, %v7413
  %v7415 = vsel %vm542, %v6813, 0.0
  %v7416 = vadd.f32 %v7414, %v7415
  %v7417 = vsel %vm542, %v6814, 0.0
  %v7418 = vadd.f32 %v7416, %v7417
  %v7419 = vsel %vm542, %v6815, 0.0
  %v7420 = vadd.f32 %v7418, %v7419
  %v7421 = vsel %vm542, %v6816, 0.0
  %v7422 = vadd.f32 %v7420, %v7421
  %v7423 = vsel %vm542, %v6817, 0.0
  %v7424 = vadd.f32 %v7422, %v7423
  %v7425 = vsel %vm542, %v6818, 0.0
  %v7426 = vadd.f32 %v7424, %v7425
  %v7427 = vsel %vm542, %v6819, 0.0
  %v7428 = vadd.f32 %v7426, %v7427
  %v7429 = vsel %vm542, %v6820, 0.0
  %v7430 = vadd.f32 %v7428, %v7429
  %v7431 = vsel %vm542, %v6821, 0.0
  %v7432 = vadd.f32 %v7430, %v7431
  %v7433 = vsel %vm542, %v6822, 0.0
  %v7434 = vadd.f32 %v7432, %v7433
  %v7435 = vsel %vm542, %v6823, 0.0
  %v7436 = vadd.f32 %v7434, %v7435
  %v7437 = vsel %vm542, %v6824, 0.0
  %v7438 = vadd.f32 %v7436, %v7437
  %v7439 = vsel %vm542, %v6825, 0.0
  %v7440 = vadd.f32 %v7438, %v7439
  %v7441 = vsel %vm542, %v6826, 0.0
  %v7442 = vadd.f32 %v7440, %v7441
  %v7443 = vsel %vm542, %v6827, 0.0
  %v7444 = vadd.f32 %v7442, %v7443
  %v7445 = vsel %vm542, %v6828, 0.0
  %v7446 = vadd.f32 %v7444, %v7445
  %v7447 = vsel %vm542, %v6829, 0.0
  %v7448 = vadd.f32 %v7446, %v7447
  %v7449 = vsel %vm542, %v6830, 0.0
  %v7450 = vadd.f32 %v7448, %v7449
  %v7451 = vsel %vm542, %v6831, 0.0
  %v7452 = vadd.f32 %v7450, %v7451
  %v7453 = vsel %vm542, %v6832, 0.0
  %v7454 = vadd.f32 %v7452, %v7453
  %v7455 = vsel %vm542, %v6833, 0.0
  %v7456 = vadd.f32 %v7454, %v7455
  %v7457 = vsel %vm542, %v6834, 0.0
  %v7458 = vadd.f32 %v7456, %v7457
  %v7459 = vsel %vm542, %v6835, 0.0
  %v7460 = vadd.f32 %v7458, %v7459
  %v7461 = vsel %vm542, %v6836, 0.0
  %v7462 = vadd.f32 %v7460, %v7461
  %v7463 = vsel %vm542, %v6837, 0.0
  %v7464 = vadd.f32 %v7462, %v7463
  %v7465 = vsel %vm542, %v6838, 0.0
  %v7466 = vadd.f32 %v7464, %v7465
  %v7467 = vsel %vm542, %v6839, 0.0
  %v7468 = vadd.f32 %v7466, %v7467
  %v7469 = vsel %vm542, %v6840, 0.0
  %v7470 = vadd.f32 %v7468, %v7469
  %v7471 = vsel %vm542, %v6841, 0.0
  %v7472 = vadd.f32 %v7470, %v7471
  %v7473 = vsel %vm542, %v6842, 0.0
  %v7474 = vadd.f32 %v7472, %v7473
  %v7475 = vsel %vm542, %v6843, 0.0
  %v7476 = vadd.f32 %v7474, %v7475
  %v7477 = vsel %vm542, %v6844, 0.0
  %v7478 = vadd.f32 %v7476, %v7477
  %v7479 = vsel %vm542, %v6845, 0.0
  %v7480 = vadd.f32 %v7478, %v7479
  %v7481 = vsel %vm542, %v6846, 0.0
  %v7482 = vadd.f32 %v7480, %v7481
  %v7483 = vsel %vm542, %v6847, 0.0
  %v7484 = vadd.f32 %v7482, %v7483
  %v7485 = vsel %vm542, %v6848, 0.0
  %v7486 = vadd.f32 %v7484, %v7485
  %v7487 = vsel %vm542, %v6849, 0.0
  %v7488 = vadd.f32 %v7486, %v7487
  %v7489 = vsel %vm542, %v6850, 0.0
  %v7490 = vadd.f32 %v7488, %v7489
  %v7491 = vsel %vm542, %v6851, 0.0
  %v7492 = vadd.f32 %v7490, %v7491
  %v7493 = vsel %vm542, %v6852, 0.0
  %v7494 = vadd.f32 %v7492, %v7493
  %v7495 = vsel %vm542, %v6853, 0.0
  %v7496 = vadd.f32 %v7494, %v7495
  %v7497 = vsel %vm542, %v6854, 0.0
  %v7498 = vadd.f32 %v7496, %v7497
  %v7499 = vsel %vm542, %v6855, 0.0
  %v7500 = vadd.f32 %v7498, %v7499
  %v7501 = vsel %vm542, %v6856, 0.0
  %v7502 = vadd.f32 %v7500, %v7501
  %v7503 = vsel %vm542, %v6857, 0.0
  %v7504 = vadd.f32 %v7502, %v7503
  %v7505 = vsel %vm542, %v6858, 0.0
  %v7506 = vadd.f32 %v7504, %v7505
  %v7507 = vsel %vm542, %v6859, 0.0
  %v7508 = vadd.f32 %v7506, %v7507
  %v7509 = vsel %vm542, %v6860, 0.0
  %v7510 = vadd.f32 %v7508, %v7509
  %v7511 = vsel %vm542, %v6861, 0.0
  %v7512 = vadd.f32 %v7510, %v7511
  %v7513 = vsel %vm542, %v6862, 0.0
  %v7514 = vadd.f32 %v7512, %v7513
  %v7515 = vsel %vm542, %v6863, 0.0
  %v7516 = vadd.f32 %v7514, %v7515
  %v7517 = vsel %vm542, %v6864, 0.0
  %v7518 = vadd.f32 %v7516, %v7517
  %v7519 = vsel %vm542, %v6865, 0.0
  %v7520 = vadd.f32 %v7518, %v7519
  %v7521 = vsel %vm542, %v6866, 0.0
  %v7522 = vadd.f32 %v7520, %v7521
  %v7523 = vsel %vm542, %v6867, 0.0
  %v7524 = vadd.f32 %v7522, %v7523
  %v7525 = vsel %vm542, %v6868, 0.0
  %v7526 = vadd.f32 %v7524, %v7525
  %v7527 = vsel %vm542, %v6869, 0.0
  %v7528 = vadd.f32 %v7526, %v7527
  %v7529 = vsel %vm542, %v6870, 0.0
  %v7530 = vadd.f32 %v7528, %v7529
  %v7531 = vsel %vm542, %v6871, 0.0
  %v7532 = vadd.f32 %v7530, %v7531
  %v7533 = vsel %vm542, %v6872, 0.0
  %v7534 = vadd.f32 %v7532, %v7533
  %v7535 = vsel %vm542, %v6873, 0.0
  %v7536 = vadd.f32 %v7534, %v7535
  %v7537 = vsel %vm542, %v6874, 0.0
  %v7538 = vadd.f32 %v7536, %v7537
  %v7539 = vsel %vm542, %v6875, 0.0
  %v7540 = vadd.f32 %v7538, %v7539
  %v7541 = vsel %vm542, %v6876, 0.0
  %v7542 = vadd.f32 %v7540, %v7541
  %v7543 = vsel %vm542, %v6877, 0.0
  %v7544 = vadd.f32 %v7542, %v7543
  %v7545 = vsel %vm542, %v6878, 0.0
  %v7546 = vadd.f32 %v7544, %v7545
  %v7547 = vsel %vm542, %v6879, 0.0
  %v7548 = vadd.f32 %v7546, %v7547
  %v7549 = vsel %vm542, %v6880, 0.0
  %v7550 = vadd.f32 %v7548, %v7549
  %v7551 = vsel %vm542, %v6881, 0.0
  %v7552 = vadd.f32 %v7550, %v7551
  %v7553 = vsel %vm542, %v6882, 0.0
  %v7554 = vadd.f32 %v7552, %v7553
  %v7555 = vsel %vm542, %v6883, 0.0
  %v7556 = vadd.f32 %v7554, %v7555
  %v7557 = vsel %vm542, %v6884, 0.0
  %v7558 = vadd.f32 %v7556, %v7557
  %v7559 = vsel %vm542, %v6885, 0.0
  %v7560 = vadd.f32 %v7558, %v7559
  %v7561 = vsel %vm542, %v6886, 0.0
  %v7562 = vadd.f32 %v7560, %v7561
  %v7563 = vsel %vm542, %v6887, 0.0
  %v7564 = vadd.f32 %v7562, %v7563
  %v7565 = vsel %vm542, %v6888, 0.0
  %v7566 = vadd.f32 %v7564, %v7565
  %v7567 = vsel %vm542, %v6889, 0.0
  %v7568 = vadd.f32 %v7566, %v7567
  %v7569 = vsel %vm542, %v6890, 0.0
  %v7570 = vadd.f32 %v7568, %v7569
  %v7571 = vsel %vm542, %v6891, 0.0
  %v7572 = vadd.f32 %v7570, %v7571
  %v7573 = vsel %vm542, %v6892, 0.0
  %v7574 = vadd.f32 %v7572, %v7573
  %v7575 = vsel %vm542, %v6893, 0.0
  %v7576 = vadd.f32 %v7574, %v7575
  %v7577 = vsel %vm542, %v6894, 0.0
  %v7578 = vadd.f32 %v7576, %v7577
  %v7579 = vsel %vm542, %v6895, 0.0
  %v7580 = vadd.f32 %v7578, %v7579
  %v7581 = vsel %vm542, %v6896, 0.0
  %v7582 = vadd.f32 %v7580, %v7581
  %v7583 = vsel %vm542, %v6897, 0.0
  %v7584 = vadd.f32 %v7582, %v7583
  %v7585 = vsel %vm542, %v6898, 0.0
  %v7586 = vadd.f32 %v7584, %v7585
  %v7587 = vsel %vm542, %v6899, 0.0
  %v7588 = vadd.f32 %v7586, %v7587
  %v7589 = vsel %vm542, %v6900, 0.0
  %v7590 = vadd.f32 %v7588, %v7589
  %v7591 = vsel %vm542, %v6901, 0.0
  %v7592 = vadd.f32 %v7590, %v7591
  %v7593 = vsel %vm542, %v6902, 0.0
  %v7594 = vadd.f32 %v7592, %v7593
  %v7595 = vsel %vm542, %v6903, 0.0
  %v7596 = vadd.f32 %v7594, %v7595
  %v7597 = vsel %vm542, %v6904, 0.0
  %v7598 = vadd.f32 %v7596, %v7597
  %v7599 = vsel %vm542, %v6905, 0.0
  %v7600 = vadd.f32 %v7598, %v7599
  %v7601 = vsel %vm542, %v6906, 0.0
  %v7602 = vadd.f32 %v7600, %v7601
  %v7603 = vsel %vm542, %v6907, 0.0
  %v7604 = vadd.f32 %v7602, %v7603
  %v7605 = vsel %vm542, %v6908, 0.0
  %v7606 = vadd.f32 %v7604, %v7605
  %v7607 = vsel %vm542, %v6909, 0.0
  %v7608 = vadd.f32 %v7606, %v7607
  %v7609 = vsel %vm542, %v6910, 0.0
  %v7610 = vadd.f32 %v7608, %v7609
  %v7611 = vsel %vm542, %v6911, 0.0
  %v7612 = vadd.f32 %v7610, %v7611
  %v7613 = vsel %vm542, %v6912, 0.0
  %v7614 = vadd.f32 %v7612, %v7613
  %v7615 = vsel %vm542, %v6913, 0.0
  %v7616 = vadd.f32 %v7614, %v7615
  %v7617 = vsel %vm542, %v6914, 0.0
  %v7618 = vadd.f32 %v7616, %v7617
  %v7619 = vsel %vm542, %v6915, 0.0
  %v7620 = vadd.f32 %v7618, %v7619
  %v7621 = vsel %vm542, %v6916, 0.0
  %v7622 = vadd.f32 %v7620, %v7621
  %v7623 = vsel %vm542, %v6917, 0.0
  %v7624 = vadd.f32 %v7622, %v7623
  %v7625 = vsel %vm542, %v6918, 0.0
  %v7626 = vadd.f32 %v7624, %v7625
  %v7627 = vsel %vm542, %v6919, 0.0
  %v7628 = vadd.f32 %v7626, %v7627
  %v7629 = vsel %vm542, %v6920, 0.0
  %v7630 = vadd.f32 %v7628, %v7629
  %v7631 = vsel %vm542, %v6921, 0.0
  %v7632 = vadd.f32 %v7630, %v7631
  %v7633 = vsel %vm542, %v6922, 0.0
  %v7634 = vadd.f32 %v7632, %v7633
  %v7635 = vsel %vm542, %v6923, 0.0
  %v7636 = vadd.f32 %v7634, %v7635
  %v7637 = vsel %vm542, %v6924, 0.0
  %v7638 = vadd.f32 %v7636, %v7637
  %v7639 = vsel %vm542, %v6925, 0.0
  %v7640 = vadd.f32 %v7638, %v7639
  %v7641 = vsel %vm542, %v6926, 0.0
  %v7642 = vadd.f32 %v7640, %v7641
  %v7643 = vsel %vm542, %v6927, 0.0
  %v7644 = vadd.f32 %v7642, %v7643
  %v7645 = vsel %vm542, %v6928, 0.0
  %v7646 = vadd.f32 %v7644, %v7645
  %v7647 = vsel %vm542, %v6929, 0.0
  %v7648 = vadd.f32 %v7646, %v7647
  %v7649 = vsel %vm542, %v6930, 0.0
  %v7650 = vadd.f32 %v7648, %v7649
  %v7651 = vsel %vm542, %v6931, 0.0
  %v7652 = vadd.f32 %v7650, %v7651
  %v7653 = vsel %vm542, %v6932, 0.0
  %v7654 = vadd.f32 %v7652, %v7653
  %v7655 = vsel %vm542, %v6933, 0.0
  %v7656 = vadd.f32 %v7654, %v7655
  %v7657 = vsel %vm542, %v6934, 0.0
  %v7658 = vadd.f32 %v7656, %v7657
  %v7659 = vsel %vm542, %v6935, 0.0
  %v7660 = vadd.f32 %v7658, %v7659
  %v7661 = vsel %vm542, %v6936, 0.0
  %v7662 = vadd.f32 %v7660, %v7661
  %v7663 = vsel %vm542, %v6937, 0.0
  %v7664 = vadd.f32 %v7662, %v7663
  %v7665 = vsel %vm542, %v6938, 0.0
  %v7666 = vadd.f32 %v7664, %v7665
  %v7667 = vsel %vm542, %v6939, 0.0
  %v7668 = vadd.f32 %v7666, %v7667
  %v7669 = vsel %vm542, %v6940, 0.0
  %v7670 = vadd.f32 %v7668, %v7669
  %v7671 = vsel %vm542, %v6941, 0.0
  %v7672 = vadd.f32 %v7670, %v7671
  %v7673 = vsel %vm542, %v6942, 0.0
  %v7674 = vadd.f32 %v7672, %v7673
  %v7675 = vsel %vm542, %v6943, 0.0
  %v7676 = vadd.f32 %v7674, %v7675
  %v7677 = vsel %vm542, %v6944, 0.0
  %v7678 = vadd.f32 %v7676, %v7677
  %v7679 = vsel %vm542, %v6945, 0.0
  %v7680 = vadd.f32 %v7678, %v7679
  %v7681 = vsel %vm542, %v6946, 0.0
  %v7682 = vadd.f32 %v7680, %v7681
  %v7683 = vsel %vm542, %v6947, 0.0
  %v7684 = vadd.f32 %v7682, %v7683
  %v7685 = vsel %vm542, %v6948, 0.0
  %v7686 = vadd.f32 %v7684, %v7685
  %v7687 = vsel %vm542, %v6949, 0.0
  %v7688 = vadd.f32 %v7686, %v7687
  %v7689 = vsel %vm542, %v6950, 0.0
  %v7690 = vadd.f32 %v7688, %v7689
  %v7691 = vsel %vm542, %v6951, 0.0
  %v7692 = vadd.f32 %v7690, %v7691
  %v7693 = vsel %vm542, %v6952, 0.0
  %v7694 = vadd.f32 %v7692, %v7693
  %v7695 = vsel %vm542, %v6953, 0.0
  %v7696 = vadd.f32 %v7694, %v7695
  %v7697 = vsel %vm542, %v6954, 0.0
  %v7698 = vadd.f32 %v7696, %v7697
  %v7699 = vsel %vm542, %v6955, 0.0
  %v7700 = vadd.f32 %v7698, %v7699
  %v7701 = vsel %vm542, %v6956, 0.0
  %v7702 = vadd.f32 %v7700, %v7701
  %v7703 = vsel %vm542, %v6957, 0.0
  %v7704 = vadd.f32 %v7702, %v7703
  %v7705 = vsel %vm542, %v6958, 0.0
  %v7706 = vadd.f32 %v7704, %v7705
  %v7707 = vsel %vm542, %v6959, 0.0
  %v7708 = vadd.f32 %v7706, %v7707
  %v7709 = vsel %vm542, %v6960, 0.0
  %v7710 = vadd.f32 %v7708, %v7709
  %v7711 = vsel %vm542, %v6961, 0.0
  %v7712 = vadd.f32 %v7710, %v7711
  %v7713 = vsel %vm542, %v6962, 0.0
  %v7714 = vadd.f32 %v7712, %v7713
  %v7715 = vsel %vm542, %v6963, 0.0
  %v7716 = vadd.f32 %v7714, %v7715
  %v7717 = vsel %vm542, %v6964, 0.0
  %v7718 = vadd.f32 %v7716, %v7717
  %v7719 = vsel %vm542, %v6965, 0.0
  %v7720 = vadd.f32 %v7718, %v7719
  %v7721 = vsel %vm542, %v6966, 0.0
  %v7722 = vadd.f32 %v7720, %v7721
  %v7723 = vsel %vm542, %v6967, 0.0
  %v7724 = vadd.f32 %v7722, %v7723
  %v7725 = vsel %vm542, %v6968, 0.0
  %v7726 = vadd.f32 %v7724, %v7725
  %v7727 = vsel %vm542, %v6969, 0.0
  %v7728 = vadd.f32 %v7726, %v7727
  %v7729 = vsel %vm542, %v6970, 0.0
  %v7730 = vadd.f32 %v7728, %v7729
  %v7731 = vsel %vm542, %v6971, 0.0
  %v7732 = vadd.f32 %v7730, %v7731
  %v7733 = vsel %vm542, %v6972, 0.0
  %v7734 = vadd.f32 %v7732, %v7733
  %v7735 = vsel %vm542, %v6973, 0.0
  %v7736 = vadd.f32 %v7734, %v7735
  %v7737 = vsel %vm542, %v6974, 0.0
  %v7738 = vadd.f32 %v7736, %v7737
  %v7739 = vsel %vm542, %v6975, 0.0
  %v7740 = vadd.f32 %v7738, %v7739
  %v7741 = vsel %vm542, %v6976, 0.0
  %v7742 = vadd.f32 %v7740, %v7741
  %v7743 = vsel %vm542, %v6977, 0.0
  %v7744 = vadd.f32 %v7742, %v7743
  %v7745 = vsel %vm542, %v6978, 0.0
  %v7746 = vadd.f32 %v7744, %v7745
  %v7747 = vsel %vm542, %v6979, 0.0
  %v7748 = vadd.f32 %v7746, %v7747
  %v7749 = vsel %vm542, %v6980, 0.0
  %v7750 = vadd.f32 %v7748, %v7749
  %v7751 = vsel %vm542, %v6981, 0.0
  %v7752 = vadd.f32 %v7750, %v7751
  %v7753 = vsel %vm542, %v6982, 0.0
  %v7754 = vadd.f32 %v7752, %v7753
  %v7755 = vsel %vm542, %v6983, 0.0
  %v7756 = vadd.f32 %v7754, %v7755
  %v7757 = vsel %vm542, %v6984, 0.0
  %v7758 = vadd.f32 %v7756, %v7757
  %v7759 = vsel %vm542, %v6985, 0.0
  %v7760 = vadd.f32 %v7758, %v7759
  %v7761 = vsel %vm542, %v6986, 0.0
  %v7762 = vadd.f32 %v7760, %v7761
  %v7763 = vsel %vm542, %v6987, 0.0
  %v7764 = vadd.f32 %v7762, %v7763
  %v7765 = vsel %vm542, %v6988, 0.0
  %v7766 = vadd.f32 %v7764, %v7765
  %v7767 = vsel %vm542, %v6989, 0.0
  %v7768 = vadd.f32 %v7766, %v7767
  %v7769 = vsel %vm542, %v6990, 0.0
  %v7770 = vadd.f32 %v7768, %v7769
  %v7771 = vsel %vm542, %v6991, 0.0
  %v7772 = vadd.f32 %v7770, %v7771
  %v7773 = vsel %vm542, %v6992, 0.0
  %v7774 = vadd.f32 %v7772, %v7773
  %v7775 = vsel %vm542, %v6993, 0.0
  %v7776 = vadd.f32 %v7774, %v7775
  %v7777 = vsel %vm542, %v6994, 0.0
  %v7778 = vadd.f32 %v7776, %v7777
  %v7779 = vsel %vm542, %v6995, 0.0
  %v7780 = vadd.f32 %v7778, %v7779
  %v7781 = vsel %vm542, %v6996, 0.0
  %v7782 = vadd.f32 %v7780, %v7781
  %v7783 = vsel %vm542, %v6997, 0.0
  %v7784 = vadd.f32 %v7782, %v7783
  %v7785 = vsel %vm542, %v6998, 0.0
  %v7786 = vadd.f32 %v7784, %v7785
  %v7787 = vsel %vm542, %v6999, 0.0
  %v7788 = vadd.f32 %v7786, %v7787
  %v7789 = vsel %vm542, %v7000, 0.0
  %v7790 = vadd.f32 %v7788, %v7789
  %v7791 = vsel %vm542, %v7001, 0.0
  %v7792 = vadd.f32 %v7790, %v7791
  %v7793 = vsel %vm542, %v7002, 0.0
  %v7794 = vadd.f32 %v7792, %v7793
  %v7795 = vsel %vm542, %v7003, 0.0
  %v7796 = vadd.f32 %v7794, %v7795
  %v7797 = vsel %vm542, %v7004, 0.0
  %v7798 = vadd.f32 %v7796, %v7797
  %v7799 = vsel %vm542, %v7005, 0.0
  %v7800 = vadd.f32 %v7798, %v7799
  %v7801 = vsel %vm542, %v7006, 0.0
  %v7802 = vadd.f32 %v7800, %v7801
  %v7803 = vsel %vm542, %v7007, 0.0
  %v7804 = vadd.f32 %v7802, %v7803
  %v7805 = vsel %vm542, %v7008, 0.0
  %v7806 = vadd.f32 %v7804, %v7805
  %v7807 = vsel %vm542, %v7009, 0.0
  %v7808 = vadd.f32 %v7806, %v7807
  %v7809 = vsel %vm542, %v7010, 0.0
  %v7810 = vadd.f32 %v7808, %v7809
  %v7811 = vsel %vm542, %v7011, 0.0
  %v7812 = vadd.f32 %v7810, %v7811
  %v7813 = vsel %vm542, %v7012, 0.0
  %v7814 = vadd.f32 %v7812, %v7813
  %v7815 = vsel %vm542, %v7013, 0.0
  %v7816 = vadd.f32 %v7814, %v7815
  %v7817 = vsel %vm542, %v7014, 0.0
  %v7818 = vadd.f32 %v7816, %v7817
  %v7819 = vsel %vm542, %v7015, 0.0
  %v7820 = vadd.f32 %v7818, %v7819
  %v7821 = vsel %vm542, %v7016, 0.0
  %v7822 = vadd.f32 %v7820, %v7821
  %v7823 = vsel %vm542, %v7017, 0.0
  %v7824 = vadd.f32 %v7822, %v7823
  %v7825 = vsel %vm542, %v7018, 0.0
  %v7826 = vadd.f32 %v7824, %v7825
  %v7827 = vsel %vm542, %v7019, 0.0
  %v7828 = vadd.f32 %v7826, %v7827
  %v7829 = vsel %vm542, %v7020, 0.0
  %v7830 = vadd.f32 %v7828, %v7829
  %v7831 = vsel %vm542, %v7021, 0.0
  %v7832 = vadd.f32 %v7830, %v7831
  %v7833 = vsel %vm542, %v7022, 0.0
  %v7834 = vadd.f32 %v7832, %v7833
  %v7835 = vsel %vm542, %v7023, 0.0
  %v7836 = vadd.f32 %v7834, %v7835
  %v7837 = vsel %vm542, %v7024, 0.0
  %v7838 = vadd.f32 %v7836, %v7837
  %v7839 = vsel %vm542, %v7025, 0.0
  %v7840 = vadd.f32 %v7838, %v7839
  %v7841 = vsel %vm542, %v7026, 0.0
  %v7842 = vadd.f32 %v7840, %v7841
  %v7843 = vsel %vm542, %v7027, 0.0
  %v7844 = vadd.f32 %v7842, %v7843
  %v7845 = vsel %vm542, %v7028, 0.0
  %v7846 = vadd.f32 %v7844, %v7845
  %v7847 = vsel %vm542, %v7029, 0.0
  %v7848 = vadd.f32 %v7846, %v7847
  %v7849 = vsel %vm542, %v7030, 0.0
  %v7850 = vadd.f32 %v7848, %v7849
  %v7851 = vsel %vm542, %v7031, 0.0
  %v7852 = vadd.f32 %v7850, %v7851
  %v7853 = vsel %vm542, %v7032, 0.0
  %v7854 = vadd.f32 %v7852, %v7853
  %v7855 = vsel %vm542, %v7033, 0.0
  %v7856 = vadd.f32 %v7854, %v7855
  %v7857 = vsel %vm542, %v7034, 0.0
  %v7858 = vadd.f32 %v7856, %v7857
  %v7859 = vsel %vm542, %v7035, 0.0
  %v7860 = vadd.f32 %v7858, %v7859
  %v7861 = vsel %vm542, %v7036, 0.0
  %v7862 = vadd.f32 %v7860, %v7861
  %v7863 = vsel %vm542, %v7037, 0.0
  %v7864 = vadd.f32 %v7862, %v7863
  %v7865 = vsel %vm542, %v7038, 0.0
  %v7866 = vadd.f32 %v7864, %v7865
  %v7867 = vsel %vm542, %v7039, 0.0
  %v7868 = vadd.f32 %v7866, %v7867
  %v7869 = vsel %vm542, %v7040, 0.0
  %v7870 = vadd.f32 %v7868, %v7869
  %v7871 = vsel %vm542, %v7041, 0.0
  %v7872 = vadd.f32 %v7870, %v7871
  %v7873 = vsel %vm542, %v7042, 0.0
  %v7874 = vadd.f32 %v7872, %v7873
  %v7875 = vsel %vm542, %v7043, 0.0
  %v7876 = vadd.f32 %v7874, %v7875
  %v7877 = vsel %vm542, %v7044, 0.0
  %v7878 = vadd.f32 %v7876, %v7877
  %v7879 = vsel %vm542, %v7045, 0.0
  %v7880 = vadd.f32 %v7878, %v7879
  %v7881 = vsel %vm542, %v7046, 0.0
  %v7882 = vadd.f32 %v7880, %v7881
  %v7883 = vsel %vm542, %v7047, 0.0
  %v7884 = vadd.f32 %v7882, %v7883
  %v7885 = vsel %vm542, %v7048, 0.0
  %v7886 = vadd.f32 %v7884, %v7885
  %v7887 = vsel %vm542, %v7049, 0.0
  %v7888 = vadd.f32 %v7886, %v7887
  %v7889 = vsel %vm542, %v7050, 0.0
  %v7890 = vadd.f32 %v7888, %v7889
  %v7891 = vsel %vm542, %v7051, 0.0
  %v7892 = vadd.f32 %v7890, %v7891
  %v7893 = vsel %vm542, %v7052, 0.0
  %v7894 = vadd.f32 %v7892, %v7893
  %v7895 = vsel %vm542, %v7053, 0.0
  %v7896 = vadd.f32 %v7894, %v7895
  %v7897 = vsel %vm542, %v7054, 0.0
  %v7898 = vadd.f32 %v7896, %v7897
  %v7899 = vsel %vm542, %v7055, 0.0
  %v7900 = vadd.f32 %v7898, %v7899
  %v7901 = vsel %vm542, %v7056, 0.0
  %v7902 = vadd.f32 %v7900, %v7901
  %v7903 = vsel %vm542, %v7057, 0.0
  %v7904 = vadd.f32 %v7902, %v7903
  %v7905 = vsel %vm542, %v7058, 0.0
  %v7906 = vadd.f32 %v7904, %v7905
  %v7907 = vsel %vm542, %v7059, 0.0
  %v7908 = vadd.f32 %v7906, %v7907
  %v7909 = vsel %vm542, %v7060, 0.0
  %v7910 = vadd.f32 %v7908, %v7909
  %v7911 = vsel %vm542, %v7061, 0.0
  %v7912 = vadd.f32 %v7910, %v7911
  %v7913 = vsel %vm542, %v7062, 0.0
  %v7914 = vadd.f32 %v7912, %v7913
  %v7915 = vsel %vm542, %v7063, 0.0
  %v7916 = vadd.f32 %v7914, %v7915
  %v7917 = vsel %vm542, %v7064, 0.0
  %v7918 = vadd.f32 %v7916, %v7917
  %v7919 = vsel %vm542, %v7065, 0.0
  %v7920 = vadd.f32 %v7918, %v7919
  %v7921 = vsel %vm542, %v7066, 0.0
  %v7922 = vadd.f32 %v7920, %v7921
  %v7923 = vsel %vm542, %v7067, 0.0
  %v7924 = vadd.f32 %v7922, %v7923
  %v7925 = vsel %vm542, %v7068, 0.0
  %v7926 = vadd.f32 %v7924, %v7925
  %v7927 = vsel %vm542, %v7069, 0.0
  %v7928 = vadd.f32 %v7926, %v7927
  %v7929 = vsel %vm542, %v7070, 0.0
  %v7930 = vadd.f32 %v7928, %v7929
  %v7931 = vsel %vm542, %v7071, 0.0
  %v7932 = vadd.f32 %v7930, %v7931
  %v7933 = vsel %vm542, %v7072, 0.0
  %v7934 = vadd.f32 %v7932, %v7933
  %v7935 = vsel %vm542, %v7073, 0.0
  %v7936 = vadd.f32 %v7934, %v7935
  %v7937 = vsel %vm542, %v7074, 0.0
  %v7938 = vadd.f32 %v7936, %v7937
  %v7939 = vsel %vm542, %v7075, 0.0
  %v7940 = vadd.f32 %v7938, %v7939
  %v7941 = vsel %vm542, %v7076, 0.0
  %v7942 = vadd.f32 %v7940, %v7941
  %v7943 = vsel %vm542, %v7077, 0.0
  %v7944 = vadd.f32 %v7942, %v7943
  %v7945 = vsel %vm542, %v7078, 0.0
  %v7946 = vadd.f32 %v7944, %v7945
  %v7947 = vsel %vm542, %v7079, 0.0
  %v7948 = vadd.f32 %v7946, %v7947
  %v7949 = vsel %vm542, %v7080, 0.0
  %v7950 = vadd.f32 %v7948, %v7949
  %v7951 = vsel %vm542, %v7081, 0.0
  %v7952 = vadd.f32 %v7950, %v7951
  %v7953 = vsel %vm542, %v7082, 0.0
  %v7954 = vadd.f32 %v7952, %v7953
  %v7955 = vsel %vm542, %v7083, 0.0
  %v7956 = vadd.f32 %v7954, %v7955
  %v7957 = vsel %vm542, %v7084, 0.0
  %v7958 = vadd.f32 %v7956, %v7957
  %v7959 = vsel %vm542, %v7085, 0.0
  %v7960 = vadd.f32 %v7958, %v7959
  %v7961 = vsel %vm542, %v7086, 0.0
  %v7962 = vadd.f32 %v7960, %v7961
  %v7963 = vsel %vm542, %v7087, 0.0
  %v7964 = vadd.f32 %v7962, %v7963
  %v7965 = vsel %vm542, %v7088, 0.0
  %v7966 = vadd.f32 %v7964, %v7965
  %v7967 = vsel %vm542, %v7089, 0.0
  %v7968 = vadd.f32 %v7966, %v7967
  %v7969 = vsel %vm542, %v7090, 0.0
  %v7970 = vadd.f32 %v7968, %v7969
  %v7971 = vsel %vm542, %v7091, 0.0
  %v7972 = vadd.f32 %v7970, %v7971
  %v7973 = vsel %vm542, %v7092, 0.0
  %v7974 = vadd.f32 %v7972, %v7973
  %v7975 = vsel %vm542, %v7093, 0.0
  %v7976 = vadd.f32 %v7974, %v7975
  %v7977 = vsel %vm542, %v7094, 0.0
  %v7978 = vadd.f32 %v7976, %v7977
  %v7979 = vsel %vm542, %v7095, 0.0
  %v7980 = vadd.f32 %v7978, %v7979
  %v7981 = vsel %vm542, %v7096, 0.0
  %v7982 = vadd.f32 %v7980, %v7981
  %v7983 = vsel %vm542, %v7097, 0.0
  %v7984 = vadd.f32 %v7982, %v7983
  %v7985 = vsel %vm542, %v7098, 0.0
  %v7986 = vadd.f32 %v7984, %v7985
  %v7987 = vsel %vm542, %v7099, 0.0
  %v7988 = vadd.f32 %v7986, %v7987
  %v7989 = vsel %vm542, %v7100, 0.0
  %v7990 = vadd.f32 %v7988, %v7989
  %v7991 = vsel %vm542, %v7101, 0.0
  %v7992 = vadd.f32 %v7990, %v7991
  %v7993 = vsel %vm542, %v7102, 0.0
  %v7994 = vadd.f32 %v7992, %v7993
  %v7995 = vsel %vm542, %v7103, 0.0
  %v7996 = vadd.f32 %v7994, %v7995
  %v7997 = vsel %vm542, %v7104, 0.0
  %v7998 = vadd.f32 %v7996, %v7997
  %v7999 = vsel %vm542, %v7105, 0.0
  %v8000 = vadd.f32 %v7998, %v7999
  %v8001 = vsel %vm542, %v7106, 0.0
  %v8002 = vadd.f32 %v8000, %v8001
  %v8003 = vsel %vm542, %v7107, 0.0
  %v8004 = vadd.f32 %v8002, %v8003
  %v8005 = vsel %vm542, %v7108, 0.0
  %v8006 = vadd.f32 %v8004, %v8005
  %v8007 = vsel %vm542, %v7109, 0.0
  %v8008 = vadd.f32 %v8006, %v8007
  %v8009 = vsel %vm542, %v7110, 0.0
  %v8010 = vadd.f32 %v8008, %v8009
  %v8011 = vsel %vm542, %v7111, 0.0
  %v8012 = vadd.f32 %v8010, %v8011
  %v8013 = vsel %vm542, %v7112, 0.0
  %v8014 = vadd.f32 %v8012, %v8013
  %v8015 = vsel %vm542, %v7113, 0.0
  %v8016 = vadd.f32 %v8014, %v8015
  %v8017 = vsel %vm542, %v7114, 0.0
  %v8018 = vadd.f32 %v8016, %v8017
  %v8019 = vsel %vm542, %v7115, 0.0
  %v8020 = vadd.f32 %v8018, %v8019
  %v8021 = vsel %vm542, %v7116, 0.0
  %v8022 = vadd.f32 %v8020, %v8021
  %v8023 = vsel %vm542, %v7117, 0.0
  %v8024 = vadd.f32 %v8022, %v8023
  %v8025 = vsel %vm542, %v7118, 0.0
  %v8026 = vadd.f32 %v8024, %v8025
  %v8027 = vsel %vm542, %v7119, 0.0
  %v8028 = vadd.f32 %v8026, %v8027
  %v8029 = vsel %vm542, %v7120, 0.0
  %v8030 = vadd.f32 %v8028, %v8029
  %v8031 = vsel %vm542, %v7121, 0.0
  %v8032 = vadd.f32 %v8030, %v8031
  %v8033 = vsel %vm542, %v7122, 0.0
  %v8034 = vadd.f32 %v8032, %v8033
  %v8035 = vsel %vm542, %v7123, 0.0
  %v8036 = vadd.f32 %v8034, %v8035
  %v8037 = vsel %vm542, %v7124, 0.0
  %v8038 = vadd.f32 %v8036, %v8037
  %v8039 = vsel %vm542, %v7125, 0.0
  %v8040 = vadd.f32 %v8038, %v8039
  %v8041 = vsel %vm542, %v7126, 0.0
  %v8042 = vadd.f32 %v8040, %v8041
  %v8043 = vsel %vm542, %v7127, 0.0
  %v8044 = vadd.f32 %v8042, %v8043
  %v8045 = vsel %vm542, %v7128, 0.0
  %v8046 = vadd.f32 %v8044, %v8045
  %v8047 = vsel %vm542, %v7129, 0.0
  %v8048 = vadd.f32 %v8046, %v8047
  %v8049 = vsel %vm542, %v7130, 0.0
  %v8050 = vadd.f32 %v8048, %v8049
  %v8051 = vsel %vm542, %v7131, 0.0
  %v8052 = vadd.f32 %v8050, %v8051
  %v8053 = vsel %vm542, %v7132, 0.0
  %v8054 = vadd.f32 %v8052, %v8053
  %v8055 = vsel %vm542, %v7133, 0.0
  %v8056 = vadd.f32 %v8054, %v8055
  %v8057 = vsel %vm542, %v7134, 0.0
  %v8058 = vadd.f32 %v8056, %v8057
  %v8059 = vsel %vm542, %v7135, 0.0
  %v8060 = vadd.f32 %v8058, %v8059
  %v8061 = vsel %vm542, %v7136, 0.0
  %v8062 = vadd.f32 %v8060, %v8061
  %v8063 = vsel %vm542, %v7137, 0.0
  %v8064 = vadd.f32 %v8062, %v8063
  %v8065 = vsel %vm542, %v7138, 0.0
  %v8066 = vadd.f32 %v8064, %v8065
  %v8067 = vsel %vm542, %v7139, 0.0
  %v8068 = vadd.f32 %v8066, %v8067
  %v8069 = vsel %vm542, %v7140, 0.0
  %v8070 = vadd.f32 %v8068, %v8069
  %v8071 = vsel %vm542, %v7141, 0.0
  %v8072 = vadd.f32 %v8070, %v8071
  %v8073 = vsel %vm542, %v7142, 0.0
  %v8074 = vadd.f32 %v8072, %v8073
  %v8075 = vsel %vm542, %v7143, 0.0
  %v8076 = vadd.f32 %v8074, %v8075
  %v8077 = vsel %vm542, %v7144, 0.0
  %v8078 = vadd.f32 %v8076, %v8077
  %v8079 = vsel %vm542, %v7145, 0.0
  %v8080 = vadd.f32 %v8078, %v8079
  %v8081 = vsel %vm542, %v7146, 0.0
  %v8082 = vadd.f32 %v8080, %v8081
  %v8083 = vsel %vm542, %v7147, 0.0
  %v8084 = vadd.f32 %v8082, %v8083
  %v8085 = vsel %vm542, %v7148, 0.0
  %v8086 = vadd.f32 %v8084, %v8085
  %v8087 = vsel %vm542, %v7149, 0.0
  %v8088 = vadd.f32 %v8086, %v8087
  %v8089 = vsel %vm542, %v7150, 0.0
  %v8090 = vadd.f32 %v8088, %v8089
  %v8091 = vsel %vm542, %v7151, 0.0
  %v8092 = vadd.f32 %v8090, %v8091
  %v8093 = vsel %vm542, %v7152, 0.0
  %v8094 = vadd.f32 %v8092, %v8093
  %v8095 = vsel %vm542, %v7153, 0.0
  %v8096 = vadd.f32 %v8094, %v8095
  %v8097 = vsel %vm542, %v7154, 0.0
  %v8098 = vadd.f32 %v8096, %v8097
  %v8099 = vsel %vm542, %v7155, 0.0
  %v8100 = vadd.f32 %v8098, %v8099
  %v8101 = vsel %vm542, %v7156, 0.0
  %v8102 = vadd.f32 %v8100, %v8101
  %v8103 = vsel %vm542, %v7157, 0.0
  %v8104 = vadd.f32 %v8102, %v8103
  %v8105 = vsel %vm542, %v7158, 0.0
  %v8106 = vadd.f32 %v8104, %v8105
  %v8107 = vsel %vm542, %v7159, 0.0
  %v8108 = vadd.f32 %v8106, %v8107
  %v8109 = vsel %vm542, %v7160, 0.0
  %v8110 = vadd.f32 %v8108, %v8109
  %v8111 = vsel %vm542, %v7161, 0.0
  %v8112 = vadd.f32 %v8110, %v8111
  %v8113 = vsel %vm542, %v7162, 0.0
  %v8114 = vadd.f32 %v8112, %v8113
  %v8115 = vsel %vm542, %v7163, 0.0
  %v8116 = vadd.f32 %v8114, %v8115
  %v8117 = vsel %vm542, %v7164, 0.0
  %v8118 = vadd.f32 %v8116, %v8117
  %v8119 = vsel %vm542, %v7165, 0.0
  %v8120 = vadd.f32 %v8118, %v8119
  %v8121 = vsel %vm542, %v7166, 0.0
  %v8122 = vadd.f32 %v8120, %v8121
  %v8123 = vsel %vm542, %v7167, 0.0
  %v8124 = vadd.f32 %v8122, %v8123
  %v8125 = vsel %vm542, %v7168, 0.0
  %v8126 = vadd.f32 %v8124, %v8125
  %v8127 = vsel %vm542, %v7169, 0.0
  %v8128 = vadd.f32 %v8126, %v8127
  %v8129 = vsel %vm542, %v7170, 0.0
  %v8130 = vadd.f32 %v8128, %v8129
  %v8131 = vsel %vm542, %v7171, 0.0
  %v8132 = vadd.f32 %v8130, %v8131
  %v8133 = vsel %vm542, %v7172, 0.0
  %v8134 = vadd.f32 %v8132, %v8133
  %v8135 = vsel %vm542, %v7173, 0.0
  %v8136 = vadd.f32 %v8134, %v8135
  %v8137 = vsel %vm542, %v7174, 0.0
  %v8138 = vadd.f32 %v8136, %v8137
  %v8139 = vsel %vm542, %v7175, 0.0
  %v8140 = vadd.f32 %v8138, %v8139
  %v8141 = vsel %vm542, %v7176, 0.0
  %v8142 = vadd.f32 %v8140, %v8141
  %v8143 = vsel %vm542, %v7177, 0.0
  %v8144 = vadd.f32 %v8142, %v8143
  %v8145 = vsel %vm542, %v7178, 0.0
  %v8146 = vadd.f32 %v8144, %v8145
  %v8147 = vsel %vm542, %v7179, 0.0
  %v8148 = vadd.f32 %v8146, %v8147
  %v8149 = vsel %vm542, %v7180, 0.0
  %v8150 = vadd.f32 %v8148, %v8149
  %v8151 = vsel %vm542, %v7181, 0.0
  %v8152 = vadd.f32 %v8150, %v8151
  %v8153 = vsel %vm542, %v7182, 0.0
  %v8154 = vadd.f32 %v8152, %v8153
  %v8155 = vsel %vm542, %v7183, 0.0
  %v8156 = vadd.f32 %v8154, %v8155
  %v8157 = vsel %vm542, %v7184, 0.0
  %v8158 = vadd.f32 %v8156, %v8157
  %v8159 = vsel %vm542, %v7185, 0.0
  %v8160 = vadd.f32 %v8158, %v8159
  %v8161 = vsel %vm542, %v7186, 0.0
  %v8162 = vadd.f32 %v8160, %v8161
  %v8163 = vsel %vm542, %v7187, 0.0
  %v8164 = vadd.f32 %v8162, %v8163
  %v8165 = vsel %vm542, %v7188, 0.0
  %v8166 = vadd.f32 %v8164, %v8165
  %v8167 = vsel %vm542, %v7189, 0.0
  %v8168 = vadd.f32 %v8166, %v8167
  %v8169 = vsel %vm542, %v7190, 0.0
  %v8170 = vadd.f32 %v8168, %v8169
  %v8171 = vsel %vm542, %v7191, 0.0
  %v8172 = vadd.f32 %v8170, %v8171
  %v8173 = vsel %vm542, %v7192, 0.0
  %v8174 = vadd.f32 %v8172, %v8173
  %v8175 = vsel %vm542, %v7193, 0.0
  %v8176 = vadd.f32 %v8174, %v8175
  %v8177 = vsel %vm542, %v7194, 0.0
  %v8178 = vadd.f32 %v8176, %v8177
  %v8179 = vsel %vm542, %v7195, 0.0
  %v8180 = vadd.f32 %v8178, %v8179
  %v8181 = vsel %vm542, %v7196, 0.0
  %v8182 = vadd.f32 %v8180, %v8181
  %v8183 = vsel %vm542, %v7197, 0.0
  %v8184 = vadd.f32 %v8182, %v8183
  %v8185 = vsel %vm542, %v7198, 0.0
  %v8186 = vadd.f32 %v8184, %v8185
  %v8187 = vsel %vm542, %v7199, 0.0
  %v8188 = vadd.f32 %v8186, %v8187
  %v8189 = vsel %vm542, %v7200, 0.0
  %v8190 = vadd.f32 %v8188, %v8189
  %v8191 = vsel %vm542, %v7201, 0.0
  %v8192 = vadd.f32 %v8190, %v8191
  %v8193 = vsel %vm542, %v7202, 0.0
  %v8194 = vadd.f32 %v8192, %v8193
  %v8195 = vsel %vm542, %v7203, 0.0
  %v8196 = vadd.f32 %v8194, %v8195
  %v8197 = vsel %vm542, %v7204, 0.0
  %v8198 = vadd.f32 %v8196, %v8197
  %v8199 = vsel %vm542, %v7205, 0.0
  %v8200 = vadd.f32 %v8198, %v8199
  %v8201 = vsel %vm542, %v7206, 0.0
  %v8202 = vadd.f32 %v8200, %v8201
  %v8203 = vsel %vm542, %v7207, 0.0
  %v8204 = vadd.f32 %v8202, %v8203
  %v8205 = vsel %vm542, %v7208, 0.0
  %v8206 = vadd.f32 %v8204, %v8205
  %v8207 = vsel %vm542, %v7209, 0.0
  %v8208 = vadd.f32 %v8206, %v8207
  %v8209 = vsel %vm542, %v7210, 0.0
  %v8210 = vadd.f32 %v8208, %v8209
  %v8211 = vsel %vm542, %v7211, 0.0
  %v8212 = vadd.f32 %v8210, %v8211
  %v8213 = vsel %vm542, %v7212, 0.0
  %v8214 = vadd.f32 %v8212, %v8213
  %v8215 = vsel %vm542, %v7213, 0.0
  %v8216 = vadd.f32 %v8214, %v8215
  %v8217 = vsel %vm542, %v7214, 0.0
  %v8218 = vadd.f32 %v8216, %v8217
  %v8219 = vsel %vm542, %v7215, 0.0
  %v8220 = vadd.f32 %v8218, %v8219
  %v8221 = vsel %vm542, %v7216, 0.0
  %v8222 = vadd.f32 %v8220, %v8221
  %v8223 = vsel %vm542, %v7217, 0.0
  %v8224 = vadd.f32 %v8222, %v8223
  %v8225 = vsel %vm542, %v7218, 0.0
  %v8226 = vadd.f32 %v8224, %v8225
  %v8227 = vsel %vm542, %v7219, 0.0
  %v8228 = vadd.f32 %v8226, %v8227
  %v8229 = vsel %vm542, %v7220, 0.0
  %v8230 = vadd.f32 %v8228, %v8229
  %v8231 = vsel %vm542, %v7221, 0.0
  %v8232 = vadd.f32 %v8230, %v8231
  %v8233 = vsel %vm542, %v7222, 0.0
  %v8234 = vadd.f32 %v8232, %v8233
  %v8235 = vsel %vm542, %v7223, 0.0
  %v8236 = vadd.f32 %v8234, %v8235
  %v8237 = vsel %vm542, %v7224, 0.0
  %v8238 = vadd.f32 %v8236, %v8237
  %v8239 = vsel %vm542, %v7225, 0.0
  %v8240 = vadd.f32 %v8238, %v8239
  %v8241 = vsel %vm542, %v7226, 0.0
  %v8242 = vadd.f32 %v8240, %v8241
  %v8243 = vsel %vm542, %v7227, 0.0
  %v8244 = vadd.f32 %v8242, %v8243
  %v8245 = vsel %vm542, %v7228, 0.0
  %v8246 = vadd.f32 %v8244, %v8245
  %v8247 = vsel %vm542, %v7229, 0.0
  %v8248 = vadd.f32 %v8246, %v8247
  %v8249 = vsel %vm542, %v7230, 0.0
  %v8250 = vadd.f32 %v8248, %v8249
  %v8251 = vsel %vm542, %v7231, 0.0
  %v8252 = vadd.f32 %v8250, %v8251
  %v8253 = vsel %vm542, %v7232, 0.0
  %v8254 = vadd.f32 %v8252, %v8253
  %v8255 = vsel %vm542, %v7233, 0.0
  %v8256 = vadd.f32 %v8254, %v8255
  %v8257 = vrot.slane %v8256, 4
  %v8258 = vadd.f32 %v8256, %v8257
  %v8259 = vrot.slane %v8258, 2
  %v8260 = vadd.f32 %v8258, %v8259
  %v8261 = vrot.slane %v8260, 1
  %v8262 = vadd.f32 %v8260, %v8261
  %v8263 = vmul.f32 %v6721, %v3113
  %v8264 = vmul.f32 %v8262, %v3113
  %v8265 = vmul.f32 %v8263, %v8263
  %v8266 = vsub.f32 %v8264, %v8265
  %v8267 = vadd.f32 %v8266, 1e-05
  %v8268 = vrsqrt.pop %v8267
  %v8269 = vmul.f32 %v8268, %v28
  %v8270 = vmul.f32 %v8263, %v8269
  %v8271 = vsub.f32 %v29, %v8270
  %v8272 = vlaneseq
  %v8273 = vshrl.u32 %v8272, 7
  %v8274 = vsub.s32 0, %v8273
  %v8275 = vrot.slane %v8269, %v8274
  %v8276 = vmul.f32 %v5181, %v8275
  %v8277 = vmul.f32 %v5182, %v8275
  %v8278 = vmul.f32 %v5183, %v8275
  %v8279 = vmul.f32 %v5184, %v8275
  %v8280 = vmul.f32 %v5185, %v8275
  %v8281 = vmul.f32 %v5186, %v8275
  %v8282 = vmul.f32 %v5187, %v8275
  %v8283 = vmul.f32 %v5188, %v8275
  %v8284 = vmul.f32 %v5189, %v8275
  %v8285 = vmul.f32 %v5190, %v8275
  %v8286 = vmul.f32 %v5191, %v8275
  %v8287 = vmul.f32 %v5192, %v8275
  %v8288 = vmul.f32 %v5193, %v8275
  %v8289 = vmul.f32 %v5194, %v8275
  %v8290 = vmul.f32 %v5195, %v8275
  %v8291 = vmul.f32 %v5196, %v8275
  %v8292 = vmul.f32 %v5197, %v8275
  %v8293 = vmul.f32 %v5198, %v8275
  %v8294 = vmul.f32 %v5199, %v8275
  %v8295 = vmul.f32 %v5200, %v8275
  %v8296 = vmul.f32 %v5201, %v8275
  %v8297 = vmul.f32 %v5202, %v8275
  %v8298 = vmul.f32 %v5203, %v8275
  %v8299 = vmul.f32 %v5204, %v8275
  %v8300 = vmul.f32 %v5205, %v8275
  %v8301 = vmul.f32 %v5206, %v8275
  %v8302 = vmul.f32 %v5207, %v8275
  %v8303 = vmul.f32 %v5208, %v8275
  %v8304 = vmul.f32 %v5209, %v8275
  %v8305 = vmul.f32 %v5210, %v8275
  %v8306 = vmul.f32 %v5211, %v8275
  %v8307 = vmul.f32 %v5212, %v8275
  %v8308 = vmul.f32 %v5213, %v8275
  %v8309 = vmul.f32 %v5214, %v8275
  %v8310 = vmul.f32 %v5215, %v8275
  %v8311 = vmul.f32 %v5216, %v8275
  %v8312 = vmul.f32 %v5217, %v8275
  %v8313 = vmul.f32 %v5218, %v8275
  %v8314 = vmul.f32 %v5219, %v8275
  %v8315 = vmul.f32 %v5220, %v8275
  %v8316 = vmul.f32 %v5221, %v8275
  %v8317 = vmul.f32 %v5222, %v8275
  %v8318 = vmul.f32 %v5223, %v8275
  %v8319 = vmul.f32 %v5224, %v8275
  %v8320 = vmul.f32 %v5225, %v8275
  %v8321 = vmul.f32 %v5226, %v8275
  %v8322 = vmul.f32 %v5227, %v8275
  %v8323 = vmul.f32 %v5228, %v8275
  %v8324 = vmul.f32 %v5229, %v8275
  %v8325 = vmul.f32 %v5230, %v8275
  %v8326 = vmul.f32 %v5231, %v8275
  %v8327 = vmul.f32 %v5232, %v8275
  %v8328 = vmul.f32 %v5233, %v8275
  %v8329 = vmul.f32 %v5234, %v8275
  %v8330 = vmul.f32 %v5235, %v8275
  %v8331 = vmul.f32 %v5236, %v8275
  %v8332 = vmul.f32 %v5237, %v8275
  %v8333 = vmul.f32 %v5238, %v8275
  %v8334 = vmul.f32 %v5239, %v8275
  %v8335 = vmul.f32 %v5240, %v8275
  %v8336 = vmul.f32 %v5241, %v8275
  %v8337 = vmul.f32 %v5242, %v8275
  %v8338 = vmul.f32 %v5243, %v8275
  %v8339 = vmul.f32 %v5244, %v8275
  %v8340 = vmul.f32 %v5245, %v8275
  %v8341 = vmul.f32 %v5246, %v8275
  %v8342 = vmul.f32 %v5247, %v8275
  %v8343 = vmul.f32 %v5248, %v8275
  %v8344 = vmul.f32 %v5249, %v8275
  %v8345 = vmul.f32 %v5250, %v8275
  %v8346 = vmul.f32 %v5251, %v8275
  %v8347 = vmul.f32 %v5252, %v8275
  %v8348 = vmul.f32 %v5253, %v8275
  %v8349 = vmul.f32 %v5254, %v8275
  %v8350 = vmul.f32 %v5255, %v8275
  %v8351 = vmul.f32 %v5256, %v8275
  %v8352 = vmul.f32 %v5257, %v8275
  %v8353 = vmul.f32 %v5258, %v8275
  %v8354 = vmul.f32 %v5259, %v8275
  %v8355 = vmul.f32 %v5260, %v8275
  %v8356 = vmul.f32 %v5261, %v8275
  %v8357 = vmul.f32 %v5262, %v8275
  %v8358 = vmul.f32 %v5263, %v8275
  %v8359 = vmul.f32 %v5264, %v8275
  %v8360 = vmul.f32 %v5265, %v8275
  %v8361 = vmul.f32 %v5266, %v8275
  %v8362 = vmul.f32 %v5267, %v8275
  %v8363 = vmul.f32 %v5268, %v8275
  %v8364 = vmul.f32 %v5269, %v8275
  %v8365 = vmul.f32 %v5270, %v8275
  %v8366 = vmul.f32 %v5271, %v8275
  %v8367 = vmul.f32 %v5272, %v8275
  %v8368 = vmul.f32 %v5273, %v8275
  %v8369 = vmul.f32 %v5274, %v8275
  %v8370 = vmul.f32 %v5275, %v8275
  %v8371 = vmul.f32 %v5276, %v8275
  %v8372 = vmul.f32 %v5277, %v8275
  %v8373 = vmul.f32 %v5278, %v8275
  %v8374 = vmul.f32 %v5279, %v8275
  %v8375 = vmul.f32 %v5280, %v8275
  %v8376 = vmul.f32 %v5281, %v8275
  %v8377 = vmul.f32 %v5282, %v8275
  %v8378 = vmul.f32 %v5283, %v8275
  %v8379 = vmul.f32 %v5284, %v8275
  %v8380 = vmul.f32 %v5285, %v8275
  %v8381 = vmul.f32 %v5286, %v8275
  %v8382 = vmul.f32 %v5287, %v8275
  %v8383 = vmul.f32 %v5288, %v8275
  %v8384 = vmul.f32 %v5289, %v8275
  %v8385 = vmul.f32 %v5290, %v8275
  %v8386 = vmul.f32 %v5291, %v8275
  %v8387 = vmul.f32 %v5292, %v8275
  %v8388 = vmul.f32 %v5293, %v8275
  %v8389 = vmul.f32 %v5294, %v8275
  %v8390 = vmul.f32 %v5295, %v8275
  %v8391 = vmul.f32 %v5296, %v8275
  %v8392 = vmul.f32 %v5297, %v8275
  %v8393 = vmul.f32 %v5298, %v8275
  %v8394 = vmul.f32 %v5299, %v8275
  %v8395 = vmul.f32 %v5300, %v8275
  %v8396 = vmul.f32 %v5301, %v8275
  %v8397 = vmul.f32 %v5302, %v8275
  %v8398 = vmul.f32 %v5303, %v8275
  %v8399 = vmul.f32 %v5304, %v8275
  %v8400 = vmul.f32 %v5305, %v8275
  %v8401 = vmul.f32 %v5306, %v8275
  %v8402 = vmul.f32 %v5307, %v8275
  %v8403 = vmul.f32 %v5308, %v8275
  %v8404 = vmul.f32 %v5309, %v8275
  %v8405 = vmul.f32 %v5310, %v8275
  %v8406 = vmul.f32 %v5311, %v8275
  %v8407 = vmul.f32 %v5312, %v8275
  %v8408 = vmul.f32 %v5313, %v8275
  %v8409 = vmul.f32 %v5314, %v8275
  %v8410 = vmul.f32 %v5315, %v8275
  %v8411 = vmul.f32 %v5316, %v8275
  %v8412 = vmul.f32 %v5317, %v8275
  %v8413 = vmul.f32 %v5318, %v8275
  %v8414 = vmul.f32 %v5319, %v8275
  %v8415 = vmul.f32 %v5320, %v8275
  %v8416 = vmul.f32 %v5321, %v8275
  %v8417 = vmul.f32 %v5322, %v8275
  %v8418 = vmul.f32 %v5323, %v8275
  %v8419 = vmul.f32 %v5324, %v8275
  %v8420 = vmul.f32 %v5325, %v8275
  %v8421 = vmul.f32 %v5326, %v8275
  %v8422 = vmul.f32 %v5327, %v8275
  %v8423 = vmul.f32 %v5328, %v8275
  %v8424 = vmul.f32 %v5329, %v8275
  %v8425 = vmul.f32 %v5330, %v8275
  %v8426 = vmul.f32 %v5331, %v8275
  %v8427 = vmul.f32 %v5332, %v8275
  %v8428 = vmul.f32 %v5333, %v8275
  %v8429 = vmul.f32 %v5334, %v8275
  %v8430 = vmul.f32 %v5335, %v8275
  %v8431 = vmul.f32 %v5336, %v8275
  %v8432 = vmul.f32 %v5337, %v8275
  %v8433 = vmul.f32 %v5338, %v8275
  %v8434 = vmul.f32 %v5339, %v8275
  %v8435 = vmul.f32 %v5340, %v8275
  %v8436 = vmul.f32 %v5341, %v8275
  %v8437 = vmul.f32 %v5342, %v8275
  %v8438 = vmul.f32 %v5343, %v8275
  %v8439 = vmul.f32 %v5344, %v8275
  %v8440 = vmul.f32 %v5345, %v8275
  %v8441 = vmul.f32 %v5346, %v8275
  %v8442 = vmul.f32 %v5347, %v8275
  %v8443 = vmul.f32 %v5348, %v8275
  %v8444 = vmul.f32 %v5349, %v8275
  %v8445 = vmul.f32 %v5350, %v8275
  %v8446 = vmul.f32 %v5351, %v8275
  %v8447 = vmul.f32 %v5352, %v8275
  %v8448 = vmul.f32 %v5353, %v8275
  %v8449 = vmul.f32 %v5354, %v8275
  %v8450 = vmul.f32 %v5355, %v8275
  %v8451 = vmul.f32 %v5356, %v8275
  %v8452 = vmul.f32 %v5357, %v8275
  %v8453 = vmul.f32 %v5358, %v8275
  %v8454 = vmul.f32 %v5359, %v8275
  %v8455 = vmul.f32 %v5360, %v8275
  %v8456 = vmul.f32 %v5361, %v8275
  %v8457 = vmul.f32 %v5362, %v8275
  %v8458 = vmul.f32 %v5363, %v8275
  %v8459 = vmul.f32 %v5364, %v8275
  %v8460 = vmul.f32 %v5365, %v8275
  %v8461 = vmul.f32 %v5366, %v8275
  %v8462 = vmul.f32 %v5367, %v8275
  %v8463 = vmul.f32 %v5368, %v8275
  %v8464 = vmul.f32 %v5369, %v8275
  %v8465 = vmul.f32 %v5370, %v8275
  %v8466 = vmul.f32 %v5371, %v8275
  %v8467 = vmul.f32 %v5372, %v8275
  %v8468 = vmul.f32 %v5373, %v8275
  %v8469 = vmul.f32 %v5374, %v8275
  %v8470 = vmul.f32 %v5375, %v8275
  %v8471 = vmul.f32 %v5376, %v8275
  %v8472 = vmul.f32 %v5377, %v8275
  %v8473 = vmul.f32 %v5378, %v8275
  %v8474 = vmul.f32 %v5379, %v8275
  %v8475 = vmul.f32 %v5380, %v8275
  %v8476 = vmul.f32 %v5381, %v8275
  %v8477 = vmul.f32 %v5382, %v8275
  %v8478 = vmul.f32 %v5383, %v8275
  %v8479 = vmul.f32 %v5384, %v8275
  %v8480 = vmul.f32 %v5385, %v8275
  %v8481 = vmul.f32 %v5386, %v8275
  %v8482 = vmul.f32 %v5387, %v8275
  %v8483 = vmul.f32 %v5388, %v8275
  %v8484 = vmul.f32 %v5389, %v8275
  %v8485 = vmul.f32 %v5390, %v8275
  %v8486 = vmul.f32 %v5391, %v8275
  %v8487 = vmul.f32 %v5392, %v8275
  %v8488 = vmul.f32 %v5393, %v8275
  %v8489 = vmul.f32 %v5394, %v8275
  %v8490 = vmul.f32 %v5395, %v8275
  %v8491 = vmul.f32 %v5396, %v8275
  %v8492 = vmul.f32 %v5397, %v8275
  %v8493 = vmul.f32 %v5398, %v8275
  %v8494 = vmul.f32 %v5399, %v8275
  %v8495 = vmul.f32 %v5400, %v8275
  %v8496 = vmul.f32 %v5401, %v8275
  %v8497 = vmul.f32 %v5402, %v8275
  %v8498 = vmul.f32 %v5403, %v8275
  %v8499 = vmul.f32 %v5404, %v8275
  %v8500 = vmul.f32 %v5405, %v8275
  %v8501 = vmul.f32 %v5406, %v8275
  %v8502 = vmul.f32 %v5407, %v8275
  %v8503 = vmul.f32 %v5408, %v8275
  %v8504 = vmul.f32 %v5409, %v8275
  %v8505 = vmul.f32 %v5410, %v8275
  %v8506 = vmul.f32 %v5411, %v8275
  %v8507 = vmul.f32 %v5412, %v8275
  %v8508 = vmul.f32 %v5413, %v8275
  %v8509 = vmul.f32 %v5414, %v8275
  %v8510 = vmul.f32 %v5415, %v8275
  %v8511 = vmul.f32 %v5416, %v8275
  %v8512 = vmul.f32 %v5417, %v8275
  %v8513 = vmul.f32 %v5418, %v8275
  %v8514 = vmul.f32 %v5419, %v8275
  %v8515 = vmul.f32 %v5420, %v8275
  %v8516 = vmul.f32 %v5421, %v8275
  %v8517 = vmul.f32 %v5422, %v8275
  %v8518 = vmul.f32 %v5423, %v8275
  %v8519 = vmul.f32 %v5424, %v8275
  %v8520 = vmul.f32 %v5425, %v8275
  %v8521 = vmul.f32 %v5426, %v8275
  %v8522 = vmul.f32 %v5427, %v8275
  %v8523 = vmul.f32 %v5428, %v8275
  %v8524 = vmul.f32 %v5429, %v8275
  %v8525 = vmul.f32 %v5430, %v8275
  %v8526 = vmul.f32 %v5431, %v8275
  %v8527 = vmul.f32 %v5432, %v8275
  %v8528 = vmul.f32 %v5433, %v8275
  %v8529 = vmul.f32 %v5434, %v8275
  %v8530 = vmul.f32 %v5435, %v8275
  %v8531 = vmul.f32 %v5436, %v8275
  %v8532 = vmul.f32 %v5437, %v8275
  %v8533 = vmul.f32 %v5438, %v8275
  %v8534 = vmul.f32 %v5439, %v8275
  %v8535 = vmul.f32 %v5440, %v8275
  %v8536 = vmul.f32 %v5441, %v8275
  %v8537 = vmul.f32 %v5442, %v8275
  %v8538 = vmul.f32 %v5443, %v8275
  %v8539 = vmul.f32 %v5444, %v8275
  %v8540 = vmul.f32 %v5445, %v8275
  %v8541 = vmul.f32 %v5446, %v8275
  %v8542 = vmul.f32 %v5447, %v8275
  %v8543 = vmul.f32 %v5448, %v8275
  %v8544 = vmul.f32 %v5449, %v8275
  %v8545 = vmul.f32 %v5450, %v8275
  %v8546 = vmul.f32 %v5451, %v8275
  %v8547 = vmul.f32 %v5452, %v8275
  %v8548 = vmul.f32 %v5453, %v8275
  %v8549 = vmul.f32 %v5454, %v8275
  %v8550 = vmul.f32 %v5455, %v8275
  %v8551 = vmul.f32 %v5456, %v8275
  %v8552 = vmul.f32 %v5457, %v8275
  %v8553 = vmul.f32 %v5458, %v8275
  %v8554 = vmul.f32 %v5459, %v8275
  %v8555 = vmul.f32 %v5460, %v8275
  %v8556 = vmul.f32 %v5461, %v8275
  %v8557 = vmul.f32 %v5462, %v8275
  %v8558 = vmul.f32 %v5463, %v8275
  %v8559 = vmul.f32 %v5464, %v8275
  %v8560 = vmul.f32 %v5465, %v8275
  %v8561 = vmul.f32 %v5466, %v8275
  %v8562 = vmul.f32 %v5467, %v8275
  %v8563 = vmul.f32 %v5468, %v8275
  %v8564 = vmul.f32 %v5469, %v8275
  %v8565 = vmul.f32 %v5470, %v8275
  %v8566 = vmul.f32 %v5471, %v8275
  %v8567 = vmul.f32 %v5472, %v8275
  %v8568 = vmul.f32 %v5473, %v8275
  %v8569 = vmul.f32 %v5474, %v8275
  %v8570 = vmul.f32 %v5475, %v8275
  %v8571 = vmul.f32 %v5476, %v8275
  %v8572 = vmul.f32 %v5477, %v8275
  %v8573 = vmul.f32 %v5478, %v8275
  %v8574 = vmul.f32 %v5479, %v8275
  %v8575 = vmul.f32 %v5480, %v8275
  %v8576 = vmul.f32 %v5481, %v8275
  %v8577 = vmul.f32 %v5482, %v8275
  %v8578 = vmul.f32 %v5483, %v8275
  %v8579 = vmul.f32 %v5484, %v8275
  %v8580 = vmul.f32 %v5485, %v8275
  %v8581 = vmul.f32 %v5486, %v8275
  %v8582 = vmul.f32 %v5487, %v8275
  %v8583 = vmul.f32 %v5488, %v8275
  %v8584 = vmul.f32 %v5489, %v8275
  %v8585 = vmul.f32 %v5490, %v8275
  %v8586 = vmul.f32 %v5491, %v8275
  %v8587 = vmul.f32 %v5492, %v8275
  %v8588 = vmul.f32 %v5493, %v8275
  %v8589 = vmul.f32 %v5494, %v8275
  %v8590 = vmul.f32 %v5495, %v8275
  %v8591 = vmul.f32 %v5496, %v8275
  %v8592 = vmul.f32 %v5497, %v8275
  %v8593 = vmul.f32 %v5498, %v8275
  %v8594 = vmul.f32 %v5499, %v8275
  %v8595 = vmul.f32 %v5500, %v8275
  %v8596 = vmul.f32 %v5501, %v8275
  %v8597 = vmul.f32 %v5502, %v8275
  %v8598 = vmul.f32 %v5503, %v8275
  %v8599 = vmul.f32 %v5504, %v8275
  %v8600 = vmul.f32 %v5505, %v8275
  %v8601 = vmul.f32 %v5506, %v8275
  %v8602 = vmul.f32 %v5507, %v8275
  %v8603 = vmul.f32 %v5508, %v8275
  %v8604 = vmul.f32 %v5509, %v8275
  %v8605 = vmul.f32 %v5510, %v8275
  %v8606 = vmul.f32 %v5511, %v8275
  %v8607 = vmul.f32 %v5512, %v8275
  %v8608 = vmul.f32 %v5513, %v8275
  %v8609 = vmul.f32 %v5514, %v8275
  %v8610 = vmul.f32 %v5515, %v8275
  %v8611 = vmul.f32 %v5516, %v8275
  %v8612 = vmul.f32 %v5517, %v8275
  %v8613 = vmul.f32 %v5518, %v8275
  %v8614 = vmul.f32 %v5519, %v8275
  %v8615 = vmul.f32 %v5520, %v8275
  %v8616 = vmul.f32 %v5521, %v8275
  %v8617 = vmul.f32 %v5522, %v8275
  %v8618 = vmul.f32 %v5523, %v8275
  %v8619 = vmul.f32 %v5524, %v8275
  %v8620 = vmul.f32 %v5525, %v8275
  %v8621 = vmul.f32 %v5526, %v8275
  %v8622 = vmul.f32 %v5527, %v8275
  %v8623 = vmul.f32 %v5528, %v8275
  %v8624 = vmul.f32 %v5529, %v8275
  %v8625 = vmul.f32 %v5530, %v8275
  %v8626 = vmul.f32 %v5531, %v8275
  %v8627 = vmul.f32 %v5532, %v8275
  %v8628 = vmul.f32 %v5533, %v8275
  %v8629 = vmul.f32 %v5534, %v8275
  %v8630 = vmul.f32 %v5535, %v8275
  %v8631 = vmul.f32 %v5536, %v8275
  %v8632 = vmul.f32 %v5537, %v8275
  %v8633 = vmul.f32 %v5538, %v8275
  %v8634 = vmul.f32 %v5539, %v8275
  %v8635 = vmul.f32 %v5540, %v8275
  %v8636 = vmul.f32 %v5541, %v8275
  %v8637 = vmul.f32 %v5542, %v8275
  %v8638 = vmul.f32 %v5543, %v8275
  %v8639 = vmul.f32 %v5544, %v8275
  %v8640 = vmul.f32 %v5545, %v8275
  %v8641 = vmul.f32 %v5546, %v8275
  %v8642 = vmul.f32 %v5547, %v8275
  %v8643 = vmul.f32 %v5548, %v8275
  %v8644 = vmul.f32 %v5549, %v8275
  %v8645 = vmul.f32 %v5550, %v8275
  %v8646 = vmul.f32 %v5551, %v8275
  %v8647 = vmul.f32 %v5552, %v8275
  %v8648 = vmul.f32 %v5553, %v8275
  %v8649 = vmul.f32 %v5554, %v8275
  %v8650 = vmul.f32 %v5555, %v8275
  %v8651 = vmul.f32 %v5556, %v8275
  %v8652 = vmul.f32 %v5557, %v8275
  %v8653 = vmul.f32 %v5558, %v8275
  %v8654 = vmul.f32 %v5559, %v8275
  %v8655 = vmul.f32 %v5560, %v8275
  %v8656 = vmul.f32 %v5561, %v8275
  %v8657 = vmul.f32 %v5562, %v8275
  %v8658 = vmul.f32 %v5563, %v8275
  %v8659 = vmul.f32 %v5564, %v8275
  %v8660 = vmul.f32 %v5565, %v8275
  %v8661 = vmul.f32 %v5566, %v8275
  %v8662 = vmul.f32 %v5567, %v8275
  %v8663 = vmul.f32 %v5568, %v8275
  %v8664 = vmul.f32 %v5569, %v8275
  %v8665 = vmul.f32 %v5570, %v8275
  %v8666 = vmul.f32 %v5571, %v8275
  %v8667 = vmul.f32 %v5572, %v8275
  %v8668 = vmul.f32 %v5573, %v8275
  %v8669 = vmul.f32 %v5574, %v8275
  %v8670 = vmul.f32 %v5575, %v8275
  %v8671 = vmul.f32 %v5576, %v8275
  %v8672 = vmul.f32 %v5577, %v8275
  %v8673 = vmul.f32 %v5578, %v8275
  %v8674 = vmul.f32 %v5579, %v8275
  %v8675 = vmul.f32 %v5580, %v8275
  %v8676 = vmul.f32 %v5581, %v8275
  %v8677 = vmul.f32 %v5582, %v8275
  %v8678 = vmul.f32 %v5583, %v8275
  %v8679 = vmul.f32 %v5584, %v8275
  %v8680 = vmul.f32 %v5585, %v8275
  %v8681 = vmul.f32 %v5586, %v8275
  %v8682 = vmul.f32 %v5587, %v8275
  %v8683 = vmul.f32 %v5588, %v8275
  %v8684 = vmul.f32 %v5589, %v8275
  %v8685 = vmul.f32 %v5590, %v8275
  %v8686 = vmul.f32 %v5591, %v8275
  %v8687 = vmul.f32 %v5592, %v8275
  %v8688 = vmul.f32 %v5593, %v8275
  %v8689 = vmul.f32 %v5594, %v8275
  %v8690 = vmul.f32 %v5595, %v8275
  %v8691 = vmul.f32 %v5596, %v8275
  %v8692 = vmul.f32 %v5597, %v8275
  %v8693 = vmul.f32 %v5598, %v8275
  %v8694 = vmul.f32 %v5599, %v8275
  %v8695 = vmul.f32 %v5600, %v8275
  %v8696 = vmul.f32 %v5601, %v8275
  %v8697 = vmul.f32 %v5602, %v8275
  %v8698 = vmul.f32 %v5603, %v8275
  %v8699 = vmul.f32 %v5604, %v8275
  %v8700 = vmul.f32 %v5605, %v8275
  %v8701 = vmul.f32 %v5606, %v8275
  %v8702 = vmul.f32 %v5607, %v8275
  %v8703 = vmul.f32 %v5608, %v8275
  %v8704 = vmul.f32 %v5609, %v8275
  %v8705 = vmul.f32 %v5610, %v8275
  %v8706 = vmul.f32 %v5611, %v8275
  %v8707 = vmul.f32 %v5612, %v8275
  %v8708 = vmul.f32 %v5613, %v8275
  %v8709 = vmul.f32 %v5614, %v8275
  %v8710 = vmul.f32 %v5615, %v8275
  %v8711 = vmul.f32 %v5616, %v8275
  %v8712 = vmul.f32 %v5617, %v8275
  %v8713 = vmul.f32 %v5618, %v8275
  %v8714 = vmul.f32 %v5619, %v8275
  %v8715 = vmul.f32 %v5620, %v8275
  %v8716 = vmul.f32 %v5621, %v8275
  %v8717 = vmul.f32 %v5622, %v8275
  %v8718 = vmul.f32 %v5623, %v8275
  %v8719 = vmul.f32 %v5624, %v8275
  %v8720 = vmul.f32 %v5625, %v8275
  %v8721 = vmul.f32 %v5626, %v8275
  %v8722 = vmul.f32 %v5627, %v8275
  %v8723 = vmul.f32 %v5628, %v8275
  %v8724 = vmul.f32 %v5629, %v8275
  %v8725 = vmul.f32 %v5630, %v8275
  %v8726 = vmul.f32 %v5631, %v8275
  %v8727 = vmul.f32 %v5632, %v8275
  %v8728 = vmul.f32 %v5633, %v8275
  %v8729 = vmul.f32 %v5634, %v8275
  %v8730 = vmul.f32 %v5635, %v8275
  %v8731 = vmul.f32 %v5636, %v8275
  %v8732 = vmul.f32 %v5637, %v8275
  %v8733 = vmul.f32 %v5638, %v8275
  %v8734 = vmul.f32 %v5639, %v8275
  %v8735 = vmul.f32 %v5640, %v8275
  %v8736 = vmul.f32 %v5641, %v8275
  %v8737 = vmul.f32 %v5642, %v8275
  %v8738 = vmul.f32 %v5643, %v8275
  %v8739 = vmul.f32 %v5644, %v8275
  %v8740 = vmul.f32 %v5645, %v8275
  %v8741 = vmul.f32 %v5646, %v8275
  %v8742 = vmul.f32 %v5647, %v8275
  %v8743 = vmul.f32 %v5648, %v8275
  %v8744 = vmul.f32 %v5649, %v8275
  %v8745 = vmul.f32 %v5650, %v8275
  %v8746 = vmul.f32 %v5651, %v8275
  %v8747 = vmul.f32 %v5652, %v8275
  %v8748 = vmul.f32 %v5653, %v8275
  %v8749 = vmul.f32 %v5654, %v8275
  %v8750 = vmul.f32 %v5655, %v8275
  %v8751 = vmul.f32 %v5656, %v8275
  %v8752 = vmul.f32 %v5657, %v8275
  %v8753 = vmul.f32 %v5658, %v8275
  %v8754 = vmul.f32 %v5659, %v8275
  %v8755 = vmul.f32 %v5660, %v8275
  %v8756 = vmul.f32 %v5661, %v8275
  %v8757 = vmul.f32 %v5662, %v8275
  %v8758 = vmul.f32 %v5663, %v8275
  %v8759 = vmul.f32 %v5664, %v8275
  %v8760 = vmul.f32 %v5665, %v8275
  %v8761 = vmul.f32 %v5666, %v8275
  %v8762 = vmul.f32 %v5667, %v8275
  %v8763 = vmul.f32 %v5668, %v8275
  %v8764 = vmul.f32 %v5669, %v8275
  %v8765 = vmul.f32 %v5670, %v8275
  %v8766 = vmul.f32 %v5671, %v8275
  %v8767 = vmul.f32 %v5672, %v8275
  %v8768 = vmul.f32 %v5673, %v8275
  %v8769 = vmul.f32 %v5674, %v8275
  %v8770 = vmul.f32 %v5675, %v8275
  %v8771 = vmul.f32 %v5676, %v8275
  %v8772 = vmul.f32 %v5677, %v8275
  %v8773 = vmul.f32 %v5678, %v8275
  %v8774 = vmul.f32 %v5679, %v8275
  %v8775 = vmul.f32 %v5680, %v8275
  %v8776 = vmul.f32 %v5681, %v8275
  %v8777 = vmul.f32 %v5682, %v8275
  %v8778 = vmul.f32 %v5683, %v8275
  %v8779 = vmul.f32 %v5684, %v8275
  %v8780 = vmul.f32 %v5685, %v8275
  %v8781 = vmul.f32 %v5686, %v8275
  %v8782 = vmul.f32 %v5687, %v8275
  %v8783 = vmul.f32 %v5688, %v8275
  %v8784 = vmul.f32 %v5689, %v8275
  %v8785 = vmul.f32 %v5690, %v8275
  %v8786 = vmul.f32 %v5691, %v8275
  %v8787 = vmul.f32 %v5692, %v8275
  %v8789 = vlaneseq
  %v8790 = vshrl.u32 %v8789, 7
  %v8791 = vsub.s32 0, %v8790
  %v8792 = vrot.slane %v8271, %v8791
  %v8794 = vadd.f32 %v8276, %v8792
  %v8795 = vadd.f32 %v8277, %v8792
  %v8796 = vadd.f32 %v8278, %v8792
  %v8797 = vadd.f32 %v8279, %v8792
  %v8798 = vadd.f32 %v8280, %v8792
  %v8799 = vadd.f32 %v8281, %v8792
  %v8800 = vadd.f32 %v8282, %v8792
  %v8801 = vadd.f32 %v8283, %v8792
  %v8802 = vadd.f32 %v8284, %v8792
  %v8803 = vadd.f32 %v8285, %v8792
  %v8804 = vadd.f32 %v8286, %v8792
  %v8805 = vadd.f32 %v8287, %v8792
  %v8806 = vadd.f32 %v8288, %v8792
  %v8807 = vadd.f32 %v8289, %v8792
  %v8808 = vadd.f32 %v8290, %v8792
  %v8809 = vadd.f32 %v8291, %v8792
  %v8810 = vadd.f32 %v8292, %v8792
  %v8811 = vadd.f32 %v8293, %v8792
  %v8812 = vadd.f32 %v8294, %v8792
  %v8813 = vadd.f32 %v8295, %v8792
  %v8814 = vadd.f32 %v8296, %v8792
  %v8815 = vadd.f32 %v8297, %v8792
  %v8816 = vadd.f32 %v8298, %v8792
  %v8817 = vadd.f32 %v8299, %v8792
  %v8818 = vadd.f32 %v8300, %v8792
  %v8819 = vadd.f32 %v8301, %v8792
  %v8820 = vadd.f32 %v8302, %v8792
  %v8821 = vadd.f32 %v8303, %v8792
  %v8822 = vadd.f32 %v8304, %v8792
  %v8823 = vadd.f32 %v8305, %v8792
  %v8824 = vadd.f32 %v8306, %v8792
  %v8825 = vadd.f32 %v8307, %v8792
  %v8826 = vadd.f32 %v8308, %v8792
  %v8827 = vadd.f32 %v8309, %v8792
  %v8828 = vadd.f32 %v8310, %v8792
  %v8829 = vadd.f32 %v8311, %v8792
  %v8830 = vadd.f32 %v8312, %v8792
  %v8831 = vadd.f32 %v8313, %v8792
  %v8832 = vadd.f32 %v8314, %v8792
  %v8833 = vadd.f32 %v8315, %v8792
  %v8834 = vadd.f32 %v8316, %v8792
  %v8835 = vadd.f32 %v8317, %v8792
  %v8836 = vadd.f32 %v8318, %v8792
  %v8837 = vadd.f32 %v8319, %v8792
  %v8838 = vadd.f32 %v8320, %v8792
  %v8839 = vadd.f32 %v8321, %v8792
  %v8840 = vadd.f32 %v8322, %v8792
  %v8841 = vadd.f32 %v8323, %v8792
  %v8842 = vadd.f32 %v8324, %v8792
  %v8843 = vadd.f32 %v8325, %v8792
  %v8844 = vadd.f32 %v8326, %v8792
  %v8845 = vadd.f32 %v8327, %v8792
  %v8846 = vadd.f32 %v8328, %v8792
  %v8847 = vadd.f32 %v8329, %v8792
  %v8848 = vadd.f32 %v8330, %v8792
  %v8849 = vadd.f32 %v8331, %v8792
  %v8850 = vadd.f32 %v8332, %v8792
  %v8851 = vadd.f32 %v8333, %v8792
  %v8852 = vadd.f32 %v8334, %v8792
  %v8853 = vadd.f32 %v8335, %v8792
  %v8854 = vadd.f32 %v8336, %v8792
  %v8855 = vadd.f32 %v8337, %v8792
  %v8856 = vadd.f32 %v8338, %v8792
  %v8857 = vadd.f32 %v8339, %v8792
  %v8858 = vadd.f32 %v8340, %v8792
  %v8859 = vadd.f32 %v8341, %v8792
  %v8860 = vadd.f32 %v8342, %v8792
  %v8861 = vadd.f32 %v8343, %v8792
  %v8862 = vadd.f32 %v8344, %v8792
  %v8863 = vadd.f32 %v8345, %v8792
  %v8864 = vadd.f32 %v8346, %v8792
  %v8865 = vadd.f32 %v8347, %v8792
  %v8866 = vadd.f32 %v8348, %v8792
  %v8867 = vadd.f32 %v8349, %v8792
  %v8868 = vadd.f32 %v8350, %v8792
  %v8869 = vadd.f32 %v8351, %v8792
  %v8870 = vadd.f32 %v8352, %v8792
  %v8871 = vadd.f32 %v8353, %v8792
  %v8872 = vadd.f32 %v8354, %v8792
  %v8873 = vadd.f32 %v8355, %v8792
  %v8874 = vadd.f32 %v8356, %v8792
  %v8875 = vadd.f32 %v8357, %v8792
  %v8876 = vadd.f32 %v8358, %v8792
  %v8877 = vadd.f32 %v8359, %v8792
  %v8878 = vadd.f32 %v8360, %v8792
  %v8879 = vadd.f32 %v8361, %v8792
  %v8880 = vadd.f32 %v8362, %v8792
  %v8881 = vadd.f32 %v8363, %v8792
  %v8882 = vadd.f32 %v8364, %v8792
  %v8883 = vadd.f32 %v8365, %v8792
  %v8884 = vadd.f32 %v8366, %v8792
  %v8885 = vadd.f32 %v8367, %v8792
  %v8886 = vadd.f32 %v8368, %v8792
  %v8887 = vadd.f32 %v8369, %v8792
  %v8888 = vadd.f32 %v8370, %v8792
  %v8889 = vadd.f32 %v8371, %v8792
  %v8890 = vadd.f32 %v8372, %v8792
  %v8891 = vadd.f32 %v8373, %v8792
  %v8892 = vadd.f32 %v8374, %v8792
  %v8893 = vadd.f32 %v8375, %v8792
  %v8894 = vadd.f32 %v8376, %v8792
  %v8895 = vadd.f32 %v8377, %v8792
  %v8896 = vadd.f32 %v8378, %v8792
  %v8897 = vadd.f32 %v8379, %v8792
  %v8898 = vadd.f32 %v8380, %v8792
  %v8899 = vadd.f32 %v8381, %v8792
  %v8900 = vadd.f32 %v8382, %v8792
  %v8901 = vadd.f32 %v8383, %v8792
  %v8902 = vadd.f32 %v8384, %v8792
  %v8903 = vadd.f32 %v8385, %v8792
  %v8904 = vadd.f32 %v8386, %v8792
  %v8905 = vadd.f32 %v8387, %v8792
  %v8906 = vadd.f32 %v8388, %v8792
  %v8907 = vadd.f32 %v8389, %v8792
  %v8908 = vadd.f32 %v8390, %v8792
  %v8909 = vadd.f32 %v8391, %v8792
  %v8910 = vadd.f32 %v8392, %v8792
  %v8911 = vadd.f32 %v8393, %v8792
  %v8912 = vadd.f32 %v8394, %v8792
  %v8913 = vadd.f32 %v8395, %v8792
  %v8914 = vadd.f32 %v8396, %v8792
  %v8915 = vadd.f32 %v8397, %v8792
  %v8916 = vadd.f32 %v8398, %v8792
  %v8917 = vadd.f32 %v8399, %v8792
  %v8918 = vadd.f32 %v8400, %v8792
  %v8919 = vadd.f32 %v8401, %v8792
  %v8920 = vadd.f32 %v8402, %v8792
  %v8921 = vadd.f32 %v8403, %v8792
  %v8922 = vadd.f32 %v8404, %v8792
  %v8923 = vadd.f32 %v8405, %v8792
  %v8924 = vadd.f32 %v8406, %v8792
  %v8925 = vadd.f32 %v8407, %v8792
  %v8926 = vadd.f32 %v8408, %v8792
  %v8927 = vadd.f32 %v8409, %v8792
  %v8928 = vadd.f32 %v8410, %v8792
  %v8929 = vadd.f32 %v8411, %v8792
  %v8930 = vadd.f32 %v8412, %v8792
  %v8931 = vadd.f32 %v8413, %v8792
  %v8932 = vadd.f32 %v8414, %v8792
  %v8933 = vadd.f32 %v8415, %v8792
  %v8934 = vadd.f32 %v8416, %v8792
  %v8935 = vadd.f32 %v8417, %v8792
  %v8936 = vadd.f32 %v8418, %v8792
  %v8937 = vadd.f32 %v8419, %v8792
  %v8938 = vadd.f32 %v8420, %v8792
  %v8939 = vadd.f32 %v8421, %v8792
  %v8940 = vadd.f32 %v8422, %v8792
  %v8941 = vadd.f32 %v8423, %v8792
  %v8942 = vadd.f32 %v8424, %v8792
  %v8943 = vadd.f32 %v8425, %v8792
  %v8944 = vadd.f32 %v8426, %v8792
  %v8945 = vadd.f32 %v8427, %v8792
  %v8946 = vadd.f32 %v8428, %v8792
  %v8947 = vadd.f32 %v8429, %v8792
  %v8948 = vadd.f32 %v8430, %v8792
  %v8949 = vadd.f32 %v8431, %v8792
  %v8950 = vadd.f32 %v8432, %v8792
  %v8951 = vadd.f32 %v8433, %v8792
  %v8952 = vadd.f32 %v8434, %v8792
  %v8953 = vadd.f32 %v8435, %v8792
  %v8954 = vadd.f32 %v8436, %v8792
  %v8955 = vadd.f32 %v8437, %v8792
  %v8956 = vadd.f32 %v8438, %v8792
  %v8957 = vadd.f32 %v8439, %v8792
  %v8958 = vadd.f32 %v8440, %v8792
  %v8959 = vadd.f32 %v8441, %v8792
  %v8960 = vadd.f32 %v8442, %v8792
  %v8961 = vadd.f32 %v8443, %v8792
  %v8962 = vadd.f32 %v8444, %v8792
  %v8963 = vadd.f32 %v8445, %v8792
  %v8964 = vadd.f32 %v8446, %v8792
  %v8965 = vadd.f32 %v8447, %v8792
  %v8966 = vadd.f32 %v8448, %v8792
  %v8967 = vadd.f32 %v8449, %v8792
  %v8968 = vadd.f32 %v8450, %v8792
  %v8969 = vadd.f32 %v8451, %v8792
  %v8970 = vadd.f32 %v8452, %v8792
  %v8971 = vadd.f32 %v8453, %v8792
  %v8972 = vadd.f32 %v8454, %v8792
  %v8973 = vadd.f32 %v8455, %v8792
  %v8974 = vadd.f32 %v8456, %v8792
  %v8975 = vadd.f32 %v8457, %v8792
  %v8976 = vadd.f32 %v8458, %v8792
  %v8977 = vadd.f32 %v8459, %v8792
  %v8978 = vadd.f32 %v8460, %v8792
  %v8979 = vadd.f32 %v8461, %v8792
  %v8980 = vadd.f32 %v8462, %v8792
  %v8981 = vadd.f32 %v8463, %v8792
  %v8982 = vadd.f32 %v8464, %v8792
  %v8983 = vadd.f32 %v8465, %v8792
  %v8984 = vadd.f32 %v8466, %v8792
  %v8985 = vadd.f32 %v8467, %v8792
  %v8986 = vadd.f32 %v8468, %v8792
  %v8987 = vadd.f32 %v8469, %v8792
  %v8988 = vadd.f32 %v8470, %v8792
  %v8989 = vadd.f32 %v8471, %v8792
  %v8990 = vadd.f32 %v8472, %v8792
  %v8991 = vadd.f32 %v8473, %v8792
  %v8992 = vadd.f32 %v8474, %v8792
  %v8993 = vadd.f32 %v8475, %v8792
  %v8994 = vadd.f32 %v8476, %v8792
  %v8995 = vadd.f32 %v8477, %v8792
  %v8996 = vadd.f32 %v8478, %v8792
  %v8997 = vadd.f32 %v8479, %v8792
  %v8998 = vadd.f32 %v8480, %v8792
  %v8999 = vadd.f32 %v8481, %v8792
  %v9000 = vadd.f32 %v8482, %v8792
  %v9001 = vadd.f32 %v8483, %v8792
  %v9002 = vadd.f32 %v8484, %v8792
  %v9003 = vadd.f32 %v8485, %v8792
  %v9004 = vadd.f32 %v8486, %v8792
  %v9005 = vadd.f32 %v8487, %v8792
  %v9006 = vadd.f32 %v8488, %v8792
  %v9007 = vadd.f32 %v8489, %v8792
  %v9008 = vadd.f32 %v8490, %v8792
  %v9009 = vadd.f32 %v8491, %v8792
  %v9010 = vadd.f32 %v8492, %v8792
  %v9011 = vadd.f32 %v8493, %v8792
  %v9012 = vadd.f32 %v8494, %v8792
  %v9013 = vadd.f32 %v8495, %v8792
  %v9014 = vadd.f32 %v8496, %v8792
  %v9015 = vadd.f32 %v8497, %v8792
  %v9016 = vadd.f32 %v8498, %v8792
  %v9017 = vadd.f32 %v8499, %v8792
  %v9018 = vadd.f32 %v8500, %v8792
  %v9019 = vadd.f32 %v8501, %v8792
  %v9020 = vadd.f32 %v8502, %v8792
  %v9021 = vadd.f32 %v8503, %v8792
  %v9022 = vadd.f32 %v8504, %v8792
  %v9023 = vadd.f32 %v8505, %v8792
  %v9024 = vadd.f32 %v8506, %v8792
  %v9025 = vadd.f32 %v8507, %v8792
  %v9026 = vadd.f32 %v8508, %v8792
  %v9027 = vadd.f32 %v8509, %v8792
  %v9028 = vadd.f32 %v8510, %v8792
  %v9029 = vadd.f32 %v8511, %v8792
  %v9030 = vadd.f32 %v8512, %v8792
  %v9031 = vadd.f32 %v8513, %v8792
  %v9032 = vadd.f32 %v8514, %v8792
  %v9033 = vadd.f32 %v8515, %v8792
  %v9034 = vadd.f32 %v8516, %v8792
  %v9035 = vadd.f32 %v8517, %v8792
  %v9036 = vadd.f32 %v8518, %v8792
  %v9037 = vadd.f32 %v8519, %v8792
  %v9038 = vadd.f32 %v8520, %v8792
  %v9039 = vadd.f32 %v8521, %v8792
  %v9040 = vadd.f32 %v8522, %v8792
  %v9041 = vadd.f32 %v8523, %v8792
  %v9042 = vadd.f32 %v8524, %v8792
  %v9043 = vadd.f32 %v8525, %v8792
  %v9044 = vadd.f32 %v8526, %v8792
  %v9045 = vadd.f32 %v8527, %v8792
  %v9046 = vadd.f32 %v8528, %v8792
  %v9047 = vadd.f32 %v8529, %v8792
  %v9048 = vadd.f32 %v8530, %v8792
  %v9049 = vadd.f32 %v8531, %v8792
  %v9050 = vadd.f32 %v8532, %v8792
  %v9051 = vadd.f32 %v8533, %v8792
  %v9052 = vadd.f32 %v8534, %v8792
  %v9053 = vadd.f32 %v8535, %v8792
  %v9054 = vadd.f32 %v8536, %v8792
  %v9055 = vadd.f32 %v8537, %v8792
  %v9056 = vadd.f32 %v8538, %v8792
  %v9057 = vadd.f32 %v8539, %v8792
  %v9058 = vadd.f32 %v8540, %v8792
  %v9059 = vadd.f32 %v8541, %v8792
  %v9060 = vadd.f32 %v8542, %v8792
  %v9061 = vadd.f32 %v8543, %v8792
  %v9062 = vadd.f32 %v8544, %v8792
  %v9063 = vadd.f32 %v8545, %v8792
  %v9064 = vadd.f32 %v8546, %v8792
  %v9065 = vadd.f32 %v8547, %v8792
  %v9066 = vadd.f32 %v8548, %v8792
  %v9067 = vadd.f32 %v8549, %v8792
  %v9068 = vadd.f32 %v8550, %v8792
  %v9069 = vadd.f32 %v8551, %v8792
  %v9070 = vadd.f32 %v8552, %v8792
  %v9071 = vadd.f32 %v8553, %v8792
  %v9072 = vadd.f32 %v8554, %v8792
  %v9073 = vadd.f32 %v8555, %v8792
  %v9074 = vadd.f32 %v8556, %v8792
  %v9075 = vadd.f32 %v8557, %v8792
  %v9076 = vadd.f32 %v8558, %v8792
  %v9077 = vadd.f32 %v8559, %v8792
  %v9078 = vadd.f32 %v8560, %v8792
  %v9079 = vadd.f32 %v8561, %v8792
  %v9080 = vadd.f32 %v8562, %v8792
  %v9081 = vadd.f32 %v8563, %v8792
  %v9082 = vadd.f32 %v8564, %v8792
  %v9083 = vadd.f32 %v8565, %v8792
  %v9084 = vadd.f32 %v8566, %v8792
  %v9085 = vadd.f32 %v8567, %v8792
  %v9086 = vadd.f32 %v8568, %v8792
  %v9087 = vadd.f32 %v8569, %v8792
  %v9088 = vadd.f32 %v8570, %v8792
  %v9089 = vadd.f32 %v8571, %v8792
  %v9090 = vadd.f32 %v8572, %v8792
  %v9091 = vadd.f32 %v8573, %v8792
  %v9092 = vadd.f32 %v8574, %v8792
  %v9093 = vadd.f32 %v8575, %v8792
  %v9094 = vadd.f32 %v8576, %v8792
  %v9095 = vadd.f32 %v8577, %v8792
  %v9096 = vadd.f32 %v8578, %v8792
  %v9097 = vadd.f32 %v8579, %v8792
  %v9098 = vadd.f32 %v8580, %v8792
  %v9099 = vadd.f32 %v8581, %v8792
  %v9100 = vadd.f32 %v8582, %v8792
  %v9101 = vadd.f32 %v8583, %v8792
  %v9102 = vadd.f32 %v8584, %v8792
  %v9103 = vadd.f32 %v8585, %v8792
  %v9104 = vadd.f32 %v8586, %v8792
  %v9105 = vadd.f32 %v8587, %v8792
  %v9106 = vadd.f32 %v8588, %v8792
  %v9107 = vadd.f32 %v8589, %v8792
  %v9108 = vadd.f32 %v8590, %v8792
  %v9109 = vadd.f32 %v8591, %v8792
  %v9110 = vadd.f32 %v8592, %v8792
  %v9111 = vadd.f32 %v8593, %v8792
  %v9112 = vadd.f32 %v8594, %v8792
  %v9113 = vadd.f32 %v8595, %v8792
  %v9114 = vadd.f32 %v8596, %v8792
  %v9115 = vadd.f32 %v8597, %v8792
  %v9116 = vadd.f32 %v8598, %v8792
  %v9117 = vadd.f32 %v8599, %v8792
  %v9118 = vadd.f32 %v8600, %v8792
  %v9119 = vadd.f32 %v8601, %v8792
  %v9120 = vadd.f32 %v8602, %v8792
  %v9121 = vadd.f32 %v8603, %v8792
  %v9122 = vadd.f32 %v8604, %v8792
  %v9123 = vadd.f32 %v8605, %v8792
  %v9124 = vadd.f32 %v8606, %v8792
  %v9125 = vadd.f32 %v8607, %v8792
  %v9126 = vadd.f32 %v8608, %v8792
  %v9127 = vadd.f32 %v8609, %v8792
  %v9128 = vadd.f32 %v8610, %v8792
  %v9129 = vadd.f32 %v8611, %v8792
  %v9130 = vadd.f32 %v8612, %v8792
  %v9131 = vadd.f32 %v8613, %v8792
  %v9132 = vadd.f32 %v8614, %v8792
  %v9133 = vadd.f32 %v8615, %v8792
  %v9134 = vadd.f32 %v8616, %v8792
  %v9135 = vadd.f32 %v8617, %v8792
  %v9136 = vadd.f32 %v8618, %v8792
  %v9137 = vadd.f32 %v8619, %v8792
  %v9138 = vadd.f32 %v8620, %v8792
  %v9139 = vadd.f32 %v8621, %v8792
  %v9140 = vadd.f32 %v8622, %v8792
  %v9141 = vadd.f32 %v8623, %v8792
  %v9142 = vadd.f32 %v8624, %v8792
  %v9143 = vadd.f32 %v8625, %v8792
  %v9144 = vadd.f32 %v8626, %v8792
  %v9145 = vadd.f32 %v8627, %v8792
  %v9146 = vadd.f32 %v8628, %v8792
  %v9147 = vadd.f32 %v8629, %v8792
  %v9148 = vadd.f32 %v8630, %v8792
  %v9149 = vadd.f32 %v8631, %v8792
  %v9150 = vadd.f32 %v8632, %v8792
  %v9151 = vadd.f32 %v8633, %v8792
  %v9152 = vadd.f32 %v8634, %v8792
  %v9153 = vadd.f32 %v8635, %v8792
  %v9154 = vadd.f32 %v8636, %v8792
  %v9155 = vadd.f32 %v8637, %v8792
  %v9156 = vadd.f32 %v8638, %v8792
  %v9157 = vadd.f32 %v8639, %v8792
  %v9158 = vadd.f32 %v8640, %v8792
  %v9159 = vadd.f32 %v8641, %v8792
  %v9160 = vadd.f32 %v8642, %v8792
  %v9161 = vadd.f32 %v8643, %v8792
  %v9162 = vadd.f32 %v8644, %v8792
  %v9163 = vadd.f32 %v8645, %v8792
  %v9164 = vadd.f32 %v8646, %v8792
  %v9165 = vadd.f32 %v8647, %v8792
  %v9166 = vadd.f32 %v8648, %v8792
  %v9167 = vadd.f32 %v8649, %v8792
  %v9168 = vadd.f32 %v8650, %v8792
  %v9169 = vadd.f32 %v8651, %v8792
  %v9170 = vadd.f32 %v8652, %v8792
  %v9171 = vadd.f32 %v8653, %v8792
  %v9172 = vadd.f32 %v8654, %v8792
  %v9173 = vadd.f32 %v8655, %v8792
  %v9174 = vadd.f32 %v8656, %v8792
  %v9175 = vadd.f32 %v8657, %v8792
  %v9176 = vadd.f32 %v8658, %v8792
  %v9177 = vadd.f32 %v8659, %v8792
  %v9178 = vadd.f32 %v8660, %v8792
  %v9179 = vadd.f32 %v8661, %v8792
  %v9180 = vadd.f32 %v8662, %v8792
  %v9181 = vadd.f32 %v8663, %v8792
  %v9182 = vadd.f32 %v8664, %v8792
  %v9183 = vadd.f32 %v8665, %v8792
  %v9184 = vadd.f32 %v8666, %v8792
  %v9185 = vadd.f32 %v8667, %v8792
  %v9186 = vadd.f32 %v8668, %v8792
  %v9187 = vadd.f32 %v8669, %v8792
  %v9188 = vadd.f32 %v8670, %v8792
  %v9189 = vadd.f32 %v8671, %v8792
  %v9190 = vadd.f32 %v8672, %v8792
  %v9191 = vadd.f32 %v8673, %v8792
  %v9192 = vadd.f32 %v8674, %v8792
  %v9193 = vadd.f32 %v8675, %v8792
  %v9194 = vadd.f32 %v8676, %v8792
  %v9195 = vadd.f32 %v8677, %v8792
  %v9196 = vadd.f32 %v8678, %v8792
  %v9197 = vadd.f32 %v8679, %v8792
  %v9198 = vadd.f32 %v8680, %v8792
  %v9199 = vadd.f32 %v8681, %v8792
  %v9200 = vadd.f32 %v8682, %v8792
  %v9201 = vadd.f32 %v8683, %v8792
  %v9202 = vadd.f32 %v8684, %v8792
  %v9203 = vadd.f32 %v8685, %v8792
  %v9204 = vadd.f32 %v8686, %v8792
  %v9205 = vadd.f32 %v8687, %v8792
  %v9206 = vadd.f32 %v8688, %v8792
  %v9207 = vadd.f32 %v8689, %v8792
  %v9208 = vadd.f32 %v8690, %v8792
  %v9209 = vadd.f32 %v8691, %v8792
  %v9210 = vadd.f32 %v8692, %v8792
  %v9211 = vadd.f32 %v8693, %v8792
  %v9212 = vadd.f32 %v8694, %v8792
  %v9213 = vadd.f32 %v8695, %v8792
  %v9214 = vadd.f32 %v8696, %v8792
  %v9215 = vadd.f32 %v8697, %v8792
  %v9216 = vadd.f32 %v8698, %v8792
  %v9217 = vadd.f32 %v8699, %v8792
  %v9218 = vadd.f32 %v8700, %v8792
  %v9219 = vadd.f32 %v8701, %v8792
  %v9220 = vadd.f32 %v8702, %v8792
  %v9221 = vadd.f32 %v8703, %v8792
  %v9222 = vadd.f32 %v8704, %v8792
  %v9223 = vadd.f32 %v8705, %v8792
  %v9224 = vadd.f32 %v8706, %v8792
  %v9225 = vadd.f32 %v8707, %v8792
  %v9226 = vadd.f32 %v8708, %v8792
  %v9227 = vadd.f32 %v8709, %v8792
  %v9228 = vadd.f32 %v8710, %v8792
  %v9229 = vadd.f32 %v8711, %v8792
  %v9230 = vadd.f32 %v8712, %v8792
  %v9231 = vadd.f32 %v8713, %v8792
  %v9232 = vadd.f32 %v8714, %v8792
  %v9233 = vadd.f32 %v8715, %v8792
  %v9234 = vadd.f32 %v8716, %v8792
  %v9235 = vadd.f32 %v8717, %v8792
  %v9236 = vadd.f32 %v8718, %v8792
  %v9237 = vadd.f32 %v8719, %v8792
  %v9238 = vadd.f32 %v8720, %v8792
  %v9239 = vadd.f32 %v8721, %v8792
  %v9240 = vadd.f32 %v8722, %v8792
  %v9241 = vadd.f32 %v8723, %v8792
  %v9242 = vadd.f32 %v8724, %v8792
  %v9243 = vadd.f32 %v8725, %v8792
  %v9244 = vadd.f32 %v8726, %v8792
  %v9245 = vadd.f32 %v8727, %v8792
  %v9246 = vadd.f32 %v8728, %v8792
  %v9247 = vadd.f32 %v8729, %v8792
  %v9248 = vadd.f32 %v8730, %v8792
  %v9249 = vadd.f32 %v8731, %v8792
  %v9250 = vadd.f32 %v8732, %v8792
  %v9251 = vadd.f32 %v8733, %v8792
  %v9252 = vadd.f32 %v8734, %v8792
  %v9253 = vadd.f32 %v8735, %v8792
  %v9254 = vadd.f32 %v8736, %v8792
  %v9255 = vadd.f32 %v8737, %v8792
  %v9256 = vadd.f32 %v8738, %v8792
  %v9257 = vadd.f32 %v8739, %v8792
  %v9258 = vadd.f32 %v8740, %v8792
  %v9259 = vadd.f32 %v8741, %v8792
  %v9260 = vadd.f32 %v8742, %v8792
  %v9261 = vadd.f32 %v8743, %v8792
  %v9262 = vadd.f32 %v8744, %v8792
  %v9263 = vadd.f32 %v8745, %v8792
  %v9264 = vadd.f32 %v8746, %v8792
  %v9265 = vadd.f32 %v8747, %v8792
  %v9266 = vadd.f32 %v8748, %v8792
  %v9267 = vadd.f32 %v8749, %v8792
  %v9268 = vadd.f32 %v8750, %v8792
  %v9269 = vadd.f32 %v8751, %v8792
  %v9270 = vadd.f32 %v8752, %v8792
  %v9271 = vadd.f32 %v8753, %v8792
  %v9272 = vadd.f32 %v8754, %v8792
  %v9273 = vadd.f32 %v8755, %v8792
  %v9274 = vadd.f32 %v8756, %v8792
  %v9275 = vadd.f32 %v8757, %v8792
  %v9276 = vadd.f32 %v8758, %v8792
  %v9277 = vadd.f32 %v8759, %v8792
  %v9278 = vadd.f32 %v8760, %v8792
  %v9279 = vadd.f32 %v8761, %v8792
  %v9280 = vadd.f32 %v8762, %v8792
  %v9281 = vadd.f32 %v8763, %v8792
  %v9282 = vadd.f32 %v8764, %v8792
  %v9283 = vadd.f32 %v8765, %v8792
  %v9284 = vadd.f32 %v8766, %v8792
  %v9285 = vadd.f32 %v8767, %v8792
  %v9286 = vadd.f32 %v8768, %v8792
  %v9287 = vadd.f32 %v8769, %v8792
  %v9288 = vadd.f32 %v8770, %v8792
  %v9289 = vadd.f32 %v8771, %v8792
  %v9290 = vadd.f32 %v8772, %v8792
  %v9291 = vadd.f32 %v8773, %v8792
  %v9292 = vadd.f32 %v8774, %v8792
  %v9293 = vadd.f32 %v8775, %v8792
  %v9294 = vadd.f32 %v8776, %v8792
  %v9295 = vadd.f32 %v8777, %v8792
  %v9296 = vadd.f32 %v8778, %v8792
  %v9297 = vadd.f32 %v8779, %v8792
  %v9298 = vadd.f32 %v8780, %v8792
  %v9299 = vadd.f32 %v8781, %v8792
  %v9300 = vadd.f32 %v8782, %v8792
  %v9301 = vadd.f32 %v8783, %v8792
  %v9302 = vadd.f32 %v8784, %v8792
  %v9303 = vadd.f32 %v8785, %v8792
  %v9304 = vadd.f32 %v8786, %v8792
  %v9305 = vadd.f32 %v8787, %v8792
  %v9306 = vmax.f32 %v8794, 0.0
  %v9307 = vmax.f32 %v8795, 0.0
  %v9308 = vmax.f32 %v8796, 0.0
  %v9309 = vmax.f32 %v8797, 0.0
  %v9310 = vmax.f32 %v8798, 0.0
  %v9311 = vmax.f32 %v8799, 0.0
  %v9312 = vmax.f32 %v8800, 0.0
  %v9313 = vmax.f32 %v8801, 0.0
  %v9314 = vmax.f32 %v8802, 0.0
  %v9315 = vmax.f32 %v8803, 0.0
  %v9316 = vmax.f32 %v8804, 0.0
  %v9317 = vmax.f32 %v8805, 0.0
  %v9318 = vmax.f32 %v8806, 0.0
  %v9319 = vmax.f32 %v8807, 0.0
  %v9320 = vmax.f32 %v8808, 0.0
  %v9321 = vmax.f32 %v8809, 0.0
  %v9322 = vmax.f32 %v8810, 0.0
  %v9323 = vmax.f32 %v8811, 0.0
  %v9324 = vmax.f32 %v8812, 0.0
  %v9325 = vmax.f32 %v8813, 0.0
  %v9326 = vmax.f32 %v8814, 0.0
  %v9327 = vmax.f32 %v8815, 0.0
  %v9328 = vmax.f32 %v8816, 0.0
  %v9329 = vmax.f32 %v8817, 0.0
  %v9330 = vmax.f32 %v8818, 0.0
  %v9331 = vmax.f32 %v8819, 0.0
  %v9332 = vmax.f32 %v8820, 0.0
  %v9333 = vmax.f32 %v8821, 0.0
  %v9334 = vmax.f32 %v8822, 0.0
  %v9335 = vmax.f32 %v8823, 0.0
  %v9336 = vmax.f32 %v8824, 0.0
  %v9337 = vmax.f32 %v8825, 0.0
  %v9338 = vmax.f32 %v8826, 0.0
  %v9339 = vmax.f32 %v8827, 0.0
  %v9340 = vmax.f32 %v8828, 0.0
  %v9341 = vmax.f32 %v8829, 0.0
  %v9342 = vmax.f32 %v8830, 0.0
  %v9343 = vmax.f32 %v8831, 0.0
  %v9344 = vmax.f32 %v8832, 0.0
  %v9345 = vmax.f32 %v8833, 0.0
  %v9346 = vmax.f32 %v8834, 0.0
  %v9347 = vmax.f32 %v8835, 0.0
  %v9348 = vmax.f32 %v8836, 0.0
  %v9349 = vmax.f32 %v8837, 0.0
  %v9350 = vmax.f32 %v8838, 0.0
  %v9351 = vmax.f32 %v8839, 0.0
  %v9352 = vmax.f32 %v8840, 0.0
  %v9353 = vmax.f32 %v8841, 0.0
  %v9354 = vmax.f32 %v8842, 0.0
  %v9355 = vmax.f32 %v8843, 0.0
  %v9356 = vmax.f32 %v8844, 0.0
  %v9357 = vmax.f32 %v8845, 0.0
  %v9358 = vmax.f32 %v8846, 0.0
  %v9359 = vmax.f32 %v8847, 0.0
  %v9360 = vmax.f32 %v8848, 0.0
  %v9361 = vmax.f32 %v8849, 0.0
  %v9362 = vmax.f32 %v8850, 0.0
  %v9363 = vmax.f32 %v8851, 0.0
  %v9364 = vmax.f32 %v8852, 0.0
  %v9365 = vmax.f32 %v8853, 0.0
  %v9366 = vmax.f32 %v8854, 0.0
  %v9367 = vmax.f32 %v8855, 0.0
  %v9368 = vmax.f32 %v8856, 0.0
  %v9369 = vmax.f32 %v8857, 0.0
  %v9370 = vmax.f32 %v8858, 0.0
  %v9371 = vmax.f32 %v8859, 0.0
  %v9372 = vmax.f32 %v8860, 0.0
  %v9373 = vmax.f32 %v8861, 0.0
  %v9374 = vmax.f32 %v8862, 0.0
  %v9375 = vmax.f32 %v8863, 0.0
  %v9376 = vmax.f32 %v8864, 0.0
  %v9377 = vmax.f32 %v8865, 0.0
  %v9378 = vmax.f32 %v8866, 0.0
  %v9379 = vmax.f32 %v8867, 0.0
  %v9380 = vmax.f32 %v8868, 0.0
  %v9381 = vmax.f32 %v8869, 0.0
  %v9382 = vmax.f32 %v8870, 0.0
  %v9383 = vmax.f32 %v8871, 0.0
  %v9384 = vmax.f32 %v8872, 0.0
  %v9385 = vmax.f32 %v8873, 0.0
  %v9386 = vmax.f32 %v8874, 0.0
  %v9387 = vmax.f32 %v8875, 0.0
  %v9388 = vmax.f32 %v8876, 0.0
  %v9389 = vmax.f32 %v8877, 0.0
  %v9390 = vmax.f32 %v8878, 0.0
  %v9391 = vmax.f32 %v8879, 0.0
  %v9392 = vmax.f32 %v8880, 0.0
  %v9393 = vmax.f32 %v8881, 0.0
  %v9394 = vmax.f32 %v8882, 0.0
  %v9395 = vmax.f32 %v8883, 0.0
  %v9396 = vmax.f32 %v8884, 0.0
  %v9397 = vmax.f32 %v8885, 0.0
  %v9398 = vmax.f32 %v8886, 0.0
  %v9399 = vmax.f32 %v8887, 0.0
  %v9400 = vmax.f32 %v8888, 0.0
  %v9401 = vmax.f32 %v8889, 0.0
  %v9402 = vmax.f32 %v8890, 0.0
  %v9403 = vmax.f32 %v8891, 0.0
  %v9404 = vmax.f32 %v8892, 0.0
  %v9405 = vmax.f32 %v8893, 0.0
  %v9406 = vmax.f32 %v8894, 0.0
  %v9407 = vmax.f32 %v8895, 0.0
  %v9408 = vmax.f32 %v8896, 0.0
  %v9409 = vmax.f32 %v8897, 0.0
  %v9410 = vmax.f32 %v8898, 0.0
  %v9411 = vmax.f32 %v8899, 0.0
  %v9412 = vmax.f32 %v8900, 0.0
  %v9413 = vmax.f32 %v8901, 0.0
  %v9414 = vmax.f32 %v8902, 0.0
  %v9415 = vmax.f32 %v8903, 0.0
  %v9416 = vmax.f32 %v8904, 0.0
  %v9417 = vmax.f32 %v8905, 0.0
  %v9418 = vmax.f32 %v8906, 0.0
  %v9419 = vmax.f32 %v8907, 0.0
  %v9420 = vmax.f32 %v8908, 0.0
  %v9421 = vmax.f32 %v8909, 0.0
  %v9422 = vmax.f32 %v8910, 0.0
  %v9423 = vmax.f32 %v8911, 0.0
  %v9424 = vmax.f32 %v8912, 0.0
  %v9425 = vmax.f32 %v8913, 0.0
  %v9426 = vmax.f32 %v8914, 0.0
  %v9427 = vmax.f32 %v8915, 0.0
  %v9428 = vmax.f32 %v8916, 0.0
  %v9429 = vmax.f32 %v8917, 0.0
  %v9430 = vmax.f32 %v8918, 0.0
  %v9431 = vmax.f32 %v8919, 0.0
  %v9432 = vmax.f32 %v8920, 0.0
  %v9433 = vmax.f32 %v8921, 0.0
  %v9434 = vmax.f32 %v8922, 0.0
  %v9435 = vmax.f32 %v8923, 0.0
  %v9436 = vmax.f32 %v8924, 0.0
  %v9437 = vmax.f32 %v8925, 0.0
  %v9438 = vmax.f32 %v8926, 0.0
  %v9439 = vmax.f32 %v8927, 0.0
  %v9440 = vmax.f32 %v8928, 0.0
  %v9441 = vmax.f32 %v8929, 0.0
  %v9442 = vmax.f32 %v8930, 0.0
  %v9443 = vmax.f32 %v8931, 0.0
  %v9444 = vmax.f32 %v8932, 0.0
  %v9445 = vmax.f32 %v8933, 0.0
  %v9446 = vmax.f32 %v8934, 0.0
  %v9447 = vmax.f32 %v8935, 0.0
  %v9448 = vmax.f32 %v8936, 0.0
  %v9449 = vmax.f32 %v8937, 0.0
  %v9450 = vmax.f32 %v8938, 0.0
  %v9451 = vmax.f32 %v8939, 0.0
  %v9452 = vmax.f32 %v8940, 0.0
  %v9453 = vmax.f32 %v8941, 0.0
  %v9454 = vmax.f32 %v8942, 0.0
  %v9455 = vmax.f32 %v8943, 0.0
  %v9456 = vmax.f32 %v8944, 0.0
  %v9457 = vmax.f32 %v8945, 0.0
  %v9458 = vmax.f32 %v8946, 0.0
  %v9459 = vmax.f32 %v8947, 0.0
  %v9460 = vmax.f32 %v8948, 0.0
  %v9461 = vmax.f32 %v8949, 0.0
  %v9462 = vmax.f32 %v8950, 0.0
  %v9463 = vmax.f32 %v8951, 0.0
  %v9464 = vmax.f32 %v8952, 0.0
  %v9465 = vmax.f32 %v8953, 0.0
  %v9466 = vmax.f32 %v8954, 0.0
  %v9467 = vmax.f32 %v8955, 0.0
  %v9468 = vmax.f32 %v8956, 0.0
  %v9469 = vmax.f32 %v8957, 0.0
  %v9470 = vmax.f32 %v8958, 0.0
  %v9471 = vmax.f32 %v8959, 0.0
  %v9472 = vmax.f32 %v8960, 0.0
  %v9473 = vmax.f32 %v8961, 0.0
  %v9474 = vmax.f32 %v8962, 0.0
  %v9475 = vmax.f32 %v8963, 0.0
  %v9476 = vmax.f32 %v8964, 0.0
  %v9477 = vmax.f32 %v8965, 0.0
  %v9478 = vmax.f32 %v8966, 0.0
  %v9479 = vmax.f32 %v8967, 0.0
  %v9480 = vmax.f32 %v8968, 0.0
  %v9481 = vmax.f32 %v8969, 0.0
  %v9482 = vmax.f32 %v8970, 0.0
  %v9483 = vmax.f32 %v8971, 0.0
  %v9484 = vmax.f32 %v8972, 0.0
  %v9485 = vmax.f32 %v8973, 0.0
  %v9486 = vmax.f32 %v8974, 0.0
  %v9487 = vmax.f32 %v8975, 0.0
  %v9488 = vmax.f32 %v8976, 0.0
  %v9489 = vmax.f32 %v8977, 0.0
  %v9490 = vmax.f32 %v8978, 0.0
  %v9491 = vmax.f32 %v8979, 0.0
  %v9492 = vmax.f32 %v8980, 0.0
  %v9493 = vmax.f32 %v8981, 0.0
  %v9494 = vmax.f32 %v8982, 0.0
  %v9495 = vmax.f32 %v8983, 0.0
  %v9496 = vmax.f32 %v8984, 0.0
  %v9497 = vmax.f32 %v8985, 0.0
  %v9498 = vmax.f32 %v8986, 0.0
  %v9499 = vmax.f32 %v8987, 0.0
  %v9500 = vmax.f32 %v8988, 0.0
  %v9501 = vmax.f32 %v8989, 0.0
  %v9502 = vmax.f32 %v8990, 0.0
  %v9503 = vmax.f32 %v8991, 0.0
  %v9504 = vmax.f32 %v8992, 0.0
  %v9505 = vmax.f32 %v8993, 0.0
  %v9506 = vmax.f32 %v8994, 0.0
  %v9507 = vmax.f32 %v8995, 0.0
  %v9508 = vmax.f32 %v8996, 0.0
  %v9509 = vmax.f32 %v8997, 0.0
  %v9510 = vmax.f32 %v8998, 0.0
  %v9511 = vmax.f32 %v8999, 0.0
  %v9512 = vmax.f32 %v9000, 0.0
  %v9513 = vmax.f32 %v9001, 0.0
  %v9514 = vmax.f32 %v9002, 0.0
  %v9515 = vmax.f32 %v9003, 0.0
  %v9516 = vmax.f32 %v9004, 0.0
  %v9517 = vmax.f32 %v9005, 0.0
  %v9518 = vmax.f32 %v9006, 0.0
  %v9519 = vmax.f32 %v9007, 0.0
  %v9520 = vmax.f32 %v9008, 0.0
  %v9521 = vmax.f32 %v9009, 0.0
  %v9522 = vmax.f32 %v9010, 0.0
  %v9523 = vmax.f32 %v9011, 0.0
  %v9524 = vmax.f32 %v9012, 0.0
  %v9525 = vmax.f32 %v9013, 0.0
  %v9526 = vmax.f32 %v9014, 0.0
  %v9527 = vmax.f32 %v9015, 0.0
  %v9528 = vmax.f32 %v9016, 0.0
  %v9529 = vmax.f32 %v9017, 0.0
  %v9530 = vmax.f32 %v9018, 0.0
  %v9531 = vmax.f32 %v9019, 0.0
  %v9532 = vmax.f32 %v9020, 0.0
  %v9533 = vmax.f32 %v9021, 0.0
  %v9534 = vmax.f32 %v9022, 0.0
  %v9535 = vmax.f32 %v9023, 0.0
  %v9536 = vmax.f32 %v9024, 0.0
  %v9537 = vmax.f32 %v9025, 0.0
  %v9538 = vmax.f32 %v9026, 0.0
  %v9539 = vmax.f32 %v9027, 0.0
  %v9540 = vmax.f32 %v9028, 0.0
  %v9541 = vmax.f32 %v9029, 0.0
  %v9542 = vmax.f32 %v9030, 0.0
  %v9543 = vmax.f32 %v9031, 0.0
  %v9544 = vmax.f32 %v9032, 0.0
  %v9545 = vmax.f32 %v9033, 0.0
  %v9546 = vmax.f32 %v9034, 0.0
  %v9547 = vmax.f32 %v9035, 0.0
  %v9548 = vmax.f32 %v9036, 0.0
  %v9549 = vmax.f32 %v9037, 0.0
  %v9550 = vmax.f32 %v9038, 0.0
  %v9551 = vmax.f32 %v9039, 0.0
  %v9552 = vmax.f32 %v9040, 0.0
  %v9553 = vmax.f32 %v9041, 0.0
  %v9554 = vmax.f32 %v9042, 0.0
  %v9555 = vmax.f32 %v9043, 0.0
  %v9556 = vmax.f32 %v9044, 0.0
  %v9557 = vmax.f32 %v9045, 0.0
  %v9558 = vmax.f32 %v9046, 0.0
  %v9559 = vmax.f32 %v9047, 0.0
  %v9560 = vmax.f32 %v9048, 0.0
  %v9561 = vmax.f32 %v9049, 0.0
  %v9562 = vmax.f32 %v9050, 0.0
  %v9563 = vmax.f32 %v9051, 0.0
  %v9564 = vmax.f32 %v9052, 0.0
  %v9565 = vmax.f32 %v9053, 0.0
  %v9566 = vmax.f32 %v9054, 0.0
  %v9567 = vmax.f32 %v9055, 0.0
  %v9568 = vmax.f32 %v9056, 0.0
  %v9569 = vmax.f32 %v9057, 0.0
  %v9570 = vmax.f32 %v9058, 0.0
  %v9571 = vmax.f32 %v9059, 0.0
  %v9572 = vmax.f32 %v9060, 0.0
  %v9573 = vmax.f32 %v9061, 0.0
  %v9574 = vmax.f32 %v9062, 0.0
  %v9575 = vmax.f32 %v9063, 0.0
  %v9576 = vmax.f32 %v9064, 0.0
  %v9577 = vmax.f32 %v9065, 0.0
  %v9578 = vmax.f32 %v9066, 0.0
  %v9579 = vmax.f32 %v9067, 0.0
  %v9580 = vmax.f32 %v9068, 0.0
  %v9581 = vmax.f32 %v9069, 0.0
  %v9582 = vmax.f32 %v9070, 0.0
  %v9583 = vmax.f32 %v9071, 0.0
  %v9584 = vmax.f32 %v9072, 0.0
  %v9585 = vmax.f32 %v9073, 0.0
  %v9586 = vmax.f32 %v9074, 0.0
  %v9587 = vmax.f32 %v9075, 0.0
  %v9588 = vmax.f32 %v9076, 0.0
  %v9589 = vmax.f32 %v9077, 0.0
  %v9590 = vmax.f32 %v9078, 0.0
  %v9591 = vmax.f32 %v9079, 0.0
  %v9592 = vmax.f32 %v9080, 0.0
  %v9593 = vmax.f32 %v9081, 0.0
  %v9594 = vmax.f32 %v9082, 0.0
  %v9595 = vmax.f32 %v9083, 0.0
  %v9596 = vmax.f32 %v9084, 0.0
  %v9597 = vmax.f32 %v9085, 0.0
  %v9598 = vmax.f32 %v9086, 0.0
  %v9599 = vmax.f32 %v9087, 0.0
  %v9600 = vmax.f32 %v9088, 0.0
  %v9601 = vmax.f32 %v9089, 0.0
  %v9602 = vmax.f32 %v9090, 0.0
  %v9603 = vmax.f32 %v9091, 0.0
  %v9604 = vmax.f32 %v9092, 0.0
  %v9605 = vmax.f32 %v9093, 0.0
  %v9606 = vmax.f32 %v9094, 0.0
  %v9607 = vmax.f32 %v9095, 0.0
  %v9608 = vmax.f32 %v9096, 0.0
  %v9609 = vmax.f32 %v9097, 0.0
  %v9610 = vmax.f32 %v9098, 0.0
  %v9611 = vmax.f32 %v9099, 0.0
  %v9612 = vmax.f32 %v9100, 0.0
  %v9613 = vmax.f32 %v9101, 0.0
  %v9614 = vmax.f32 %v9102, 0.0
  %v9615 = vmax.f32 %v9103, 0.0
  %v9616 = vmax.f32 %v9104, 0.0
  %v9617 = vmax.f32 %v9105, 0.0
  %v9618 = vmax.f32 %v9106, 0.0
  %v9619 = vmax.f32 %v9107, 0.0
  %v9620 = vmax.f32 %v9108, 0.0
  %v9621 = vmax.f32 %v9109, 0.0
  %v9622 = vmax.f32 %v9110, 0.0
  %v9623 = vmax.f32 %v9111, 0.0
  %v9624 = vmax.f32 %v9112, 0.0
  %v9625 = vmax.f32 %v9113, 0.0
  %v9626 = vmax.f32 %v9114, 0.0
  %v9627 = vmax.f32 %v9115, 0.0
  %v9628 = vmax.f32 %v9116, 0.0
  %v9629 = vmax.f32 %v9117, 0.0
  %v9630 = vmax.f32 %v9118, 0.0
  %v9631 = vmax.f32 %v9119, 0.0
  %v9632 = vmax.f32 %v9120, 0.0
  %v9633 = vmax.f32 %v9121, 0.0
  %v9634 = vmax.f32 %v9122, 0.0
  %v9635 = vmax.f32 %v9123, 0.0
  %v9636 = vmax.f32 %v9124, 0.0
  %v9637 = vmax.f32 %v9125, 0.0
  %v9638 = vmax.f32 %v9126, 0.0
  %v9639 = vmax.f32 %v9127, 0.0
  %v9640 = vmax.f32 %v9128, 0.0
  %v9641 = vmax.f32 %v9129, 0.0
  %v9642 = vmax.f32 %v9130, 0.0
  %v9643 = vmax.f32 %v9131, 0.0
  %v9644 = vmax.f32 %v9132, 0.0
  %v9645 = vmax.f32 %v9133, 0.0
  %v9646 = vmax.f32 %v9134, 0.0
  %v9647 = vmax.f32 %v9135, 0.0
  %v9648 = vmax.f32 %v9136, 0.0
  %v9649 = vmax.f32 %v9137, 0.0
  %v9650 = vmax.f32 %v9138, 0.0
  %v9651 = vmax.f32 %v9139, 0.0
  %v9652 = vmax.f32 %v9140, 0.0
  %v9653 = vmax.f32 %v9141, 0.0
  %v9654 = vmax.f32 %v9142, 0.0
  %v9655 = vmax.f32 %v9143, 0.0
  %v9656 = vmax.f32 %v9144, 0.0
  %v9657 = vmax.f32 %v9145, 0.0
  %v9658 = vmax.f32 %v9146, 0.0
  %v9659 = vmax.f32 %v9147, 0.0
  %v9660 = vmax.f32 %v9148, 0.0
  %v9661 = vmax.f32 %v9149, 0.0
  %v9662 = vmax.f32 %v9150, 0.0
  %v9663 = vmax.f32 %v9151, 0.0
  %v9664 = vmax.f32 %v9152, 0.0
  %v9665 = vmax.f32 %v9153, 0.0
  %v9666 = vmax.f32 %v9154, 0.0
  %v9667 = vmax.f32 %v9155, 0.0
  %v9668 = vmax.f32 %v9156, 0.0
  %v9669 = vmax.f32 %v9157, 0.0
  %v9670 = vmax.f32 %v9158, 0.0
  %v9671 = vmax.f32 %v9159, 0.0
  %v9672 = vmax.f32 %v9160, 0.0
  %v9673 = vmax.f32 %v9161, 0.0
  %v9674 = vmax.f32 %v9162, 0.0
  %v9675 = vmax.f32 %v9163, 0.0
  %v9676 = vmax.f32 %v9164, 0.0
  %v9677 = vmax.f32 %v9165, 0.0
  %v9678 = vmax.f32 %v9166, 0.0
  %v9679 = vmax.f32 %v9167, 0.0
  %v9680 = vmax.f32 %v9168, 0.0
  %v9681 = vmax.f32 %v9169, 0.0
  %v9682 = vmax.f32 %v9170, 0.0
  %v9683 = vmax.f32 %v9171, 0.0
  %v9684 = vmax.f32 %v9172, 0.0
  %v9685 = vmax.f32 %v9173, 0.0
  %v9686 = vmax.f32 %v9174, 0.0
  %v9687 = vmax.f32 %v9175, 0.0
  %v9688 = vmax.f32 %v9176, 0.0
  %v9689 = vmax.f32 %v9177, 0.0
  %v9690 = vmax.f32 %v9178, 0.0
  %v9691 = vmax.f32 %v9179, 0.0
  %v9692 = vmax.f32 %v9180, 0.0
  %v9693 = vmax.f32 %v9181, 0.0
  %v9694 = vmax.f32 %v9182, 0.0
  %v9695 = vmax.f32 %v9183, 0.0
  %v9696 = vmax.f32 %v9184, 0.0
  %v9697 = vmax.f32 %v9185, 0.0
  %v9698 = vmax.f32 %v9186, 0.0
  %v9699 = vmax.f32 %v9187, 0.0
  %v9700 = vmax.f32 %v9188, 0.0
  %v9701 = vmax.f32 %v9189, 0.0
  %v9702 = vmax.f32 %v9190, 0.0
  %v9703 = vmax.f32 %v9191, 0.0
  %v9704 = vmax.f32 %v9192, 0.0
  %v9705 = vmax.f32 %v9193, 0.0
  %v9706 = vmax.f32 %v9194, 0.0
  %v9707 = vmax.f32 %v9195, 0.0
  %v9708 = vmax.f32 %v9196, 0.0
  %v9709 = vmax.f32 %v9197, 0.0
  %v9710 = vmax.f32 %v9198, 0.0
  %v9711 = vmax.f32 %v9199, 0.0
  %v9712 = vmax.f32 %v9200, 0.0
  %v9713 = vmax.f32 %v9201, 0.0
  %v9714 = vmax.f32 %v9202, 0.0
  %v9715 = vmax.f32 %v9203, 0.0
  %v9716 = vmax.f32 %v9204, 0.0
  %v9717 = vmax.f32 %v9205, 0.0
  %v9718 = vmax.f32 %v9206, 0.0
  %v9719 = vmax.f32 %v9207, 0.0
  %v9720 = vmax.f32 %v9208, 0.0
  %v9721 = vmax.f32 %v9209, 0.0
  %v9722 = vmax.f32 %v9210, 0.0
  %v9723 = vmax.f32 %v9211, 0.0
  %v9724 = vmax.f32 %v9212, 0.0
  %v9725 = vmax.f32 %v9213, 0.0
  %v9726 = vmax.f32 %v9214, 0.0
  %v9727 = vmax.f32 %v9215, 0.0
  %v9728 = vmax.f32 %v9216, 0.0
  %v9729 = vmax.f32 %v9217, 0.0
  %v9730 = vmax.f32 %v9218, 0.0
  %v9731 = vmax.f32 %v9219, 0.0
  %v9732 = vmax.f32 %v9220, 0.0
  %v9733 = vmax.f32 %v9221, 0.0
  %v9734 = vmax.f32 %v9222, 0.0
  %v9735 = vmax.f32 %v9223, 0.0
  %v9736 = vmax.f32 %v9224, 0.0
  %v9737 = vmax.f32 %v9225, 0.0
  %v9738 = vmax.f32 %v9226, 0.0
  %v9739 = vmax.f32 %v9227, 0.0
  %v9740 = vmax.f32 %v9228, 0.0
  %v9741 = vmax.f32 %v9229, 0.0
  %v9742 = vmax.f32 %v9230, 0.0
  %v9743 = vmax.f32 %v9231, 0.0
  %v9744 = vmax.f32 %v9232, 0.0
  %v9745 = vmax.f32 %v9233, 0.0
  %v9746 = vmax.f32 %v9234, 0.0
  %v9747 = vmax.f32 %v9235, 0.0
  %v9748 = vmax.f32 %v9236, 0.0
  %v9749 = vmax.f32 %v9237, 0.0
  %v9750 = vmax.f32 %v9238, 0.0
  %v9751 = vmax.f32 %v9239, 0.0
  %v9752 = vmax.f32 %v9240, 0.0
  %v9753 = vmax.f32 %v9241, 0.0
  %v9754 = vmax.f32 %v9242, 0.0
  %v9755 = vmax.f32 %v9243, 0.0
  %v9756 = vmax.f32 %v9244, 0.0
  %v9757 = vmax.f32 %v9245, 0.0
  %v9758 = vmax.f32 %v9246, 0.0
  %v9759 = vmax.f32 %v9247, 0.0
  %v9760 = vmax.f32 %v9248, 0.0
  %v9761 = vmax.f32 %v9249, 0.0
  %v9762 = vmax.f32 %v9250, 0.0
  %v9763 = vmax.f32 %v9251, 0.0
  %v9764 = vmax.f32 %v9252, 0.0
  %v9765 = vmax.f32 %v9253, 0.0
  %v9766 = vmax.f32 %v9254, 0.0
  %v9767 = vmax.f32 %v9255, 0.0
  %v9768 = vmax.f32 %v9256, 0.0
  %v9769 = vmax.f32 %v9257, 0.0
  %v9770 = vmax.f32 %v9258, 0.0
  %v9771 = vmax.f32 %v9259, 0.0
  %v9772 = vmax.f32 %v9260, 0.0
  %v9773 = vmax.f32 %v9261, 0.0
  %v9774 = vmax.f32 %v9262, 0.0
  %v9775 = vmax.f32 %v9263, 0.0
  %v9776 = vmax.f32 %v9264, 0.0
  %v9777 = vmax.f32 %v9265, 0.0
  %v9778 = vmax.f32 %v9266, 0.0
  %v9779 = vmax.f32 %v9267, 0.0
  %v9780 = vmax.f32 %v9268, 0.0
  %v9781 = vmax.f32 %v9269, 0.0
  %v9782 = vmax.f32 %v9270, 0.0
  %v9783 = vmax.f32 %v9271, 0.0
  %v9784 = vmax.f32 %v9272, 0.0
  %v9785 = vmax.f32 %v9273, 0.0
  %v9786 = vmax.f32 %v9274, 0.0
  %v9787 = vmax.f32 %v9275, 0.0
  %v9788 = vmax.f32 %v9276, 0.0
  %v9789 = vmax.f32 %v9277, 0.0
  %v9790 = vmax.f32 %v9278, 0.0
  %v9791 = vmax.f32 %v9279, 0.0
  %v9792 = vmax.f32 %v9280, 0.0
  %v9793 = vmax.f32 %v9281, 0.0
  %v9794 = vmax.f32 %v9282, 0.0
  %v9795 = vmax.f32 %v9283, 0.0
  %v9796 = vmax.f32 %v9284, 0.0
  %v9797 = vmax.f32 %v9285, 0.0
  %v9798 = vmax.f32 %v9286, 0.0
  %v9799 = vmax.f32 %v9287, 0.0
  %v9800 = vmax.f32 %v9288, 0.0
  %v9801 = vmax.f32 %v9289, 0.0
  %v9802 = vmax.f32 %v9290, 0.0
  %v9803 = vmax.f32 %v9291, 0.0
  %v9804 = vmax.f32 %v9292, 0.0
  %v9805 = vmax.f32 %v9293, 0.0
  %v9806 = vmax.f32 %v9294, 0.0
  %v9807 = vmax.f32 %v9295, 0.0
  %v9808 = vmax.f32 %v9296, 0.0
  %v9809 = vmax.f32 %v9297, 0.0
  %v9810 = vmax.f32 %v9298, 0.0
  %v9811 = vmax.f32 %v9299, 0.0
  %v9812 = vmax.f32 %v9300, 0.0
  %v9813 = vmax.f32 %v9301, 0.0
  %v9814 = vmax.f32 %v9302, 0.0
  %v9815 = vmax.f32 %v9303, 0.0
  %v9816 = vmax.f32 %v9304, 0.0
  %v9817 = vmax.f32 %v9305, 0.0
  %9818 = vst.msk [vmem:[%s5 + $0x1000] sm:$0xff] %vm542, %v9306
  %9819 = vst.msk [vmem:[%s5 + $0x1008] sm:$0xff] %vm542, %v9307
  %9820 = vst.msk [vmem:[%s5 + $0x1010] sm:$0xff] %vm542, %v9308
  %9821 = vst.msk [vmem:[%s5 + $0x1018] sm:$0xff] %vm542, %v9309
  %9822 = vst.msk [vmem:[%s5 + $0x1020] sm:$0xff] %vm542, %v9310
  %9823 = vst.msk [vmem:[%s5 + $0x1028] sm:$0xff] %vm542, %v9311
  %9824 = vst.msk [vmem:[%s5 + $0x1030] sm:$0xff] %vm542, %v9312
  %9825 = vst.msk [vmem:[%s5 + $0x1038] sm:$0xff] %vm542, %v9313
  %9826 = vst.msk [vmem:[%s5 + $0x1040] sm:$0xff] %vm542, %v9314
  %9827 = vst.msk [vmem:[%s5 + $0x1048] sm:$0xff] %vm542, %v9315
  %9828 = vst.msk [vmem:[%s5 + $0x1050] sm:$0xff] %vm542, %v9316
  %9829 = vst.msk [vmem:[%s5 + $0x1058] sm:$0xff] %vm542, %v9317
  %9830 = vst.msk [vmem:[%s5 + $0x1060] sm:$0xff] %vm542, %v9318
  %9831 = vst.msk [vmem:[%s5 + $0x1068] sm:$0xff] %vm542, %v9319
  %9832 = vst.msk [vmem:[%s5 + $0x1070] sm:$0xff] %vm542, %v9320
  %9833 = vst.msk [vmem:[%s5 + $0x1078] sm:$0xff] %vm542, %v9321
  %9834 = vst.msk [vmem:[%s5 + $0x1080] sm:$0xff] %vm542, %v9322
  %9835 = vst.msk [vmem:[%s5 + $0x1088] sm:$0xff] %vm542, %v9323
  %9836 = vst.msk [vmem:[%s5 + $0x1090] sm:$0xff] %vm542, %v9324
  %9837 = vst.msk [vmem:[%s5 + $0x1098] sm:$0xff] %vm542, %v9325
  %9838 = vst.msk [vmem:[%s5 + $0x10a0] sm:$0xff] %vm542, %v9326
  %9839 = vst.msk [vmem:[%s5 + $0x10a8] sm:$0xff] %vm542, %v9327
  %9840 = vst.msk [vmem:[%s5 + $0x10b0] sm:$0xff] %vm542, %v9328
  %9841 = vst.msk [vmem:[%s5 + $0x10b8] sm:$0xff] %vm542, %v9329
  %9842 = vst.msk [vmem:[%s5 + $0x10c0] sm:$0xff] %vm542, %v9330
  %9843 = vst.msk [vmem:[%s5 + $0x10c8] sm:$0xff] %vm542, %v9331
  %9844 = vst.msk [vmem:[%s5 + $0x10d0] sm:$0xff] %vm542, %v9332
  %9845 = vst.msk [vmem:[%s5 + $0x10d8] sm:$0xff] %vm542, %v9333
  %9846 = vst.msk [vmem:[%s5 + $0x10e0] sm:$0xff] %vm542, %v9334
  %9847 = vst.msk [vmem:[%s5 + $0x10e8] sm:$0xff] %vm542, %v9335
  %9848 = vst.msk [vmem:[%s5 + $0x10f0] sm:$0xff] %vm542, %v9336
  %9849 = vst.msk [vmem:[%s5 + $0x10f8] sm:$0xff] %vm542, %v9337
  %9850 = vst.msk [vmem:[%s5 + $0x1100] sm:$0xff] %vm542, %v9338
  %9851 = vst.msk [vmem:[%s5 + $0x1108] sm:$0xff] %vm542, %v9339
  %9852 = vst.msk [vmem:[%s5 + $0x1110] sm:$0xff] %vm542, %v9340
  %9853 = vst.msk [vmem:[%s5 + $0x1118] sm:$0xff] %vm542, %v9341
  %9854 = vst.msk [vmem:[%s5 + $0x1120] sm:$0xff] %vm542, %v9342
  %9855 = vst.msk [vmem:[%s5 + $0x1128] sm:$0xff] %vm542, %v9343
  %9856 = vst.msk [vmem:[%s5 + $0x1130] sm:$0xff] %vm542, %v9344
  %9857 = vst.msk [vmem:[%s5 + $0x1138] sm:$0xff] %vm542, %v9345
  %9858 = vst.msk [vmem:[%s5 + $0x1140] sm:$0xff] %vm542, %v9346
  %9859 = vst.msk [vmem:[%s5 + $0x1148] sm:$0xff] %vm542, %v9347
  %9860 = vst.msk [vmem:[%s5 + $0x1150] sm:$0xff] %vm542, %v9348
  %9861 = vst.msk [vmem:[%s5 + $0x1158] sm:$0xff] %vm542, %v9349
  %9862 = vst.msk [vmem:[%s5 + $0x1160] sm:$0xff] %vm542, %v9350
  %9863 = vst.msk [vmem:[%s5 + $0x1168] sm:$0xff] %vm542, %v9351
  %9864 = vst.msk [vmem:[%s5 + $0x1170] sm:$0xff] %vm542, %v9352
  %9865 = vst.msk [vmem:[%s5 + $0x1178] sm:$0xff] %vm542, %v9353
  %9866 = vst.msk [vmem:[%s5 + $0x1180] sm:$0xff] %vm542, %v9354
  %9867 = vst.msk [vmem:[%s5 + $0x1188] sm:$0xff] %vm542, %v9355
  %9868 = vst.msk [vmem:[%s5 + $0x1190] sm:$0xff] %vm542, %v9356
  %9869 = vst.msk [vmem:[%s5 + $0x1198] sm:$0xff] %vm542, %v9357
  %9870 = vst.msk [vmem:[%s5 + $0x11a0] sm:$0xff] %vm542, %v9358
  %9871 = vst.msk [vmem:[%s5 + $0x11a8] sm:$0xff] %vm542, %v9359
  %9872 = vst.msk [vmem:[%s5 + $0x11b0] sm:$0xff] %vm542, %v9360
  %9873 = vst.msk [vmem:[%s5 + $0x11b8] sm:$0xff] %vm542, %v9361
  %9874 = vst.msk [vmem:[%s5 + $0x11c0] sm:$0xff] %vm542, %v9362
  %9875 = vst.msk [vmem:[%s5 + $0x11c8] sm:$0xff] %vm542, %v9363
  %9876 = vst.msk [vmem:[%s5 + $0x11d0] sm:$0xff] %vm542, %v9364
  %9877 = vst.msk [vmem:[%s5 + $0x11d8] sm:$0xff] %vm542, %v9365
  %9878 = vst.msk [vmem:[%s5 + $0x11e0] sm:$0xff] %vm542, %v9366
  %9879 = vst.msk [vmem:[%s5 + $0x11e8] sm:$0xff] %vm542, %v9367
  %9880 = vst.msk [vmem:[%s5 + $0x11f0] sm:$0xff] %vm542, %v9368
  %9881 = vst.msk [vmem:[%s5 + $0x11f8] sm:$0xff] %vm542, %v9369
  %9882 = vst.msk [vmem:[%s5 + $0x1200] sm:$0xff] %vm542, %v9370
  %9883 = vst.msk [vmem:[%s5 + $0x1208] sm:$0xff] %vm542, %v9371
  %9884 = vst.msk [vmem:[%s5 + $0x1210] sm:$0xff] %vm542, %v9372
  %9885 = vst.msk [vmem:[%s5 + $0x1218] sm:$0xff] %vm542, %v9373
  %9886 = vst.msk [vmem:[%s5 + $0x1220] sm:$0xff] %vm542, %v9374
  %9887 = vst.msk [vmem:[%s5 + $0x1228] sm:$0xff] %vm542, %v9375
  %9888 = vst.msk [vmem:[%s5 + $0x1230] sm:$0xff] %vm542, %v9376
  %9889 = vst.msk [vmem:[%s5 + $0x1238] sm:$0xff] %vm542, %v9377
  %9890 = vst.msk [vmem:[%s5 + $0x1240] sm:$0xff] %vm542, %v9378
  %9891 = vst.msk [vmem:[%s5 + $0x1248] sm:$0xff] %vm542, %v9379
  %9892 = vst.msk [vmem:[%s5 + $0x1250] sm:$0xff] %vm542, %v9380
  %9893 = vst.msk [vmem:[%s5 + $0x1258] sm:$0xff] %vm542, %v9381
  %9894 = vst.msk [vmem:[%s5 + $0x1260] sm:$0xff] %vm542, %v9382
  %9895 = vst.msk [vmem:[%s5 + $0x1268] sm:$0xff] %vm542, %v9383
  %9896 = vst.msk [vmem:[%s5 + $0x1270] sm:$0xff] %vm542, %v9384
  %9897 = vst.msk [vmem:[%s5 + $0x1278] sm:$0xff] %vm542, %v9385
  %9898 = vst.msk [vmem:[%s5 + $0x1280] sm:$0xff] %vm542, %v9386
  %9899 = vst.msk [vmem:[%s5 + $0x1288] sm:$0xff] %vm542, %v9387
  %9900 = vst.msk [vmem:[%s5 + $0x1290] sm:$0xff] %vm542, %v9388
  %9901 = vst.msk [vmem:[%s5 + $0x1298] sm:$0xff] %vm542, %v9389
  %9902 = vst.msk [vmem:[%s5 + $0x12a0] sm:$0xff] %vm542, %v9390
  %9903 = vst.msk [vmem:[%s5 + $0x12a8] sm:$0xff] %vm542, %v9391
  %9904 = vst.msk [vmem:[%s5 + $0x12b0] sm:$0xff] %vm542, %v9392
  %9905 = vst.msk [vmem:[%s5 + $0x12b8] sm:$0xff] %vm542, %v9393
  %9906 = vst.msk [vmem:[%s5 + $0x12c0] sm:$0xff] %vm542, %v9394
  %9907 = vst.msk [vmem:[%s5 + $0x12c8] sm:$0xff] %vm542, %v9395
  %9908 = vst.msk [vmem:[%s5 + $0x12d0] sm:$0xff] %vm542, %v9396
  %9909 = vst.msk [vmem:[%s5 + $0x12d8] sm:$0xff] %vm542, %v9397
  %9910 = vst.msk [vmem:[%s5 + $0x12e0] sm:$0xff] %vm542, %v9398
  %9911 = vst.msk [vmem:[%s5 + $0x12e8] sm:$0xff] %vm542, %v9399
  %9912 = vst.msk [vmem:[%s5 + $0x12f0] sm:$0xff] %vm542, %v9400
  %9913 = vst.msk [vmem:[%s5 + $0x12f8] sm:$0xff] %vm542, %v9401
  %9914 = vst.msk [vmem:[%s5 + $0x1300] sm:$0xff] %vm542, %v9402
  %9915 = vst.msk [vmem:[%s5 + $0x1308] sm:$0xff] %vm542, %v9403
  %9916 = vst.msk [vmem:[%s5 + $0x1310] sm:$0xff] %vm542, %v9404
  %9917 = vst.msk [vmem:[%s5 + $0x1318] sm:$0xff] %vm542, %v9405
  %9918 = vst.msk [vmem:[%s5 + $0x1320] sm:$0xff] %vm542, %v9406
  %9919 = vst.msk [vmem:[%s5 + $0x1328] sm:$0xff] %vm542, %v9407
  %9920 = vst.msk [vmem:[%s5 + $0x1330] sm:$0xff] %vm542, %v9408
  %9921 = vst.msk [vmem:[%s5 + $0x1338] sm:$0xff] %vm542, %v9409
  %9922 = vst.msk [vmem:[%s5 + $0x1340] sm:$0xff] %vm542, %v9410
  %9923 = vst.msk [vmem:[%s5 + $0x1348] sm:$0xff] %vm542, %v9411
  %9924 = vst.msk [vmem:[%s5 + $0x1350] sm:$0xff] %vm542, %v9412
  %9925 = vst.msk [vmem:[%s5 + $0x1358] sm:$0xff] %vm542, %v9413
  %9926 = vst.msk [vmem:[%s5 + $0x1360] sm:$0xff] %vm542, %v9414
  %9927 = vst.msk [vmem:[%s5 + $0x1368] sm:$0xff] %vm542, %v9415
  %9928 = vst.msk [vmem:[%s5 + $0x1370] sm:$0xff] %vm542, %v9416
  %9929 = vst.msk [vmem:[%s5 + $0x1378] sm:$0xff] %vm542, %v9417
  %9930 = vst.msk [vmem:[%s5 + $0x1380] sm:$0xff] %vm542, %v9418
  %9931 = vst.msk [vmem:[%s5 + $0x1388] sm:$0xff] %vm542, %v9419
  %9932 = vst.msk [vmem:[%s5 + $0x1390] sm:$0xff] %vm542, %v9420
  %9933 = vst.msk [vmem:[%s5 + $0x1398] sm:$0xff] %vm542, %v9421
  %9934 = vst.msk [vmem:[%s5 + $0x13a0] sm:$0xff] %vm542, %v9422
  %9935 = vst.msk [vmem:[%s5 + $0x13a8] sm:$0xff] %vm542, %v9423
  %9936 = vst.msk [vmem:[%s5 + $0x13b0] sm:$0xff] %vm542, %v9424
  %9937 = vst.msk [vmem:[%s5 + $0x13b8] sm:$0xff] %vm542, %v9425
  %9938 = vst.msk [vmem:[%s5 + $0x13c0] sm:$0xff] %vm542, %v9426
  %9939 = vst.msk [vmem:[%s5 + $0x13c8] sm:$0xff] %vm542, %v9427
  %9940 = vst.msk [vmem:[%s5 + $0x13d0] sm:$0xff] %vm542, %v9428
  %9941 = vst.msk [vmem:[%s5 + $0x13d8] sm:$0xff] %vm542, %v9429
  %9942 = vst.msk [vmem:[%s5 + $0x13e0] sm:$0xff] %vm542, %v9430
  %9943 = vst.msk [vmem:[%s5 + $0x13e8] sm:$0xff] %vm542, %v9431
  %9944 = vst.msk [vmem:[%s5 + $0x13f0] sm:$0xff] %vm542, %v9432
  %9945 = vst.msk [vmem:[%s5 + $0x13f8] sm:$0xff] %vm542, %v9433
  %9946 = vst.msk [vmem:[%s5 + $0x1400] sm:$0xff] %vm542, %v9434
  %9947 = vst.msk [vmem:[%s5 + $0x1408] sm:$0xff] %vm542, %v9435
  %9948 = vst.msk [vmem:[%s5 + $0x1410] sm:$0xff] %vm542, %v9436
  %9949 = vst.msk [vmem:[%s5 + $0x1418] sm:$0xff] %vm542, %v9437
  %9950 = vst.msk [vmem:[%s5 + $0x1420] sm:$0xff] %vm542, %v9438
  %9951 = vst.msk [vmem:[%s5 + $0x1428] sm:$0xff] %vm542, %v9439
  %9952 = vst.msk [vmem:[%s5 + $0x1430] sm:$0xff] %vm542, %v9440
  %9953 = vst.msk [vmem:[%s5 + $0x1438] sm:$0xff] %vm542, %v9441
  %9954 = vst.msk [vmem:[%s5 + $0x1440] sm:$0xff] %vm542, %v9442
  %9955 = vst.msk [vmem:[%s5 + $0x1448] sm:$0xff] %vm542, %v9443
  %9956 = vst.msk [vmem:[%s5 + $0x1450] sm:$0xff] %vm542, %v9444
  %9957 = vst.msk [vmem:[%s5 + $0x1458] sm:$0xff] %vm542, %v9445
  %9958 = vst.msk [vmem:[%s5 + $0x1460] sm:$0xff] %vm542, %v9446
  %9959 = vst.msk [vmem:[%s5 + $0x1468] sm:$0xff] %vm542, %v9447
  %9960 = vst.msk [vmem:[%s5 + $0x1470] sm:$0xff] %vm542, %v9448
  %9961 = vst.msk [vmem:[%s5 + $0x1478] sm:$0xff] %vm542, %v9449
  %9962 = vst.msk [vmem:[%s5 + $0x1480] sm:$0xff] %vm542, %v9450
  %9963 = vst.msk [vmem:[%s5 + $0x1488] sm:$0xff] %vm542, %v9451
  %9964 = vst.msk [vmem:[%s5 + $0x1490] sm:$0xff] %vm542, %v9452
  %9965 = vst.msk [vmem:[%s5 + $0x1498] sm:$0xff] %vm542, %v9453
  %9966 = vst.msk [vmem:[%s5 + $0x14a0] sm:$0xff] %vm542, %v9454
  %9967 = vst.msk [vmem:[%s5 + $0x14a8] sm:$0xff] %vm542, %v9455
  %9968 = vst.msk [vmem:[%s5 + $0x14b0] sm:$0xff] %vm542, %v9456
  %9969 = vst.msk [vmem:[%s5 + $0x14b8] sm:$0xff] %vm542, %v9457
  %9970 = vst.msk [vmem:[%s5 + $0x14c0] sm:$0xff] %vm542, %v9458
  %9971 = vst.msk [vmem:[%s5 + $0x14c8] sm:$0xff] %vm542, %v9459
  %9972 = vst.msk [vmem:[%s5 + $0x14d0] sm:$0xff] %vm542, %v9460
  %9973 = vst.msk [vmem:[%s5 + $0x14d8] sm:$0xff] %vm542, %v9461
  %9974 = vst.msk [vmem:[%s5 + $0x14e0] sm:$0xff] %vm542, %v9462
  %9975 = vst.msk [vmem:[%s5 + $0x14e8] sm:$0xff] %vm542, %v9463
  %9976 = vst.msk [vmem:[%s5 + $0x14f0] sm:$0xff] %vm542, %v9464
  %9977 = vst.msk [vmem:[%s5 + $0x14f8] sm:$0xff] %vm542, %v9465
  %9978 = vst.msk [vmem:[%s5 + $0x1500] sm:$0xff] %vm542, %v9466
  %9979 = vst.msk [vmem:[%s5 + $0x1508] sm:$0xff] %vm542, %v9467
  %9980 = vst.msk [vmem:[%s5 + $0x1510] sm:$0xff] %vm542, %v9468
  %9981 = vst.msk [vmem:[%s5 + $0x1518] sm:$0xff] %vm542, %v9469
  %9982 = vst.msk [vmem:[%s5 + $0x1520] sm:$0xff] %vm542, %v9470
  %9983 = vst.msk [vmem:[%s5 + $0x1528] sm:$0xff] %vm542, %v9471
  %9984 = vst.msk [vmem:[%s5 + $0x1530] sm:$0xff] %vm542, %v9472
  %9985 = vst.msk [vmem:[%s5 + $0x1538] sm:$0xff] %vm542, %v9473
  %9986 = vst.msk [vmem:[%s5 + $0x1540] sm:$0xff] %vm542, %v9474
  %9987 = vst.msk [vmem:[%s5 + $0x1548] sm:$0xff] %vm542, %v9475
  %9988 = vst.msk [vmem:[%s5 + $0x1550] sm:$0xff] %vm542, %v9476
  %9989 = vst.msk [vmem:[%s5 + $0x1558] sm:$0xff] %vm542, %v9477
  %9990 = vst.msk [vmem:[%s5 + $0x1560] sm:$0xff] %vm542, %v9478
  %9991 = vst.msk [vmem:[%s5 + $0x1568] sm:$0xff] %vm542, %v9479
  %9992 = vst.msk [vmem:[%s5 + $0x1570] sm:$0xff] %vm542, %v9480
  %9993 = vst.msk [vmem:[%s5 + $0x1578] sm:$0xff] %vm542, %v9481
  %9994 = vst.msk [vmem:[%s5 + $0x1580] sm:$0xff] %vm542, %v9482
  %9995 = vst.msk [vmem:[%s5 + $0x1588] sm:$0xff] %vm542, %v9483
  %9996 = vst.msk [vmem:[%s5 + $0x1590] sm:$0xff] %vm542, %v9484
  %9997 = vst.msk [vmem:[%s5 + $0x1598] sm:$0xff] %vm542, %v9485
  %9998 = vst.msk [vmem:[%s5 + $0x15a0] sm:$0xff] %vm542, %v9486
  %9999 = vst.msk [vmem:[%s5 + $0x15a8] sm:$0xff] %vm542, %v9487
  %10000 = vst.msk [vmem:[%s5 + $0x15b0] sm:$0xff] %vm542, %v9488
  %10001 = vst.msk [vmem:[%s5 + $0x15b8] sm:$0xff] %vm542, %v9489
  %10002 = vst.msk [vmem:[%s5 + $0x15c0] sm:$0xff] %vm542, %v9490
  %10003 = vst.msk [vmem:[%s5 + $0x15c8] sm:$0xff] %vm542, %v9491
  %10004 = vst.msk [vmem:[%s5 + $0x15d0] sm:$0xff] %vm542, %v9492
  %10005 = vst.msk [vmem:[%s5 + $0x15d8] sm:$0xff] %vm542, %v9493
  %10006 = vst.msk [vmem:[%s5 + $0x15e0] sm:$0xff] %vm542, %v9494
  %10007 = vst.msk [vmem:[%s5 + $0x15e8] sm:$0xff] %vm542, %v9495
  %10008 = vst.msk [vmem:[%s5 + $0x15f0] sm:$0xff] %vm542, %v9496
  %10009 = vst.msk [vmem:[%s5 + $0x15f8] sm:$0xff] %vm542, %v9497
  %10010 = vst.msk [vmem:[%s5 + $0x1600] sm:$0xff] %vm542, %v9498
  %10011 = vst.msk [vmem:[%s5 + $0x1608] sm:$0xff] %vm542, %v9499
  %10012 = vst.msk [vmem:[%s5 + $0x1610] sm:$0xff] %vm542, %v9500
  %10013 = vst.msk [vmem:[%s5 + $0x1618] sm:$0xff] %vm542, %v9501
  %10014 = vst.msk [vmem:[%s5 + $0x1620] sm:$0xff] %vm542, %v9502
  %10015 = vst.msk [vmem:[%s5 + $0x1628] sm:$0xff] %vm542, %v9503
  %10016 = vst.msk [vmem:[%s5 + $0x1630] sm:$0xff] %vm542, %v9504
  %10017 = vst.msk [vmem:[%s5 + $0x1638] sm:$0xff] %vm542, %v9505
  %10018 = vst.msk [vmem:[%s5 + $0x1640] sm:$0xff] %vm542, %v9506
  %10019 = vst.msk [vmem:[%s5 + $0x1648] sm:$0xff] %vm542, %v9507
  %10020 = vst.msk [vmem:[%s5 + $0x1650] sm:$0xff] %vm542, %v9508
  %10021 = vst.msk [vmem:[%s5 + $0x1658] sm:$0xff] %vm542, %v9509
  %10022 = vst.msk [vmem:[%s5 + $0x1660] sm:$0xff] %vm542, %v9510
  %10023 = vst.msk [vmem:[%s5 + $0x1668] sm:$0xff] %vm542, %v9511
  %10024 = vst.msk [vmem:[%s5 + $0x1670] sm:$0xff] %vm542, %v9512
  %10025 = vst.msk [vmem:[%s5 + $0x1678] sm:$0xff] %vm542, %v9513
  %10026 = vst.msk [vmem:[%s5 + $0x1680] sm:$0xff] %vm542, %v9514
  %10027 = vst.msk [vmem:[%s5 + $0x1688] sm:$0xff] %vm542, %v9515
  %10028 = vst.msk [vmem:[%s5 + $0x1690] sm:$0xff] %vm542, %v9516
  %10029 = vst.msk [vmem:[%s5 + $0x1698] sm:$0xff] %vm542, %v9517
  %10030 = vst.msk [vmem:[%s5 + $0x16a0] sm:$0xff] %vm542, %v9518
  %10031 = vst.msk [vmem:[%s5 + $0x16a8] sm:$0xff] %vm542, %v9519
  %10032 = vst.msk [vmem:[%s5 + $0x16b0] sm:$0xff] %vm542, %v9520
  %10033 = vst.msk [vmem:[%s5 + $0x16b8] sm:$0xff] %vm542, %v9521
  %10034 = vst.msk [vmem:[%s5 + $0x16c0] sm:$0xff] %vm542, %v9522
  %10035 = vst.msk [vmem:[%s5 + $0x16c8] sm:$0xff] %vm542, %v9523
  %10036 = vst.msk [vmem:[%s5 + $0x16d0] sm:$0xff] %vm542, %v9524
  %10037 = vst.msk [vmem:[%s5 + $0x16d8] sm:$0xff] %vm542, %v9525
  %10038 = vst.msk [vmem:[%s5 + $0x16e0] sm:$0xff] %vm542, %v9526
  %10039 = vst.msk [vmem:[%s5 + $0x16e8] sm:$0xff] %vm542, %v9527
  %10040 = vst.msk [vmem:[%s5 + $0x16f0] sm:$0xff] %vm542, %v9528
  %10041 = vst.msk [vmem:[%s5 + $0x16f8] sm:$0xff] %vm542, %v9529
  %10042 = vst.msk [vmem:[%s5 + $0x1700] sm:$0xff] %vm542, %v9530
  %10043 = vst.msk [vmem:[%s5 + $0x1708] sm:$0xff] %vm542, %v9531
  %10044 = vst.msk [vmem:[%s5 + $0x1710] sm:$0xff] %vm542, %v9532
  %10045 = vst.msk [vmem:[%s5 + $0x1718] sm:$0xff] %vm542, %v9533
  %10046 = vst.msk [vmem:[%s5 + $0x1720] sm:$0xff] %vm542, %v9534
  %10047 = vst.msk [vmem:[%s5 + $0x1728] sm:$0xff] %vm542, %v9535
  %10048 = vst.msk [vmem:[%s5 + $0x1730] sm:$0xff] %vm542, %v9536
  %10049 = vst.msk [vmem:[%s5 + $0x1738] sm:$0xff] %vm542, %v9537
  %10050 = vst.msk [vmem:[%s5 + $0x1740] sm:$0xff] %vm542, %v9538
  %10051 = vst.msk [vmem:[%s5 + $0x1748] sm:$0xff] %vm542, %v9539
  %10052 = vst.msk [vmem:[%s5 + $0x1750] sm:$0xff] %vm542, %v9540
  %10053 = vst.msk [vmem:[%s5 + $0x1758] sm:$0xff] %vm542, %v9541
  %10054 = vst.msk [vmem:[%s5 + $0x1760] sm:$0xff] %vm542, %v9542
  %10055 = vst.msk [vmem:[%s5 + $0x1768] sm:$0xff] %vm542, %v9543
  %10056 = vst.msk [vmem:[%s5 + $0x1770] sm:$0xff] %vm542, %v9544
  %10057 = vst.msk [vmem:[%s5 + $0x1778] sm:$0xff] %vm542, %v9545
  %10058 = vst.msk [vmem:[%s5 + $0x1780] sm:$0xff] %vm542, %v9546
  %10059 = vst.msk [vmem:[%s5 + $0x1788] sm:$0xff] %vm542, %v9547
  %10060 = vst.msk [vmem:[%s5 + $0x1790] sm:$0xff] %vm542, %v9548
  %10061 = vst.msk [vmem:[%s5 + $0x1798] sm:$0xff] %vm542, %v9549
  %10062 = vst.msk [vmem:[%s5 + $0x17a0] sm:$0xff] %vm542, %v9550
  %10063 = vst.msk [vmem:[%s5 + $0x17a8] sm:$0xff] %vm542, %v9551
  %10064 = vst.msk [vmem:[%s5 + $0x17b0] sm:$0xff] %vm542, %v9552
  %10065 = vst.msk [vmem:[%s5 + $0x17b8] sm:$0xff] %vm542, %v9553
  %10066 = vst.msk [vmem:[%s5 + $0x17c0] sm:$0xff] %vm542, %v9554
  %10067 = vst.msk [vmem:[%s5 + $0x17c8] sm:$0xff] %vm542, %v9555
  %10068 = vst.msk [vmem:[%s5 + $0x17d0] sm:$0xff] %vm542, %v9556
  %10069 = vst.msk [vmem:[%s5 + $0x17d8] sm:$0xff] %vm542, %v9557
  %10070 = vst.msk [vmem:[%s5 + $0x17e0] sm:$0xff] %vm542, %v9558
  %10071 = vst.msk [vmem:[%s5 + $0x17e8] sm:$0xff] %vm542, %v9559
  %10072 = vst.msk [vmem:[%s5 + $0x17f0] sm:$0xff] %vm542, %v9560
  %10073 = vst.msk [vmem:[%s5 + $0x17f8] sm:$0xff] %vm542, %v9561
  %10074 = vst.msk [vmem:[%s5 + $0x1800] sm:$0xff] %vm542, %v9562
  %10075 = vst.msk [vmem:[%s5 + $0x1808] sm:$0xff] %vm542, %v9563
  %10076 = vst.msk [vmem:[%s5 + $0x1810] sm:$0xff] %vm542, %v9564
  %10077 = vst.msk [vmem:[%s5 + $0x1818] sm:$0xff] %vm542, %v9565
  %10078 = vst.msk [vmem:[%s5 + $0x1820] sm:$0xff] %vm542, %v9566
  %10079 = vst.msk [vmem:[%s5 + $0x1828] sm:$0xff] %vm542, %v9567
  %10080 = vst.msk [vmem:[%s5 + $0x1830] sm:$0xff] %vm542, %v9568
  %10081 = vst.msk [vmem:[%s5 + $0x1838] sm:$0xff] %vm542, %v9569
  %10082 = vst.msk [vmem:[%s5 + $0x1840] sm:$0xff] %vm542, %v9570
  %10083 = vst.msk [vmem:[%s5 + $0x1848] sm:$0xff] %vm542, %v9571
  %10084 = vst.msk [vmem:[%s5 + $0x1850] sm:$0xff] %vm542, %v9572
  %10085 = vst.msk [vmem:[%s5 + $0x1858] sm:$0xff] %vm542, %v9573
  %10086 = vst.msk [vmem:[%s5 + $0x1860] sm:$0xff] %vm542, %v9574
  %10087 = vst.msk [vmem:[%s5 + $0x1868] sm:$0xff] %vm542, %v9575
  %10088 = vst.msk [vmem:[%s5 + $0x1870] sm:$0xff] %vm542, %v9576
  %10089 = vst.msk [vmem:[%s5 + $0x1878] sm:$0xff] %vm542, %v9577
  %10090 = vst.msk [vmem:[%s5 + $0x1880] sm:$0xff] %vm542, %v9578
  %10091 = vst.msk [vmem:[%s5 + $0x1888] sm:$0xff] %vm542, %v9579
  %10092 = vst.msk [vmem:[%s5 + $0x1890] sm:$0xff] %vm542, %v9580
  %10093 = vst.msk [vmem:[%s5 + $0x1898] sm:$0xff] %vm542, %v9581
  %10094 = vst.msk [vmem:[%s5 + $0x18a0] sm:$0xff] %vm542, %v9582
  %10095 = vst.msk [vmem:[%s5 + $0x18a8] sm:$0xff] %vm542, %v9583
  %10096 = vst.msk [vmem:[%s5 + $0x18b0] sm:$0xff] %vm542, %v9584
  %10097 = vst.msk [vmem:[%s5 + $0x18b8] sm:$0xff] %vm542, %v9585
  %10098 = vst.msk [vmem:[%s5 + $0x18c0] sm:$0xff] %vm542, %v9586
  %10099 = vst.msk [vmem:[%s5 + $0x18c8] sm:$0xff] %vm542, %v9587
  %10100 = vst.msk [vmem:[%s5 + $0x18d0] sm:$0xff] %vm542, %v9588
  %10101 = vst.msk [vmem:[%s5 + $0x18d8] sm:$0xff] %vm542, %v9589
  %10102 = vst.msk [vmem:[%s5 + $0x18e0] sm:$0xff] %vm542, %v9590
  %10103 = vst.msk [vmem:[%s5 + $0x18e8] sm:$0xff] %vm542, %v9591
  %10104 = vst.msk [vmem:[%s5 + $0x18f0] sm:$0xff] %vm542, %v9592
  %10105 = vst.msk [vmem:[%s5 + $0x18f8] sm:$0xff] %vm542, %v9593
  %10106 = vst.msk [vmem:[%s5 + $0x1900] sm:$0xff] %vm542, %v9594
  %10107 = vst.msk [vmem:[%s5 + $0x1908] sm:$0xff] %vm542, %v9595
  %10108 = vst.msk [vmem:[%s5 + $0x1910] sm:$0xff] %vm542, %v9596
  %10109 = vst.msk [vmem:[%s5 + $0x1918] sm:$0xff] %vm542, %v9597
  %10110 = vst.msk [vmem:[%s5 + $0x1920] sm:$0xff] %vm542, %v9598
  %10111 = vst.msk [vmem:[%s5 + $0x1928] sm:$0xff] %vm542, %v9599
  %10112 = vst.msk [vmem:[%s5 + $0x1930] sm:$0xff] %vm542, %v9600
  %10113 = vst.msk [vmem:[%s5 + $0x1938] sm:$0xff] %vm542, %v9601
  %10114 = vst.msk [vmem:[%s5 + $0x1940] sm:$0xff] %vm542, %v9602
  %10115 = vst.msk [vmem:[%s5 + $0x1948] sm:$0xff] %vm542, %v9603
  %10116 = vst.msk [vmem:[%s5 + $0x1950] sm:$0xff] %vm542, %v9604
  %10117 = vst.msk [vmem:[%s5 + $0x1958] sm:$0xff] %vm542, %v9605
  %10118 = vst.msk [vmem:[%s5 + $0x1960] sm:$0xff] %vm542, %v9606
  %10119 = vst.msk [vmem:[%s5 + $0x1968] sm:$0xff] %vm542, %v9607
  %10120 = vst.msk [vmem:[%s5 + $0x1970] sm:$0xff] %vm542, %v9608
  %10121 = vst.msk [vmem:[%s5 + $0x1978] sm:$0xff] %vm542, %v9609
  %10122 = vst.msk [vmem:[%s5 + $0x1980] sm:$0xff] %vm542, %v9610
  %10123 = vst.msk [vmem:[%s5 + $0x1988] sm:$0xff] %vm542, %v9611
  %10124 = vst.msk [vmem:[%s5 + $0x1990] sm:$0xff] %vm542, %v9612
  %10125 = vst.msk [vmem:[%s5 + $0x1998] sm:$0xff] %vm542, %v9613
  %10126 = vst.msk [vmem:[%s5 + $0x19a0] sm:$0xff] %vm542, %v9614
  %10127 = vst.msk [vmem:[%s5 + $0x19a8] sm:$0xff] %vm542, %v9615
  %10128 = vst.msk [vmem:[%s5 + $0x19b0] sm:$0xff] %vm542, %v9616
  %10129 = vst.msk [vmem:[%s5 + $0x19b8] sm:$0xff] %vm542, %v9617
  %10130 = vst.msk [vmem:[%s5 + $0x19c0] sm:$0xff] %vm542, %v9618
  %10131 = vst.msk [vmem:[%s5 + $0x19c8] sm:$0xff] %vm542, %v9619
  %10132 = vst.msk [vmem:[%s5 + $0x19d0] sm:$0xff] %vm542, %v9620
  %10133 = vst.msk [vmem:[%s5 + $0x19d8] sm:$0xff] %vm542, %v9621
  %10134 = vst.msk [vmem:[%s5 + $0x19e0] sm:$0xff] %vm542, %v9622
  %10135 = vst.msk [vmem:[%s5 + $0x19e8] sm:$0xff] %vm542, %v9623
  %10136 = vst.msk [vmem:[%s5 + $0x19f0] sm:$0xff] %vm542, %v9624
  %10137 = vst.msk [vmem:[%s5 + $0x19f8] sm:$0xff] %vm542, %v9625
  %10138 = vst.msk [vmem:[%s5 + $0x1a00] sm:$0xff] %vm542, %v9626
  %10139 = vst.msk [vmem:[%s5 + $0x1a08] sm:$0xff] %vm542, %v9627
  %10140 = vst.msk [vmem:[%s5 + $0x1a10] sm:$0xff] %vm542, %v9628
  %10141 = vst.msk [vmem:[%s5 + $0x1a18] sm:$0xff] %vm542, %v9629
  %10142 = vst.msk [vmem:[%s5 + $0x1a20] sm:$0xff] %vm542, %v9630
  %10143 = vst.msk [vmem:[%s5 + $0x1a28] sm:$0xff] %vm542, %v9631
  %10144 = vst.msk [vmem:[%s5 + $0x1a30] sm:$0xff] %vm542, %v9632
  %10145 = vst.msk [vmem:[%s5 + $0x1a38] sm:$0xff] %vm542, %v9633
  %10146 = vst.msk [vmem:[%s5 + $0x1a40] sm:$0xff] %vm542, %v9634
  %10147 = vst.msk [vmem:[%s5 + $0x1a48] sm:$0xff] %vm542, %v9635
  %10148 = vst.msk [vmem:[%s5 + $0x1a50] sm:$0xff] %vm542, %v9636
  %10149 = vst.msk [vmem:[%s5 + $0x1a58] sm:$0xff] %vm542, %v9637
  %10150 = vst.msk [vmem:[%s5 + $0x1a60] sm:$0xff] %vm542, %v9638
  %10151 = vst.msk [vmem:[%s5 + $0x1a68] sm:$0xff] %vm542, %v9639
  %10152 = vst.msk [vmem:[%s5 + $0x1a70] sm:$0xff] %vm542, %v9640
  %10153 = vst.msk [vmem:[%s5 + $0x1a78] sm:$0xff] %vm542, %v9641
  %10154 = vst.msk [vmem:[%s5 + $0x1a80] sm:$0xff] %vm542, %v9642
  %10155 = vst.msk [vmem:[%s5 + $0x1a88] sm:$0xff] %vm542, %v9643
  %10156 = vst.msk [vmem:[%s5 + $0x1a90] sm:$0xff] %vm542, %v9644
  %10157 = vst.msk [vmem:[%s5 + $0x1a98] sm:$0xff] %vm542, %v9645
  %10158 = vst.msk [vmem:[%s5 + $0x1aa0] sm:$0xff] %vm542, %v9646
  %10159 = vst.msk [vmem:[%s5 + $0x1aa8] sm:$0xff] %vm542, %v9647
  %10160 = vst.msk [vmem:[%s5 + $0x1ab0] sm:$0xff] %vm542, %v9648
  %10161 = vst.msk [vmem:[%s5 + $0x1ab8] sm:$0xff] %vm542, %v9649
  %10162 = vst.msk [vmem:[%s5 + $0x1ac0] sm:$0xff] %vm542, %v9650
  %10163 = vst.msk [vmem:[%s5 + $0x1ac8] sm:$0xff] %vm542, %v9651
  %10164 = vst.msk [vmem:[%s5 + $0x1ad0] sm:$0xff] %vm542, %v9652
  %10165 = vst.msk [vmem:[%s5 + $0x1ad8] sm:$0xff] %vm542, %v9653
  %10166 = vst.msk [vmem:[%s5 + $0x1ae0] sm:$0xff] %vm542, %v9654
  %10167 = vst.msk [vmem:[%s5 + $0x1ae8] sm:$0xff] %vm542, %v9655
  %10168 = vst.msk [vmem:[%s5 + $0x1af0] sm:$0xff] %vm542, %v9656
  %10169 = vst.msk [vmem:[%s5 + $0x1af8] sm:$0xff] %vm542, %v9657
  %10170 = vst.msk [vmem:[%s5 + $0x1b00] sm:$0xff] %vm542, %v9658
  %10171 = vst.msk [vmem:[%s5 + $0x1b08] sm:$0xff] %vm542, %v9659
  %10172 = vst.msk [vmem:[%s5 + $0x1b10] sm:$0xff] %vm542, %v9660
  %10173 = vst.msk [vmem:[%s5 + $0x1b18] sm:$0xff] %vm542, %v9661
  %10174 = vst.msk [vmem:[%s5 + $0x1b20] sm:$0xff] %vm542, %v9662
  %10175 = vst.msk [vmem:[%s5 + $0x1b28] sm:$0xff] %vm542, %v9663
  %10176 = vst.msk [vmem:[%s5 + $0x1b30] sm:$0xff] %vm542, %v9664
  %10177 = vst.msk [vmem:[%s5 + $0x1b38] sm:$0xff] %vm542, %v9665
  %10178 = vst.msk [vmem:[%s5 + $0x1b40] sm:$0xff] %vm542, %v9666
  %10179 = vst.msk [vmem:[%s5 + $0x1b48] sm:$0xff] %vm542, %v9667
  %10180 = vst.msk [vmem:[%s5 + $0x1b50] sm:$0xff] %vm542, %v9668
  %10181 = vst.msk [vmem:[%s5 + $0x1b58] sm:$0xff] %vm542, %v9669
  %10182 = vst.msk [vmem:[%s5 + $0x1b60] sm:$0xff] %vm542, %v9670
  %10183 = vst.msk [vmem:[%s5 + $0x1b68] sm:$0xff] %vm542, %v9671
  %10184 = vst.msk [vmem:[%s5 + $0x1b70] sm:$0xff] %vm542, %v9672
  %10185 = vst.msk [vmem:[%s5 + $0x1b78] sm:$0xff] %vm542, %v9673
  %10186 = vst.msk [vmem:[%s5 + $0x1b80] sm:$0xff] %vm542, %v9674
  %10187 = vst.msk [vmem:[%s5 + $0x1b88] sm:$0xff] %vm542, %v9675
  %10188 = vst.msk [vmem:[%s5 + $0x1b90] sm:$0xff] %vm542, %v9676
  %10189 = vst.msk [vmem:[%s5 + $0x1b98] sm:$0xff] %vm542, %v9677
  %10190 = vst.msk [vmem:[%s5 + $0x1ba0] sm:$0xff] %vm542, %v9678
  %10191 = vst.msk [vmem:[%s5 + $0x1ba8] sm:$0xff] %vm542, %v9679
  %10192 = vst.msk [vmem:[%s5 + $0x1bb0] sm:$0xff] %vm542, %v9680
  %10193 = vst.msk [vmem:[%s5 + $0x1bb8] sm:$0xff] %vm542, %v9681
  %10194 = vst.msk [vmem:[%s5 + $0x1bc0] sm:$0xff] %vm542, %v9682
  %10195 = vst.msk [vmem:[%s5 + $0x1bc8] sm:$0xff] %vm542, %v9683
  %10196 = vst.msk [vmem:[%s5 + $0x1bd0] sm:$0xff] %vm542, %v9684
  %10197 = vst.msk [vmem:[%s5 + $0x1bd8] sm:$0xff] %vm542, %v9685
  %10198 = vst.msk [vmem:[%s5 + $0x1be0] sm:$0xff] %vm542, %v9686
  %10199 = vst.msk [vmem:[%s5 + $0x1be8] sm:$0xff] %vm542, %v9687
  %10200 = vst.msk [vmem:[%s5 + $0x1bf0] sm:$0xff] %vm542, %v9688
  %10201 = vst.msk [vmem:[%s5 + $0x1bf8] sm:$0xff] %vm542, %v9689
  %10202 = vst.msk [vmem:[%s5 + $0x1c00] sm:$0xff] %vm542, %v9690
  %10203 = vst.msk [vmem:[%s5 + $0x1c08] sm:$0xff] %vm542, %v9691
  %10204 = vst.msk [vmem:[%s5 + $0x1c10] sm:$0xff] %vm542, %v9692
  %10205 = vst.msk [vmem:[%s5 + $0x1c18] sm:$0xff] %vm542, %v9693
  %10206 = vst.msk [vmem:[%s5 + $0x1c20] sm:$0xff] %vm542, %v9694
  %10207 = vst.msk [vmem:[%s5 + $0x1c28] sm:$0xff] %vm542, %v9695
  %10208 = vst.msk [vmem:[%s5 + $0x1c30] sm:$0xff] %vm542, %v9696
  %10209 = vst.msk [vmem:[%s5 + $0x1c38] sm:$0xff] %vm542, %v9697
  %10210 = vst.msk [vmem:[%s5 + $0x1c40] sm:$0xff] %vm542, %v9698
  %10211 = vst.msk [vmem:[%s5 + $0x1c48] sm:$0xff] %vm542, %v9699
  %10212 = vst.msk [vmem:[%s5 + $0x1c50] sm:$0xff] %vm542, %v9700
  %10213 = vst.msk [vmem:[%s5 + $0x1c58] sm:$0xff] %vm542, %v9701
  %10214 = vst.msk [vmem:[%s5 + $0x1c60] sm:$0xff] %vm542, %v9702
  %10215 = vst.msk [vmem:[%s5 + $0x1c68] sm:$0xff] %vm542, %v9703
  %10216 = vst.msk [vmem:[%s5 + $0x1c70] sm:$0xff] %vm542, %v9704
  %10217 = vst.msk [vmem:[%s5 + $0x1c78] sm:$0xff] %vm542, %v9705
  %10218 = vst.msk [vmem:[%s5 + $0x1c80] sm:$0xff] %vm542, %v9706
  %10219 = vst.msk [vmem:[%s5 + $0x1c88] sm:$0xff] %vm542, %v9707
  %10220 = vst.msk [vmem:[%s5 + $0x1c90] sm:$0xff] %vm542, %v9708
  %10221 = vst.msk [vmem:[%s5 + $0x1c98] sm:$0xff] %vm542, %v9709
  %10222 = vst.msk [vmem:[%s5 + $0x1ca0] sm:$0xff] %vm542, %v9710
  %10223 = vst.msk [vmem:[%s5 + $0x1ca8] sm:$0xff] %vm542, %v9711
  %10224 = vst.msk [vmem:[%s5 + $0x1cb0] sm:$0xff] %vm542, %v9712
  %10225 = vst.msk [vmem:[%s5 + $0x1cb8] sm:$0xff] %vm542, %v9713
  %10226 = vst.msk [vmem:[%s5 + $0x1cc0] sm:$0xff] %vm542, %v9714
  %10227 = vst.msk [vmem:[%s5 + $0x1cc8] sm:$0xff] %vm542, %v9715
  %10228 = vst.msk [vmem:[%s5 + $0x1cd0] sm:$0xff] %vm542, %v9716
  %10229 = vst.msk [vmem:[%s5 + $0x1cd8] sm:$0xff] %vm542, %v9717
  %10230 = vst.msk [vmem:[%s5 + $0x1ce0] sm:$0xff] %vm542, %v9718
  %10231 = vst.msk [vmem:[%s5 + $0x1ce8] sm:$0xff] %vm542, %v9719
  %10232 = vst.msk [vmem:[%s5 + $0x1cf0] sm:$0xff] %vm542, %v9720
  %10233 = vst.msk [vmem:[%s5 + $0x1cf8] sm:$0xff] %vm542, %v9721
  %10234 = vst.msk [vmem:[%s5 + $0x1d00] sm:$0xff] %vm542, %v9722
  %10235 = vst.msk [vmem:[%s5 + $0x1d08] sm:$0xff] %vm542, %v9723
  %10236 = vst.msk [vmem:[%s5 + $0x1d10] sm:$0xff] %vm542, %v9724
  %10237 = vst.msk [vmem:[%s5 + $0x1d18] sm:$0xff] %vm542, %v9725
  %10238 = vst.msk [vmem:[%s5 + $0x1d20] sm:$0xff] %vm542, %v9726
  %10239 = vst.msk [vmem:[%s5 + $0x1d28] sm:$0xff] %vm542, %v9727
  %10240 = vst.msk [vmem:[%s5 + $0x1d30] sm:$0xff] %vm542, %v9728
  %10241 = vst.msk [vmem:[%s5 + $0x1d38] sm:$0xff] %vm542, %v9729
  %10242 = vst.msk [vmem:[%s5 + $0x1d40] sm:$0xff] %vm542, %v9730
  %10243 = vst.msk [vmem:[%s5 + $0x1d48] sm:$0xff] %vm542, %v9731
  %10244 = vst.msk [vmem:[%s5 + $0x1d50] sm:$0xff] %vm542, %v9732
  %10245 = vst.msk [vmem:[%s5 + $0x1d58] sm:$0xff] %vm542, %v9733
  %10246 = vst.msk [vmem:[%s5 + $0x1d60] sm:$0xff] %vm542, %v9734
  %10247 = vst.msk [vmem:[%s5 + $0x1d68] sm:$0xff] %vm542, %v9735
  %10248 = vst.msk [vmem:[%s5 + $0x1d70] sm:$0xff] %vm542, %v9736
  %10249 = vst.msk [vmem:[%s5 + $0x1d78] sm:$0xff] %vm542, %v9737
  %10250 = vst.msk [vmem:[%s5 + $0x1d80] sm:$0xff] %vm542, %v9738
  %10251 = vst.msk [vmem:[%s5 + $0x1d88] sm:$0xff] %vm542, %v9739
  %10252 = vst.msk [vmem:[%s5 + $0x1d90] sm:$0xff] %vm542, %v9740
  %10253 = vst.msk [vmem:[%s5 + $0x1d98] sm:$0xff] %vm542, %v9741
  %10254 = vst.msk [vmem:[%s5 + $0x1da0] sm:$0xff] %vm542, %v9742
  %10255 = vst.msk [vmem:[%s5 + $0x1da8] sm:$0xff] %vm542, %v9743
  %10256 = vst.msk [vmem:[%s5 + $0x1db0] sm:$0xff] %vm542, %v9744
  %10257 = vst.msk [vmem:[%s5 + $0x1db8] sm:$0xff] %vm542, %v9745
  %10258 = vst.msk [vmem:[%s5 + $0x1dc0] sm:$0xff] %vm542, %v9746
  %10259 = vst.msk [vmem:[%s5 + $0x1dc8] sm:$0xff] %vm542, %v9747
  %10260 = vst.msk [vmem:[%s5 + $0x1dd0] sm:$0xff] %vm542, %v9748
  %10261 = vst.msk [vmem:[%s5 + $0x1dd8] sm:$0xff] %vm542, %v9749
  %10262 = vst.msk [vmem:[%s5 + $0x1de0] sm:$0xff] %vm542, %v9750
  %10263 = vst.msk [vmem:[%s5 + $0x1de8] sm:$0xff] %vm542, %v9751
  %10264 = vst.msk [vmem:[%s5 + $0x1df0] sm:$0xff] %vm542, %v9752
  %10265 = vst.msk [vmem:[%s5 + $0x1df8] sm:$0xff] %vm542, %v9753
  %10266 = vst.msk [vmem:[%s5 + $0x1e00] sm:$0xff] %vm542, %v9754
  %10267 = vst.msk [vmem:[%s5 + $0x1e08] sm:$0xff] %vm542, %v9755
  %10268 = vst.msk [vmem:[%s5 + $0x1e10] sm:$0xff] %vm542, %v9756
  %10269 = vst.msk [vmem:[%s5 + $0x1e18] sm:$0xff] %vm542, %v9757
  %10270 = vst.msk [vmem:[%s5 + $0x1e20] sm:$0xff] %vm542, %v9758
  %10271 = vst.msk [vmem:[%s5 + $0x1e28] sm:$0xff] %vm542, %v9759
  %10272 = vst.msk [vmem:[%s5 + $0x1e30] sm:$0xff] %vm542, %v9760
  %10273 = vst.msk [vmem:[%s5 + $0x1e38] sm:$0xff] %vm542, %v9761
  %10274 = vst.msk [vmem:[%s5 + $0x1e40] sm:$0xff] %vm542, %v9762
  %10275 = vst.msk [vmem:[%s5 + $0x1e48] sm:$0xff] %vm542, %v9763
  %10276 = vst.msk [vmem:[%s5 + $0x1e50] sm:$0xff] %vm542, %v9764
  %10277 = vst.msk [vmem:[%s5 + $0x1e58] sm:$0xff] %vm542, %v9765
  %10278 = vst.msk [vmem:[%s5 + $0x1e60] sm:$0xff] %vm542, %v9766
  %10279 = vst.msk [vmem:[%s5 + $0x1e68] sm:$0xff] %vm542, %v9767
  %10280 = vst.msk [vmem:[%s5 + $0x1e70] sm:$0xff] %vm542, %v9768
  %10281 = vst.msk [vmem:[%s5 + $0x1e78] sm:$0xff] %vm542, %v9769
  %10282 = vst.msk [vmem:[%s5 + $0x1e80] sm:$0xff] %vm542, %v9770
  %10283 = vst.msk [vmem:[%s5 + $0x1e88] sm:$0xff] %vm542, %v9771
  %10284 = vst.msk [vmem:[%s5 + $0x1e90] sm:$0xff] %vm542, %v9772
  %10285 = vst.msk [vmem:[%s5 + $0x1e98] sm:$0xff] %vm542, %v9773
  %10286 = vst.msk [vmem:[%s5 + $0x1ea0] sm:$0xff] %vm542, %v9774
  %10287 = vst.msk [vmem:[%s5 + $0x1ea8] sm:$0xff] %vm542, %v9775
  %10288 = vst.msk [vmem:[%s5 + $0x1eb0] sm:$0xff] %vm542, %v9776
  %10289 = vst.msk [vmem:[%s5 + $0x1eb8] sm:$0xff] %vm542, %v9777
  %10290 = vst.msk [vmem:[%s5 + $0x1ec0] sm:$0xff] %vm542, %v9778
  %10291 = vst.msk [vmem:[%s5 + $0x1ec8] sm:$0xff] %vm542, %v9779
  %10292 = vst.msk [vmem:[%s5 + $0x1ed0] sm:$0xff] %vm542, %v9780
  %10293 = vst.msk [vmem:[%s5 + $0x1ed8] sm:$0xff] %vm542, %v9781
  %10294 = vst.msk [vmem:[%s5 + $0x1ee0] sm:$0xff] %vm542, %v9782
  %10295 = vst.msk [vmem:[%s5 + $0x1ee8] sm:$0xff] %vm542, %v9783
  %10296 = vst.msk [vmem:[%s5 + $0x1ef0] sm:$0xff] %vm542, %v9784
  %10297 = vst.msk [vmem:[%s5 + $0x1ef8] sm:$0xff] %vm542, %v9785
  %10298 = vst.msk [vmem:[%s5 + $0x1f00] sm:$0xff] %vm542, %v9786
  %10299 = vst.msk [vmem:[%s5 + $0x1f08] sm:$0xff] %vm542, %v9787
  %10300 = vst.msk [vmem:[%s5 + $0x1f10] sm:$0xff] %vm542, %v9788
  %10301 = vst.msk [vmem:[%s5 + $0x1f18] sm:$0xff] %vm542, %v9789
  %10302 = vst.msk [vmem:[%s5 + $0x1f20] sm:$0xff] %vm542, %v9790
  %10303 = vst.msk [vmem:[%s5 + $0x1f28] sm:$0xff] %vm542, %v9791
  %10304 = vst.msk [vmem:[%s5 + $0x1f30] sm:$0xff] %vm542, %v9792
  %10305 = vst.msk [vmem:[%s5 + $0x1f38] sm:$0xff] %vm542, %v9793
  %10306 = vst.msk [vmem:[%s5 + $0x1f40] sm:$0xff] %vm542, %v9794
  %10307 = vst.msk [vmem:[%s5 + $0x1f48] sm:$0xff] %vm542, %v9795
  %10308 = vst.msk [vmem:[%s5 + $0x1f50] sm:$0xff] %vm542, %v9796
  %10309 = vst.msk [vmem:[%s5 + $0x1f58] sm:$0xff] %vm542, %v9797
  %10310 = vst.msk [vmem:[%s5 + $0x1f60] sm:$0xff] %vm542, %v9798
  %10311 = vst.msk [vmem:[%s5 + $0x1f68] sm:$0xff] %vm542, %v9799
  %10312 = vst.msk [vmem:[%s5 + $0x1f70] sm:$0xff] %vm542, %v9800
  %10313 = vst.msk [vmem:[%s5 + $0x1f78] sm:$0xff] %vm542, %v9801
  %10314 = vst.msk [vmem:[%s5 + $0x1f80] sm:$0xff] %vm542, %v9802
  %10315 = vst.msk [vmem:[%s5 + $0x1f88] sm:$0xff] %vm542, %v9803
  %10316 = vst.msk [vmem:[%s5 + $0x1f90] sm:$0xff] %vm542, %v9804
  %10317 = vst.msk [vmem:[%s5 + $0x1f98] sm:$0xff] %vm542, %v9805
  %10318 = vst.msk [vmem:[%s5 + $0x1fa0] sm:$0xff] %vm542, %v9806
  %10319 = vst.msk [vmem:[%s5 + $0x1fa8] sm:$0xff] %vm542, %v9807
  %10320 = vst.msk [vmem:[%s5 + $0x1fb0] sm:$0xff] %vm542, %v9808
  %10321 = vst.msk [vmem:[%s5 + $0x1fb8] sm:$0xff] %vm542, %v9809
  %10322 = vst.msk [vmem:[%s5 + $0x1fc0] sm:$0xff] %vm542, %v9810
  %10323 = vst.msk [vmem:[%s5 + $0x1fc8] sm:$0xff] %vm542, %v9811
  %10324 = vst.msk [vmem:[%s5 + $0x1fd0] sm:$0xff] %vm542, %v9812
  %10325 = vst.msk [vmem:[%s5 + $0x1fd8] sm:$0xff] %vm542, %v9813
  %10326 = vst.msk [vmem:[%s5 + $0x1fe0] sm:$0xff] %vm542, %v9814
  %10327 = vst.msk [vmem:[%s5 + $0x1fe8] sm:$0xff] %vm542, %v9815
  %10328 = vst.msk [vmem:[%s5 + $0x1ff0] sm:$0xff] %vm542, %v9816
  %10329 = vst.msk [vmem:[%s5 + $0x1ff8] sm:$0xff] %vm542, %v9817
  // Predicated region
  $region22: #{tpu_custom_call.1} parent=0 // pred_check
    _
  $region23: #{tpu_custom_call.1} parent=0 // pred_check_branch
    %10331 = sbr.rel (0) target = $region25
  $region24: #{tpu_custom_call.1} parent=0 // pred_region
    _
  $region25: #{tpu_custom_call.1} parent=0 // pred_fallthru
    _
  // Predicated region
  $region26: #{tpu_custom_call.1} parent=0 // pred_check
    _
  $region27: #{tpu_custom_call.1} parent=0 // pred_check_branch
    %10333 = sbr.rel (0) target = $region29
  $region28: #{tpu_custom_call.1} parent=0 // pred_region
    _
  $region29: #{tpu_custom_call.1} parent=0 // pred_fallthru
    _

</llo_original>
